<compile_context>
chip_gen: v7x
topology: tpu7x:2x2x1
jax: 0.10.0
libtpu: 0.0.40
codegen_flags: <defaults>
</compile_context>

<pallas_src>
import functools

import jax
import jax.numpy as jnp
from jax.experimental import pallas as pl
from jax.experimental.pallas import tpu as pltpu

EPS = 1e-5          # torch.nn.LayerNorm default
NEG_INF = -1e30     # finite masked-fill (avoids -inf max -> NaN hazards)
HIGH = jax.lax.Precision.HIGHEST


# ----------------------------- kernels ------------------------------------ #

def _attn_block_kernel(x_ref, g1_ref, b1_ref, wqkv_ref, wp_ref, bp_ref,
                       g2_ref, b2_ref, h_ref, xn2_ref, *,
                       batch, seq, num_heads, head_dim):
    """Whole (B*T, C) slab: LN1 -> MHA (all batches/heads) -> proj -> LN2."""
    B, T, H, D = batch, seq, num_heads, head_dim
    HD = H * D
    x = x_ref[...]                                     # (N, C) f32, N = B*T

    # ---- LayerNorm 1 (f32 VPU math) ----
    mu = jnp.mean(x, axis=-1, keepdims=True)
    var = jnp.mean((x - mu) ** 2, axis=-1, keepdims=True)
    xn1 = (x - mu) * jax.lax.rsqrt(var + EPS) * g1_ref[...] + b1_ref[...]

    # ---- fused QKV: one wide (N,C)@(C,3C) matmul, bf16 operands, f32 acc ----
    qkv = jnp.dot(xn1.astype(jnp.bfloat16), wqkv_ref[...],
                  preferred_element_type=jnp.float32)  # (N, 3*HD) f32

    # causal mask hoisted out of all loops
    row = jax.lax.broadcasted_iota(jnp.int32, (T, T), 0)
    col = jax.lax.broadcasted_iota(jnp.int32, (T, T), 1)
    causal = col <= row
    scale = float(D) ** -0.5

    # ---- per-(batch, head) softmax attention; heads fill a concat slab ----
    rows = []
    for b in range(B):                                 # B, H static -> unrolled
        r0 = b * T
        head_outs = []
        for h in range(H):
            q = qkv[r0:r0 + T, h * D:(h + 1) * D]                   # (T, D)
            k = qkv[r0:r0 + T, HD + h * D:HD + (h + 1) * D]
            v = qkv[r0:r0 + T, 2 * HD + h * D:2 * HD + (h + 1) * D]
            s = jax.lax.dot_general(q, k, (((1,), (1,)), ((), ())),
                                    preferred_element_type=jnp.float32) * scale
            s = jnp.where(causal, s, NEG_INF)
            s = s - jnp.max(s, axis=-1, keepdims=True)
            p = jnp.exp(s)
            # exact divide (pl.reciprocal(approx=True) would be the EUP-slot
            # choice in production; kept exact for bit-stable top-k gating)
            p = p / jnp.sum(p, axis=-1, keepdims=True)
            head_outs.append(jnp.dot(p, v, preferred_element_type=jnp.float32))
        rows.append(jnp.concatenate(head_outs, axis=-1))            # (T, HD)
    o_cat = jnp.concatenate(rows, axis=0).astype(jnp.bfloat16)      # (N, HD)

    # ---- single wide output projection (K = H*D) + bias ----
    attn = jnp.dot(o_cat, wp_ref[...],
                   preferred_element_type=jnp.float32) + bp_ref[...]

    # ---- residual + LayerNorm 2 (both outputs lane-dense, width C) ----
    hres = x + attn
    h_ref[...] = hres
    mu2 = jnp.mean(hres, axis=-1, keepdims=True)
    var2 = jnp.mean((hres - mu2) ** 2, axis=-1, keepdims=True)
    xn2_ref[...] = ((hres - mu2) * jax.lax.rsqrt(var2 + EPS) * g2_ref[...]
                    + b2_ref[...])


def _moe_expert_kernel(xn2_ref, dw_ref, w1_ref, b1_ref, w2_ref, b2_ref,
                       out_ref):
    """One expert per inner grid step; per-group output block is a VMEM
    accumulator (init at e==0).  bf16 weights/operands, f32 accumulation."""
    e = pl.program_id(1)                  # expert-within-group axis (reduction)

    @pl.when(e == 0)
    def _():
        out_ref[...] = jnp.zeros_like(out_ref)

    xb = xn2_ref[...].astype(jnp.bfloat16)                           # (N, C)
    hid = jnp.dot(xb, w1_ref[0],
                  preferred_element_type=jnp.float32) + b1_ref[0]    # (N, 4C)
    hid = jnp.maximum(hid, 0.0)                                      # ReLU
    y = jnp.dot(hid.astype(jnp.bfloat16), w2_ref[0],
                preferred_element_type=jnp.float32) + b2_ref[0]      # (N, C)
    out_ref[...] += dw_ref[...] * y[None, :, :]        # dw: (1, N, 1) gates


# ----------------------------- wrapper ------------------------------------ #

@functools.partial(jax.jit, static_argnames=("num_heads", "top_k"))
def block_forward(x, g1, b1, wqkv, wp_t, bp, g2, b2,
                  wg, ew1, eb1, ew2, eb2, *, num_heads, top_k):
    """Pallas Block forward (kv_cache=None, eval mode).

    x     : (B, T, C) f32
    g1,b1 : (1, C)  f32      LayerNorm1 scale/shift
    wqkv  : (C, 3*C) bf16    stacked per-head Q|K|V weights (head-major cols)
    wp_t  : (C, C)   bf16    MHA projection weight, pre-transposed
    bp    : (1, C)   f32     MHA projection bias
    g2,b2 : (1, C)   f32     LayerNorm2 scale/shift
    wg    : (C, n_exp) f32   gate weight, pre-transposed
    ew1   : (n_exp, C, 4C)  bf16  expert first Linear (pre-transposed)
    eb1   : (n_exp, 1, 4C)  f32
    ew2   : (n_exp, 4C, C)  bf16  expert second Linear (pre-transposed)
    eb2   : (n_exp, 1, C)   f32
    """
    B, T, C = x.shape
    H = num_heads
    D = C // H
    num_experts = wg.shape[1]
    hidden = ew1.shape[-1]
    N = B * T
    x_flat = x.reshape(N, C)

    # ---- fused LN1 + MHA + residual + LN2: batch folded into matmul M ----
    attn_kernel = functools.partial(_attn_block_kernel, batch=B, seq=T,
                                    num_heads=H, head_dim=D)
    h_flat, xn2_flat = pl.pallas_call(
        attn_kernel,
        out_shape=(jax.ShapeDtypeStruct((N, C), jnp.float32),
                   jax.ShapeDtypeStruct((N, C), jnp.float32)),
        grid_spec=pltpu.PrefetchScalarGridSpec(
            num_scalar_prefetch=0,
            grid=(1,),
            in_specs=[
                pl.BlockSpec((N, C), lambda i: (0, 0)),        # x (flat)
                pl.BlockSpec((1, C), lambda i: (0, 0)),        # ln1 gamma
                pl.BlockSpec((1, C), lambda i: (0, 0)),        # ln1 beta
                pl.BlockSpec((C, 3 * C), lambda i: (0, 0)),    # Wqkv  (bf16)
                pl.BlockSpec((C, C), lambda i: (0, 0)),        # Wp^T  (bf16)
                pl.BlockSpec((1, C), lambda i: (0, 0)),        # bp
                pl.BlockSpec((1, C), lambda i: (0, 0)),        # ln2 gamma
                pl.BlockSpec((1, C), lambda i: (0, 0)),        # ln2 beta
            ],
            out_specs=[
                pl.BlockSpec((N, C), lambda i: (0, 0)),        # h = x + attn
                pl.BlockSpec((N, C), lambda i: (0, 0)),        # ln2(h)
            ],
        ),
        compiler_params=pltpu.CompilerParams(
            dimension_semantics=("arbitrary",)),
    )(x_flat, g1, b1, wqkv, wp_t, bp, g2, b2)

    # ---- top-k gating in plain JAX (tiny (N, n_exp) tensor) ----
    logits = jnp.dot(xn2_flat, wg, precision=HIGH)
    gate = jax.nn.softmax(logits.astype(jnp.float32), axis=-1)
    top_w, top_i = jax.lax.top_k(gate, top_k)
    top_w = top_w / jnp.sum(top_w, axis=-1, keepdims=True)
    dense_w = jnp.zeros((N, num_experts), jnp.float32)
    dense_w = dense_w.at[jnp.arange(N)[:, None], top_i].set(top_w)
    dw3 = jnp.transpose(dense_w)[:, :, None]            # (n_exp, N, 1)

    # ---- MoE experts: expert axis split into core groups (v7x: 2 TCs) ----
    n_groups = 2 if (num_experts % 2 == 0 and num_experts >= 2) else 1
    epg = num_experts // n_groups

    # right-sized VMEM budget: double-buffered bf16 expert weights + activ.
    per_exp_w_bytes = (C * hidden + hidden * C) * ew1.dtype.itemsize
    moe_vmem_bytes = int(2 * per_exp_w_bytes            # dbl-buffered W1/W2
                         + 4 * N * (C + hidden)         # xn2 + hidden activ.
                         + (12 << 20))                  # bias/output/scratch

    partials = pl.pallas_call(
        _moe_expert_kernel,
        out_shape=jax.ShapeDtypeStruct((n_groups, N, C), jnp.float32),
        grid_spec=pltpu.PrefetchScalarGridSpec(
            num_scalar_prefetch=0,
            grid=(n_groups, epg),
            in_specs=[
                pl.BlockSpec((N, C), lambda g, e: (0, 0)),                # ln2(h)
                pl.BlockSpec((1, N, 1), lambda g, e: (g * epg + e, 0, 0)),      # gate col
                pl.BlockSpec((1, C, hidden), lambda g, e: (g * epg + e, 0, 0)),  # W1_e bf16
                pl.BlockSpec((1, 1, hidden), lambda g, e: (g * epg + e, 0, 0)),  # b1_e
                pl.BlockSpec((1, hidden, C), lambda g, e: (g * epg + e, 0, 0)),  # W2_e bf16
                pl.BlockSpec((1, 1, C), lambda g, e: (g * epg + e, 0, 0)),       # b2_e
            ],
            out_specs=pl.BlockSpec((1, N, C), lambda g, e: (g, 0, 0)),
        ),
        compiler_params=pltpu.CompilerParams(
            dimension_semantics=("parallel", "arbitrary"),
            vmem_limit_bytes=moe_vmem_bytes),
    )(xn2_flat, dw3, ew1, eb1, ew2, eb2)

    out_flat = h_flat + jnp.sum(partials, axis=0)       # residual + MoE
    return out_flat.reshape(B, T, C)


# -------------------------- pure-JAX reference ----------------------------- #

def _layer_norm(z, g, b):
    m = jnp.mean(z, axis=-1, keepdims=True)
    v = jnp.mean((z - m) ** 2, axis=-1, keepdims=True)
    return (z - m) * jax.lax.rsqrt(v + EPS) * g + b


def _reference(x, g1, b1, wq, wk, wv, wp_t, bp, g2, b2,
               wg, ew1, eb1, ew2, eb2, top_k, dot_dtype=jnp.float32):
    """Module-faithful JAX reference.  dot_dtype=bfloat16 reproduces the
    kernel's mixed-precision policy (bf16 matmul operands, f32 accumulation);
    dot_dtype=float32 is the exact PyTorch-eval math."""
    cast = lambda a: a.astype(dot_dtype)
    B, T, C = x.shape
    H, _, D = wq.shape
    xn1 = _layer_norm(x, g1, b1)
    q = jnp.einsum("btc,hcd->bhtd", cast(xn1), cast(wq), precision=HIGH,
                   preferred_element_type=jnp.float32)
    k = jnp.einsum("btc,hcd->bhtd", cast(xn1), cast(wk), precision=HIGH,
                   preferred_element_type=jnp.float32)
    v = jnp.einsum("btc,hcd->bhtd", cast(xn1), cast(wv), precision=HIGH,
                   preferred_element_type=jnp.float32)
    s = jnp.einsum("bhqd,bhkd->bhqk", q, k, precision=HIGH) * (D ** -0.5)
    mask = jnp.tril(jnp.ones((T, T), dtype=bool))
    s = jnp.where(mask, s, -jnp.inf)
    p = jax.nn.softmax(s, axis=-1)
    o = jnp.einsum("bhqk,bhkd->bhqd", p, v, precision=HIGH)
    o = jnp.transpose(o, (0, 2, 1, 3)).reshape(B, T, H * D)
    attn = jnp.dot(cast(o), cast(wp_t), precision=HIGH,
                   preferred_element_type=jnp.float32) + bp
    h = x + attn
    xn2 = _layer_norm(h, g2, b2)

    xf = xn2.reshape(-1, C)
    logits = jnp.dot(xf, wg, precision=HIGH)
    gate = jax.nn.softmax(logits.astype(jnp.float32), axis=-1)
    tw, ti = jax.lax.top_k(gate, top_k)
    tw = tw / jnp.sum(tw, axis=-1, keepdims=True)
    n_exp = wg.shape[1]
    dense = jnp.zeros((xf.shape[0], n_exp), jnp.float32)
    dense = dense.at[jnp.arange(xf.shape[0])[:, None], ti].set(tw)
    moe = jnp.zeros_like(xf)
    for e in range(n_exp):
        ye = jnp.maximum(jnp.dot(cast(xf), cast(ew1[e]), precision=HIGH,
                                 preferred_element_type=jnp.float32) + eb1[e],
                         0.0)
        ye = jnp.dot(cast(ye), cast(ew2[e]), precision=HIGH,
                     preferred_element_type=jnp.float32) + eb2[e]
        moe = moe + dense[:, e:e + 1] * ye
    return (h.reshape(-1, C) + moe).reshape(B, T, C)


# ------------------------------- main -------------------------------------- #

if __name__ == "__main__":
    EMBEDDING_DIM = 512
    NUM_HEADS = 4
    HEAD_SIZE = EMBEDDING_DIM // NUM_HEADS          # 128
    NUM_EXPERTS = 4
    TOP_K = 2
    B, T = 2, 8                                     # small batch / seq
    C, D, H = EMBEDDING_DIM, HEAD_SIZE, NUM_HEADS
    FF = 4 * C

    key = jax.random.PRNGKey(0)
    ks = jax.random.split(key, 16)
    x = jax.random.normal(ks[0], (B, T, C), dtype=jnp.float32)

    g1 = 1.0 + 0.02 * jax.random.normal(ks[1], (1, C), dtype=jnp.float32)
    b1 = 0.02 * jax.random.normal(ks[2], (1, C), dtype=jnp.float32)
    g2 = 1.0 + 0.02 * jax.random.normal(ks[3], (1, C), dtype=jnp.float32)
    b2 = 0.02 * jax.random.normal(ks[4], (1, C), dtype=jnp.float32)

    wq = 0.02 * jax.random.normal(ks[5], (H, C, D), dtype=jnp.float32)
    wk = 0.02 * jax.random.normal(ks[6], (H, C, D), dtype=jnp.float32)
    wv = 0.02 * jax.random.normal(ks[7], (H, C, D), dtype=jnp.float32)
    wp_t = 0.02 * jax.random.normal(ks[8], (H * D, C), dtype=jnp.float32)
    bp = 0.02 * jax.random.normal(ks[9], (1, C), dtype=jnp.float32)

    wg = 0.02 * jax.random.normal(ks[10], (C, NUM_EXPERTS), dtype=jnp.float32)
    ew1 = 0.02 * jax.random.normal(ks[11], (NUM_EXPERTS, C, FF), dtype=jnp.float32)
    eb1 = 0.02 * jax.random.normal(ks[12], (NUM_EXPERTS, 1, FF), dtype=jnp.float32)
    ew2 = 0.02 * jax.random.normal(ks[13], (NUM_EXPERTS, FF, C), dtype=jnp.float32)
    eb2 = 0.02 * jax.random.normal(ks[14], (NUM_EXPERTS, 1, C), dtype=jnp.float32)

    # pack per-head QKV weights into one wide (C, 3*H*D) matrix (head-major)
    def pack_heads(w):                       # (H, C, D) -> (C, H*D)
        return jnp.transpose(w, (1, 0, 2)).reshape(C, H * D)
    wqkv = jnp.concatenate([pack_heads(wq), pack_heads(wk), pack_heads(wv)],
                           axis=-1)

    # bf16 weight storage (halves HBM streaming, MXU-native on v6e/v7x);
    # biases, LN params and the tiny gate weight stay f32.
    wqkv_b = wqkv.astype(jnp.bfloat16)
    wp_b = wp_t.astype(jnp.bfloat16)
    ew1_b = ew1.astype(jnp.bfloat16)
    ew2_b = ew2.astype(jnp.bfloat16)

    out = block_forward(x, g1, b1, wqkv_b, wp_b, bp, g2, b2,
                        wg, ew1_b, eb1, ew2_b, eb2,
                        num_heads=NUM_HEADS, top_k=TOP_K)
    out = jax.block_until_ready(out)
    assert out.shape == (B, T, C)
    assert out.dtype == jnp.float32

    # Precision-matched reference (same bf16 weight/operand quantization,
    # f32 accumulation): tight agreement expected.
    ref_bf16 = _reference(x, g1, b1, wq, wk, wv, wp_t, bp, g2, b2,
                          wg, ew1, eb1, ew2, eb2, TOP_K,
                          dot_dtype=jnp.bfloat16)
    assert jnp.allclose(out, ref_bf16, atol=5e-3, rtol=5e-3)

    # Full-f32 module reference: the top-k gate is a discrete decision, so
    # bf16 may legitimately flip near-tie tokens; check a flip-robust quantile
    # of the elementwise error instead of a strict allclose.
    ref_f32 = _reference(x, g1, b1, wq, wk, wv, wp_t, bp, g2, b2,
                         wg, ew1, eb1, ew2, eb2, TOP_K,
                         dot_dtype=jnp.float32)
    err = jnp.abs(out - ref_f32)
    assert float(jnp.quantile(err, 0.75)) < 3e-2

    print("KERNEL_OK")
</pallas_src>

<mosaic_0001>
module attributes {stable_mosaic.version = 11 : i64} {
  func.func @_attn_block_kernel(%arg0: i32, %arg1: memref<16x512xf32, #tpu.memory_space<vmem>>, %arg2: memref<1x512xf32, #tpu.memory_space<vmem>>, %arg3: memref<1x512xf32, #tpu.memory_space<vmem>>, %arg4: memref<512x1536xbf16, #tpu.memory_space<vmem>>, %arg5: memref<512x512xbf16, #tpu.memory_space<vmem>>, %arg6: memref<1x512xf32, #tpu.memory_space<vmem>>, %arg7: memref<1x512xf32, #tpu.memory_space<vmem>>, %arg8: memref<1x512xf32, #tpu.memory_space<vmem>>, %arg9: memref<16x512xf32, #tpu.memory_space<vmem>>, %arg10: memref<16x512xf32, #tpu.memory_space<vmem>>) attributes {dimension_semantics = [#tpu.dimension_semantics<arbitrary>], iteration_bounds = array<i64: 1>, scalar_prefetch = 0 : i64, scratch_operands = 0 : i64, tpu.core_type = #tpu.core_type<tc>, window_params = [{pipeline_mode = #tpu.pipeline_mode<synchronous>, transform_indices = @transform_0, window_bounds = array<i64: 16, 512>}, {pipeline_mode = #tpu.pipeline_mode<synchronous>, transform_indices = @transform_1, window_bounds = array<i64: 1, 512>}, {pipeline_mode = #tpu.pipeline_mode<synchronous>, transform_indices = @transform_2, window_bounds = array<i64: 1, 512>}, {pipeline_mode = #tpu.pipeline_mode<synchronous>, transform_indices = @transform_3, window_bounds = array<i64: 512, 1536>}, {pipeline_mode = #tpu.pipeline_mode<synchronous>, transform_indices = @transform_4, window_bounds = array<i64: 512, 512>}, {pipeline_mode = #tpu.pipeline_mode<synchronous>, transform_indices = @transform_5, window_bounds = array<i64: 1, 512>}, {pipeline_mode = #tpu.pipeline_mode<synchronous>, transform_indices = @transform_6, window_bounds = array<i64: 1, 512>}, {pipeline_mode = #tpu.pipeline_mode<synchronous>, transform_indices = @transform_7, window_bounds = array<i64: 1, 512>}, {pipeline_mode = #tpu.pipeline_mode<synchronous>, transform_indices = @transform_8, window_bounds = array<i64: 16, 512>}, {pipeline_mode = #tpu.pipeline_mode<synchronous>, transform_indices = @transform_9, window_bounds = array<i64: 16, 512>}]} {
    %c0 = arith.constant 0 : index
    %c0_0 = arith.constant 0 : index
    %0 = vector.load %arg1[%c0, %c0_0] : memref<16x512xf32, #tpu.memory_space<vmem>>, vector<16x512xf32>
    %cst = arith.constant dense<0.000000e+00> : vector<16xf32>
    %1 = vector.multi_reduction <add>, %0, %cst [1] : vector<16x512xf32> to vector<16xf32>
    %2 = vector.shape_cast %1 : vector<16xf32> to vector<16x1xf32>
    %cst_1 = arith.constant 5.120000e+02 : f32
    %3 = vector.broadcast %cst_1 : f32 to vector<16x1xf32>
    %4 = arith.divf %2, %3 : vector<16x1xf32>
    %5 = vector.broadcast %4 : vector<16x1xf32> to vector<16x512xf32>
    %6 = arith.subf %0, %5 : vector<16x512xf32>
    %7 = arith.mulf %6, %6 : vector<16x512xf32>
    %cst_2 = arith.constant dense<0.000000e+00> : vector<16xf32>
    %8 = vector.multi_reduction <add>, %7, %cst_2 [1] : vector<16x512xf32> to vector<16xf32>
    %9 = vector.shape_cast %8 : vector<16xf32> to vector<16x1xf32>
    %cst_3 = arith.constant 5.120000e+02 : f32
    %10 = vector.broadcast %cst_3 : f32 to vector<16x1xf32>
    %11 = arith.divf %9, %10 : vector<16x1xf32>
    %12 = vector.broadcast %4 : vector<16x1xf32> to vector<16x512xf32>
    %13 = arith.subf %0, %12 : vector<16x512xf32>
    %cst_4 = arith.constant 9.99999974E-6 : f32
    %14 = vector.broadcast %cst_4 : f32 to vector<16x1xf32>
    %15 = arith.addf %11, %14 : vector<16x1xf32>
    %16 = math.rsqrt %15 : vector<16x1xf32>
    %17 = vector.broadcast %16 : vector<16x1xf32> to vector<16x512xf32>
    %18 = arith.mulf %13, %17 : vector<16x512xf32>
    %c0_5 = arith.constant 0 : index
    %c0_6 = arith.constant 0 : index
    %19 = vector.load %arg2[%c0_5, %c0_6] : memref<1x512xf32, #tpu.memory_space<vmem>>, vector<1x512xf32>
    %20 = vector.broadcast %19 : vector<1x512xf32> to vector<16x512xf32>
    %21 = arith.mulf %18, %20 : vector<16x512xf32>
    %c0_7 = arith.constant 0 : index
    %c0_8 = arith.constant 0 : index
    %22 = vector.load %arg3[%c0_7, %c0_8] : memref<1x512xf32, #tpu.memory_space<vmem>>, vector<1x512xf32>
    %23 = vector.broadcast %22 : vector<1x512xf32> to vector<16x512xf32>
    %24 = arith.addf %21, %23 : vector<16x512xf32>
    %25 = arith.truncf %24 : vector<16x512xf32> to vector<16x512xbf16>
    %c0_9 = arith.constant 0 : index
    %c0_10 = arith.constant 0 : index
    %26 = vector.load %arg4[%c0_9, %c0_10] : memref<512x1536xbf16, #tpu.memory_space<vmem>>, vector<512x1536xbf16>
    %cst_11 = arith.constant dense<0.000000e+00> : vector<16x1536xf32>
    %27 = tpu.matmul %25, %26, %cst_11 {dimension_numbers = #tpu.dot_dimension_numbers<[1], [0], [0], [1], [0, 0, 1, 1], [], []>} : vector<16x512xbf16>, vector<512x1536xbf16>, vector<16x1536xf32> -> vector<16x1536xf32>
    %28 = tpu.iota {dimensions = array<i32: 0>} : vector<8x8xi32>
    %29 = tpu.iota {dimensions = array<i32: 1>} : vector<8x8xi32>
    %30 = arith.cmpi sle, %29, %28 : vector<8x8xi32>
    %31 = vector.extract_strided_slice %27 {offsets = [0, 0], sizes = [8, 128], strides = [1, 1]} : vector<16x1536xf32> to vector<8x128xf32>
    %32 = vector.extract_strided_slice %27 {offsets = [0, 512], sizes = [8, 128], strides = [1, 1]} : vector<16x1536xf32> to vector<8x128xf32>
    %33 = vector.extract_strided_slice %27 {offsets = [0, 1024], sizes = [8, 128], strides = [1, 1]} : vector<16x1536xf32> to vector<8x128xf32>
    %cst_12 = arith.constant dense<0.000000e+00> : vector<8x8xf32>
    %34 = tpu.matmul %31, %32, %cst_12 {dimension_numbers = #tpu.dot_dimension_numbers<[1], [1], [0], [0], [0, 0, 1, 0], [], []>} : vector<8x128xf32>, vector<8x128xf32>, vector<8x8xf32> -> vector<8x8xf32>
    %cst_13 = arith.constant 0.0883883461 : f32
    %35 = vector.broadcast %cst_13 : f32 to vector<8x8xf32>
    %36 = arith.mulf %34, %35 : vector<8x8xf32>
    %cst_14 = arith.constant -1.000000e+30 : f32
    %37 = vector.broadcast %cst_14 : f32 to vector<8x8xf32>
    %38 = arith.select %30, %36, %37 : vector<8x8xi1>, vector<8x8xf32>
    %cst_15 = arith.constant dense<0xFF800000> : vector<8xf32>
    %39 = vector.multi_reduction <maximumf>, %38, %cst_15 [1] : vector<8x8xf32> to vector<8xf32>
    %40 = vector.shape_cast %39 : vector<8xf32> to vector<8x1xf32>
    %41 = vector.broadcast %40 : vector<8x1xf32> to vector<8x8xf32>
    %42 = arith.subf %38, %41 : vector<8x8xf32>
    %43 = math.exp %42 : vector<8x8xf32>
    %cst_16 = arith.constant dense<0.000000e+00> : vector<8xf32>
    %44 = vector.multi_reduction <add>, %43, %cst_16 [1] : vector<8x8xf32> to vector<8xf32>
    %45 = vector.shape_cast %44 : vector<8xf32> to vector<8x1xf32>
    %46 = vector.broadcast %45 : vector<8x1xf32> to vector<8x8xf32>
    %47 = arith.divf %43, %46 : vector<8x8xf32>
    %cst_17 = arith.constant dense<0.000000e+00> : vector<8x128xf32>
    %48 = tpu.matmul %47, %33, %cst_17 {dimension_numbers = #tpu.dot_dimension_numbers<[1], [0], [0], [1], [0, 0, 1, 1], [], []>} : vector<8x8xf32>, vector<8x128xf32>, vector<8x128xf32> -> vector<8x128xf32>
    %49 = vector.extract_strided_slice %27 {offsets = [0, 128], sizes = [8, 128], strides = [1, 1]} : vector<16x1536xf32> to vector<8x128xf32>
    %50 = vector.extract_strided_slice %27 {offsets = [0, 640], sizes = [8, 128], strides = [1, 1]} : vector<16x1536xf32> to vector<8x128xf32>
    %51 = vector.extract_strided_slice %27 {offsets = [0, 1152], sizes = [8, 128], strides = [1, 1]} : vector<16x1536xf32> to vector<8x128xf32>
    %cst_18 = arith.constant dense<0.000000e+00> : vector<8x8xf32>
    %52 = tpu.matmul %49, %50, %cst_18 {dimension_numbers = #tpu.dot_dimension_numbers<[1], [1], [0], [0], [0, 0, 1, 0], [], []>} : vector<8x128xf32>, vector<8x128xf32>, vector<8x8xf32> -> vector<8x8xf32>
    %cst_19 = arith.constant 0.0883883461 : f32
    %53 = vector.broadcast %cst_19 : f32 to vector<8x8xf32>
    %54 = arith.mulf %52, %53 : vector<8x8xf32>
    %cst_20 = arith.constant -1.000000e+30 : f32
    %55 = vector.broadcast %cst_20 : f32 to vector<8x8xf32>
    %56 = arith.select %30, %54, %55 : vector<8x8xi1>, vector<8x8xf32>
    %cst_21 = arith.constant dense<0xFF800000> : vector<8xf32>
    %57 = vector.multi_reduction <maximumf>, %56, %cst_21 [1] : vector<8x8xf32> to vector<8xf32>
    %58 = vector.shape_cast %57 : vector<8xf32> to vector<8x1xf32>
    %59 = vector.broadcast %58 : vector<8x1xf32> to vector<8x8xf32>
    %60 = arith.subf %56, %59 : vector<8x8xf32>
    %61 = math.exp %60 : vector<8x8xf32>
    %cst_22 = arith.constant dense<0.000000e+00> : vector<8xf32>
    %62 = vector.multi_reduction <add>, %61, %cst_22 [1] : vector<8x8xf32> to vector<8xf32>
    %63 = vector.shape_cast %62 : vector<8xf32> to vector<8x1xf32>
    %64 = vector.broadcast %63 : vector<8x1xf32> to vector<8x8xf32>
    %65 = arith.divf %61, %64 : vector<8x8xf32>
    %cst_23 = arith.constant dense<0.000000e+00> : vector<8x128xf32>
    %66 = tpu.matmul %65, %51, %cst_23 {dimension_numbers = #tpu.dot_dimension_numbers<[1], [0], [0], [1], [0, 0, 1, 1], [], []>} : vector<8x8xf32>, vector<8x128xf32>, vector<8x128xf32> -> vector<8x128xf32>
    %67 = vector.extract_strided_slice %27 {offsets = [0, 256], sizes = [8, 128], strides = [1, 1]} : vector<16x1536xf32> to vector<8x128xf32>
    %68 = vector.extract_strided_slice %27 {offsets = [0, 768], sizes = [8, 128], strides = [1, 1]} : vector<16x1536xf32> to vector<8x128xf32>
    %69 = vector.extract_strided_slice %27 {offsets = [0, 1280], sizes = [8, 128], strides = [1, 1]} : vector<16x1536xf32> to vector<8x128xf32>
    %cst_24 = arith.constant dense<0.000000e+00> : vector<8x8xf32>
    %70 = tpu.matmul %67, %68, %cst_24 {dimension_numbers = #tpu.dot_dimension_numbers<[1], [1], [0], [0], [0, 0, 1, 0], [], []>} : vector<8x128xf32>, vector<8x128xf32>, vector<8x8xf32> -> vector<8x8xf32>
    %cst_25 = arith.constant 0.0883883461 : f32
    %71 = vector.broadcast %cst_25 : f32 to vector<8x8xf32>
    %72 = arith.mulf %70, %71 : vector<8x8xf32>
    %cst_26 = arith.constant -1.000000e+30 : f32
    %73 = vector.broadcast %cst_26 : f32 to vector<8x8xf32>
    %74 = arith.select %30, %72, %73 : vector<8x8xi1>, vector<8x8xf32>
    %cst_27 = arith.constant dense<0xFF800000> : vector<8xf32>
    %75 = vector.multi_reduction <maximumf>, %74, %cst_27 [1] : vector<8x8xf32> to vector<8xf32>
    %76 = vector.shape_cast %75 : vector<8xf32> to vector<8x1xf32>
    %77 = vector.broadcast %76 : vector<8x1xf32> to vector<8x8xf32>
    %78 = arith.subf %74, %77 : vector<8x8xf32>
    %79 = math.exp %78 : vector<8x8xf32>
    %cst_28 = arith.constant dense<0.000000e+00> : vector<8xf32>
    %80 = vector.multi_reduction <add>, %79, %cst_28 [1] : vector<8x8xf32> to vector<8xf32>
    %81 = vector.shape_cast %80 : vector<8xf32> to vector<8x1xf32>
    %82 = vector.broadcast %81 : vector<8x1xf32> to vector<8x8xf32>
    %83 = arith.divf %79, %82 : vector<8x8xf32>
    %cst_29 = arith.constant dense<0.000000e+00> : vector<8x128xf32>
    %84 = tpu.matmul %83, %69, %cst_29 {dimension_numbers = #tpu.dot_dimension_numbers<[1], [0], [0], [1], [0, 0, 1, 1], [], []>} : vector<8x8xf32>, vector<8x128xf32>, vector<8x128xf32> -> vector<8x128xf32>
    %85 = vector.extract_strided_slice %27 {offsets = [0, 384], sizes = [8, 128], strides = [1, 1]} : vector<16x1536xf32> to vector<8x128xf32>
    %86 = vector.extract_strided_slice %27 {offsets = [0, 896], sizes = [8, 128], strides = [1, 1]} : vector<16x1536xf32> to vector<8x128xf32>
    %87 = vector.extract_strided_slice %27 {offsets = [0, 1408], sizes = [8, 128], strides = [1, 1]} : vector<16x1536xf32> to vector<8x128xf32>
    %cst_30 = arith.constant dense<0.000000e+00> : vector<8x8xf32>
    %88 = tpu.matmul %85, %86, %cst_30 {dimension_numbers = #tpu.dot_dimension_numbers<[1], [1], [0], [0], [0, 0, 1, 0], [], []>} : vector<8x128xf32>, vector<8x128xf32>, vector<8x8xf32> -> vector<8x8xf32>
    %cst_31 = arith.constant 0.0883883461 : f32
    %89 = vector.broadcast %cst_31 : f32 to vector<8x8xf32>
    %90 = arith.mulf %88, %89 : vector<8x8xf32>
    %cst_32 = arith.constant -1.000000e+30 : f32
    %91 = vector.broadcast %cst_32 : f32 to vector<8x8xf32>
    %92 = arith.select %30, %90, %91 : vector<8x8xi1>, vector<8x8xf32>
    %cst_33 = arith.constant dense<0xFF800000> : vector<8xf32>
    %93 = vector.multi_reduction <maximumf>, %92, %cst_33 [1] : vector<8x8xf32> to vector<8xf32>
    %94 = vector.shape_cast %93 : vector<8xf32> to vector<8x1xf32>
    %95 = vector.broadcast %94 : vector<8x1xf32> to vector<8x8xf32>
    %96 = arith.subf %92, %95 : vector<8x8xf32>
    %97 = math.exp %96 : vector<8x8xf32>
    %cst_34 = arith.constant dense<0.000000e+00> : vector<8xf32>
    %98 = vector.multi_reduction <add>, %97, %cst_34 [1] : vector<8x8xf32> to vector<8xf32>
    %99 = vector.shape_cast %98 : vector<8xf32> to vector<8x1xf32>
    %100 = vector.broadcast %99 : vector<8x1xf32> to vector<8x8xf32>
    %101 = arith.divf %97, %100 : vector<8x8xf32>
    %cst_35 = arith.constant dense<0.000000e+00> : vector<8x128xf32>
    %102 = tpu.matmul %101, %87, %cst_35 {dimension_numbers = #tpu.dot_dimension_numbers<[1], [0], [0], [1], [0, 0, 1, 1], [], []>} : vector<8x8xf32>, vector<8x128xf32>, vector<8x128xf32> -> vector<8x128xf32>
    %103 = tpu.concatenate %48, %66, %84, %102 in 1 : vector<8x128xf32>, vector<8x128xf32>, vector<8x128xf32>, vector<8x128xf32> -> vector<8x512xf32>
    %104 = vector.extract_strided_slice %27 {offsets = [8, 0], sizes = [8, 128], strides = [1, 1]} : vector<16x1536xf32> to vector<8x128xf32>
    %105 = vector.extract_strided_slice %27 {offsets = [8, 512], sizes = [8, 128], strides = [1, 1]} : vector<16x1536xf32> to vector<8x128xf32>
    %106 = vector.extract_strided_slice %27 {offsets = [8, 1024], sizes = [8, 128], strides = [1, 1]} : vector<16x1536xf32> to vector<8x128xf32>
    %cst_36 = arith.constant dense<0.000000e+00> : vector<8x8xf32>
    %107 = tpu.matmul %104, %105, %cst_36 {dimension_numbers = #tpu.dot_dimension_numbers<[1], [1], [0], [0], [0, 0, 1, 0], [], []>} : vector<8x128xf32>, vector<8x128xf32>, vector<8x8xf32> -> vector<8x8xf32>
    %cst_37 = arith.constant 0.0883883461 : f32
    %108 = vector.broadcast %cst_37 : f32 to vector<8x8xf32>
    %109 = arith.mulf %107, %108 : vector<8x8xf32>
    %cst_38 = arith.constant -1.000000e+30 : f32
    %110 = vector.broadcast %cst_38 : f32 to vector<8x8xf32>
    %111 = arith.select %30, %109, %110 : vector<8x8xi1>, vector<8x8xf32>
    %cst_39 = arith.constant dense<0xFF800000> : vector<8xf32>
    %112 = vector.multi_reduction <maximumf>, %111, %cst_39 [1] : vector<8x8xf32> to vector<8xf32>
    %113 = vector.shape_cast %112 : vector<8xf32> to vector<8x1xf32>
    %114 = vector.broadcast %113 : vector<8x1xf32> to vector<8x8xf32>
    %115 = arith.subf %111, %114 : vector<8x8xf32>
    %116 = math.exp %115 : vector<8x8xf32>
    %cst_40 = arith.constant dense<0.000000e+00> : vector<8xf32>
    %117 = vector.multi_reduction <add>, %116, %cst_40 [1] : vector<8x8xf32> to vector<8xf32>
    %118 = vector.shape_cast %117 : vector<8xf32> to vector<8x1xf32>
    %119 = vector.broadcast %118 : vector<8x1xf32> to vector<8x8xf32>
    %120 = arith.divf %116, %119 : vector<8x8xf32>
    %cst_41 = arith.constant dense<0.000000e+00> : vector<8x128xf32>
    %121 = tpu.matmul %120, %106, %cst_41 {dimension_numbers = #tpu.dot_dimension_numbers<[1], [0], [0], [1], [0, 0, 1, 1], [], []>} : vector<8x8xf32>, vector<8x128xf32>, vector<8x128xf32> -> vector<8x128xf32>
    %122 = vector.extract_strided_slice %27 {offsets = [8, 128], sizes = [8, 128], strides = [1, 1]} : vector<16x1536xf32> to vector<8x128xf32>
    %123 = vector.extract_strided_slice %27 {offsets = [8, 640], sizes = [8, 128], strides = [1, 1]} : vector<16x1536xf32> to vector<8x128xf32>
    %124 = vector.extract_strided_slice %27 {offsets = [8, 1152], sizes = [8, 128], strides = [1, 1]} : vector<16x1536xf32> to vector<8x128xf32>
    %cst_42 = arith.constant dense<0.000000e+00> : vector<8x8xf32>
    %125 = tpu.matmul %122, %123, %cst_42 {dimension_numbers = #tpu.dot_dimension_numbers<[1], [1], [0], [0], [0, 0, 1, 0], [], []>} : vector<8x128xf32>, vector<8x128xf32>, vector<8x8xf32> -> vector<8x8xf32>
    %cst_43 = arith.constant 0.0883883461 : f32
    %126 = vector.broadcast %cst_43 : f32 to vector<8x8xf32>
    %127 = arith.mulf %125, %126 : vector<8x8xf32>
    %cst_44 = arith.constant -1.000000e+30 : f32
    %128 = vector.broadcast %cst_44 : f32 to vector<8x8xf32>
    %129 = arith.select %30, %127, %128 : vector<8x8xi1>, vector<8x8xf32>
    %cst_45 = arith.constant dense<0xFF800000> : vector<8xf32>
    %130 = vector.multi_reduction <maximumf>, %129, %cst_45 [1] : vector<8x8xf32> to vector<8xf32>
    %131 = vector.shape_cast %130 : vector<8xf32> to vector<8x1xf32>
    %132 = vector.broadcast %131 : vector<8x1xf32> to vector<8x8xf32>
    %133 = arith.subf %129, %132 : vector<8x8xf32>
    %134 = math.exp %133 : vector<8x8xf32>
    %cst_46 = arith.constant dense<0.000000e+00> : vector<8xf32>
    %135 = vector.multi_reduction <add>, %134, %cst_46 [1] : vector<8x8xf32> to vector<8xf32>
    %136 = vector.shape_cast %135 : vector<8xf32> to vector<8x1xf32>
    %137 = vector.broadcast %136 : vector<8x1xf32> to vector<8x8xf32>
    %138 = arith.divf %134, %137 : vector<8x8xf32>
    %cst_47 = arith.constant dense<0.000000e+00> : vector<8x128xf32>
    %139 = tpu.matmul %138, %124, %cst_47 {dimension_numbers = #tpu.dot_dimension_numbers<[1], [0], [0], [1], [0, 0, 1, 1], [], []>} : vector<8x8xf32>, vector<8x128xf32>, vector<8x128xf32> -> vector<8x128xf32>
    %140 = vector.extract_strided_slice %27 {offsets = [8, 256], sizes = [8, 128], strides = [1, 1]} : vector<16x1536xf32> to vector<8x128xf32>
    %141 = vector.extract_strided_slice %27 {offsets = [8, 768], sizes = [8, 128], strides = [1, 1]} : vector<16x1536xf32> to vector<8x128xf32>
    %142 = vector.extract_strided_slice %27 {offsets = [8, 1280], sizes = [8, 128], strides = [1, 1]} : vector<16x1536xf32> to vector<8x128xf32>
    %cst_48 = arith.constant dense<0.000000e+00> : vector<8x8xf32>
    %143 = tpu.matmul %140, %141, %cst_48 {dimension_numbers = #tpu.dot_dimension_numbers<[1], [1], [0], [0], [0, 0, 1, 0], [], []>} : vector<8x128xf32>, vector<8x128xf32>, vector<8x8xf32> -> vector<8x8xf32>
    %cst_49 = arith.constant 0.0883883461 : f32
    %144 = vector.broadcast %cst_49 : f32 to vector<8x8xf32>
    %145 = arith.mulf %143, %144 : vector<8x8xf32>
    %cst_50 = arith.constant -1.000000e+30 : f32
    %146 = vector.broadcast %cst_50 : f32 to vector<8x8xf32>
    %147 = arith.select %30, %145, %146 : vector<8x8xi1>, vector<8x8xf32>
    %cst_51 = arith.constant dense<0xFF800000> : vector<8xf32>
    %148 = vector.multi_reduction <maximumf>, %147, %cst_51 [1] : vector<8x8xf32> to vector<8xf32>
    %149 = vector.shape_cast %148 : vector<8xf32> to vector<8x1xf32>
    %150 = vector.broadcast %149 : vector<8x1xf32> to vector<8x8xf32>
    %151 = arith.subf %147, %150 : vector<8x8xf32>
    %152 = math.exp %151 : vector<8x8xf32>
    %cst_52 = arith.constant dense<0.000000e+00> : vector<8xf32>
    %153 = vector.multi_reduction <add>, %152, %cst_52 [1] : vector<8x8xf32> to vector<8xf32>
    %154 = vector.shape_cast %153 : vector<8xf32> to vector<8x1xf32>
    %155 = vector.broadcast %154 : vector<8x1xf32> to vector<8x8xf32>
    %156 = arith.divf %152, %155 : vector<8x8xf32>
    %cst_53 = arith.constant dense<0.000000e+00> : vector<8x128xf32>
    %157 = tpu.matmul %156, %142, %cst_53 {dimension_numbers = #tpu.dot_dimension_numbers<[1], [0], [0], [1], [0, 0, 1, 1], [], []>} : vector<8x8xf32>, vector<8x128xf32>, vector<8x128xf32> -> vector<8x128xf32>
    %158 = vector.extract_strided_slice %27 {offsets = [8, 384], sizes = [8, 128], strides = [1, 1]} : vector<16x1536xf32> to vector<8x128xf32>
    %159 = vector.extract_strided_slice %27 {offsets = [8, 896], sizes = [8, 128], strides = [1, 1]} : vector<16x1536xf32> to vector<8x128xf32>
    %160 = vector.extract_strided_slice %27 {offsets = [8, 1408], sizes = [8, 128], strides = [1, 1]} : vector<16x1536xf32> to vector<8x128xf32>
    %cst_54 = arith.constant dense<0.000000e+00> : vector<8x8xf32>
    %161 = tpu.matmul %158, %159, %cst_54 {dimension_numbers = #tpu.dot_dimension_numbers<[1], [1], [0], [0], [0, 0, 1, 0], [], []>} : vector<8x128xf32>, vector<8x128xf32>, vector<8x8xf32> -> vector<8x8xf32>
    %cst_55 = arith.constant 0.0883883461 : f32
    %162 = vector.broadcast %cst_55 : f32 to vector<8x8xf32>
    %163 = arith.mulf %161, %162 : vector<8x8xf32>
    %cst_56 = arith.constant -1.000000e+30 : f32
    %164 = vector.broadcast %cst_56 : f32 to vector<8x8xf32>
    %165 = arith.select %30, %163, %164 : vector<8x8xi1>, vector<8x8xf32>
    %cst_57 = arith.constant dense<0xFF800000> : vector<8xf32>
    %166 = vector.multi_reduction <maximumf>, %165, %cst_57 [1] : vector<8x8xf32> to vector<8xf32>
    %167 = vector.shape_cast %166 : vector<8xf32> to vector<8x1xf32>
    %168 = vector.broadcast %167 : vector<8x1xf32> to vector<8x8xf32>
    %169 = arith.subf %165, %168 : vector<8x8xf32>
    %170 = math.exp %169 : vector<8x8xf32>
    %cst_58 = arith.constant dense<0.000000e+00> : vector<8xf32>
    %171 = vector.multi_reduction <add>, %170, %cst_58 [1] : vector<8x8xf32> to vector<8xf32>
    %172 = vector.shape_cast %171 : vector<8xf32> to vector<8x1xf32>
    %173 = vector.broadcast %172 : vector<8x1xf32> to vector<8x8xf32>
    %174 = arith.divf %170, %173 : vector<8x8xf32>
    %cst_59 = arith.constant dense<0.000000e+00> : vector<8x128xf32>
    %175 = tpu.matmul %174, %160, %cst_59 {dimension_numbers = #tpu.dot_dimension_numbers<[1], [0], [0], [1], [0, 0, 1, 1], [], []>} : vector<8x8xf32>, vector<8x128xf32>, vector<8x128xf32> -> vector<8x128xf32>
    %176 = tpu.concatenate %121, %139, %157, %175 in 1 : vector<8x128xf32>, vector<8x128xf32>, vector<8x128xf32>, vector<8x128xf32> -> vector<8x512xf32>
    %177 = tpu.concatenate %103, %176 in 0 : vector<8x512xf32>, vector<8x512xf32> -> vector<16x512xf32>
    %178 = arith.truncf %177 : vector<16x512xf32> to vector<16x512xbf16>
    %c0_60 = arith.constant 0 : index
    %c0_61 = arith.constant 0 : index
    %179 = vector.load %arg5[%c0_60, %c0_61] : memref<512x512xbf16, #tpu.memory_space<vmem>>, vector<512x512xbf16>
    %cst_62 = arith.constant dense<0.000000e+00> : vector<16x512xf32>
    %180 = tpu.matmul %178, %179, %cst_62 {dimension_numbers = #tpu.dot_dimension_numbers<[1], [0], [0], [1], [0, 0, 1, 1], [], []>} : vector<16x512xbf16>, vector<512x512xbf16>, vector<16x512xf32> -> vector<16x512xf32>
    %c0_63 = arith.constant 0 : index
    %c0_64 = arith.constant 0 : index
    %181 = vector.load %arg6[%c0_63, %c0_64] : memref<1x512xf32, #tpu.memory_space<vmem>>, vector<1x512xf32>
    %182 = vector.broadcast %181 : vector<1x512xf32> to vector<16x512xf32>
    %183 = arith.addf %180, %182 : vector<16x512xf32>
    %184 = arith.addf %0, %183 : vector<16x512xf32>
    %c0_65 = arith.constant 0 : index
    %c0_66 = arith.constant 0 : index
    %185 = vector.load %arg9[%c0_65, %c0_66] : memref<16x512xf32, #tpu.memory_space<vmem>>, vector<16x512xf32>
    tpu.vector_store %arg9[%c0_65, %c0_66], %184 {strides = array<i32>} : memref<16x512xf32, #tpu.memory_space<vmem>>, vector<16x512xf32>,
    %cst_67 = arith.constant dense<0.000000e+00> : vector<16xf32>
    %186 = vector.multi_reduction <add>, %184, %cst_67 [1] : vector<16x512xf32> to vector<16xf32>
    %187 = vector.shape_cast %186 : vector<16xf32> to vector<16x1xf32>
    %cst_68 = arith.constant 5.120000e+02 : f32
    %188 = vector.broadcast %cst_68 : f32 to vector<16x1xf32>
    %189 = arith.divf %187, %188 : vector<16x1xf32>
    %190 = vector.broadcast %189 : vector<16x1xf32> to vector<16x512xf32>
    %191 = arith.subf %184, %190 : vector<16x512xf32>
    %192 = arith.mulf %191, %191 : vector<16x512xf32>
    %cst_69 = arith.constant dense<0.000000e+00> : vector<16xf32>
    %193 = vector.multi_reduction <add>, %192, %cst_69 [1] : vector<16x512xf32> to vector<16xf32>
    %194 = vector.shape_cast %193 : vector<16xf32> to vector<16x1xf32>
    %cst_70 = arith.constant 5.120000e+02 : f32
    %195 = vector.broadcast %cst_70 : f32 to vector<16x1xf32>
    %196 = arith.divf %194, %195 : vector<16x1xf32>
    %197 = vector.broadcast %189 : vector<16x1xf32> to vector<16x512xf32>
    %198 = arith.subf %184, %197 : vector<16x512xf32>
    %cst_71 = arith.constant 9.99999974E-6 : f32
    %199 = vector.broadcast %cst_71 : f32 to vector<16x1xf32>
    %200 = arith.addf %196, %199 : vector<16x1xf32>
    %201 = math.rsqrt %200 : vector<16x1xf32>
    %202 = vector.broadcast %201 : vector<16x1xf32> to vector<16x512xf32>
    %203 = arith.mulf %198, %202 : vector<16x512xf32>
    %c0_72 = arith.constant 0 : index
    %c0_73 = arith.constant 0 : index
    %204 = vector.load %arg7[%c0_72, %c0_73] : memref<1x512xf32, #tpu.memory_space<vmem>>, vector<1x512xf32>
    %205 = vector.broadcast %204 : vector<1x512xf32> to vector<16x512xf32>
    %206 = arith.mulf %203, %205 : vector<16x512xf32>
    %c0_74 = arith.constant 0 : index
    %c0_75 = arith.constant 0 : index
    %207 = vector.load %arg8[%c0_74, %c0_75] : memref<1x512xf32, #tpu.memory_space<vmem>>, vector<1x512xf32>
    %208 = vector.broadcast %207 : vector<1x512xf32> to vector<16x512xf32>
    %209 = arith.addf %206, %208 : vector<16x512xf32>
    %c0_76 = arith.constant 0 : index
    %c0_77 = arith.constant 0 : index
    %210 = vector.load %arg10[%c0_76, %c0_77] : memref<16x512xf32, #tpu.memory_space<vmem>>, vector<16x512xf32>
    tpu.vector_store %arg10[%c0_76, %c0_77], %209 {strides = array<i32>} : memref<16x512xf32, #tpu.memory_space<vmem>>, vector<16x512xf32>,
    return
  }
  func.func @transform_0(%arg0: i32) -> (i32, i32) {
    %c0_i32 = arith.constant 0 : i32
    %c0_i32_0 = arith.constant 0 : i32
    %c0_i32_1 = arith.constant 0 : i32
    return %c0_i32, %c0_i32_0 : i32, i32
  }
  func.func @transform_1(%arg0: i32) -> (i32, i32) {
    %c0_i32 = arith.constant 0 : i32
    %c0_i32_0 = arith.constant 0 : i32
    %c0_i32_1 = arith.constant 0 : i32
    return %c0_i32, %c0_i32_0 : i32, i32
  }
  func.func @transform_2(%arg0: i32) -> (i32, i32) {
    %c0_i32 = arith.constant 0 : i32
    %c0_i32_0 = arith.constant 0 : i32
    %c0_i32_1 = arith.constant 0 : i32
    return %c0_i32, %c0_i32_0 : i32, i32
  }
  func.func @transform_3(%arg0: i32) -> (i32, i32) {
    %c0_i32 = arith.constant 0 : i32
    %c0_i32_0 = arith.constant 0 : i32
    %c0_i32_1 = arith.constant 0 : i32
    return %c0_i32, %c0_i32_0 : i32, i32
  }
  func.func @transform_4(%arg0: i32) -> (i32, i32) {
    %c0_i32 = arith.constant 0 : i32
    %c0_i32_0 = arith.constant 0 : i32
    %c0_i32_1 = arith.constant 0 : i32
    return %c0_i32, %c0_i32_0 : i32, i32
  }
  func.func @transform_5(%arg0: i32) -> (i32, i32) {
    %c0_i32 = arith.constant 0 : i32
    %c0_i32_0 = arith.constant 0 : i32
    %c0_i32_1 = arith.constant 0 : i32
    return %c0_i32, %c0_i32_0 : i32, i32
  }
  func.func @transform_6(%arg0: i32) -> (i32, i32) {
    %c0_i32 = arith.constant 0 : i32
    %c0_i32_0 = arith.constant 0 : i32
    %c0_i32_1 = arith.constant 0 : i32
    return %c0_i32, %c0_i32_0 : i32, i32
  }
  func.func @transform_7(%arg0: i32) -> (i32, i32) {
    %c0_i32 = arith.constant 0 : i32
    %c0_i32_0 = arith.constant 0 : i32
    %c0_i32_1 = arith.constant 0 : i32
    return %c0_i32, %c0_i32_0 : i32, i32
  }
  func.func @transform_8(%arg0: i32) -> (i32, i32) {
    %c0_i32 = arith.constant 0 : i32
    %c0_i32_0 = arith.constant 0 : i32
    %c0_i32_1 = arith.constant 0 : i32
    return %c0_i32, %c0_i32_0 : i32, i32
  }
  func.func @transform_9(%arg0: i32) -> (i32, i32) {
    %c0_i32 = arith.constant 0 : i32
    %c0_i32_0 = arith.constant 0 : i32
    %c0_i32_1 = arith.constant 0 : i32
    return %c0_i32, %c0_i32_0 : i32, i32
  }
}

module attributes {stable_mosaic.version = 11 : i64} {
  func.func @_moe_expert_kernel(%arg0: i32, %arg1: i32, %arg2: memref<16x512xf32, #tpu.memory_space<vmem>>, %arg3: memref<1x16x1xf32, #tpu.memory_space<vmem>>, %arg4: memref<1x512x2048xbf16, #tpu.memory_space<vmem>>, %arg5: memref<1x1x2048xf32, #tpu.memory_space<vmem>>, %arg6: memref<1x2048x512xbf16, #tpu.memory_space<vmem>>, %arg7: memref<1x1x512xf32, #tpu.memory_space<vmem>>, %arg8: memref<1x16x512xf32, #tpu.memory_space<vmem>>) attributes {dimension_semantics = [#tpu.dimension_semantics<parallel>, #tpu.dimension_semantics<arbitrary>], iteration_bounds = array<i64: 2, 2>, scalar_prefetch = 0 : i64, scratch_operands = 0 : i64, tpu.core_type = #tpu.core_type<tc>, window_params = [{pipeline_mode = #tpu.pipeline_mode<synchronous>, transform_indices = @transform_0, window_bounds = array<i64: 16, 512>}, {transform_indices = @transform_1, window_bounds = array<i64: 1, 16, 1>}, {transform_indices = @transform_2, window_bounds = array<i64: 1, 512, 2048>}, {transform_indices = @transform_3, window_bounds = array<i64: 1, 1, 2048>}, {transform_indices = @transform_4, window_bounds = array<i64: 1, 2048, 512>}, {transform_indices = @transform_5, window_bounds = array<i64: 1, 1, 512>}, {transform_indices = @transform_6, window_bounds = array<i64: 1, 16, 512>}]} {
    %c0_i32 = arith.constant 0 : i32
    %0 = arith.cmpi eq, %arg1, %c0_i32 : i32
    %1 = arith.extui %0 : i1 to i32
    %c0_i32_0 = arith.constant 0 : i32
    %2 = arith.cmpi ne, %1, %c0_i32_0 : i32
    scf.if %2 {
      %cst_25 = arith.constant 0.000000e+00 : f32
      %29 = vector.broadcast %cst_25 : f32 to vector<1x16x512xf32>
      %c0_26 = arith.constant 0 : index
      %c0_27 = arith.constant 0 : index
      %c0_28 = arith.constant 0 : index
      %30 = vector.load %arg8[%c0_26, %c0_27, %c0_28] : memref<1x16x512xf32, #tpu.memory_space<vmem>>, vector<1x16x512xf32>
      tpu.vector_store %arg8[%c0_26, %c0_27, %c0_28], %29 {strides = array<i32>} : memref<1x16x512xf32, #tpu.memory_space<vmem>>, vector<1x16x512xf32>,
    } else {
    }
    %c0 = arith.constant 0 : index
    %c0_1 = arith.constant 0 : index
    %3 = vector.load %arg2[%c0, %c0_1] : memref<16x512xf32, #tpu.memory_space<vmem>>, vector<16x512xf32>
    %4 = arith.truncf %3 : vector<16x512xf32> to vector<16x512xbf16>
    %c0_2 = arith.constant 0 : index
    %c0_3 = arith.constant 0 : index
    %c0_4 = arith.constant 0 : index
    %5 = vector.load %arg4[%c0_2, %c0_3, %c0_4] : memref<1x512x2048xbf16, #tpu.memory_space<vmem>>, vector<1x512x2048xbf16>
    %6 = vector.shape_cast %5 : vector<1x512x2048xbf16> to vector<512x2048xbf16>
    %cst = arith.constant dense<0.000000e+00> : vector<16x2048xf32>
    %7 = tpu.matmul %4, %6, %cst {dimension_numbers = #tpu.dot_dimension_numbers<[1], [0], [0], [1], [0, 0, 1, 1], [], []>} : vector<16x512xbf16>, vector<512x2048xbf16>, vector<16x2048xf32> -> vector<16x2048xf32>
    %c0_5 = arith.constant 0 : index
    %c0_6 = arith.constant 0 : index
    %c0_7 = arith.constant 0 : index
    %8 = vector.load %arg5[%c0_5, %c0_6, %c0_7] : memref<1x1x2048xf32, #tpu.memory_space<vmem>>, vector<1x1x2048xf32>
    %9 = vector.shape_cast %8 : vector<1x1x2048xf32> to vector<1x2048xf32>
    %10 = vector.broadcast %9 : vector<1x2048xf32> to vector<16x2048xf32>
    %11 = arith.addf %7, %10 : vector<16x2048xf32>
    %cst_8 = arith.constant 0.000000e+00 : f32
    %12 = vector.broadcast %cst_8 : f32 to vector<16x2048xf32>
    %13 = arith.maximumf %11, %12 : vector<16x2048xf32>
    %14 = arith.truncf %13 : vector<16x2048xf32> to vector<16x2048xbf16>
    %c0_9 = arith.constant 0 : index
    %c0_10 = arith.constant 0 : index
    %c0_11 = arith.constant 0 : index
    %15 = vector.load %arg6[%c0_9, %c0_10, %c0_11] : memref<1x2048x512xbf16, #tpu.memory_space<vmem>>, vector<1x2048x512xbf16>
    %16 = vector.shape_cast %15 : vector<1x2048x512xbf16> to vector<2048x512xbf16>
    %cst_12 = arith.constant dense<0.000000e+00> : vector<16x512xf32>
    %17 = tpu.matmul %14, %16, %cst_12 {dimension_numbers = #tpu.dot_dimension_numbers<[1], [0], [0], [1], [0, 0, 1, 1], [], []>} : vector<16x2048xbf16>, vector<2048x512xbf16>, vector<16x512xf32> -> vector<16x512xf32>
    %c0_13 = arith.constant 0 : index
    %c0_14 = arith.constant 0 : index
    %c0_15 = arith.constant 0 : index
    %18 = vector.load %arg7[%c0_13, %c0_14, %c0_15] : memref<1x1x512xf32, #tpu.memory_space<vmem>>, vector<1x1x512xf32>
    %19 = vector.shape_cast %18 : vector<1x1x512xf32> to vector<1x512xf32>
    %20 = vector.broadcast %19 : vector<1x512xf32> to vector<16x512xf32>
    %21 = arith.addf %17, %20 : vector<16x512xf32>
    %c0_16 = arith.constant 0 : index
    %c0_17 = arith.constant 0 : index
    %c0_18 = arith.constant 0 : index
    %22 = vector.load %arg8[%c0_16, %c0_17, %c0_18] : memref<1x16x512xf32, #tpu.memory_space<vmem>>, vector<1x16x512xf32>
    %c0_19 = arith.constant 0 : index
    %c0_20 = arith.constant 0 : index
    %c0_21 = arith.constant 0 : index
    %23 = vector.load %arg3[%c0_19, %c0_20, %c0_21] : memref<1x16x1xf32, #tpu.memory_space<vmem>>, vector<1x16x1xf32>
    %24 = vector.shape_cast %21 : vector<16x512xf32> to vector<1x16x512xf32>
    %25 = vector.broadcast %23 : vector<1x16x1xf32> to vector<1x16x512xf32>
    %26 = arith.mulf %25, %24 : vector<1x16x512xf32>
    %27 = arith.addf %22, %26 : vector<1x16x512xf32>
    %c0_22 = arith.constant 0 : index
    %c0_23 = arith.constant 0 : index
    %c0_24 = arith.constant 0 : index
    %28 = vector.load %arg8[%c0_22, %c0_23, %c0_24] : memref<1x16x512xf32, #tpu.memory_space<vmem>>, vector<1x16x512xf32>
    tpu.vector_store %arg8[%c0_22, %c0_23, %c0_24], %27 {strides = array<i32>} : memref<1x16x512xf32, #tpu.memory_space<vmem>>, vector<1x16x512xf32>,
    return
  }
  func.func @transform_0(%arg0: i32, %arg1: i32) -> (i32, i32) {
    %c0_i32 = arith.constant 0 : i32
    %c0_i32_0 = arith.constant 0 : i32
    %c0_i32_1 = arith.constant 0 : i32
    return %c0_i32, %c0_i32_0 : i32, i32
  }
  func.func @transform_1(%arg0: i32, %arg1: i32) -> (i32, i32, i32) {
    %c2_i32 = arith.constant 2 : i32
    %0 = arith.muli %arg0, %c2_i32 : i32
    %1 = arith.addi %0, %arg1 : i32
    %c0_i32 = arith.constant 0 : i32
    %c0_i32_0 = arith.constant 0 : i32
    %c0_i32_1 = arith.constant 0 : i32
    return %1, %c0_i32, %c0_i32_0 : i32, i32, i32
  }
  func.func @transform_2(%arg0: i32, %arg1: i32) -> (i32, i32, i32) {
    %c2_i32 = arith.constant 2 : i32
    %0 = arith.muli %arg0, %c2_i32 : i32
    %1 = arith.addi %0, %arg1 : i32
    %c0_i32 = arith.constant 0 : i32
    %c0_i32_0 = arith.constant 0 : i32
    %c0_i32_1 = arith.constant 0 : i32
    return %1, %c0_i32, %c0_i32_0 : i32, i32, i32
  }
  func.func @transform_3(%arg0: i32, %arg1: i32) -> (i32, i32, i32) {
    %c2_i32 = arith.constant 2 : i32
    %0 = arith.muli %arg0, %c2_i32 : i32
    %1 = arith.addi %0, %arg1 : i32
    %c0_i32 = arith.constant 0 : i32
    %c0_i32_0 = arith.constant 0 : i32
    %c0_i32_1 = arith.constant 0 : i32
    return %1, %c0_i32, %c0_i32_0 : i32, i32, i32
  }
  func.func @transform_4(%arg0: i32, %arg1: i32) -> (i32, i32, i32) {
    %c2_i32 = arith.constant 2 : i32
    %0 = arith.muli %arg0, %c2_i32 : i32
    %1 = arith.addi %0, %arg1 : i32
    %c0_i32 = arith.constant 0 : i32
    %c0_i32_0 = arith.constant 0 : i32
    %c0_i32_1 = arith.constant 0 : i32
    return %1, %c0_i32, %c0_i32_0 : i32, i32, i32
  }
  func.func @transform_5(%arg0: i32, %arg1: i32) -> (i32, i32, i32) {
    %c2_i32 = arith.constant 2 : i32
    %0 = arith.muli %arg0, %c2_i32 : i32
    %1 = arith.addi %0, %arg1 : i32
    %c0_i32 = arith.constant 0 : i32
    %c0_i32_0 = arith.constant 0 : i32
    %c0_i32_1 = arith.constant 0 : i32
    return %1, %c0_i32, %c0_i32_0 : i32, i32, i32
  }
  func.func @transform_6(%arg0: i32, %arg1: i32) -> (i32, i32, i32) {
    %c0_i32 = arith.constant 0 : i32
    %c0_i32_0 = arith.constant 0 : i32
    %c0_i32_1 = arith.constant 0 : i32
    return %arg0, %c0_i32, %c0_i32_0 : i32, i32, i32
  }
}

</mosaic_0001>

<llo_original>
// kernel: block_forward.2
$region0: #{block_forward.2}
  #allocation0 [shape = 'u32[]', space=smem, size = 0x4, offset = 0x4, fixed_abs, tag = 'smem constant byte address 0x4 - core index']
  #allocation1 [shape = 'u32[144,128]{1,0:T(1,128)}', space=vmem, size = 0x12000, scoped, tag = 'internal scratch']
  %s0 = inlined_call_operand.hbm [shape: f32[16,512], index: 0, kind: input, shape index: {}]
  %s1 = inlined_call_operand.hbm [shape: f32[1,512], index: 1, kind: input, shape index: {}]
  %s2 = inlined_call_operand.hbm [shape: f32[1,512], index: 2, kind: input, shape index: {}]
  %s3 = inlined_call_operand.hbm [shape: bf16[512,1536], index: 3, kind: input, shape index: {}]
  %s4 = inlined_call_operand.hbm [shape: bf16[512,512], index: 4, kind: input, shape index: {}]
  %s5 = inlined_call_operand.hbm [shape: f32[1,512], index: 5, kind: input, shape index: {}]
  %s6 = inlined_call_operand.hbm [shape: f32[1,512], index: 6, kind: input, shape index: {}]
  %s7 = inlined_call_operand.hbm [shape: f32[1,512], index: 7, kind: input, shape index: {}]
  %s8 = inlined_call_operand.vmem [shape: f32[16,512], index: 8, kind: output, shape index: {0}]
  %s9 = inlined_call_operand.vmem [shape: f32[16,512], index: 9, kind: output, shape index: {1}]
  %10 = xla_tuple %s8, %s9
  %s11 = sld [smem:[#allocation0]]
  $region82: #{block_forward.2} parent=0
    _
  %s13 = ssub.s32 1, %s11
  %s14 = scalar_select 0, %s13, %s11
  $region1: #{block_forward.2} parent=0
    #allocation2 [shape = 'u8[32768]{0}', space=vmem, size = 0x8000, scoped, tag = 'input window, operand 0, single buffered']
    #allocation3 [shape = 's32[1]{0}', space=sflag, size = 0x4, scoped, tag = 'scoped memory for block_forward.2']
    #allocation4 [shape = 'u8[2048]{0}', space=vmem, size = 0x800, scoped, tag = 'input window, operand 1, single buffered']
    #allocation5 [shape = 's32[1]{0}', space=sflag, size = 0x4, scoped, tag = 'scoped memory for block_forward.2']
    #allocation6 [shape = 'u8[2048]{0}', space=vmem, size = 0x800, scoped, tag = 'input window, operand 2, single buffered']
    #allocation7 [shape = 'u8[1572864]{0}', space=vmem, size = 0x180000, scoped, tag = 'input window, operand 3, single buffered']
    #allocation8 [shape = 's32[1]{0}', space=sflag, size = 0x4, scoped, tag = 'scoped memory for block_forward.2']
    #allocation9 [shape = 'u8[524288]{0}', space=vmem, size = 0x80000, scoped, tag = 'input window, operand 4, single buffered']
    #allocation10 [shape = 'u8[2048]{0}', space=vmem, size = 0x800, scoped, tag = 'input window, operand 5, single buffered']
    #allocation11 [shape = 's32[1]{0}', space=sflag, size = 0x4, scoped, tag = 'scoped memory for block_forward.2']
    #allocation12 [shape = 'u8[2048]{0}', space=vmem, size = 0x800, scoped, tag = 'input window, operand 6, single buffered']
    #allocation13 [shape = 'u8[2048]{0}', space=vmem, size = 0x800, scoped, tag = 'input window, operand 7, single buffered']
    #allocation14 [shape = 's32[1]{0}', space=sflag, size = 0x4, scoped, tag = 'scoped memory for block_forward.2']
    %15 = vsyncpa [#allocation3], 0
    %16 = vsyncpa [#allocation5], 0
    %17 = vsyncpa [#allocation8], 0
    %18 = vsyncpa [#allocation11], 0
    %19 = vsyncpa [#allocation14], 0
    // Predicated region
    $region2: #{block_forward.2} parent=1 // pred_check
      _
    $region3: #{block_forward.2} parent=1 // pred_check_branch
      %21 = sbr.rel (0) target = $region5
    $region4: #{block_forward.2} parent=1 // pred_region
      %s23 = ssub.s32 1024, 1024
      %24 = vsyncadd [#allocation3], %s23
      %s25 = sshll.u32 [#allocation2], 4
      %s26 = int_to_ptr.vmem [resolvable:$true] %s25
      %31 = dma.hbm_to_vmem [thread:$0]  %s0, 1024, %s26, [#allocation3], 512, 512, 32
    $region5: #{block_forward.2} parent=1 // pred_fallthru
      _
    // Predicated region
    $region6: #{block_forward.2} parent=1 // pred_check
      _
    $region7: #{block_forward.2} parent=1 // pred_check_branch
      %33 = sbr.rel (0) target = $region9
    $region8: #{block_forward.2} parent=1 // pred_region
      %s35 = ssub.s32 64, 64
      %36 = vsyncadd [#allocation5], %s35
      %s38 = sshll.u32 [#allocation4], 4
      %s39 = int_to_ptr.vmem [resolvable:$true] %s38
      %41 = dma.hbm_to_vmem [thread:$0]  %s1, 64, %s39, [#allocation5]
    $region9: #{block_forward.2} parent=1 // pred_fallthru
      _
    // Predicated region
    $region10: #{block_forward.2} parent=1 // pred_check
      _
    $region11: #{block_forward.2} parent=1 // pred_check_branch
      %43 = sbr.rel (0) target = $region13
    $region12: #{block_forward.2} parent=1 // pred_region
      %s45 = ssub.s32 64, 64
      %46 = vsyncadd [#allocation5], %s45
      %s48 = sshll.u32 [#allocation6], 4
      %s49 = int_to_ptr.vmem [resolvable:$true] %s48
      %51 = dma.hbm_to_vmem [thread:$0]  %s2, 64, %s49, [#allocation5]
    $region13: #{block_forward.2} parent=1 // pred_fallthru
      _
    // Predicated region
    $region14: #{block_forward.2} parent=1 // pred_check
      _
    $region15: #{block_forward.2} parent=1 // pred_check_branch
      %53 = sbr.rel (0) target = $region17
    $region16: #{block_forward.2} parent=1 // pred_region
      %s55 = ssub.s32 49152, 49152
      %56 = vsyncadd [#allocation8], %s55
      %s57 = sshll.u32 [#allocation7], 4
      %s58 = int_to_ptr.vmem [resolvable:$true] %s57
      %63 = dma.hbm_to_vmem [thread:$0]  %s3, 49152, %s58, [#allocation8], 768, 768, 48
    $region17: #{block_forward.2} parent=1 // pred_fallthru
      _
    // Predicated region
    $region18: #{block_forward.2} parent=1 // pred_check
      _
    $region19: #{block_forward.2} parent=1 // pred_check_branch
      %65 = sbr.rel (0) target = $region21
    $region20: #{block_forward.2} parent=1 // pred_region
      %s67 = ssub.s32 16384, 16384
      %68 = vsyncadd [#allocation8], %s67
      %s69 = sshll.u32 [#allocation9], 4
      %s70 = int_to_ptr.vmem [resolvable:$true] %s69
      %75 = dma.hbm_to_vmem [thread:$0]  %s4, 16384, %s70, [#allocation8], 256, 256, 16
    $region21: #{block_forward.2} parent=1 // pred_fallthru
      _
    // Predicated region
    $region22: #{block_forward.2} parent=1 // pred_check
      _
    $region23: #{block_forward.2} parent=1 // pred_check_branch
      %77 = sbr.rel (0) target = $region25
    $region24: #{block_forward.2} parent=1 // pred_region
      %s79 = ssub.s32 64, 64
      %80 = vsyncadd [#allocation11], %s79
      %s82 = sshll.u32 [#allocation10], 4
      %s83 = int_to_ptr.vmem [resolvable:$true] %s82
      %85 = dma.hbm_to_vmem [thread:$0]  %s5, 64, %s83, [#allocation11]
    $region25: #{block_forward.2} parent=1 // pred_fallthru
      _
    // Predicated region
    $region26: #{block_forward.2} parent=1 // pred_check
      _
    $region27: #{block_forward.2} parent=1 // pred_check_branch
      %87 = sbr.rel (0) target = $region29
    $region28: #{block_forward.2} parent=1 // pred_region
      %s89 = ssub.s32 64, 64
      %90 = vsyncadd [#allocation11], %s89
      %s92 = sshll.u32 [#allocation12], 4
      %s93 = int_to_ptr.vmem [resolvable:$true] %s92
      %95 = dma.hbm_to_vmem [thread:$0]  %s6, 64, %s93, [#allocation11]
    $region29: #{block_forward.2} parent=1 // pred_fallthru
      _
    // Predicated region
    $region30: #{block_forward.2} parent=1 // pred_check
      _
    $region31: #{block_forward.2} parent=1 // pred_check_branch
      %97 = sbr.rel (0) target = $region33
    $region32: #{block_forward.2} parent=1 // pred_region
      %s99 = ssub.s32 64, 64
      %100 = vsyncadd [#allocation14], %s99
      %s102 = sshll.u32 [#allocation13], 4
      %s103 = int_to_ptr.vmem [resolvable:$true] %s102
      %105 = dma.hbm_to_vmem [thread:$0]  %s7, 64, %s103, [#allocation14]
    $region33: #{block_forward.2} parent=1 // pred_fallthru
      _
    // Predicated region
    $region34: #{block_forward.2} parent=1 // pred_check
      _
    $region35: #{block_forward.2} parent=1 // pred_check_branch
      %107 = sbr.rel (0) target = $region37
    $region36: #{block_forward.2} parent=1 // pred_region
      %108 = dma.done [#allocation3], 1024
    $region37: #{block_forward.2} parent=1 // pred_fallthru
      _
    // Predicated region
    $region38: #{block_forward.2} parent=1 // pred_check
      _
    $region39: #{block_forward.2} parent=1 // pred_check_branch
      %110 = sbr.rel (0) target = $region41
    $region40: #{block_forward.2} parent=1 // pred_region
      %111 = dma.done [#allocation5], 64
    $region41: #{block_forward.2} parent=1 // pred_fallthru
      _
    // Predicated region
    $region42: #{block_forward.2} parent=1 // pred_check
      _
    $region43: #{block_forward.2} parent=1 // pred_check_branch
      %113 = sbr.rel (0) target = $region45
    $region44: #{block_forward.2} parent=1 // pred_region
      %114 = dma.done [#allocation5], 64
    $region45: #{block_forward.2} parent=1 // pred_fallthru
      _
    // Predicated region
    $region46: #{block_forward.2} parent=1 // pred_check
      _
    $region47: #{block_forward.2} parent=1 // pred_check_branch
      %116 = sbr.rel (0) target = $region49
    $region48: #{block_forward.2} parent=1 // pred_region
      %117 = dma.done [#allocation8], 49152
    $region49: #{block_forward.2} parent=1 // pred_fallthru
      _
    // Predicated region
    $region50: #{block_forward.2} parent=1 // pred_check
      _
    $region51: #{block_forward.2} parent=1 // pred_check_branch
      %119 = sbr.rel (0) target = $region53
    $region52: #{block_forward.2} parent=1 // pred_region
      %120 = dma.done [#allocation8], 16384
    $region53: #{block_forward.2} parent=1 // pred_fallthru
      _
    // Predicated region
    $region54: #{block_forward.2} parent=1 // pred_check
      _
    $region55: #{block_forward.2} parent=1 // pred_check_branch
      %122 = sbr.rel (0) target = $region57
    $region56: #{block_forward.2} parent=1 // pred_region
      %123 = dma.done [#allocation11], 64
    $region57: #{block_forward.2} parent=1 // pred_fallthru
      _
    // Predicated region
    $region58: #{block_forward.2} parent=1 // pred_check
      _
    $region59: #{block_forward.2} parent=1 // pred_check_branch
      %125 = sbr.rel (0) target = $region61
    $region60: #{block_forward.2} parent=1 // pred_region
      %126 = dma.done [#allocation11], 64
    $region61: #{block_forward.2} parent=1 // pred_fallthru
      _
    // Predicated region
    $region62: #{block_forward.2} parent=1 // pred_check
      _
    $region63: #{block_forward.2} parent=1 // pred_check_branch
      %128 = sbr.rel (0) target = $region65
    $region64: #{block_forward.2} parent=1 // pred_region
      %129 = dma.done [#allocation14], 64
    $region65: #{block_forward.2} parent=1 // pred_fallthru
      _
    %v130 = vld [vmem:[#allocation2] sm:$0xff]
    %v131 = vld [vmem:[#allocation2 + $0x8] sm:$0xff]
    %v132 = vld [vmem:[#allocation2 + $0x10] sm:$0xff]
    %v133 = vld [vmem:[#allocation2 + $0x18] sm:$0xff]
    %v134 = vld [vmem:[#allocation2 + $0x20] sm:$0xff]
    %v135 = vld [vmem:[#allocation2 + $0x28] sm:$0xff]
    %v136 = vld [vmem:[#allocation2 + $0x30] sm:$0xff]
    %v137 = vld [vmem:[#allocation2 + $0x38] sm:$0xff]
    %v138 = vadd.f32 %v130, %v131
    %v139 = vadd.f32 %v138, %v132
    %v140 = vadd.f32 %v139, %v133
    %141 = vadd.xlane.f32.xlu0 %v140
    %v142 = vpop.xlane.xlu0 %141
    %v143 = vadd.f32 %v134, %v135
    %v144 = vadd.f32 %v143, %v136
    %v145 = vadd.f32 %v144, %v137
    %146 = vadd.xlane.f32.xlu0 %v145
    %v147 = vpop.xlane.xlu0 %146
    %v148 = vrcp.pop 512.0
    %v149 = vmul.f32 %v142, %v148
    %v150 = vmul.f32 %v147, %v148
    %v151 = vsub.f32 %v130, %v149
    %v152 = vsub.f32 %v131, %v149
    %v153 = vsub.f32 %v132, %v149
    %v154 = vsub.f32 %v133, %v149
    %v155 = vsub.f32 %v134, %v150
    %v156 = vsub.f32 %v135, %v150
    %v157 = vsub.f32 %v136, %v150
    %v158 = vsub.f32 %v137, %v150
    %v159 = vmul.f32 %v151, %v151
    %v160 = vmul.f32 %v152, %v152
    %v161 = vmul.f32 %v153, %v153
    %v162 = vmul.f32 %v154, %v154
    %v163 = vmul.f32 %v155, %v155
    %v164 = vmul.f32 %v156, %v156
    %v165 = vmul.f32 %v157, %v157
    %v166 = vmul.f32 %v158, %v158
    %v167 = vadd.f32 %v159, %v160
    %v168 = vadd.f32 %v167, %v161
    %v169 = vadd.f32 %v168, %v162
    %170 = vadd.xlane.f32.xlu0 %v169
    %v171 = vpop.xlane.xlu0 %170
    %v172 = vadd.f32 %v163, %v164
    %v173 = vadd.f32 %v172, %v165
    %v174 = vadd.f32 %v173, %v166
    %175 = vadd.xlane.f32.xlu0 %v174
    %v176 = vpop.xlane.xlu0 %175
    %v177 = vmul.f32 %v171, %v148
    %v178 = vmul.f32 %v176, %v148
    %v179 = vadd.f32 %v177, 1e-05
    %v180 = vadd.f32 %v178, 1e-05
    %v181 = vrsqrt.pop %v179
    %v182 = vrsqrt.pop %v180
    %v183 = vmul.f32 %v151, %v181
    %v184 = vmul.f32 %v152, %v181
    %v185 = vmul.f32 %v153, %v181
    %v186 = vmul.f32 %v154, %v181
    %v187 = vmul.f32 %v155, %v182
    %v188 = vmul.f32 %v156, %v182
    %v189 = vmul.f32 %v157, %v182
    %v190 = vmul.f32 %v158, %v182
    %v191 = vld [vmem:[#allocation4] sm:$0xf]
    %v193 = vlaneseq
    %v194 = vshrl.u32 %v193, 7
    %v195 = vsub.s32 0, %v194
    %v196 = vrot.slane %v191, %v195
    %v197 = vlaneseq
    %v198 = vshrl.u32 %v197, 7
    %v199 = vsub.s32 1, %v198
    %v200 = vrot.slane %v191, %v199
    %v201 = vlaneseq
    %v202 = vshrl.u32 %v201, 7
    %v203 = vsub.s32 2, %v202
    %v204 = vrot.slane %v191, %v203
    %v205 = vlaneseq
    %v206 = vshrl.u32 %v205, 7
    %v207 = vsub.s32 3, %v206
    %v208 = vrot.slane %v191, %v207
    %v213 = vmul.f32 %v183, %v196
    %v214 = vmul.f32 %v184, %v200
    %v215 = vmul.f32 %v185, %v204
    %v216 = vmul.f32 %v186, %v208
    %v217 = vmul.f32 %v187, %v196
    %v218 = vmul.f32 %v188, %v200
    %v219 = vmul.f32 %v189, %v204
    %v220 = vmul.f32 %v190, %v208
    %v221 = vld [vmem:[#allocation6] sm:$0xf]
    %v223 = vlaneseq
    %v224 = vshrl.u32 %v223, 7
    %v225 = vsub.s32 0, %v224
    %v226 = vrot.slane %v221, %v225
    %v227 = vlaneseq
    %v228 = vshrl.u32 %v227, 7
    %v229 = vsub.s32 1, %v228
    %v230 = vrot.slane %v221, %v229
    %v231 = vlaneseq
    %v232 = vshrl.u32 %v231, 7
    %v233 = vsub.s32 2, %v232
    %v234 = vrot.slane %v221, %v233
    %v235 = vlaneseq
    %v236 = vshrl.u32 %v235, 7
    %v237 = vsub.s32 3, %v236
    %v238 = vrot.slane %v221, %v237
    %v243 = vadd.f32 %v213, %v226
    %v244 = vadd.f32 %v214, %v230
    %v245 = vadd.f32 %v215, %v234
    %v246 = vadd.f32 %v216, %v238
    %v247 = vadd.f32 %v217, %v226
    %v248 = vadd.f32 %v218, %v230
    %v249 = vadd.f32 %v219, %v234
    %v250 = vadd.f32 %v220, %v238
    %v251 = vpack.c.bf16 %v247, %v243
    %v252 = vpack.c.bf16 %v248, %v244
    %v253 = vpack.c.bf16 %v249, %v245
    %v254 = vpack.c.bf16 %v250, %v246
    %v255 = vld [vmem:[#allocation7] sm:$0xff]
    %v256 = vld [vmem:[#allocation7 + $0x8] sm:$0xff]
    %v257 = vld [vmem:[#allocation7 + $0x10] sm:$0xff]
    %v258 = vld [vmem:[#allocation7 + $0x18] sm:$0xff]
    %v259 = vld [vmem:[#allocation7 + $0x20] sm:$0xff]
    %v260 = vld [vmem:[#allocation7 + $0x28] sm:$0xff]
    %v261 = vld [vmem:[#allocation7 + $0x30] sm:$0xff]
    %v262 = vld [vmem:[#allocation7 + $0x38] sm:$0xff]
    %v263 = vld [vmem:[#allocation7 + $0x40] sm:$0xff]
    %v264 = vld [vmem:[#allocation7 + $0x48] sm:$0xff]
    %v265 = vld [vmem:[#allocation7 + $0x50] sm:$0xff]
    %v266 = vld [vmem:[#allocation7 + $0x58] sm:$0xff]
    %v267 = vld [vmem:[#allocation7 + $0x60] sm:$0xff]
    %v268 = vld [vmem:[#allocation7 + $0x68] sm:$0xff]
    %v269 = vld [vmem:[#allocation7 + $0x70] sm:$0xff]
    %v270 = vld [vmem:[#allocation7 + $0x78] sm:$0xff]
    %v271 = vld [vmem:[#allocation7 + $0x80] sm:$0xff]
    %v272 = vld [vmem:[#allocation7 + $0x88] sm:$0xff]
    %v273 = vld [vmem:[#allocation7 + $0x90] sm:$0xff]
    %v274 = vld [vmem:[#allocation7 + $0x98] sm:$0xff]
    %v275 = vld [vmem:[#allocation7 + $0xa0] sm:$0xff]
    %v276 = vld [vmem:[#allocation7 + $0xa8] sm:$0xff]
    %v277 = vld [vmem:[#allocation7 + $0xb0] sm:$0xff]
    %v278 = vld [vmem:[#allocation7 + $0xb8] sm:$0xff]
    %v279 = vld [vmem:[#allocation7 + $0xc0] sm:$0xff]
    %v280 = vld [vmem:[#allocation7 + $0xc8] sm:$0xff]
    %v281 = vld [vmem:[#allocation7 + $0xd0] sm:$0xff]
    %v282 = vld [vmem:[#allocation7 + $0xd8] sm:$0xff]
    %v283 = vld [vmem:[#allocation7 + $0xe0] sm:$0xff]
    %v284 = vld [vmem:[#allocation7 + $0xe8] sm:$0xff]
    %v285 = vld [vmem:[#allocation7 + $0xf0] sm:$0xff]
    %v286 = vld [vmem:[#allocation7 + $0xf8] sm:$0xff]
    %v287 = vld [vmem:[#allocation7 + $0x100] sm:$0xff]
    %v288 = vld [vmem:[#allocation7 + $0x108] sm:$0xff]
    %v289 = vld [vmem:[#allocation7 + $0x110] sm:$0xff]
    %v290 = vld [vmem:[#allocation7 + $0x118] sm:$0xff]
    %v291 = vld [vmem:[#allocation7 + $0x120] sm:$0xff]
    %v292 = vld [vmem:[#allocation7 + $0x128] sm:$0xff]
    %v293 = vld [vmem:[#allocation7 + $0x130] sm:$0xff]
    %v294 = vld [vmem:[#allocation7 + $0x138] sm:$0xff]
    %v295 = vld [vmem:[#allocation7 + $0x140] sm:$0xff]
    %v296 = vld [vmem:[#allocation7 + $0x148] sm:$0xff]
    %v297 = vld [vmem:[#allocation7 + $0x150] sm:$0xff]
    %v298 = vld [vmem:[#allocation7 + $0x158] sm:$0xff]
    %v299 = vld [vmem:[#allocation7 + $0x160] sm:$0xff]
    %v300 = vld [vmem:[#allocation7 + $0x168] sm:$0xff]
    %v301 = vld [vmem:[#allocation7 + $0x170] sm:$0xff]
    %v302 = vld [vmem:[#allocation7 + $0x178] sm:$0xff]
    %v303 = vld [vmem:[#allocation7 + $0x180] sm:$0xff]
    %v304 = vld [vmem:[#allocation7 + $0x188] sm:$0xff]
    %v305 = vld [vmem:[#allocation7 + $0x190] sm:$0xff]
    %v306 = vld [vmem:[#allocation7 + $0x198] sm:$0xff]
    %v307 = vld [vmem:[#allocation7 + $0x1a0] sm:$0xff]
    %v308 = vld [vmem:[#allocation7 + $0x1a8] sm:$0xff]
    %v309 = vld [vmem:[#allocation7 + $0x1b0] sm:$0xff]
    %v310 = vld [vmem:[#allocation7 + $0x1b8] sm:$0xff]
    %v311 = vld [vmem:[#allocation7 + $0x1c0] sm:$0xff]
    %v312 = vld [vmem:[#allocation7 + $0x1c8] sm:$0xff]
    %v313 = vld [vmem:[#allocation7 + $0x1d0] sm:$0xff]
    %v314 = vld [vmem:[#allocation7 + $0x1d8] sm:$0xff]
    %v315 = vld [vmem:[#allocation7 + $0x1e0] sm:$0xff]
    %v316 = vld [vmem:[#allocation7 + $0x1e8] sm:$0xff]
    %v317 = vld [vmem:[#allocation7 + $0x1f0] sm:$0xff]
    %v318 = vld [vmem:[#allocation7 + $0x1f8] sm:$0xff]
    %v319 = vld [vmem:[#allocation7 + $0x200] sm:$0xff]
    %v320 = vld [vmem:[#allocation7 + $0x208] sm:$0xff]
    %v321 = vld [vmem:[#allocation7 + $0x210] sm:$0xff]
    %v322 = vld [vmem:[#allocation7 + $0x218] sm:$0xff]
    %v323 = vld [vmem:[#allocation7 + $0x220] sm:$0xff]
    %v324 = vld [vmem:[#allocation7 + $0x228] sm:$0xff]
    %v325 = vld [vmem:[#allocation7 + $0x230] sm:$0xff]
    %v326 = vld [vmem:[#allocation7 + $0x238] sm:$0xff]
    %v327 = vld [vmem:[#allocation7 + $0x240] sm:$0xff]
    %v328 = vld [vmem:[#allocation7 + $0x248] sm:$0xff]
    %v329 = vld [vmem:[#allocation7 + $0x250] sm:$0xff]
    %v330 = vld [vmem:[#allocation7 + $0x258] sm:$0xff]
    %v331 = vld [vmem:[#allocation7 + $0x260] sm:$0xff]
    %v332 = vld [vmem:[#allocation7 + $0x268] sm:$0xff]
    %v333 = vld [vmem:[#allocation7 + $0x270] sm:$0xff]
    %v334 = vld [vmem:[#allocation7 + $0x278] sm:$0xff]
    %v335 = vld [vmem:[#allocation7 + $0x280] sm:$0xff]
    %v336 = vld [vmem:[#allocation7 + $0x288] sm:$0xff]
    %v337 = vld [vmem:[#allocation7 + $0x290] sm:$0xff]
    %v338 = vld [vmem:[#allocation7 + $0x298] sm:$0xff]
    %v339 = vld [vmem:[#allocation7 + $0x2a0] sm:$0xff]
    %v340 = vld [vmem:[#allocation7 + $0x2a8] sm:$0xff]
    %v341 = vld [vmem:[#allocation7 + $0x2b0] sm:$0xff]
    %v342 = vld [vmem:[#allocation7 + $0x2b8] sm:$0xff]
    %v343 = vld [vmem:[#allocation7 + $0x2c0] sm:$0xff]
    %v344 = vld [vmem:[#allocation7 + $0x2c8] sm:$0xff]
    %v345 = vld [vmem:[#allocation7 + $0x2d0] sm:$0xff]
    %v346 = vld [vmem:[#allocation7 + $0x2d8] sm:$0xff]
    %v347 = vld [vmem:[#allocation7 + $0x2e0] sm:$0xff]
    %v348 = vld [vmem:[#allocation7 + $0x2e8] sm:$0xff]
    %v349 = vld [vmem:[#allocation7 + $0x2f0] sm:$0xff]
    %v350 = vld [vmem:[#allocation7 + $0x2f8] sm:$0xff]
    %v351 = vld [vmem:[#allocation7 + $0x300] sm:$0xff]
    %v352 = vld [vmem:[#allocation7 + $0x308] sm:$0xff]
    %v353 = vld [vmem:[#allocation7 + $0x310] sm:$0xff]
    %v354 = vld [vmem:[#allocation7 + $0x318] sm:$0xff]
    %v355 = vld [vmem:[#allocation7 + $0x320] sm:$0xff]
    %v356 = vld [vmem:[#allocation7 + $0x328] sm:$0xff]
    %v357 = vld [vmem:[#allocation7 + $0x330] sm:$0xff]
    %v358 = vld [vmem:[#allocation7 + $0x338] sm:$0xff]
    %v359 = vld [vmem:[#allocation7 + $0x340] sm:$0xff]
    %v360 = vld [vmem:[#allocation7 + $0x348] sm:$0xff]
    %v361 = vld [vmem:[#allocation7 + $0x350] sm:$0xff]
    %v362 = vld [vmem:[#allocation7 + $0x358] sm:$0xff]
    %v363 = vld [vmem:[#allocation7 + $0x360] sm:$0xff]
    %v364 = vld [vmem:[#allocation7 + $0x368] sm:$0xff]
    %v365 = vld [vmem:[#allocation7 + $0x370] sm:$0xff]
    %v366 = vld [vmem:[#allocation7 + $0x378] sm:$0xff]
    %v367 = vld [vmem:[#allocation7 + $0x380] sm:$0xff]
    %v368 = vld [vmem:[#allocation7 + $0x388] sm:$0xff]
    %v369 = vld [vmem:[#allocation7 + $0x390] sm:$0xff]
    %v370 = vld [vmem:[#allocation7 + $0x398] sm:$0xff]
    %v371 = vld [vmem:[#allocation7 + $0x3a0] sm:$0xff]
    %v372 = vld [vmem:[#allocation7 + $0x3a8] sm:$0xff]
    %v373 = vld [vmem:[#allocation7 + $0x3b0] sm:$0xff]
    %v374 = vld [vmem:[#allocation7 + $0x3b8] sm:$0xff]
    %v375 = vld [vmem:[#allocation7 + $0x3c0] sm:$0xff]
    %v376 = vld [vmem:[#allocation7 + $0x3c8] sm:$0xff]
    %v377 = vld [vmem:[#allocation7 + $0x3d0] sm:$0xff]
    %v378 = vld [vmem:[#allocation7 + $0x3d8] sm:$0xff]
    %v379 = vld [vmem:[#allocation7 + $0x3e0] sm:$0xff]
    %v380 = vld [vmem:[#allocation7 + $0x3e8] sm:$0xff]
    %v381 = vld [vmem:[#allocation7 + $0x3f0] sm:$0xff]
    %v382 = vld [vmem:[#allocation7 + $0x3f8] sm:$0xff]
    %v383 = vld [vmem:[#allocation7 + $0x400] sm:$0xff]
    %v384 = vld [vmem:[#allocation7 + $0x408] sm:$0xff]
    %v385 = vld [vmem:[#allocation7 + $0x410] sm:$0xff]
    %v386 = vld [vmem:[#allocation7 + $0x418] sm:$0xff]
    %v387 = vld [vmem:[#allocation7 + $0x420] sm:$0xff]
    %v388 = vld [vmem:[#allocation7 + $0x428] sm:$0xff]
    %v389 = vld [vmem:[#allocation7 + $0x430] sm:$0xff]
    %v390 = vld [vmem:[#allocation7 + $0x438] sm:$0xff]
    %v391 = vld [vmem:[#allocation7 + $0x440] sm:$0xff]
    %v392 = vld [vmem:[#allocation7 + $0x448] sm:$0xff]
    %v393 = vld [vmem:[#allocation7 + $0x450] sm:$0xff]
    %v394 = vld [vmem:[#allocation7 + $0x458] sm:$0xff]
    %v395 = vld [vmem:[#allocation7 + $0x460] sm:$0xff]
    %v396 = vld [vmem:[#allocation7 + $0x468] sm:$0xff]
    %v397 = vld [vmem:[#allocation7 + $0x470] sm:$0xff]
    %v398 = vld [vmem:[#allocation7 + $0x478] sm:$0xff]
    %v399 = vld [vmem:[#allocation7 + $0x480] sm:$0xff]
    %v400 = vld [vmem:[#allocation7 + $0x488] sm:$0xff]
    %v401 = vld [vmem:[#allocation7 + $0x490] sm:$0xff]
    %v402 = vld [vmem:[#allocation7 + $0x498] sm:$0xff]
    %v403 = vld [vmem:[#allocation7 + $0x4a0] sm:$0xff]
    %v404 = vld [vmem:[#allocation7 + $0x4a8] sm:$0xff]
    %v405 = vld [vmem:[#allocation7 + $0x4b0] sm:$0xff]
    %v406 = vld [vmem:[#allocation7 + $0x4b8] sm:$0xff]
    %v407 = vld [vmem:[#allocation7 + $0x4c0] sm:$0xff]
    %v408 = vld [vmem:[#allocation7 + $0x4c8] sm:$0xff]
    %v409 = vld [vmem:[#allocation7 + $0x4d0] sm:$0xff]
    %v410 = vld [vmem:[#allocation7 + $0x4d8] sm:$0xff]
    %v411 = vld [vmem:[#allocation7 + $0x4e0] sm:$0xff]
    %v412 = vld [vmem:[#allocation7 + $0x4e8] sm:$0xff]
    %v413 = vld [vmem:[#allocation7 + $0x4f0] sm:$0xff]
    %v414 = vld [vmem:[#allocation7 + $0x4f8] sm:$0xff]
    %v415 = vld [vmem:[#allocation7 + $0x500] sm:$0xff]
    %v416 = vld [vmem:[#allocation7 + $0x508] sm:$0xff]
    %v417 = vld [vmem:[#allocation7 + $0x510] sm:$0xff]
    %v418 = vld [vmem:[#allocation7 + $0x518] sm:$0xff]
    %v419 = vld [vmem:[#allocation7 + $0x520] sm:$0xff]
    %v420 = vld [vmem:[#allocation7 + $0x528] sm:$0xff]
    %v421 = vld [vmem:[#allocation7 + $0x530] sm:$0xff]
    %v422 = vld [vmem:[#allocation7 + $0x538] sm:$0xff]
    %v423 = vld [vmem:[#allocation7 + $0x540] sm:$0xff]
    %v424 = vld [vmem:[#allocation7 + $0x548] sm:$0xff]
    %v425 = vld [vmem:[#allocation7 + $0x550] sm:$0xff]
    %v426 = vld [vmem:[#allocation7 + $0x558] sm:$0xff]
    %v427 = vld [vmem:[#allocation7 + $0x560] sm:$0xff]
    %v428 = vld [vmem:[#allocation7 + $0x568] sm:$0xff]
    %v429 = vld [vmem:[#allocation7 + $0x570] sm:$0xff]
    %v430 = vld [vmem:[#allocation7 + $0x578] sm:$0xff]
    %v431 = vld [vmem:[#allocation7 + $0x580] sm:$0xff]
    %v432 = vld [vmem:[#allocation7 + $0x588] sm:$0xff]
    %v433 = vld [vmem:[#allocation7 + $0x590] sm:$0xff]
    %v434 = vld [vmem:[#allocation7 + $0x598] sm:$0xff]
    %v435 = vld [vmem:[#allocation7 + $0x5a0] sm:$0xff]
    %v436 = vld [vmem:[#allocation7 + $0x5a8] sm:$0xff]
    %v437 = vld [vmem:[#allocation7 + $0x5b0] sm:$0xff]
    %v438 = vld [vmem:[#allocation7 + $0x5b8] sm:$0xff]
    %v439 = vld [vmem:[#allocation7 + $0x5c0] sm:$0xff]
    %v440 = vld [vmem:[#allocation7 + $0x5c8] sm:$0xff]
    %v441 = vld [vmem:[#allocation7 + $0x5d0] sm:$0xff]
    %v442 = vld [vmem:[#allocation7 + $0x5d8] sm:$0xff]
    %v443 = vld [vmem:[#allocation7 + $0x5e0] sm:$0xff]
    %v444 = vld [vmem:[#allocation7 + $0x5e8] sm:$0xff]
    %v445 = vld [vmem:[#allocation7 + $0x5f0] sm:$0xff]
    %v446 = vld [vmem:[#allocation7 + $0x5f8] sm:$0xff]
    %v447 = vld [vmem:[#allocation7 + $0x600] sm:$0xff]
    %v448 = vld [vmem:[#allocation7 + $0x608] sm:$0xff]
    %v449 = vld [vmem:[#allocation7 + $0x610] sm:$0xff]
    %v450 = vld [vmem:[#allocation7 + $0x618] sm:$0xff]
    %v451 = vld [vmem:[#allocation7 + $0x620] sm:$0xff]
    %v452 = vld [vmem:[#allocation7 + $0x628] sm:$0xff]
    %v453 = vld [vmem:[#allocation7 + $0x630] sm:$0xff]
    %v454 = vld [vmem:[#allocation7 + $0x638] sm:$0xff]
    %v455 = vld [vmem:[#allocation7 + $0x640] sm:$0xff]
    %v456 = vld [vmem:[#allocation7 + $0x648] sm:$0xff]
    %v457 = vld [vmem:[#allocation7 + $0x650] sm:$0xff]
    %v458 = vld [vmem:[#allocation7 + $0x658] sm:$0xff]
    %v459 = vld [vmem:[#allocation7 + $0x660] sm:$0xff]
    %v460 = vld [vmem:[#allocation7 + $0x668] sm:$0xff]
    %v461 = vld [vmem:[#allocation7 + $0x670] sm:$0xff]
    %v462 = vld [vmem:[#allocation7 + $0x678] sm:$0xff]
    %v463 = vld [vmem:[#allocation7 + $0x680] sm:$0xff]
    %v464 = vld [vmem:[#allocation7 + $0x688] sm:$0xff]
    %v465 = vld [vmem:[#allocation7 + $0x690] sm:$0xff]
    %v466 = vld [vmem:[#allocation7 + $0x698] sm:$0xff]
    %v467 = vld [vmem:[#allocation7 + $0x6a0] sm:$0xff]
    %v468 = vld [vmem:[#allocation7 + $0x6a8] sm:$0xff]
    %v469 = vld [vmem:[#allocation7 + $0x6b0] sm:$0xff]
    %v470 = vld [vmem:[#allocation7 + $0x6b8] sm:$0xff]
    %v471 = vld [vmem:[#allocation7 + $0x6c0] sm:$0xff]
    %v472 = vld [vmem:[#allocation7 + $0x6c8] sm:$0xff]
    %v473 = vld [vmem:[#allocation7 + $0x6d0] sm:$0xff]
    %v474 = vld [vmem:[#allocation7 + $0x6d8] sm:$0xff]
    %v475 = vld [vmem:[#allocation7 + $0x6e0] sm:$0xff]
    %v476 = vld [vmem:[#allocation7 + $0x6e8] sm:$0xff]
    %v477 = vld [vmem:[#allocation7 + $0x6f0] sm:$0xff]
    %v478 = vld [vmem:[#allocation7 + $0x6f8] sm:$0xff]
    %v479 = vld [vmem:[#allocation7 + $0x700] sm:$0xff]
    %v480 = vld [vmem:[#allocation7 + $0x708] sm:$0xff]
    %v481 = vld [vmem:[#allocation7 + $0x710] sm:$0xff]
    %v482 = vld [vmem:[#allocation7 + $0x718] sm:$0xff]
    %v483 = vld [vmem:[#allocation7 + $0x720] sm:$0xff]
    %v484 = vld [vmem:[#allocation7 + $0x728] sm:$0xff]
    %v485 = vld [vmem:[#allocation7 + $0x730] sm:$0xff]
    %v486 = vld [vmem:[#allocation7 + $0x738] sm:$0xff]
    %v487 = vld [vmem:[#allocation7 + $0x740] sm:$0xff]
    %v488 = vld [vmem:[#allocation7 + $0x748] sm:$0xff]
    %v489 = vld [vmem:[#allocation7 + $0x750] sm:$0xff]
    %v490 = vld [vmem:[#allocation7 + $0x758] sm:$0xff]
    %v491 = vld [vmem:[#allocation7 + $0x760] sm:$0xff]
    %v492 = vld [vmem:[#allocation7 + $0x768] sm:$0xff]
    %v493 = vld [vmem:[#allocation7 + $0x770] sm:$0xff]
    %v494 = vld [vmem:[#allocation7 + $0x778] sm:$0xff]
    %v495 = vld [vmem:[#allocation7 + $0x780] sm:$0xff]
    %v496 = vld [vmem:[#allocation7 + $0x788] sm:$0xff]
    %v497 = vld [vmem:[#allocation7 + $0x790] sm:$0xff]
    %v498 = vld [vmem:[#allocation7 + $0x798] sm:$0xff]
    %v499 = vld [vmem:[#allocation7 + $0x7a0] sm:$0xff]
    %v500 = vld [vmem:[#allocation7 + $0x7a8] sm:$0xff]
    %v501 = vld [vmem:[#allocation7 + $0x7b0] sm:$0xff]
    %v502 = vld [vmem:[#allocation7 + $0x7b8] sm:$0xff]
    %v503 = vld [vmem:[#allocation7 + $0x7c0] sm:$0xff]
    %v504 = vld [vmem:[#allocation7 + $0x7c8] sm:$0xff]
    %v505 = vld [vmem:[#allocation7 + $0x7d0] sm:$0xff]
    %v506 = vld [vmem:[#allocation7 + $0x7d8] sm:$0xff]
    %v507 = vld [vmem:[#allocation7 + $0x7e0] sm:$0xff]
    %v508 = vld [vmem:[#allocation7 + $0x7e8] sm:$0xff]
    %v509 = vld [vmem:[#allocation7 + $0x7f0] sm:$0xff]
    %v510 = vld [vmem:[#allocation7 + $0x7f8] sm:$0xff]
    %v511 = vld [vmem:[#allocation7 + $0x800] sm:$0xff]
    %v512 = vld [vmem:[#allocation7 + $0x808] sm:$0xff]
    %v513 = vld [vmem:[#allocation7 + $0x810] sm:$0xff]
    %v514 = vld [vmem:[#allocation7 + $0x818] sm:$0xff]
    %v515 = vld [vmem:[#allocation7 + $0x820] sm:$0xff]
    %v516 = vld [vmem:[#allocation7 + $0x828] sm:$0xff]
    %v517 = vld [vmem:[#allocation7 + $0x830] sm:$0xff]
    %v518 = vld [vmem:[#allocation7 + $0x838] sm:$0xff]
    %v519 = vld [vmem:[#allocation7 + $0x840] sm:$0xff]
    %v520 = vld [vmem:[#allocation7 + $0x848] sm:$0xff]
    %v521 = vld [vmem:[#allocation7 + $0x850] sm:$0xff]
    %v522 = vld [vmem:[#allocation7 + $0x858] sm:$0xff]
    %v523 = vld [vmem:[#allocation7 + $0x860] sm:$0xff]
    %v524 = vld [vmem:[#allocation7 + $0x868] sm:$0xff]
    %v525 = vld [vmem:[#allocation7 + $0x870] sm:$0xff]
    %v526 = vld [vmem:[#allocation7 + $0x878] sm:$0xff]
    %v527 = vld [vmem:[#allocation7 + $0x880] sm:$0xff]
    %v528 = vld [vmem:[#allocation7 + $0x888] sm:$0xff]
    %v529 = vld [vmem:[#allocation7 + $0x890] sm:$0xff]
    %v530 = vld [vmem:[#allocation7 + $0x898] sm:$0xff]
    %v531 = vld [vmem:[#allocation7 + $0x8a0] sm:$0xff]
    %v532 = vld [vmem:[#allocation7 + $0x8a8] sm:$0xff]
    %v533 = vld [vmem:[#allocation7 + $0x8b0] sm:$0xff]
    %v534 = vld [vmem:[#allocation7 + $0x8b8] sm:$0xff]
    %v535 = vld [vmem:[#allocation7 + $0x8c0] sm:$0xff]
    %v536 = vld [vmem:[#allocation7 + $0x8c8] sm:$0xff]
    %v537 = vld [vmem:[#allocation7 + $0x8d0] sm:$0xff]
    %v538 = vld [vmem:[#allocation7 + $0x8d8] sm:$0xff]
    %v539 = vld [vmem:[#allocation7 + $0x8e0] sm:$0xff]
    %v540 = vld [vmem:[#allocation7 + $0x8e8] sm:$0xff]
    %v541 = vld [vmem:[#allocation7 + $0x8f0] sm:$0xff]
    %v542 = vld [vmem:[#allocation7 + $0x8f8] sm:$0xff]
    %v543 = vld [vmem:[#allocation7 + $0x900] sm:$0xff]
    %v544 = vld [vmem:[#allocation7 + $0x908] sm:$0xff]
    %v545 = vld [vmem:[#allocation7 + $0x910] sm:$0xff]
    %v546 = vld [vmem:[#allocation7 + $0x918] sm:$0xff]
    %v547 = vld [vmem:[#allocation7 + $0x920] sm:$0xff]
    %v548 = vld [vmem:[#allocation7 + $0x928] sm:$0xff]
    %v549 = vld [vmem:[#allocation7 + $0x930] sm:$0xff]
    %v550 = vld [vmem:[#allocation7 + $0x938] sm:$0xff]
    %v551 = vld [vmem:[#allocation7 + $0x940] sm:$0xff]
    %v552 = vld [vmem:[#allocation7 + $0x948] sm:$0xff]
    %v553 = vld [vmem:[#allocation7 + $0x950] sm:$0xff]
    %v554 = vld [vmem:[#allocation7 + $0x958] sm:$0xff]
    %v555 = vld [vmem:[#allocation7 + $0x960] sm:$0xff]
    %v556 = vld [vmem:[#allocation7 + $0x968] sm:$0xff]
    %v557 = vld [vmem:[#allocation7 + $0x970] sm:$0xff]
    %v558 = vld [vmem:[#allocation7 + $0x978] sm:$0xff]
    %v559 = vld [vmem:[#allocation7 + $0x980] sm:$0xff]
    %v560 = vld [vmem:[#allocation7 + $0x988] sm:$0xff]
    %v561 = vld [vmem:[#allocation7 + $0x990] sm:$0xff]
    %v562 = vld [vmem:[#allocation7 + $0x998] sm:$0xff]
    %v563 = vld [vmem:[#allocation7 + $0x9a0] sm:$0xff]
    %v564 = vld [vmem:[#allocation7 + $0x9a8] sm:$0xff]
    %v565 = vld [vmem:[#allocation7 + $0x9b0] sm:$0xff]
    %v566 = vld [vmem:[#allocation7 + $0x9b8] sm:$0xff]
    %v567 = vld [vmem:[#allocation7 + $0x9c0] sm:$0xff]
    %v568 = vld [vmem:[#allocation7 + $0x9c8] sm:$0xff]
    %v569 = vld [vmem:[#allocation7 + $0x9d0] sm:$0xff]
    %v570 = vld [vmem:[#allocation7 + $0x9d8] sm:$0xff]
    %v571 = vld [vmem:[#allocation7 + $0x9e0] sm:$0xff]
    %v572 = vld [vmem:[#allocation7 + $0x9e8] sm:$0xff]
    %v573 = vld [vmem:[#allocation7 + $0x9f0] sm:$0xff]
    %v574 = vld [vmem:[#allocation7 + $0x9f8] sm:$0xff]
    %v575 = vld [vmem:[#allocation7 + $0xa00] sm:$0xff]
    %v576 = vld [vmem:[#allocation7 + $0xa08] sm:$0xff]
    %v577 = vld [vmem:[#allocation7 + $0xa10] sm:$0xff]
    %v578 = vld [vmem:[#allocation7 + $0xa18] sm:$0xff]
    %v579 = vld [vmem:[#allocation7 + $0xa20] sm:$0xff]
    %v580 = vld [vmem:[#allocation7 + $0xa28] sm:$0xff]
    %v581 = vld [vmem:[#allocation7 + $0xa30] sm:$0xff]
    %v582 = vld [vmem:[#allocation7 + $0xa38] sm:$0xff]
    %v583 = vld [vmem:[#allocation7 + $0xa40] sm:$0xff]
    %v584 = vld [vmem:[#allocation7 + $0xa48] sm:$0xff]
    %v585 = vld [vmem:[#allocation7 + $0xa50] sm:$0xff]
    %v586 = vld [vmem:[#allocation7 + $0xa58] sm:$0xff]
    %v587 = vld [vmem:[#allocation7 + $0xa60] sm:$0xff]
    %v588 = vld [vmem:[#allocation7 + $0xa68] sm:$0xff]
    %v589 = vld [vmem:[#allocation7 + $0xa70] sm:$0xff]
    %v590 = vld [vmem:[#allocation7 + $0xa78] sm:$0xff]
    %v591 = vld [vmem:[#allocation7 + $0xa80] sm:$0xff]
    %v592 = vld [vmem:[#allocation7 + $0xa88] sm:$0xff]
    %v593 = vld [vmem:[#allocation7 + $0xa90] sm:$0xff]
    %v594 = vld [vmem:[#allocation7 + $0xa98] sm:$0xff]
    %v595 = vld [vmem:[#allocation7 + $0xaa0] sm:$0xff]
    %v596 = vld [vmem:[#allocation7 + $0xaa8] sm:$0xff]
    %v597 = vld [vmem:[#allocation7 + $0xab0] sm:$0xff]
    %v598 = vld [vmem:[#allocation7 + $0xab8] sm:$0xff]
    %v599 = vld [vmem:[#allocation7 + $0xac0] sm:$0xff]
    %v600 = vld [vmem:[#allocation7 + $0xac8] sm:$0xff]
    %v601 = vld [vmem:[#allocation7 + $0xad0] sm:$0xff]
    %v602 = vld [vmem:[#allocation7 + $0xad8] sm:$0xff]
    %v603 = vld [vmem:[#allocation7 + $0xae0] sm:$0xff]
    %v604 = vld [vmem:[#allocation7 + $0xae8] sm:$0xff]
    %v605 = vld [vmem:[#allocation7 + $0xaf0] sm:$0xff]
    %v606 = vld [vmem:[#allocation7 + $0xaf8] sm:$0xff]
    %v607 = vld [vmem:[#allocation7 + $0xb00] sm:$0xff]
    %v608 = vld [vmem:[#allocation7 + $0xb08] sm:$0xff]
    %v609 = vld [vmem:[#allocation7 + $0xb10] sm:$0xff]
    %v610 = vld [vmem:[#allocation7 + $0xb18] sm:$0xff]
    %v611 = vld [vmem:[#allocation7 + $0xb20] sm:$0xff]
    %v612 = vld [vmem:[#allocation7 + $0xb28] sm:$0xff]
    %v613 = vld [vmem:[#allocation7 + $0xb30] sm:$0xff]
    %v614 = vld [vmem:[#allocation7 + $0xb38] sm:$0xff]
    %v615 = vld [vmem:[#allocation7 + $0xb40] sm:$0xff]
    %v616 = vld [vmem:[#allocation7 + $0xb48] sm:$0xff]
    %v617 = vld [vmem:[#allocation7 + $0xb50] sm:$0xff]
    %v618 = vld [vmem:[#allocation7 + $0xb58] sm:$0xff]
    %v619 = vld [vmem:[#allocation7 + $0xb60] sm:$0xff]
    %v620 = vld [vmem:[#allocation7 + $0xb68] sm:$0xff]
    %v621 = vld [vmem:[#allocation7 + $0xb70] sm:$0xff]
    %v622 = vld [vmem:[#allocation7 + $0xb78] sm:$0xff]
    %v623 = vld [vmem:[#allocation7 + $0xb80] sm:$0xff]
    %v624 = vld [vmem:[#allocation7 + $0xb88] sm:$0xff]
    %v625 = vld [vmem:[#allocation7 + $0xb90] sm:$0xff]
    %v626 = vld [vmem:[#allocation7 + $0xb98] sm:$0xff]
    %v627 = vld [vmem:[#allocation7 + $0xba0] sm:$0xff]
    %v628 = vld [vmem:[#allocation7 + $0xba8] sm:$0xff]
    %v629 = vld [vmem:[#allocation7 + $0xbb0] sm:$0xff]
    %v630 = vld [vmem:[#allocation7 + $0xbb8] sm:$0xff]
    %v631 = vld [vmem:[#allocation7 + $0xbc0] sm:$0xff]
    %v632 = vld [vmem:[#allocation7 + $0xbc8] sm:$0xff]
    %v633 = vld [vmem:[#allocation7 + $0xbd0] sm:$0xff]
    %v634 = vld [vmem:[#allocation7 + $0xbd8] sm:$0xff]
    %v635 = vld [vmem:[#allocation7 + $0xbe0] sm:$0xff]
    %v636 = vld [vmem:[#allocation7 + $0xbe8] sm:$0xff]
    %v637 = vld [vmem:[#allocation7 + $0xbf0] sm:$0xff]
    %v638 = vld [vmem:[#allocation7 + $0xbf8] sm:$0xff]
    %v1023 = vunpack.c.l.b16 %v255
    %v1024 = vunpack.c.h.b16 %v255
    %v1025 = vunpack.c.l.b16 %v256
    %v1026 = vunpack.c.h.b16 %v256
    %v1027 = vunpack.c.l.b16 %v257
    %v1028 = vunpack.c.h.b16 %v257
    %v1029 = vunpack.c.l.b16 %v258
    %v1030 = vunpack.c.h.b16 %v258
    %v1031 = vunpack.c.l.b16 %v259
    %v1032 = vunpack.c.h.b16 %v259
    %v1033 = vunpack.c.l.b16 %v260
    %v1034 = vunpack.c.h.b16 %v260
    %v1035 = vunpack.c.l.b16 %v261
    %v1036 = vunpack.c.h.b16 %v261
    %v1037 = vunpack.c.l.b16 %v262
    %v1038 = vunpack.c.h.b16 %v262
    %v1039 = vunpack.c.l.b16 %v263
    %v1040 = vunpack.c.h.b16 %v263
    %v1041 = vunpack.c.l.b16 %v264
    %v1042 = vunpack.c.h.b16 %v264
    %v1043 = vunpack.c.l.b16 %v265
    %v1044 = vunpack.c.h.b16 %v265
    %v1045 = vunpack.c.l.b16 %v266
    %v1046 = vunpack.c.h.b16 %v266
    %v1047 = vunpack.c.l.b16 %v267
    %v1048 = vunpack.c.h.b16 %v267
    %v1049 = vunpack.c.l.b16 %v268
    %v1050 = vunpack.c.h.b16 %v268
    %v1051 = vunpack.c.l.b16 %v269
    %v1052 = vunpack.c.h.b16 %v269
    %v1053 = vunpack.c.l.b16 %v270
    %v1054 = vunpack.c.h.b16 %v270
    %v1055 = vunpack.c.l.b16 %v271
    %v1056 = vunpack.c.h.b16 %v271
    %v1057 = vunpack.c.l.b16 %v272
    %v1058 = vunpack.c.h.b16 %v272
    %v1059 = vunpack.c.l.b16 %v273
    %v1060 = vunpack.c.h.b16 %v273
    %v1061 = vunpack.c.l.b16 %v274
    %v1062 = vunpack.c.h.b16 %v274
    %v1063 = vunpack.c.l.b16 %v275
    %v1064 = vunpack.c.h.b16 %v275
    %v1065 = vunpack.c.l.b16 %v276
    %v1066 = vunpack.c.h.b16 %v276
    %v1067 = vunpack.c.l.b16 %v277
    %v1068 = vunpack.c.h.b16 %v277
    %v1069 = vunpack.c.l.b16 %v278
    %v1070 = vunpack.c.h.b16 %v278
    %v1071 = vunpack.c.l.b16 %v279
    %v1072 = vunpack.c.h.b16 %v279
    %v1073 = vunpack.c.l.b16 %v280
    %v1074 = vunpack.c.h.b16 %v280
    %v1075 = vunpack.c.l.b16 %v281
    %v1076 = vunpack.c.h.b16 %v281
    %v1077 = vunpack.c.l.b16 %v282
    %v1078 = vunpack.c.h.b16 %v282
    %v1079 = vunpack.c.l.b16 %v283
    %v1080 = vunpack.c.h.b16 %v283
    %v1081 = vunpack.c.l.b16 %v284
    %v1082 = vunpack.c.h.b16 %v284
    %v1083 = vunpack.c.l.b16 %v285
    %v1084 = vunpack.c.h.b16 %v285
    %v1085 = vunpack.c.l.b16 %v286
    %v1086 = vunpack.c.h.b16 %v286
    %v1087 = vunpack.c.l.b16 %v287
    %v1088 = vunpack.c.h.b16 %v287
    %v1089 = vunpack.c.l.b16 %v288
    %v1090 = vunpack.c.h.b16 %v288
    %v1091 = vunpack.c.l.b16 %v289
    %v1092 = vunpack.c.h.b16 %v289
    %v1093 = vunpack.c.l.b16 %v290
    %v1094 = vunpack.c.h.b16 %v290
    %v1095 = vunpack.c.l.b16 %v291
    %v1096 = vunpack.c.h.b16 %v291
    %v1097 = vunpack.c.l.b16 %v292
    %v1098 = vunpack.c.h.b16 %v292
    %v1099 = vunpack.c.l.b16 %v293
    %v1100 = vunpack.c.h.b16 %v293
    %v1101 = vunpack.c.l.b16 %v294
    %v1102 = vunpack.c.h.b16 %v294
    %v1103 = vunpack.c.l.b16 %v295
    %v1104 = vunpack.c.h.b16 %v295
    %v1105 = vunpack.c.l.b16 %v296
    %v1106 = vunpack.c.h.b16 %v296
    %v1107 = vunpack.c.l.b16 %v297
    %v1108 = vunpack.c.h.b16 %v297
    %v1109 = vunpack.c.l.b16 %v298
    %v1110 = vunpack.c.h.b16 %v298
    %v1111 = vunpack.c.l.b16 %v299
    %v1112 = vunpack.c.h.b16 %v299
    %v1113 = vunpack.c.l.b16 %v300
    %v1114 = vunpack.c.h.b16 %v300
    %v1115 = vunpack.c.l.b16 %v301
    %v1116 = vunpack.c.h.b16 %v301
    %v1117 = vunpack.c.l.b16 %v302
    %v1118 = vunpack.c.h.b16 %v302
    %v1119 = vunpack.c.l.b16 %v303
    %v1120 = vunpack.c.h.b16 %v303
    %v1121 = vunpack.c.l.b16 %v304
    %v1122 = vunpack.c.h.b16 %v304
    %v1123 = vunpack.c.l.b16 %v305
    %v1124 = vunpack.c.h.b16 %v305
    %v1125 = vunpack.c.l.b16 %v306
    %v1126 = vunpack.c.h.b16 %v306
    %v1127 = vunpack.c.l.b16 %v307
    %v1128 = vunpack.c.h.b16 %v307
    %v1129 = vunpack.c.l.b16 %v308
    %v1130 = vunpack.c.h.b16 %v308
    %v1131 = vunpack.c.l.b16 %v309
    %v1132 = vunpack.c.h.b16 %v309
    %v1133 = vunpack.c.l.b16 %v310
    %v1134 = vunpack.c.h.b16 %v310
    %v1135 = vunpack.c.l.b16 %v311
    %v1136 = vunpack.c.h.b16 %v311
    %v1137 = vunpack.c.l.b16 %v312
    %v1138 = vunpack.c.h.b16 %v312
    %v1139 = vunpack.c.l.b16 %v313
    %v1140 = vunpack.c.h.b16 %v313
    %v1141 = vunpack.c.l.b16 %v314
    %v1142 = vunpack.c.h.b16 %v314
    %v1143 = vunpack.c.l.b16 %v315
    %v1144 = vunpack.c.h.b16 %v315
    %v1145 = vunpack.c.l.b16 %v316
    %v1146 = vunpack.c.h.b16 %v316
    %v1147 = vunpack.c.l.b16 %v317
    %v1148 = vunpack.c.h.b16 %v317
    %v1149 = vunpack.c.l.b16 %v318
    %v1150 = vunpack.c.h.b16 %v318
    %v1151 = vunpack.c.l.b16 %v319
    %v1152 = vunpack.c.h.b16 %v319
    %v1153 = vunpack.c.l.b16 %v320
    %v1154 = vunpack.c.h.b16 %v320
    %v1155 = vunpack.c.l.b16 %v321
    %v1156 = vunpack.c.h.b16 %v321
    %v1157 = vunpack.c.l.b16 %v322
    %v1158 = vunpack.c.h.b16 %v322
    %v1159 = vunpack.c.l.b16 %v323
    %v1160 = vunpack.c.h.b16 %v323
    %v1161 = vunpack.c.l.b16 %v324
    %v1162 = vunpack.c.h.b16 %v324
    %v1163 = vunpack.c.l.b16 %v325
    %v1164 = vunpack.c.h.b16 %v325
    %v1165 = vunpack.c.l.b16 %v326
    %v1166 = vunpack.c.h.b16 %v326
    %v1167 = vunpack.c.l.b16 %v327
    %v1168 = vunpack.c.h.b16 %v327
    %v1169 = vunpack.c.l.b16 %v328
    %v1170 = vunpack.c.h.b16 %v328
    %v1171 = vunpack.c.l.b16 %v329
    %v1172 = vunpack.c.h.b16 %v329
    %v1173 = vunpack.c.l.b16 %v330
    %v1174 = vunpack.c.h.b16 %v330
    %v1175 = vunpack.c.l.b16 %v331
    %v1176 = vunpack.c.h.b16 %v331
    %v1177 = vunpack.c.l.b16 %v332
    %v1178 = vunpack.c.h.b16 %v332
    %v1179 = vunpack.c.l.b16 %v333
    %v1180 = vunpack.c.h.b16 %v333
    %v1181 = vunpack.c.l.b16 %v334
    %v1182 = vunpack.c.h.b16 %v334
    %v1183 = vunpack.c.l.b16 %v335
    %v1184 = vunpack.c.h.b16 %v335
    %v1185 = vunpack.c.l.b16 %v336
    %v1186 = vunpack.c.h.b16 %v336
    %v1187 = vunpack.c.l.b16 %v337
    %v1188 = vunpack.c.h.b16 %v337
    %v1189 = vunpack.c.l.b16 %v338
    %v1190 = vunpack.c.h.b16 %v338
    %v1191 = vunpack.c.l.b16 %v339
    %v1192 = vunpack.c.h.b16 %v339
    %v1193 = vunpack.c.l.b16 %v340
    %v1194 = vunpack.c.h.b16 %v340
    %v1195 = vunpack.c.l.b16 %v341
    %v1196 = vunpack.c.h.b16 %v341
    %v1197 = vunpack.c.l.b16 %v342
    %v1198 = vunpack.c.h.b16 %v342
    %v1199 = vunpack.c.l.b16 %v343
    %v1200 = vunpack.c.h.b16 %v343
    %v1201 = vunpack.c.l.b16 %v344
    %v1202 = vunpack.c.h.b16 %v344
    %v1203 = vunpack.c.l.b16 %v345
    %v1204 = vunpack.c.h.b16 %v345
    %v1205 = vunpack.c.l.b16 %v346
    %v1206 = vunpack.c.h.b16 %v346
    %v1207 = vunpack.c.l.b16 %v347
    %v1208 = vunpack.c.h.b16 %v347
    %v1209 = vunpack.c.l.b16 %v348
    %v1210 = vunpack.c.h.b16 %v348
    %v1211 = vunpack.c.l.b16 %v349
    %v1212 = vunpack.c.h.b16 %v349
    %v1213 = vunpack.c.l.b16 %v350
    %v1214 = vunpack.c.h.b16 %v350
    %v1215 = vunpack.c.l.b16 %v351
    %v1216 = vunpack.c.h.b16 %v351
    %v1217 = vunpack.c.l.b16 %v352
    %v1218 = vunpack.c.h.b16 %v352
    %v1219 = vunpack.c.l.b16 %v353
    %v1220 = vunpack.c.h.b16 %v353
    %v1221 = vunpack.c.l.b16 %v354
    %v1222 = vunpack.c.h.b16 %v354
    %v1223 = vunpack.c.l.b16 %v355
    %v1224 = vunpack.c.h.b16 %v355
    %v1225 = vunpack.c.l.b16 %v356
    %v1226 = vunpack.c.h.b16 %v356
    %v1227 = vunpack.c.l.b16 %v357
    %v1228 = vunpack.c.h.b16 %v357
    %v1229 = vunpack.c.l.b16 %v358
    %v1230 = vunpack.c.h.b16 %v358
    %v1231 = vunpack.c.l.b16 %v359
    %v1232 = vunpack.c.h.b16 %v359
    %v1233 = vunpack.c.l.b16 %v360
    %v1234 = vunpack.c.h.b16 %v360
    %v1235 = vunpack.c.l.b16 %v361
    %v1236 = vunpack.c.h.b16 %v361
    %v1237 = vunpack.c.l.b16 %v362
    %v1238 = vunpack.c.h.b16 %v362
    %v1239 = vunpack.c.l.b16 %v363
    %v1240 = vunpack.c.h.b16 %v363
    %v1241 = vunpack.c.l.b16 %v364
    %v1242 = vunpack.c.h.b16 %v364
    %v1243 = vunpack.c.l.b16 %v365
    %v1244 = vunpack.c.h.b16 %v365
    %v1245 = vunpack.c.l.b16 %v366
    %v1246 = vunpack.c.h.b16 %v366
    %v1247 = vunpack.c.l.b16 %v367
    %v1248 = vunpack.c.h.b16 %v367
    %v1249 = vunpack.c.l.b16 %v368
    %v1250 = vunpack.c.h.b16 %v368
    %v1251 = vunpack.c.l.b16 %v369
    %v1252 = vunpack.c.h.b16 %v369
    %v1253 = vunpack.c.l.b16 %v370
    %v1254 = vunpack.c.h.b16 %v370
    %v1255 = vunpack.c.l.b16 %v371
    %v1256 = vunpack.c.h.b16 %v371
    %v1257 = vunpack.c.l.b16 %v372
    %v1258 = vunpack.c.h.b16 %v372
    %v1259 = vunpack.c.l.b16 %v373
    %v1260 = vunpack.c.h.b16 %v373
    %v1261 = vunpack.c.l.b16 %v374
    %v1262 = vunpack.c.h.b16 %v374
    %v1263 = vunpack.c.l.b16 %v375
    %v1264 = vunpack.c.h.b16 %v375
    %v1265 = vunpack.c.l.b16 %v376
    %v1266 = vunpack.c.h.b16 %v376
    %v1267 = vunpack.c.l.b16 %v377
    %v1268 = vunpack.c.h.b16 %v377
    %v1269 = vunpack.c.l.b16 %v378
    %v1270 = vunpack.c.h.b16 %v378
    %v1271 = vunpack.c.l.b16 %v379
    %v1272 = vunpack.c.h.b16 %v379
    %v1273 = vunpack.c.l.b16 %v380
    %v1274 = vunpack.c.h.b16 %v380
    %v1275 = vunpack.c.l.b16 %v381
    %v1276 = vunpack.c.h.b16 %v381
    %v1277 = vunpack.c.l.b16 %v382
    %v1278 = vunpack.c.h.b16 %v382
    %v1279 = vunpack.c.l.b16 %v383
    %v1280 = vunpack.c.h.b16 %v383
    %v1281 = vunpack.c.l.b16 %v384
    %v1282 = vunpack.c.h.b16 %v384
    %v1283 = vunpack.c.l.b16 %v385
    %v1284 = vunpack.c.h.b16 %v385
    %v1285 = vunpack.c.l.b16 %v386
    %v1286 = vunpack.c.h.b16 %v386
    %v1287 = vunpack.c.l.b16 %v387
    %v1288 = vunpack.c.h.b16 %v387
    %v1289 = vunpack.c.l.b16 %v388
    %v1290 = vunpack.c.h.b16 %v388
    %v1291 = vunpack.c.l.b16 %v389
    %v1292 = vunpack.c.h.b16 %v389
    %v1293 = vunpack.c.l.b16 %v390
    %v1294 = vunpack.c.h.b16 %v390
    %v1295 = vunpack.c.l.b16 %v391
    %v1296 = vunpack.c.h.b16 %v391
    %v1297 = vunpack.c.l.b16 %v392
    %v1298 = vunpack.c.h.b16 %v392
    %v1299 = vunpack.c.l.b16 %v393
    %v1300 = vunpack.c.h.b16 %v393
    %v1301 = vunpack.c.l.b16 %v394
    %v1302 = vunpack.c.h.b16 %v394
    %v1303 = vunpack.c.l.b16 %v395
    %v1304 = vunpack.c.h.b16 %v395
    %v1305 = vunpack.c.l.b16 %v396
    %v1306 = vunpack.c.h.b16 %v396
    %v1307 = vunpack.c.l.b16 %v397
    %v1308 = vunpack.c.h.b16 %v397
    %v1309 = vunpack.c.l.b16 %v398
    %v1310 = vunpack.c.h.b16 %v398
    %v1311 = vunpack.c.l.b16 %v399
    %v1312 = vunpack.c.h.b16 %v399
    %v1313 = vunpack.c.l.b16 %v400
    %v1314 = vunpack.c.h.b16 %v400
    %v1315 = vunpack.c.l.b16 %v401
    %v1316 = vunpack.c.h.b16 %v401
    %v1317 = vunpack.c.l.b16 %v402
    %v1318 = vunpack.c.h.b16 %v402
    %v1319 = vunpack.c.l.b16 %v403
    %v1320 = vunpack.c.h.b16 %v403
    %v1321 = vunpack.c.l.b16 %v404
    %v1322 = vunpack.c.h.b16 %v404
    %v1323 = vunpack.c.l.b16 %v405
    %v1324 = vunpack.c.h.b16 %v405
    %v1325 = vunpack.c.l.b16 %v406
    %v1326 = vunpack.c.h.b16 %v406
    %v1327 = vunpack.c.l.b16 %v407
    %v1328 = vunpack.c.h.b16 %v407
    %v1329 = vunpack.c.l.b16 %v408
    %v1330 = vunpack.c.h.b16 %v408
    %v1331 = vunpack.c.l.b16 %v409
    %v1332 = vunpack.c.h.b16 %v409
    %v1333 = vunpack.c.l.b16 %v410
    %v1334 = vunpack.c.h.b16 %v410
    %v1335 = vunpack.c.l.b16 %v411
    %v1336 = vunpack.c.h.b16 %v411
    %v1337 = vunpack.c.l.b16 %v412
    %v1338 = vunpack.c.h.b16 %v412
    %v1339 = vunpack.c.l.b16 %v413
    %v1340 = vunpack.c.h.b16 %v413
    %v1341 = vunpack.c.l.b16 %v414
    %v1342 = vunpack.c.h.b16 %v414
    %v1343 = vunpack.c.l.b16 %v415
    %v1344 = vunpack.c.h.b16 %v415
    %v1345 = vunpack.c.l.b16 %v416
    %v1346 = vunpack.c.h.b16 %v416
    %v1347 = vunpack.c.l.b16 %v417
    %v1348 = vunpack.c.h.b16 %v417
    %v1349 = vunpack.c.l.b16 %v418
    %v1350 = vunpack.c.h.b16 %v418
    %v1351 = vunpack.c.l.b16 %v419
    %v1352 = vunpack.c.h.b16 %v419
    %v1353 = vunpack.c.l.b16 %v420
    %v1354 = vunpack.c.h.b16 %v420
    %v1355 = vunpack.c.l.b16 %v421
    %v1356 = vunpack.c.h.b16 %v421
    %v1357 = vunpack.c.l.b16 %v422
    %v1358 = vunpack.c.h.b16 %v422
    %v1359 = vunpack.c.l.b16 %v423
    %v1360 = vunpack.c.h.b16 %v423
    %v1361 = vunpack.c.l.b16 %v424
    %v1362 = vunpack.c.h.b16 %v424
    %v1363 = vunpack.c.l.b16 %v425
    %v1364 = vunpack.c.h.b16 %v425
    %v1365 = vunpack.c.l.b16 %v426
    %v1366 = vunpack.c.h.b16 %v426
    %v1367 = vunpack.c.l.b16 %v427
    %v1368 = vunpack.c.h.b16 %v427
    %v1369 = vunpack.c.l.b16 %v428
    %v1370 = vunpack.c.h.b16 %v428
    %v1371 = vunpack.c.l.b16 %v429
    %v1372 = vunpack.c.h.b16 %v429
    %v1373 = vunpack.c.l.b16 %v430
    %v1374 = vunpack.c.h.b16 %v430
    %v1375 = vunpack.c.l.b16 %v431
    %v1376 = vunpack.c.h.b16 %v431
    %v1377 = vunpack.c.l.b16 %v432
    %v1378 = vunpack.c.h.b16 %v432
    %v1379 = vunpack.c.l.b16 %v433
    %v1380 = vunpack.c.h.b16 %v433
    %v1381 = vunpack.c.l.b16 %v434
    %v1382 = vunpack.c.h.b16 %v434
    %v1383 = vunpack.c.l.b16 %v435
    %v1384 = vunpack.c.h.b16 %v435
    %v1385 = vunpack.c.l.b16 %v436
    %v1386 = vunpack.c.h.b16 %v436
    %v1387 = vunpack.c.l.b16 %v437
    %v1388 = vunpack.c.h.b16 %v437
    %v1389 = vunpack.c.l.b16 %v438
    %v1390 = vunpack.c.h.b16 %v438
    %v1391 = vunpack.c.l.b16 %v439
    %v1392 = vunpack.c.h.b16 %v439
    %v1393 = vunpack.c.l.b16 %v440
    %v1394 = vunpack.c.h.b16 %v440
    %v1395 = vunpack.c.l.b16 %v441
    %v1396 = vunpack.c.h.b16 %v441
    %v1397 = vunpack.c.l.b16 %v442
    %v1398 = vunpack.c.h.b16 %v442
    %v1399 = vunpack.c.l.b16 %v443
    %v1400 = vunpack.c.h.b16 %v443
    %v1401 = vunpack.c.l.b16 %v444
    %v1402 = vunpack.c.h.b16 %v444
    %v1403 = vunpack.c.l.b16 %v445
    %v1404 = vunpack.c.h.b16 %v445
    %v1405 = vunpack.c.l.b16 %v446
    %v1406 = vunpack.c.h.b16 %v446
    %v1407 = vunpack.c.l.b16 %v447
    %v1408 = vunpack.c.h.b16 %v447
    %v1409 = vunpack.c.l.b16 %v448
    %v1410 = vunpack.c.h.b16 %v448
    %v1411 = vunpack.c.l.b16 %v449
    %v1412 = vunpack.c.h.b16 %v449
    %v1413 = vunpack.c.l.b16 %v450
    %v1414 = vunpack.c.h.b16 %v450
    %v1415 = vunpack.c.l.b16 %v451
    %v1416 = vunpack.c.h.b16 %v451
    %v1417 = vunpack.c.l.b16 %v452
    %v1418 = vunpack.c.h.b16 %v452
    %v1419 = vunpack.c.l.b16 %v453
    %v1420 = vunpack.c.h.b16 %v453
    %v1421 = vunpack.c.l.b16 %v454
    %v1422 = vunpack.c.h.b16 %v454
    %v1423 = vunpack.c.l.b16 %v455
    %v1424 = vunpack.c.h.b16 %v455
    %v1425 = vunpack.c.l.b16 %v456
    %v1426 = vunpack.c.h.b16 %v456
    %v1427 = vunpack.c.l.b16 %v457
    %v1428 = vunpack.c.h.b16 %v457
    %v1429 = vunpack.c.l.b16 %v458
    %v1430 = vunpack.c.h.b16 %v458
    %v1431 = vunpack.c.l.b16 %v459
    %v1432 = vunpack.c.h.b16 %v459
    %v1433 = vunpack.c.l.b16 %v460
    %v1434 = vunpack.c.h.b16 %v460
    %v1435 = vunpack.c.l.b16 %v461
    %v1436 = vunpack.c.h.b16 %v461
    %v1437 = vunpack.c.l.b16 %v462
    %v1438 = vunpack.c.h.b16 %v462
    %v1439 = vunpack.c.l.b16 %v463
    %v1440 = vunpack.c.h.b16 %v463
    %v1441 = vunpack.c.l.b16 %v464
    %v1442 = vunpack.c.h.b16 %v464
    %v1443 = vunpack.c.l.b16 %v465
    %v1444 = vunpack.c.h.b16 %v465
    %v1445 = vunpack.c.l.b16 %v466
    %v1446 = vunpack.c.h.b16 %v466
    %v1447 = vunpack.c.l.b16 %v467
    %v1448 = vunpack.c.h.b16 %v467
    %v1449 = vunpack.c.l.b16 %v468
    %v1450 = vunpack.c.h.b16 %v468
    %v1451 = vunpack.c.l.b16 %v469
    %v1452 = vunpack.c.h.b16 %v469
    %v1453 = vunpack.c.l.b16 %v470
    %v1454 = vunpack.c.h.b16 %v470
    %v1455 = vunpack.c.l.b16 %v471
    %v1456 = vunpack.c.h.b16 %v471
    %v1457 = vunpack.c.l.b16 %v472
    %v1458 = vunpack.c.h.b16 %v472
    %v1459 = vunpack.c.l.b16 %v473
    %v1460 = vunpack.c.h.b16 %v473
    %v1461 = vunpack.c.l.b16 %v474
    %v1462 = vunpack.c.h.b16 %v474
    %v1463 = vunpack.c.l.b16 %v475
    %v1464 = vunpack.c.h.b16 %v475
    %v1465 = vunpack.c.l.b16 %v476
    %v1466 = vunpack.c.h.b16 %v476
    %v1467 = vunpack.c.l.b16 %v477
    %v1468 = vunpack.c.h.b16 %v477
    %v1469 = vunpack.c.l.b16 %v478
    %v1470 = vunpack.c.h.b16 %v478
    %v1471 = vunpack.c.l.b16 %v479
    %v1472 = vunpack.c.h.b16 %v479
    %v1473 = vunpack.c.l.b16 %v480
    %v1474 = vunpack.c.h.b16 %v480
    %v1475 = vunpack.c.l.b16 %v481
    %v1476 = vunpack.c.h.b16 %v481
    %v1477 = vunpack.c.l.b16 %v482
    %v1478 = vunpack.c.h.b16 %v482
    %v1479 = vunpack.c.l.b16 %v483
    %v1480 = vunpack.c.h.b16 %v483
    %v1481 = vunpack.c.l.b16 %v484
    %v1482 = vunpack.c.h.b16 %v484
    %v1483 = vunpack.c.l.b16 %v485
    %v1484 = vunpack.c.h.b16 %v485
    %v1485 = vunpack.c.l.b16 %v486
    %v1486 = vunpack.c.h.b16 %v486
    %v1487 = vunpack.c.l.b16 %v487
    %v1488 = vunpack.c.h.b16 %v487
    %v1489 = vunpack.c.l.b16 %v488
    %v1490 = vunpack.c.h.b16 %v488
    %v1491 = vunpack.c.l.b16 %v489
    %v1492 = vunpack.c.h.b16 %v489
    %v1493 = vunpack.c.l.b16 %v490
    %v1494 = vunpack.c.h.b16 %v490
    %v1495 = vunpack.c.l.b16 %v491
    %v1496 = vunpack.c.h.b16 %v491
    %v1497 = vunpack.c.l.b16 %v492
    %v1498 = vunpack.c.h.b16 %v492
    %v1499 = vunpack.c.l.b16 %v493
    %v1500 = vunpack.c.h.b16 %v493
    %v1501 = vunpack.c.l.b16 %v494
    %v1502 = vunpack.c.h.b16 %v494
    %v1503 = vunpack.c.l.b16 %v495
    %v1504 = vunpack.c.h.b16 %v495
    %v1505 = vunpack.c.l.b16 %v496
    %v1506 = vunpack.c.h.b16 %v496
    %v1507 = vunpack.c.l.b16 %v497
    %v1508 = vunpack.c.h.b16 %v497
    %v1509 = vunpack.c.l.b16 %v498
    %v1510 = vunpack.c.h.b16 %v498
    %v1511 = vunpack.c.l.b16 %v499
    %v1512 = vunpack.c.h.b16 %v499
    %v1513 = vunpack.c.l.b16 %v500
    %v1514 = vunpack.c.h.b16 %v500
    %v1515 = vunpack.c.l.b16 %v501
    %v1516 = vunpack.c.h.b16 %v501
    %v1517 = vunpack.c.l.b16 %v502
    %v1518 = vunpack.c.h.b16 %v502
    %v1519 = vunpack.c.l.b16 %v503
    %v1520 = vunpack.c.h.b16 %v503
    %v1521 = vunpack.c.l.b16 %v504
    %v1522 = vunpack.c.h.b16 %v504
    %v1523 = vunpack.c.l.b16 %v505
    %v1524 = vunpack.c.h.b16 %v505
    %v1525 = vunpack.c.l.b16 %v506
    %v1526 = vunpack.c.h.b16 %v506
    %v1527 = vunpack.c.l.b16 %v507
    %v1528 = vunpack.c.h.b16 %v507
    %v1529 = vunpack.c.l.b16 %v508
    %v1530 = vunpack.c.h.b16 %v508
    %v1531 = vunpack.c.l.b16 %v509
    %v1532 = vunpack.c.h.b16 %v509
    %v1533 = vunpack.c.l.b16 %v510
    %v1534 = vunpack.c.h.b16 %v510
    %v1535 = vunpack.c.l.b16 %v511
    %v1536 = vunpack.c.h.b16 %v511
    %v1537 = vunpack.c.l.b16 %v512
    %v1538 = vunpack.c.h.b16 %v512
    %v1539 = vunpack.c.l.b16 %v513
    %v1540 = vunpack.c.h.b16 %v513
    %v1541 = vunpack.c.l.b16 %v514
    %v1542 = vunpack.c.h.b16 %v514
    %v1543 = vunpack.c.l.b16 %v515
    %v1544 = vunpack.c.h.b16 %v515
    %v1545 = vunpack.c.l.b16 %v516
    %v1546 = vunpack.c.h.b16 %v516
    %v1547 = vunpack.c.l.b16 %v517
    %v1548 = vunpack.c.h.b16 %v517
    %v1549 = vunpack.c.l.b16 %v518
    %v1550 = vunpack.c.h.b16 %v518
    %v1551 = vunpack.c.l.b16 %v519
    %v1552 = vunpack.c.h.b16 %v519
    %v1553 = vunpack.c.l.b16 %v520
    %v1554 = vunpack.c.h.b16 %v520
    %v1555 = vunpack.c.l.b16 %v521
    %v1556 = vunpack.c.h.b16 %v521
    %v1557 = vunpack.c.l.b16 %v522
    %v1558 = vunpack.c.h.b16 %v522
    %v1559 = vunpack.c.l.b16 %v523
    %v1560 = vunpack.c.h.b16 %v523
    %v1561 = vunpack.c.l.b16 %v524
    %v1562 = vunpack.c.h.b16 %v524
    %v1563 = vunpack.c.l.b16 %v525
    %v1564 = vunpack.c.h.b16 %v525
    %v1565 = vunpack.c.l.b16 %v526
    %v1566 = vunpack.c.h.b16 %v526
    %v1567 = vunpack.c.l.b16 %v527
    %v1568 = vunpack.c.h.b16 %v527
    %v1569 = vunpack.c.l.b16 %v528
    %v1570 = vunpack.c.h.b16 %v528
    %v1571 = vunpack.c.l.b16 %v529
    %v1572 = vunpack.c.h.b16 %v529
    %v1573 = vunpack.c.l.b16 %v530
    %v1574 = vunpack.c.h.b16 %v530
    %v1575 = vunpack.c.l.b16 %v531
    %v1576 = vunpack.c.h.b16 %v531
    %v1577 = vunpack.c.l.b16 %v532
    %v1578 = vunpack.c.h.b16 %v532
    %v1579 = vunpack.c.l.b16 %v533
    %v1580 = vunpack.c.h.b16 %v533
    %v1581 = vunpack.c.l.b16 %v534
    %v1582 = vunpack.c.h.b16 %v534
    %v1583 = vunpack.c.l.b16 %v535
    %v1584 = vunpack.c.h.b16 %v535
    %v1585 = vunpack.c.l.b16 %v536
    %v1586 = vunpack.c.h.b16 %v536
    %v1587 = vunpack.c.l.b16 %v537
    %v1588 = vunpack.c.h.b16 %v537
    %v1589 = vunpack.c.l.b16 %v538
    %v1590 = vunpack.c.h.b16 %v538
    %v1591 = vunpack.c.l.b16 %v539
    %v1592 = vunpack.c.h.b16 %v539
    %v1593 = vunpack.c.l.b16 %v540
    %v1594 = vunpack.c.h.b16 %v540
    %v1595 = vunpack.c.l.b16 %v541
    %v1596 = vunpack.c.h.b16 %v541
    %v1597 = vunpack.c.l.b16 %v542
    %v1598 = vunpack.c.h.b16 %v542
    %v1599 = vunpack.c.l.b16 %v543
    %v1600 = vunpack.c.h.b16 %v543
    %v1601 = vunpack.c.l.b16 %v544
    %v1602 = vunpack.c.h.b16 %v544
    %v1603 = vunpack.c.l.b16 %v545
    %v1604 = vunpack.c.h.b16 %v545
    %v1605 = vunpack.c.l.b16 %v546
    %v1606 = vunpack.c.h.b16 %v546
    %v1607 = vunpack.c.l.b16 %v547
    %v1608 = vunpack.c.h.b16 %v547
    %v1609 = vunpack.c.l.b16 %v548
    %v1610 = vunpack.c.h.b16 %v548
    %v1611 = vunpack.c.l.b16 %v549
    %v1612 = vunpack.c.h.b16 %v549
    %v1613 = vunpack.c.l.b16 %v550
    %v1614 = vunpack.c.h.b16 %v550
    %v1615 = vunpack.c.l.b16 %v551
    %v1616 = vunpack.c.h.b16 %v551
    %v1617 = vunpack.c.l.b16 %v552
    %v1618 = vunpack.c.h.b16 %v552
    %v1619 = vunpack.c.l.b16 %v553
    %v1620 = vunpack.c.h.b16 %v553
    %v1621 = vunpack.c.l.b16 %v554
    %v1622 = vunpack.c.h.b16 %v554
    %v1623 = vunpack.c.l.b16 %v555
    %v1624 = vunpack.c.h.b16 %v555
    %v1625 = vunpack.c.l.b16 %v556
    %v1626 = vunpack.c.h.b16 %v556
    %v1627 = vunpack.c.l.b16 %v557
    %v1628 = vunpack.c.h.b16 %v557
    %v1629 = vunpack.c.l.b16 %v558
    %v1630 = vunpack.c.h.b16 %v558
    %v1631 = vunpack.c.l.b16 %v559
    %v1632 = vunpack.c.h.b16 %v559
    %v1633 = vunpack.c.l.b16 %v560
    %v1634 = vunpack.c.h.b16 %v560
    %v1635 = vunpack.c.l.b16 %v561
    %v1636 = vunpack.c.h.b16 %v561
    %v1637 = vunpack.c.l.b16 %v562
    %v1638 = vunpack.c.h.b16 %v562
    %v1639 = vunpack.c.l.b16 %v563
    %v1640 = vunpack.c.h.b16 %v563
    %v1641 = vunpack.c.l.b16 %v564
    %v1642 = vunpack.c.h.b16 %v564
    %v1643 = vunpack.c.l.b16 %v565
    %v1644 = vunpack.c.h.b16 %v565
    %v1645 = vunpack.c.l.b16 %v566
    %v1646 = vunpack.c.h.b16 %v566
    %v1647 = vunpack.c.l.b16 %v567
    %v1648 = vunpack.c.h.b16 %v567
    %v1649 = vunpack.c.l.b16 %v568
    %v1650 = vunpack.c.h.b16 %v568
    %v1651 = vunpack.c.l.b16 %v569
    %v1652 = vunpack.c.h.b16 %v569
    %v1653 = vunpack.c.l.b16 %v570
    %v1654 = vunpack.c.h.b16 %v570
    %v1655 = vunpack.c.l.b16 %v571
    %v1656 = vunpack.c.h.b16 %v571
    %v1657 = vunpack.c.l.b16 %v572
    %v1658 = vunpack.c.h.b16 %v572
    %v1659 = vunpack.c.l.b16 %v573
    %v1660 = vunpack.c.h.b16 %v573
    %v1661 = vunpack.c.l.b16 %v574
    %v1662 = vunpack.c.h.b16 %v574
    %v1663 = vunpack.c.l.b16 %v575
    %v1664 = vunpack.c.h.b16 %v575
    %v1665 = vunpack.c.l.b16 %v576
    %v1666 = vunpack.c.h.b16 %v576
    %v1667 = vunpack.c.l.b16 %v577
    %v1668 = vunpack.c.h.b16 %v577
    %v1669 = vunpack.c.l.b16 %v578
    %v1670 = vunpack.c.h.b16 %v578
    %v1671 = vunpack.c.l.b16 %v579
    %v1672 = vunpack.c.h.b16 %v579
    %v1673 = vunpack.c.l.b16 %v580
    %v1674 = vunpack.c.h.b16 %v580
    %v1675 = vunpack.c.l.b16 %v581
    %v1676 = vunpack.c.h.b16 %v581
    %v1677 = vunpack.c.l.b16 %v582
    %v1678 = vunpack.c.h.b16 %v582
    %v1679 = vunpack.c.l.b16 %v583
    %v1680 = vunpack.c.h.b16 %v583
    %v1681 = vunpack.c.l.b16 %v584
    %v1682 = vunpack.c.h.b16 %v584
    %v1683 = vunpack.c.l.b16 %v585
    %v1684 = vunpack.c.h.b16 %v585
    %v1685 = vunpack.c.l.b16 %v586
    %v1686 = vunpack.c.h.b16 %v586
    %v1687 = vunpack.c.l.b16 %v587
    %v1688 = vunpack.c.h.b16 %v587
    %v1689 = vunpack.c.l.b16 %v588
    %v1690 = vunpack.c.h.b16 %v588
    %v1691 = vunpack.c.l.b16 %v589
    %v1692 = vunpack.c.h.b16 %v589
    %v1693 = vunpack.c.l.b16 %v590
    %v1694 = vunpack.c.h.b16 %v590
    %v1695 = vunpack.c.l.b16 %v591
    %v1696 = vunpack.c.h.b16 %v591
    %v1697 = vunpack.c.l.b16 %v592
    %v1698 = vunpack.c.h.b16 %v592
    %v1699 = vunpack.c.l.b16 %v593
    %v1700 = vunpack.c.h.b16 %v593
    %v1701 = vunpack.c.l.b16 %v594
    %v1702 = vunpack.c.h.b16 %v594
    %v1703 = vunpack.c.l.b16 %v595
    %v1704 = vunpack.c.h.b16 %v595
    %v1705 = vunpack.c.l.b16 %v596
    %v1706 = vunpack.c.h.b16 %v596
    %v1707 = vunpack.c.l.b16 %v597
    %v1708 = vunpack.c.h.b16 %v597
    %v1709 = vunpack.c.l.b16 %v598
    %v1710 = vunpack.c.h.b16 %v598
    %v1711 = vunpack.c.l.b16 %v599
    %v1712 = vunpack.c.h.b16 %v599
    %v1713 = vunpack.c.l.b16 %v600
    %v1714 = vunpack.c.h.b16 %v600
    %v1715 = vunpack.c.l.b16 %v601
    %v1716 = vunpack.c.h.b16 %v601
    %v1717 = vunpack.c.l.b16 %v602
    %v1718 = vunpack.c.h.b16 %v602
    %v1719 = vunpack.c.l.b16 %v603
    %v1720 = vunpack.c.h.b16 %v603
    %v1721 = vunpack.c.l.b16 %v604
    %v1722 = vunpack.c.h.b16 %v604
    %v1723 = vunpack.c.l.b16 %v605
    %v1724 = vunpack.c.h.b16 %v605
    %v1725 = vunpack.c.l.b16 %v606
    %v1726 = vunpack.c.h.b16 %v606
    %v1727 = vunpack.c.l.b16 %v607
    %v1728 = vunpack.c.h.b16 %v607
    %v1729 = vunpack.c.l.b16 %v608
    %v1730 = vunpack.c.h.b16 %v608
    %v1731 = vunpack.c.l.b16 %v609
    %v1732 = vunpack.c.h.b16 %v609
    %v1733 = vunpack.c.l.b16 %v610
    %v1734 = vunpack.c.h.b16 %v610
    %v1735 = vunpack.c.l.b16 %v611
    %v1736 = vunpack.c.h.b16 %v611
    %v1737 = vunpack.c.l.b16 %v612
    %v1738 = vunpack.c.h.b16 %v612
    %v1739 = vunpack.c.l.b16 %v613
    %v1740 = vunpack.c.h.b16 %v613
    %v1741 = vunpack.c.l.b16 %v614
    %v1742 = vunpack.c.h.b16 %v614
    %v1743 = vunpack.c.l.b16 %v615
    %v1744 = vunpack.c.h.b16 %v615
    %v1745 = vunpack.c.l.b16 %v616
    %v1746 = vunpack.c.h.b16 %v616
    %v1747 = vunpack.c.l.b16 %v617
    %v1748 = vunpack.c.h.b16 %v617
    %v1749 = vunpack.c.l.b16 %v618
    %v1750 = vunpack.c.h.b16 %v618
    %v1751 = vunpack.c.l.b16 %v619
    %v1752 = vunpack.c.h.b16 %v619
    %v1753 = vunpack.c.l.b16 %v620
    %v1754 = vunpack.c.h.b16 %v620
    %v1755 = vunpack.c.l.b16 %v621
    %v1756 = vunpack.c.h.b16 %v621
    %v1757 = vunpack.c.l.b16 %v622
    %v1758 = vunpack.c.h.b16 %v622
    %v1759 = vunpack.c.l.b16 %v623
    %v1760 = vunpack.c.h.b16 %v623
    %v1761 = vunpack.c.l.b16 %v624
    %v1762 = vunpack.c.h.b16 %v624
    %v1763 = vunpack.c.l.b16 %v625
    %v1764 = vunpack.c.h.b16 %v625
    %v1765 = vunpack.c.l.b16 %v626
    %v1766 = vunpack.c.h.b16 %v626
    %v1767 = vunpack.c.l.b16 %v627
    %v1768 = vunpack.c.h.b16 %v627
    %v1769 = vunpack.c.l.b16 %v628
    %v1770 = vunpack.c.h.b16 %v628
    %v1771 = vunpack.c.l.b16 %v629
    %v1772 = vunpack.c.h.b16 %v629
    %v1773 = vunpack.c.l.b16 %v630
    %v1774 = vunpack.c.h.b16 %v630
    %v1775 = vunpack.c.l.b16 %v631
    %v1776 = vunpack.c.h.b16 %v631
    %v1777 = vunpack.c.l.b16 %v632
    %v1778 = vunpack.c.h.b16 %v632
    %v1779 = vunpack.c.l.b16 %v633
    %v1780 = vunpack.c.h.b16 %v633
    %v1781 = vunpack.c.l.b16 %v634
    %v1782 = vunpack.c.h.b16 %v634
    %v1783 = vunpack.c.l.b16 %v635
    %v1784 = vunpack.c.h.b16 %v635
    %v1785 = vunpack.c.l.b16 %v636
    %v1786 = vunpack.c.h.b16 %v636
    %v1787 = vunpack.c.l.b16 %v637
    %v1788 = vunpack.c.h.b16 %v637
    %v1789 = vunpack.c.l.b16 %v638
    %v1790 = vunpack.c.h.b16 %v638
    %v1791 = vpack.c.b16 %v1035, %v1023
    %v1792 = vpack.c.b16 %v1036, %v1024
    %v1793 = vpack.c.b16 %v1037, %v1025
    %v1794 = vpack.c.b16 %v1038, %v1026
    %v1795 = vpack.c.b16 %v1039, %v1027
    %v1796 = vpack.c.b16 %v1040, %v1028
    %v1797 = vpack.c.b16 %v1041, %v1029
    %v1798 = vpack.c.b16 %v1042, %v1030
    %v1799 = vpack.c.b16 %v1043, %v1031
    %v1800 = vpack.c.b16 %v1044, %v1032
    %v1801 = vpack.c.b16 %v1045, %v1033
    %v1802 = vpack.c.b16 %v1046, %v1034
    %v1803 = vpack.c.b16 %v1059, %v1047
    %v1804 = vpack.c.b16 %v1060, %v1048
    %v1805 = vpack.c.b16 %v1061, %v1049
    %v1806 = vpack.c.b16 %v1062, %v1050
    %v1807 = vpack.c.b16 %v1063, %v1051
    %v1808 = vpack.c.b16 %v1064, %v1052
    %v1809 = vpack.c.b16 %v1065, %v1053
    %v1810 = vpack.c.b16 %v1066, %v1054
    %v1811 = vpack.c.b16 %v1067, %v1055
    %v1812 = vpack.c.b16 %v1068, %v1056
    %v1813 = vpack.c.b16 %v1069, %v1057
    %v1814 = vpack.c.b16 %v1070, %v1058
    %v1815 = vpack.c.b16 %v1083, %v1071
    %v1816 = vpack.c.b16 %v1084, %v1072
    %v1817 = vpack.c.b16 %v1085, %v1073
    %v1818 = vpack.c.b16 %v1086, %v1074
    %v1819 = vpack.c.b16 %v1087, %v1075
    %v1820 = vpack.c.b16 %v1088, %v1076
    %v1821 = vpack.c.b16 %v1089, %v1077
    %v1822 = vpack.c.b16 %v1090, %v1078
    %v1823 = vpack.c.b16 %v1091, %v1079
    %v1824 = vpack.c.b16 %v1092, %v1080
    %v1825 = vpack.c.b16 %v1093, %v1081
    %v1826 = vpack.c.b16 %v1094, %v1082
    %v1827 = vpack.c.b16 %v1107, %v1095
    %v1828 = vpack.c.b16 %v1108, %v1096
    %v1829 = vpack.c.b16 %v1109, %v1097
    %v1830 = vpack.c.b16 %v1110, %v1098
    %v1831 = vpack.c.b16 %v1111, %v1099
    %v1832 = vpack.c.b16 %v1112, %v1100
    %v1833 = vpack.c.b16 %v1113, %v1101
    %v1834 = vpack.c.b16 %v1114, %v1102
    %v1835 = vpack.c.b16 %v1115, %v1103
    %v1836 = vpack.c.b16 %v1116, %v1104
    %v1837 = vpack.c.b16 %v1117, %v1105
    %v1838 = vpack.c.b16 %v1118, %v1106
    %v1839 = vpack.c.b16 %v1131, %v1119
    %v1840 = vpack.c.b16 %v1132, %v1120
    %v1841 = vpack.c.b16 %v1133, %v1121
    %v1842 = vpack.c.b16 %v1134, %v1122
    %v1843 = vpack.c.b16 %v1135, %v1123
    %v1844 = vpack.c.b16 %v1136, %v1124
    %v1845 = vpack.c.b16 %v1137, %v1125
    %v1846 = vpack.c.b16 %v1138, %v1126
    %v1847 = vpack.c.b16 %v1139, %v1127
    %v1848 = vpack.c.b16 %v1140, %v1128
    %v1849 = vpack.c.b16 %v1141, %v1129
    %v1850 = vpack.c.b16 %v1142, %v1130
    %v1851 = vpack.c.b16 %v1155, %v1143
    %v1852 = vpack.c.b16 %v1156, %v1144
    %v1853 = vpack.c.b16 %v1157, %v1145
    %v1854 = vpack.c.b16 %v1158, %v1146
    %v1855 = vpack.c.b16 %v1159, %v1147
    %v1856 = vpack.c.b16 %v1160, %v1148
    %v1857 = vpack.c.b16 %v1161, %v1149
    %v1858 = vpack.c.b16 %v1162, %v1150
    %v1859 = vpack.c.b16 %v1163, %v1151
    %v1860 = vpack.c.b16 %v1164, %v1152
    %v1861 = vpack.c.b16 %v1165, %v1153
    %v1862 = vpack.c.b16 %v1166, %v1154
    %v1863 = vpack.c.b16 %v1179, %v1167
    %v1864 = vpack.c.b16 %v1180, %v1168
    %v1865 = vpack.c.b16 %v1181, %v1169
    %v1866 = vpack.c.b16 %v1182, %v1170
    %v1867 = vpack.c.b16 %v1183, %v1171
    %v1868 = vpack.c.b16 %v1184, %v1172
    %v1869 = vpack.c.b16 %v1185, %v1173
    %v1870 = vpack.c.b16 %v1186, %v1174
    %v1871 = vpack.c.b16 %v1187, %v1175
    %v1872 = vpack.c.b16 %v1188, %v1176
    %v1873 = vpack.c.b16 %v1189, %v1177
    %v1874 = vpack.c.b16 %v1190, %v1178
    %v1875 = vpack.c.b16 %v1203, %v1191
    %v1876 = vpack.c.b16 %v1204, %v1192
    %v1877 = vpack.c.b16 %v1205, %v1193
    %v1878 = vpack.c.b16 %v1206, %v1194
    %v1879 = vpack.c.b16 %v1207, %v1195
    %v1880 = vpack.c.b16 %v1208, %v1196
    %v1881 = vpack.c.b16 %v1209, %v1197
    %v1882 = vpack.c.b16 %v1210, %v1198
    %v1883 = vpack.c.b16 %v1211, %v1199
    %v1884 = vpack.c.b16 %v1212, %v1200
    %v1885 = vpack.c.b16 %v1213, %v1201
    %v1886 = vpack.c.b16 %v1214, %v1202
    %v1887 = vpack.c.b16 %v1227, %v1215
    %v1888 = vpack.c.b16 %v1228, %v1216
    %v1889 = vpack.c.b16 %v1229, %v1217
    %v1890 = vpack.c.b16 %v1230, %v1218
    %v1891 = vpack.c.b16 %v1231, %v1219
    %v1892 = vpack.c.b16 %v1232, %v1220
    %v1893 = vpack.c.b16 %v1233, %v1221
    %v1894 = vpack.c.b16 %v1234, %v1222
    %v1895 = vpack.c.b16 %v1235, %v1223
    %v1896 = vpack.c.b16 %v1236, %v1224
    %v1897 = vpack.c.b16 %v1237, %v1225
    %v1898 = vpack.c.b16 %v1238, %v1226
    %v1899 = vpack.c.b16 %v1251, %v1239
    %v1900 = vpack.c.b16 %v1252, %v1240
    %v1901 = vpack.c.b16 %v1253, %v1241
    %v1902 = vpack.c.b16 %v1254, %v1242
    %v1903 = vpack.c.b16 %v1255, %v1243
    %v1904 = vpack.c.b16 %v1256, %v1244
    %v1905 = vpack.c.b16 %v1257, %v1245
    %v1906 = vpack.c.b16 %v1258, %v1246
    %v1907 = vpack.c.b16 %v1259, %v1247
    %v1908 = vpack.c.b16 %v1260, %v1248
    %v1909 = vpack.c.b16 %v1261, %v1249
    %v1910 = vpack.c.b16 %v1262, %v1250
    %v1911 = vpack.c.b16 %v1275, %v1263
    %v1912 = vpack.c.b16 %v1276, %v1264
    %v1913 = vpack.c.b16 %v1277, %v1265
    %v1914 = vpack.c.b16 %v1278, %v1266
    %v1915 = vpack.c.b16 %v1279, %v1267
    %v1916 = vpack.c.b16 %v1280, %v1268
    %v1917 = vpack.c.b16 %v1281, %v1269
    %v1918 = vpack.c.b16 %v1282, %v1270
    %v1919 = vpack.c.b16 %v1283, %v1271
    %v1920 = vpack.c.b16 %v1284, %v1272
    %v1921 = vpack.c.b16 %v1285, %v1273
    %v1922 = vpack.c.b16 %v1286, %v1274
    %v1923 = vpack.c.b16 %v1299, %v1287
    %v1924 = vpack.c.b16 %v1300, %v1288
    %v1925 = vpack.c.b16 %v1301, %v1289
    %v1926 = vpack.c.b16 %v1302, %v1290
    %v1927 = vpack.c.b16 %v1303, %v1291
    %v1928 = vpack.c.b16 %v1304, %v1292
    %v1929 = vpack.c.b16 %v1305, %v1293
    %v1930 = vpack.c.b16 %v1306, %v1294
    %v1931 = vpack.c.b16 %v1307, %v1295
    %v1932 = vpack.c.b16 %v1308, %v1296
    %v1933 = vpack.c.b16 %v1309, %v1297
    %v1934 = vpack.c.b16 %v1310, %v1298
    %v1935 = vpack.c.b16 %v1323, %v1311
    %v1936 = vpack.c.b16 %v1324, %v1312
    %v1937 = vpack.c.b16 %v1325, %v1313
    %v1938 = vpack.c.b16 %v1326, %v1314
    %v1939 = vpack.c.b16 %v1327, %v1315
    %v1940 = vpack.c.b16 %v1328, %v1316
    %v1941 = vpack.c.b16 %v1329, %v1317
    %v1942 = vpack.c.b16 %v1330, %v1318
    %v1943 = vpack.c.b16 %v1331, %v1319
    %v1944 = vpack.c.b16 %v1332, %v1320
    %v1945 = vpack.c.b16 %v1333, %v1321
    %v1946 = vpack.c.b16 %v1334, %v1322
    %v1947 = vpack.c.b16 %v1347, %v1335
    %v1948 = vpack.c.b16 %v1348, %v1336
    %v1949 = vpack.c.b16 %v1349, %v1337
    %v1950 = vpack.c.b16 %v1350, %v1338
    %v1951 = vpack.c.b16 %v1351, %v1339
    %v1952 = vpack.c.b16 %v1352, %v1340
    %v1953 = vpack.c.b16 %v1353, %v1341
    %v1954 = vpack.c.b16 %v1354, %v1342
    %v1955 = vpack.c.b16 %v1355, %v1343
    %v1956 = vpack.c.b16 %v1356, %v1344
    %v1957 = vpack.c.b16 %v1357, %v1345
    %v1958 = vpack.c.b16 %v1358, %v1346
    %v1959 = vpack.c.b16 %v1371, %v1359
    %v1960 = vpack.c.b16 %v1372, %v1360
    %v1961 = vpack.c.b16 %v1373, %v1361
    %v1962 = vpack.c.b16 %v1374, %v1362
    %v1963 = vpack.c.b16 %v1375, %v1363
    %v1964 = vpack.c.b16 %v1376, %v1364
    %v1965 = vpack.c.b16 %v1377, %v1365
    %v1966 = vpack.c.b16 %v1378, %v1366
    %v1967 = vpack.c.b16 %v1379, %v1367
    %v1968 = vpack.c.b16 %v1380, %v1368
    %v1969 = vpack.c.b16 %v1381, %v1369
    %v1970 = vpack.c.b16 %v1382, %v1370
    %v1971 = vpack.c.b16 %v1395, %v1383
    %v1972 = vpack.c.b16 %v1396, %v1384
    %v1973 = vpack.c.b16 %v1397, %v1385
    %v1974 = vpack.c.b16 %v1398, %v1386
    %v1975 = vpack.c.b16 %v1399, %v1387
    %v1976 = vpack.c.b16 %v1400, %v1388
    %v1977 = vpack.c.b16 %v1401, %v1389
    %v1978 = vpack.c.b16 %v1402, %v1390
    %v1979 = vpack.c.b16 %v1403, %v1391
    %v1980 = vpack.c.b16 %v1404, %v1392
    %v1981 = vpack.c.b16 %v1405, %v1393
    %v1982 = vpack.c.b16 %v1406, %v1394
    %v1983 = vpack.c.b16 %v1419, %v1407
    %v1984 = vpack.c.b16 %v1420, %v1408
    %v1985 = vpack.c.b16 %v1421, %v1409
    %v1986 = vpack.c.b16 %v1422, %v1410
    %v1987 = vpack.c.b16 %v1423, %v1411
    %v1988 = vpack.c.b16 %v1424, %v1412
    %v1989 = vpack.c.b16 %v1425, %v1413
    %v1990 = vpack.c.b16 %v1426, %v1414
    %v1991 = vpack.c.b16 %v1427, %v1415
    %v1992 = vpack.c.b16 %v1428, %v1416
    %v1993 = vpack.c.b16 %v1429, %v1417
    %v1994 = vpack.c.b16 %v1430, %v1418
    %v1995 = vpack.c.b16 %v1443, %v1431
    %v1996 = vpack.c.b16 %v1444, %v1432
    %v1997 = vpack.c.b16 %v1445, %v1433
    %v1998 = vpack.c.b16 %v1446, %v1434
    %v1999 = vpack.c.b16 %v1447, %v1435
    %v2000 = vpack.c.b16 %v1448, %v1436
    %v2001 = vpack.c.b16 %v1449, %v1437
    %v2002 = vpack.c.b16 %v1450, %v1438
    %v2003 = vpack.c.b16 %v1451, %v1439
    %v2004 = vpack.c.b16 %v1452, %v1440
    %v2005 = vpack.c.b16 %v1453, %v1441
    %v2006 = vpack.c.b16 %v1454, %v1442
    %v2007 = vpack.c.b16 %v1467, %v1455
    %v2008 = vpack.c.b16 %v1468, %v1456
    %v2009 = vpack.c.b16 %v1469, %v1457
    %v2010 = vpack.c.b16 %v1470, %v1458
    %v2011 = vpack.c.b16 %v1471, %v1459
    %v2012 = vpack.c.b16 %v1472, %v1460
    %v2013 = vpack.c.b16 %v1473, %v1461
    %v2014 = vpack.c.b16 %v1474, %v1462
    %v2015 = vpack.c.b16 %v1475, %v1463
    %v2016 = vpack.c.b16 %v1476, %v1464
    %v2017 = vpack.c.b16 %v1477, %v1465
    %v2018 = vpack.c.b16 %v1478, %v1466
    %v2019 = vpack.c.b16 %v1491, %v1479
    %v2020 = vpack.c.b16 %v1492, %v1480
    %v2021 = vpack.c.b16 %v1493, %v1481
    %v2022 = vpack.c.b16 %v1494, %v1482
    %v2023 = vpack.c.b16 %v1495, %v1483
    %v2024 = vpack.c.b16 %v1496, %v1484
    %v2025 = vpack.c.b16 %v1497, %v1485
    %v2026 = vpack.c.b16 %v1498, %v1486
    %v2027 = vpack.c.b16 %v1499, %v1487
    %v2028 = vpack.c.b16 %v1500, %v1488
    %v2029 = vpack.c.b16 %v1501, %v1489
    %v2030 = vpack.c.b16 %v1502, %v1490
    %v2031 = vpack.c.b16 %v1515, %v1503
    %v2032 = vpack.c.b16 %v1516, %v1504
    %v2033 = vpack.c.b16 %v1517, %v1505
    %v2034 = vpack.c.b16 %v1518, %v1506
    %v2035 = vpack.c.b16 %v1519, %v1507
    %v2036 = vpack.c.b16 %v1520, %v1508
    %v2037 = vpack.c.b16 %v1521, %v1509
    %v2038 = vpack.c.b16 %v1522, %v1510
    %v2039 = vpack.c.b16 %v1523, %v1511
    %v2040 = vpack.c.b16 %v1524, %v1512
    %v2041 = vpack.c.b16 %v1525, %v1513
    %v2042 = vpack.c.b16 %v1526, %v1514
    %v2043 = vpack.c.b16 %v1539, %v1527
    %v2044 = vpack.c.b16 %v1540, %v1528
    %v2045 = vpack.c.b16 %v1541, %v1529
    %v2046 = vpack.c.b16 %v1542, %v1530
    %v2047 = vpack.c.b16 %v1543, %v1531
    %v2048 = vpack.c.b16 %v1544, %v1532
    %v2049 = vpack.c.b16 %v1545, %v1533
    %v2050 = vpack.c.b16 %v1546, %v1534
    %v2051 = vpack.c.b16 %v1547, %v1535
    %v2052 = vpack.c.b16 %v1548, %v1536
    %v2053 = vpack.c.b16 %v1549, %v1537
    %v2054 = vpack.c.b16 %v1550, %v1538
    %v2055 = vpack.c.b16 %v1563, %v1551
    %v2056 = vpack.c.b16 %v1564, %v1552
    %v2057 = vpack.c.b16 %v1565, %v1553
    %v2058 = vpack.c.b16 %v1566, %v1554
    %v2059 = vpack.c.b16 %v1567, %v1555
    %v2060 = vpack.c.b16 %v1568, %v1556
    %v2061 = vpack.c.b16 %v1569, %v1557
    %v2062 = vpack.c.b16 %v1570, %v1558
    %v2063 = vpack.c.b16 %v1571, %v1559
    %v2064 = vpack.c.b16 %v1572, %v1560
    %v2065 = vpack.c.b16 %v1573, %v1561
    %v2066 = vpack.c.b16 %v1574, %v1562
    %v2067 = vpack.c.b16 %v1587, %v1575
    %v2068 = vpack.c.b16 %v1588, %v1576
    %v2069 = vpack.c.b16 %v1589, %v1577
    %v2070 = vpack.c.b16 %v1590, %v1578
    %v2071 = vpack.c.b16 %v1591, %v1579
    %v2072 = vpack.c.b16 %v1592, %v1580
    %v2073 = vpack.c.b16 %v1593, %v1581
    %v2074 = vpack.c.b16 %v1594, %v1582
    %v2075 = vpack.c.b16 %v1595, %v1583
    %v2076 = vpack.c.b16 %v1596, %v1584
    %v2077 = vpack.c.b16 %v1597, %v1585
    %v2078 = vpack.c.b16 %v1598, %v1586
    %v2079 = vpack.c.b16 %v1611, %v1599
    %v2080 = vpack.c.b16 %v1612, %v1600
    %v2081 = vpack.c.b16 %v1613, %v1601
    %v2082 = vpack.c.b16 %v1614, %v1602
    %v2083 = vpack.c.b16 %v1615, %v1603
    %v2084 = vpack.c.b16 %v1616, %v1604
    %v2085 = vpack.c.b16 %v1617, %v1605
    %v2086 = vpack.c.b16 %v1618, %v1606
    %v2087 = vpack.c.b16 %v1619, %v1607
    %v2088 = vpack.c.b16 %v1620, %v1608
    %v2089 = vpack.c.b16 %v1621, %v1609
    %v2090 = vpack.c.b16 %v1622, %v1610
    %v2091 = vpack.c.b16 %v1635, %v1623
    %v2092 = vpack.c.b16 %v1636, %v1624
    %v2093 = vpack.c.b16 %v1637, %v1625
    %v2094 = vpack.c.b16 %v1638, %v1626
    %v2095 = vpack.c.b16 %v1639, %v1627
    %v2096 = vpack.c.b16 %v1640, %v1628
    %v2097 = vpack.c.b16 %v1641, %v1629
    %v2098 = vpack.c.b16 %v1642, %v1630
    %v2099 = vpack.c.b16 %v1643, %v1631
    %v2100 = vpack.c.b16 %v1644, %v1632
    %v2101 = vpack.c.b16 %v1645, %v1633
    %v2102 = vpack.c.b16 %v1646, %v1634
    %v2103 = vpack.c.b16 %v1659, %v1647
    %v2104 = vpack.c.b16 %v1660, %v1648
    %v2105 = vpack.c.b16 %v1661, %v1649
    %v2106 = vpack.c.b16 %v1662, %v1650
    %v2107 = vpack.c.b16 %v1663, %v1651
    %v2108 = vpack.c.b16 %v1664, %v1652
    %v2109 = vpack.c.b16 %v1665, %v1653
    %v2110 = vpack.c.b16 %v1666, %v1654
    %v2111 = vpack.c.b16 %v1667, %v1655
    %v2112 = vpack.c.b16 %v1668, %v1656
    %v2113 = vpack.c.b16 %v1669, %v1657
    %v2114 = vpack.c.b16 %v1670, %v1658
    %v2115 = vpack.c.b16 %v1683, %v1671
    %v2116 = vpack.c.b16 %v1684, %v1672
    %v2117 = vpack.c.b16 %v1685, %v1673
    %v2118 = vpack.c.b16 %v1686, %v1674
    %v2119 = vpack.c.b16 %v1687, %v1675
    %v2120 = vpack.c.b16 %v1688, %v1676
    %v2121 = vpack.c.b16 %v1689, %v1677
    %v2122 = vpack.c.b16 %v1690, %v1678
    %v2123 = vpack.c.b16 %v1691, %v1679
    %v2124 = vpack.c.b16 %v1692, %v1680
    %v2125 = vpack.c.b16 %v1693, %v1681
    %v2126 = vpack.c.b16 %v1694, %v1682
    %v2127 = vpack.c.b16 %v1707, %v1695
    %v2128 = vpack.c.b16 %v1708, %v1696
    %v2129 = vpack.c.b16 %v1709, %v1697
    %v2130 = vpack.c.b16 %v1710, %v1698
    %v2131 = vpack.c.b16 %v1711, %v1699
    %v2132 = vpack.c.b16 %v1712, %v1700
    %v2133 = vpack.c.b16 %v1713, %v1701
    %v2134 = vpack.c.b16 %v1714, %v1702
    %v2135 = vpack.c.b16 %v1715, %v1703
    %v2136 = vpack.c.b16 %v1716, %v1704
    %v2137 = vpack.c.b16 %v1717, %v1705
    %v2138 = vpack.c.b16 %v1718, %v1706
    %v2139 = vpack.c.b16 %v1731, %v1719
    %v2140 = vpack.c.b16 %v1732, %v1720
    %v2141 = vpack.c.b16 %v1733, %v1721
    %v2142 = vpack.c.b16 %v1734, %v1722
    %v2143 = vpack.c.b16 %v1735, %v1723
    %v2144 = vpack.c.b16 %v1736, %v1724
    %v2145 = vpack.c.b16 %v1737, %v1725
    %v2146 = vpack.c.b16 %v1738, %v1726
    %v2147 = vpack.c.b16 %v1739, %v1727
    %v2148 = vpack.c.b16 %v1740, %v1728
    %v2149 = vpack.c.b16 %v1741, %v1729
    %v2150 = vpack.c.b16 %v1742, %v1730
    %v2151 = vpack.c.b16 %v1755, %v1743
    %v2152 = vpack.c.b16 %v1756, %v1744
    %v2153 = vpack.c.b16 %v1757, %v1745
    %v2154 = vpack.c.b16 %v1758, %v1746
    %v2155 = vpack.c.b16 %v1759, %v1747
    %v2156 = vpack.c.b16 %v1760, %v1748
    %v2157 = vpack.c.b16 %v1761, %v1749
    %v2158 = vpack.c.b16 %v1762, %v1750
    %v2159 = vpack.c.b16 %v1763, %v1751
    %v2160 = vpack.c.b16 %v1764, %v1752
    %v2161 = vpack.c.b16 %v1765, %v1753
    %v2162 = vpack.c.b16 %v1766, %v1754
    %v2163 = vpack.c.b16 %v1779, %v1767
    %v2164 = vpack.c.b16 %v1780, %v1768
    %v2165 = vpack.c.b16 %v1781, %v1769
    %v2166 = vpack.c.b16 %v1782, %v1770
    %v2167 = vpack.c.b16 %v1783, %v1771
    %v2168 = vpack.c.b16 %v1784, %v1772
    %v2169 = vpack.c.b16 %v1785, %v1773
    %v2170 = vpack.c.b16 %v1786, %v1774
    %v2171 = vpack.c.b16 %v1787, %v1775
    %v2172 = vpack.c.b16 %v1788, %v1776
    %v2173 = vpack.c.b16 %v1789, %v1777
    %v2174 = vpack.c.b16 %v1790, %v1778
    %2559 = vmatprep.subr.bf16.mxu0 %v1792
    %2560 = vmatpush1.bf16.msra.mxu0 %v1791
    %2561 = vmatprep.subr.bf16.mxu0 %v1804
    %2562 = vmatpush1.bf16.msra.mxu0 %v1803
    %2563 = vmatprep.subr.bf16.mxu0 %v1816
    %2564 = vmatpush1.bf16.msra.mxu0 %v1815
    %2565 = vmatprep.subr.bf16.mxu0 %v1828
    %2566 = vmatpush1.bf16.msra.mxu0 %v1827
    %2567 = vmatprep.subr.bf16.mxu0 %v1840
    %2568 = vmatpush1.bf16.msra.mxu0 %v1839
    %2569 = vmatprep.subr.bf16.mxu0 %v1852
    %2570 = vmatpush1.bf16.msra.mxu0 %v1851
    %2571 = vmatprep.subr.bf16.mxu0 %v1864
    %2572 = vmatpush1.bf16.msra.mxu0 %v1863
    %2573 = vmatprep.subr.bf16.mxu0 %v1876
    %2574 = vmatpush1.bf16.msra.mxu0 %v1875
    %2575 = vmatprep.subr.bf16.mxu0 %v1888
    %2576 = vmatpush1.bf16.msra.mxu0 %v1887
    %2577 = vmatprep.subr.bf16.mxu0 %v1900
    %2578 = vmatpush1.bf16.msra.mxu0 %v1899
    %2579 = vmatprep.subr.bf16.mxu0 %v1912
    %2580 = vmatpush1.bf16.msra.mxu0 %v1911
    %2581 = vmatprep.subr.bf16.mxu0 %v1924
    %2582 = vmatpush1.bf16.msra.mxu0 %v1923
    %2583 = vmatprep.subr.bf16.mxu0 %v1936
    %2584 = vmatpush1.bf16.msra.mxu0 %v1935
    %2585 = vmatprep.subr.bf16.mxu0 %v1948
    %2586 = vmatpush1.bf16.msra.mxu0 %v1947
    %2587 = vmatprep.subr.bf16.mxu0 %v1960
    %2588 = vmatpush1.bf16.msra.mxu0 %v1959
    %2589 = vmatprep.subr.bf16.mxu0 %v1972
    %2590 = vmatpush1.bf16.msra.mxu0 %v1971
    %2591 = vmatprep.mubr.bf16.mxu0 %v252
    %2592 = vmatmul.mubr.bf16.gmra.mrb[0].mxu0 %v251
    %v2593 = vpop.f32.mrb[0].mxu0
    %v2594 = vadd.f32 0.0, %v2593
    %v2595 = vpop.f32.mrb[0].mxu0
    %v2596 = vadd.f32 0.0, %v2595
    %v2597 = vpop.f32.mrb[0].mxu0
    %v2598 = vadd.f32 0.0, %v2597
    %v2599 = vpop.f32.mrb[0].mxu0
    %v2600 = vadd.f32 0.0, %v2599
    %2601 = vdwg.mxu0
    %2602 = vmatprep.subr.bf16.mxu0 %v1984
    %2603 = vmatpush1.bf16.msra.mxu0 %v1983
    %2604 = vmatprep.subr.bf16.mxu0 %v1996
    %2605 = vmatpush1.bf16.msra.mxu0 %v1995
    %2606 = vmatprep.subr.bf16.mxu0 %v2008
    %2607 = vmatpush1.bf16.msra.mxu0 %v2007
    %2608 = vmatprep.subr.bf16.mxu0 %v2020
    %2609 = vmatpush1.bf16.msra.mxu0 %v2019
    %2610 = vmatprep.subr.bf16.mxu0 %v2032
    %2611 = vmatpush1.bf16.msra.mxu0 %v2031
    %2612 = vmatprep.subr.bf16.mxu0 %v2044
    %2613 = vmatpush1.bf16.msra.mxu0 %v2043
    %2614 = vmatprep.subr.bf16.mxu0 %v2056
    %2615 = vmatpush1.bf16.msra.mxu0 %v2055
    %2616 = vmatprep.subr.bf16.mxu0 %v2068
    %2617 = vmatpush1.bf16.msra.mxu0 %v2067
    %2618 = vmatprep.subr.bf16.mxu0 %v2080
    %2619 = vmatpush1.bf16.msra.mxu0 %v2079
    %2620 = vmatprep.subr.bf16.mxu0 %v2092
    %2621 = vmatpush1.bf16.msra.mxu0 %v2091
    %2622 = vmatprep.subr.bf16.mxu0 %v2104
    %2623 = vmatpush1.bf16.msra.mxu0 %v2103
    %2624 = vmatprep.subr.bf16.mxu0 %v2116
    %2625 = vmatpush1.bf16.msra.mxu0 %v2115
    %2626 = vmatprep.subr.bf16.mxu0 %v2128
    %2627 = vmatpush1.bf16.msra.mxu0 %v2127
    %2628 = vmatprep.subr.bf16.mxu0 %v2140
    %2629 = vmatpush1.bf16.msra.mxu0 %v2139
    %2630 = vmatprep.subr.bf16.mxu0 %v2152
    %2631 = vmatpush1.bf16.msra.mxu0 %v2151
    %2632 = vmatprep.subr.bf16.mxu0 %v2164
    %2633 = vmatpush1.bf16.msra.mxu0 %v2163
    %2634 = vmatprep.mubr.bf16.mxu0 %v254
    %2635 = vmatmul.mubr.bf16.gmra.mrb[0].mxu0 %v253
    %v2636 = vpop.f32.mrb[0].mxu0
    %v2637 = vadd.f32 %v2594, %v2636
    %v2638 = vpop.f32.mrb[0].mxu0
    %v2639 = vadd.f32 %v2596, %v2638
    %v2640 = vpop.f32.mrb[0].mxu0
    %v2641 = vadd.f32 %v2598, %v2640
    %v2642 = vpop.f32.mrb[0].mxu0
    %v2643 = vadd.f32 %v2600, %v2642
    %2644 = vdwg.mxu0
    %2645 = vmatprep.subr.bf16.mxu0 %v1794
    %2646 = vmatpush1.bf16.msra.mxu0 %v1793
    %2647 = vmatprep.subr.bf16.mxu0 %v1806
    %2648 = vmatpush1.bf16.msra.mxu0 %v1805
    %2649 = vmatprep.subr.bf16.mxu0 %v1818
    %2650 = vmatpush1.bf16.msra.mxu0 %v1817
    %2651 = vmatprep.subr.bf16.mxu0 %v1830
    %2652 = vmatpush1.bf16.msra.mxu0 %v1829
    %2653 = vmatprep.subr.bf16.mxu0 %v1842
    %2654 = vmatpush1.bf16.msra.mxu0 %v1841
    %2655 = vmatprep.subr.bf16.mxu0 %v1854
    %2656 = vmatpush1.bf16.msra.mxu0 %v1853
    %2657 = vmatprep.subr.bf16.mxu0 %v1866
    %2658 = vmatpush1.bf16.msra.mxu0 %v1865
    %2659 = vmatprep.subr.bf16.mxu0 %v1878
    %2660 = vmatpush1.bf16.msra.mxu0 %v1877
    %2661 = vmatprep.subr.bf16.mxu0 %v1890
    %2662 = vmatpush1.bf16.msra.mxu0 %v1889
    %2663 = vmatprep.subr.bf16.mxu0 %v1902
    %2664 = vmatpush1.bf16.msra.mxu0 %v1901
    %2665 = vmatprep.subr.bf16.mxu0 %v1914
    %2666 = vmatpush1.bf16.msra.mxu0 %v1913
    %2667 = vmatprep.subr.bf16.mxu0 %v1926
    %2668 = vmatpush1.bf16.msra.mxu0 %v1925
    %2669 = vmatprep.subr.bf16.mxu0 %v1938
    %2670 = vmatpush1.bf16.msra.mxu0 %v1937
    %2671 = vmatprep.subr.bf16.mxu0 %v1950
    %2672 = vmatpush1.bf16.msra.mxu0 %v1949
    %2673 = vmatprep.subr.bf16.mxu0 %v1962
    %2674 = vmatpush1.bf16.msra.mxu0 %v1961
    %2675 = vmatprep.subr.bf16.mxu0 %v1974
    %2676 = vmatpush1.bf16.msra.mxu0 %v1973
    %2677 = vmatprep.mubr.bf16.mxu0 %v252
    %2678 = vmatmul.mubr.bf16.gmra.mrb[0].mxu0 %v251
    %v2679 = vpop.f32.mrb[0].mxu0
    %v2680 = vadd.f32 0.0, %v2679
    %v2681 = vpop.f32.mrb[0].mxu0
    %v2682 = vadd.f32 0.0, %v2681
    %v2683 = vpop.f32.mrb[0].mxu0
    %v2684 = vadd.f32 0.0, %v2683
    %v2685 = vpop.f32.mrb[0].mxu0
    %v2686 = vadd.f32 0.0, %v2685
    %2687 = vdwg.mxu0
    %2688 = vmatprep.subr.bf16.mxu0 %v1986
    %2689 = vmatpush1.bf16.msra.mxu0 %v1985
    %2690 = vmatprep.subr.bf16.mxu0 %v1998
    %2691 = vmatpush1.bf16.msra.mxu0 %v1997
    %2692 = vmatprep.subr.bf16.mxu0 %v2010
    %2693 = vmatpush1.bf16.msra.mxu0 %v2009
    %2694 = vmatprep.subr.bf16.mxu0 %v2022
    %2695 = vmatpush1.bf16.msra.mxu0 %v2021
    %2696 = vmatprep.subr.bf16.mxu0 %v2034
    %2697 = vmatpush1.bf16.msra.mxu0 %v2033
    %2698 = vmatprep.subr.bf16.mxu0 %v2046
    %2699 = vmatpush1.bf16.msra.mxu0 %v2045
    %2700 = vmatprep.subr.bf16.mxu0 %v2058
    %2701 = vmatpush1.bf16.msra.mxu0 %v2057
    %2702 = vmatprep.subr.bf16.mxu0 %v2070
    %2703 = vmatpush1.bf16.msra.mxu0 %v2069
    %2704 = vmatprep.subr.bf16.mxu0 %v2082
    %2705 = vmatpush1.bf16.msra.mxu0 %v2081
    %2706 = vmatprep.subr.bf16.mxu0 %v2094
    %2707 = vmatpush1.bf16.msra.mxu0 %v2093
    %2708 = vmatprep.subr.bf16.mxu0 %v2106
    %2709 = vmatpush1.bf16.msra.mxu0 %v2105
    %2710 = vmatprep.subr.bf16.mxu0 %v2118
    %2711 = vmatpush1.bf16.msra.mxu0 %v2117
    %2712 = vmatprep.subr.bf16.mxu0 %v2130
    %2713 = vmatpush1.bf16.msra.mxu0 %v2129
    %2714 = vmatprep.subr.bf16.mxu0 %v2142
    %2715 = vmatpush1.bf16.msra.mxu0 %v2141
    %2716 = vmatprep.subr.bf16.mxu0 %v2154
    %2717 = vmatpush1.bf16.msra.mxu0 %v2153
    %2718 = vmatprep.subr.bf16.mxu0 %v2166
    %2719 = vmatpush1.bf16.msra.mxu0 %v2165
    %2720 = vmatprep.mubr.bf16.mxu0 %v254
    %2721 = vmatmul.mubr.bf16.gmra.mrb[0].mxu0 %v253
    %v2722 = vpop.f32.mrb[0].mxu0
    %v2723 = vadd.f32 %v2680, %v2722
    %v2724 = vpop.f32.mrb[0].mxu0
    %v2725 = vadd.f32 %v2682, %v2724
    %v2726 = vpop.f32.mrb[0].mxu0
    %v2727 = vadd.f32 %v2684, %v2726
    %v2728 = vpop.f32.mrb[0].mxu0
    %v2729 = vadd.f32 %v2686, %v2728
    %2730 = vdwg.mxu0
    %2731 = vmatprep.subr.bf16.mxu0 %v1796
    %2732 = vmatpush1.bf16.msra.mxu0 %v1795
    %2733 = vmatprep.subr.bf16.mxu0 %v1808
    %2734 = vmatpush1.bf16.msra.mxu0 %v1807
    %2735 = vmatprep.subr.bf16.mxu0 %v1820
    %2736 = vmatpush1.bf16.msra.mxu0 %v1819
    %2737 = vmatprep.subr.bf16.mxu0 %v1832
    %2738 = vmatpush1.bf16.msra.mxu0 %v1831
    %2739 = vmatprep.subr.bf16.mxu0 %v1844
    %2740 = vmatpush1.bf16.msra.mxu0 %v1843
    %2741 = vmatprep.subr.bf16.mxu0 %v1856
    %2742 = vmatpush1.bf16.msra.mxu0 %v1855
    %2743 = vmatprep.subr.bf16.mxu0 %v1868
    %2744 = vmatpush1.bf16.msra.mxu0 %v1867
    %2745 = vmatprep.subr.bf16.mxu0 %v1880
    %2746 = vmatpush1.bf16.msra.mxu0 %v1879
    %2747 = vmatprep.subr.bf16.mxu0 %v1892
    %2748 = vmatpush1.bf16.msra.mxu0 %v1891
    %2749 = vmatprep.subr.bf16.mxu0 %v1904
    %2750 = vmatpush1.bf16.msra.mxu0 %v1903
    %2751 = vmatprep.subr.bf16.mxu0 %v1916
    %2752 = vmatpush1.bf16.msra.mxu0 %v1915
    %2753 = vmatprep.subr.bf16.mxu0 %v1928
    %2754 = vmatpush1.bf16.msra.mxu0 %v1927
    %2755 = vmatprep.subr.bf16.mxu0 %v1940
    %2756 = vmatpush1.bf16.msra.mxu0 %v1939
    %2757 = vmatprep.subr.bf16.mxu0 %v1952
    %2758 = vmatpush1.bf16.msra.mxu0 %v1951
    %2759 = vmatprep.subr.bf16.mxu0 %v1964
    %2760 = vmatpush1.bf16.msra.mxu0 %v1963
    %2761 = vmatprep.subr.bf16.mxu0 %v1976
    %2762 = vmatpush1.bf16.msra.mxu0 %v1975
    %2763 = vmatprep.mubr.bf16.mxu0 %v252
    %2764 = vmatmul.mubr.bf16.gmra.mrb[0].mxu0 %v251
    %v2765 = vpop.f32.mrb[0].mxu0
    %v2766 = vadd.f32 0.0, %v2765
    %v2767 = vpop.f32.mrb[0].mxu0
    %v2768 = vadd.f32 0.0, %v2767
    %v2769 = vpop.f32.mrb[0].mxu0
    %v2770 = vadd.f32 0.0, %v2769
    %v2771 = vpop.f32.mrb[0].mxu0
    %v2772 = vadd.f32 0.0, %v2771
    %2773 = vdwg.mxu0
    %2774 = vmatprep.subr.bf16.mxu0 %v1988
    %2775 = vmatpush1.bf16.msra.mxu0 %v1987
    %2776 = vmatprep.subr.bf16.mxu0 %v2000
    %2777 = vmatpush1.bf16.msra.mxu0 %v1999
    %2778 = vmatprep.subr.bf16.mxu0 %v2012
    %2779 = vmatpush1.bf16.msra.mxu0 %v2011
    %2780 = vmatprep.subr.bf16.mxu0 %v2024
    %2781 = vmatpush1.bf16.msra.mxu0 %v2023
    %2782 = vmatprep.subr.bf16.mxu0 %v2036
    %2783 = vmatpush1.bf16.msra.mxu0 %v2035
    %2784 = vmatprep.subr.bf16.mxu0 %v2048
    %2785 = vmatpush1.bf16.msra.mxu0 %v2047
    %2786 = vmatprep.subr.bf16.mxu0 %v2060
    %2787 = vmatpush1.bf16.msra.mxu0 %v2059
    %2788 = vmatprep.subr.bf16.mxu0 %v2072
    %2789 = vmatpush1.bf16.msra.mxu0 %v2071
    %2790 = vmatprep.subr.bf16.mxu0 %v2084
    %2791 = vmatpush1.bf16.msra.mxu0 %v2083
    %2792 = vmatprep.subr.bf16.mxu0 %v2096
    %2793 = vmatpush1.bf16.msra.mxu0 %v2095
    %2794 = vmatprep.subr.bf16.mxu0 %v2108
    %2795 = vmatpush1.bf16.msra.mxu0 %v2107
    %2796 = vmatprep.subr.bf16.mxu0 %v2120
    %2797 = vmatpush1.bf16.msra.mxu0 %v2119
    %2798 = vmatprep.subr.bf16.mxu0 %v2132
    %2799 = vmatpush1.bf16.msra.mxu0 %v2131
    %2800 = vmatprep.subr.bf16.mxu0 %v2144
    %2801 = vmatpush1.bf16.msra.mxu0 %v2143
    %2802 = vmatprep.subr.bf16.mxu0 %v2156
    %2803 = vmatpush1.bf16.msra.mxu0 %v2155
    %2804 = vmatprep.subr.bf16.mxu0 %v2168
    %2805 = vmatpush1.bf16.msra.mxu0 %v2167
    %2806 = vmatprep.mubr.bf16.mxu0 %v254
    %2807 = vmatmul.mubr.bf16.gmra.mrb[0].mxu0 %v253
    %v2808 = vpop.f32.mrb[0].mxu0
    %v2809 = vadd.f32 %v2766, %v2808
    %v2810 = vpop.f32.mrb[0].mxu0
    %v2811 = vadd.f32 %v2768, %v2810
    %v2812 = vpop.f32.mrb[0].mxu0
    %v2813 = vadd.f32 %v2770, %v2812
    %v2814 = vpop.f32.mrb[0].mxu0
    %v2815 = vadd.f32 %v2772, %v2814
    %2816 = vdwg.mxu0
    %2817 = vmatprep.subr.bf16.mxu0 %v1798
    %2818 = vmatpush1.bf16.msra.mxu0 %v1797
    %2819 = vmatprep.subr.bf16.mxu0 %v1810
    %2820 = vmatpush1.bf16.msra.mxu0 %v1809
    %2821 = vmatprep.subr.bf16.mxu0 %v1822
    %2822 = vmatpush1.bf16.msra.mxu0 %v1821
    %2823 = vmatprep.subr.bf16.mxu0 %v1834
    %2824 = vmatpush1.bf16.msra.mxu0 %v1833
    %2825 = vmatprep.subr.bf16.mxu0 %v1846
    %2826 = vmatpush1.bf16.msra.mxu0 %v1845
    %2827 = vmatprep.subr.bf16.mxu0 %v1858
    %2828 = vmatpush1.bf16.msra.mxu0 %v1857
    %2829 = vmatprep.subr.bf16.mxu0 %v1870
    %2830 = vmatpush1.bf16.msra.mxu0 %v1869
    %2831 = vmatprep.subr.bf16.mxu0 %v1882
    %2832 = vmatpush1.bf16.msra.mxu0 %v1881
    %2833 = vmatprep.subr.bf16.mxu0 %v1894
    %2834 = vmatpush1.bf16.msra.mxu0 %v1893
    %2835 = vmatprep.subr.bf16.mxu0 %v1906
    %2836 = vmatpush1.bf16.msra.mxu0 %v1905
    %2837 = vmatprep.subr.bf16.mxu0 %v1918
    %2838 = vmatpush1.bf16.msra.mxu0 %v1917
    %2839 = vmatprep.subr.bf16.mxu0 %v1930
    %2840 = vmatpush1.bf16.msra.mxu0 %v1929
    %2841 = vmatprep.subr.bf16.mxu0 %v1942
    %2842 = vmatpush1.bf16.msra.mxu0 %v1941
    %2843 = vmatprep.subr.bf16.mxu0 %v1954
    %2844 = vmatpush1.bf16.msra.mxu0 %v1953
    %2845 = vmatprep.subr.bf16.mxu0 %v1966
    %2846 = vmatpush1.bf16.msra.mxu0 %v1965
    %2847 = vmatprep.subr.bf16.mxu0 %v1978
    %2848 = vmatpush1.bf16.msra.mxu0 %v1977
    %2849 = vmatprep.mubr.bf16.mxu0 %v252
    %2850 = vmatmul.mubr.bf16.gmra.mrb[0].mxu0 %v251
    %v2851 = vpop.f32.mrb[0].mxu0
    %v2852 = vadd.f32 0.0, %v2851
    %v2853 = vpop.f32.mrb[0].mxu0
    %v2854 = vadd.f32 0.0, %v2853
    %v2855 = vpop.f32.mrb[0].mxu0
    %v2856 = vadd.f32 0.0, %v2855
    %v2857 = vpop.f32.mrb[0].mxu0
    %v2858 = vadd.f32 0.0, %v2857
    %2859 = vdwg.mxu0
    %2860 = vmatprep.subr.bf16.mxu0 %v1990
    %2861 = vmatpush1.bf16.msra.mxu0 %v1989
    %2862 = vmatprep.subr.bf16.mxu0 %v2002
    %2863 = vmatpush1.bf16.msra.mxu0 %v2001
    %2864 = vmatprep.subr.bf16.mxu0 %v2014
    %2865 = vmatpush1.bf16.msra.mxu0 %v2013
    %2866 = vmatprep.subr.bf16.mxu0 %v2026
    %2867 = vmatpush1.bf16.msra.mxu0 %v2025
    %2868 = vmatprep.subr.bf16.mxu0 %v2038
    %2869 = vmatpush1.bf16.msra.mxu0 %v2037
    %2870 = vmatprep.subr.bf16.mxu0 %v2050
    %2871 = vmatpush1.bf16.msra.mxu0 %v2049
    %2872 = vmatprep.subr.bf16.mxu0 %v2062
    %2873 = vmatpush1.bf16.msra.mxu0 %v2061
    %2874 = vmatprep.subr.bf16.mxu0 %v2074
    %2875 = vmatpush1.bf16.msra.mxu0 %v2073
    %2876 = vmatprep.subr.bf16.mxu0 %v2086
    %2877 = vmatpush1.bf16.msra.mxu0 %v2085
    %2878 = vmatprep.subr.bf16.mxu0 %v2098
    %2879 = vmatpush1.bf16.msra.mxu0 %v2097
    %2880 = vmatprep.subr.bf16.mxu0 %v2110
    %2881 = vmatpush1.bf16.msra.mxu0 %v2109
    %2882 = vmatprep.subr.bf16.mxu0 %v2122
    %2883 = vmatpush1.bf16.msra.mxu0 %v2121
    %2884 = vmatprep.subr.bf16.mxu0 %v2134
    %2885 = vmatpush1.bf16.msra.mxu0 %v2133
    %2886 = vmatprep.subr.bf16.mxu0 %v2146
    %2887 = vmatpush1.bf16.msra.mxu0 %v2145
    %2888 = vmatprep.subr.bf16.mxu0 %v2158
    %2889 = vmatpush1.bf16.msra.mxu0 %v2157
    %2890 = vmatprep.subr.bf16.mxu0 %v2170
    %2891 = vmatpush1.bf16.msra.mxu0 %v2169
    %2892 = vmatprep.mubr.bf16.mxu0 %v254
    %2893 = vmatmul.mubr.bf16.gmra.mrb[0].mxu0 %v253
    %v2894 = vpop.f32.mrb[0].mxu0
    %v2895 = vadd.f32 %v2852, %v2894
    %v2896 = vpop.f32.mrb[0].mxu0
    %v2897 = vadd.f32 %v2854, %v2896
    %v2898 = vpop.f32.mrb[0].mxu0
    %v2899 = vadd.f32 %v2856, %v2898
    %v2900 = vpop.f32.mrb[0].mxu0
    %v2901 = vadd.f32 %v2858, %v2900
    %2902 = vdwg.mxu0
    %2903 = vmatprep.subr.bf16.mxu0 %v1800
    %2904 = vmatpush1.bf16.msra.mxu0 %v1799
    %2905 = vmatprep.subr.bf16.mxu0 %v1812
    %2906 = vmatpush1.bf16.msra.mxu0 %v1811
    %2907 = vmatprep.subr.bf16.mxu0 %v1824
    %2908 = vmatpush1.bf16.msra.mxu0 %v1823
    %2909 = vmatprep.subr.bf16.mxu0 %v1836
    %2910 = vmatpush1.bf16.msra.mxu0 %v1835
    %2911 = vmatprep.subr.bf16.mxu0 %v1848
    %2912 = vmatpush1.bf16.msra.mxu0 %v1847
    %2913 = vmatprep.subr.bf16.mxu0 %v1860
    %2914 = vmatpush1.bf16.msra.mxu0 %v1859
    %2915 = vmatprep.subr.bf16.mxu0 %v1872
    %2916 = vmatpush1.bf16.msra.mxu0 %v1871
    %2917 = vmatprep.subr.bf16.mxu0 %v1884
    %2918 = vmatpush1.bf16.msra.mxu0 %v1883
    %2919 = vmatprep.subr.bf16.mxu0 %v1896
    %2920 = vmatpush1.bf16.msra.mxu0 %v1895
    %2921 = vmatprep.subr.bf16.mxu0 %v1908
    %2922 = vmatpush1.bf16.msra.mxu0 %v1907
    %2923 = vmatprep.subr.bf16.mxu0 %v1920
    %2924 = vmatpush1.bf16.msra.mxu0 %v1919
    %2925 = vmatprep.subr.bf16.mxu0 %v1932
    %2926 = vmatpush1.bf16.msra.mxu0 %v1931
    %2927 = vmatprep.subr.bf16.mxu0 %v1944
    %2928 = vmatpush1.bf16.msra.mxu0 %v1943
    %2929 = vmatprep.subr.bf16.mxu0 %v1956
    %2930 = vmatpush1.bf16.msra.mxu0 %v1955
    %2931 = vmatprep.subr.bf16.mxu0 %v1968
    %2932 = vmatpush1.bf16.msra.mxu0 %v1967
    %2933 = vmatprep.subr.bf16.mxu0 %v1980
    %2934 = vmatpush1.bf16.msra.mxu0 %v1979
    %2935 = vmatprep.mubr.bf16.mxu0 %v252
    %2936 = vmatmul.mubr.bf16.gmra.mrb[0].mxu0 %v251
    %v2937 = vpop.f32.mrb[0].mxu0
    %v2938 = vadd.f32 0.0, %v2937
    %v2939 = vpop.f32.mrb[0].mxu0
    %v2940 = vadd.f32 0.0, %v2939
    %v2941 = vpop.f32.mrb[0].mxu0
    %v2942 = vadd.f32 0.0, %v2941
    %v2943 = vpop.f32.mrb[0].mxu0
    %v2944 = vadd.f32 0.0, %v2943
    %2945 = vdwg.mxu0
    %2946 = vmatprep.subr.bf16.mxu0 %v1992
    %2947 = vmatpush1.bf16.msra.mxu0 %v1991
    %2948 = vmatprep.subr.bf16.mxu0 %v2004
    %2949 = vmatpush1.bf16.msra.mxu0 %v2003
    %2950 = vmatprep.subr.bf16.mxu0 %v2016
    %2951 = vmatpush1.bf16.msra.mxu0 %v2015
    %2952 = vmatprep.subr.bf16.mxu0 %v2028
    %2953 = vmatpush1.bf16.msra.mxu0 %v2027
    %2954 = vmatprep.subr.bf16.mxu0 %v2040
    %2955 = vmatpush1.bf16.msra.mxu0 %v2039
    %2956 = vmatprep.subr.bf16.mxu0 %v2052
    %2957 = vmatpush1.bf16.msra.mxu0 %v2051
    %2958 = vmatprep.subr.bf16.mxu0 %v2064
    %2959 = vmatpush1.bf16.msra.mxu0 %v2063
    %2960 = vmatprep.subr.bf16.mxu0 %v2076
    %2961 = vmatpush1.bf16.msra.mxu0 %v2075
    %2962 = vmatprep.subr.bf16.mxu0 %v2088
    %2963 = vmatpush1.bf16.msra.mxu0 %v2087
    %2964 = vmatprep.subr.bf16.mxu0 %v2100
    %2965 = vmatpush1.bf16.msra.mxu0 %v2099
    %2966 = vmatprep.subr.bf16.mxu0 %v2112
    %2967 = vmatpush1.bf16.msra.mxu0 %v2111
    %2968 = vmatprep.subr.bf16.mxu0 %v2124
    %2969 = vmatpush1.bf16.msra.mxu0 %v2123
    %2970 = vmatprep.subr.bf16.mxu0 %v2136
    %2971 = vmatpush1.bf16.msra.mxu0 %v2135
    %2972 = vmatprep.subr.bf16.mxu0 %v2148
    %2973 = vmatpush1.bf16.msra.mxu0 %v2147
    %2974 = vmatprep.subr.bf16.mxu0 %v2160
    %2975 = vmatpush1.bf16.msra.mxu0 %v2159
    %2976 = vmatprep.subr.bf16.mxu0 %v2172
    %2977 = vmatpush1.bf16.msra.mxu0 %v2171
    %2978 = vmatprep.mubr.bf16.mxu0 %v254
    %2979 = vmatmul.mubr.bf16.gmra.mrb[0].mxu0 %v253
    %v2980 = vpop.f32.mrb[0].mxu0
    %v2981 = vadd.f32 %v2938, %v2980
    %v2982 = vpop.f32.mrb[0].mxu0
    %v2983 = vadd.f32 %v2940, %v2982
    %v2984 = vpop.f32.mrb[0].mxu0
    %v2985 = vadd.f32 %v2942, %v2984
    %v2986 = vpop.f32.mrb[0].mxu0
    %v2987 = vadd.f32 %v2944, %v2986
    %2988 = vdwg.mxu0
    %2989 = vmatprep.subr.bf16.mxu0 %v1802
    %2990 = vmatpush1.bf16.msra.mxu0 %v1801
    %2991 = vmatprep.subr.bf16.mxu0 %v1814
    %2992 = vmatpush1.bf16.msra.mxu0 %v1813
    %2993 = vmatprep.subr.bf16.mxu0 %v1826
    %2994 = vmatpush1.bf16.msra.mxu0 %v1825
    %2995 = vmatprep.subr.bf16.mxu0 %v1838
    %2996 = vmatpush1.bf16.msra.mxu0 %v1837
    %2997 = vmatprep.subr.bf16.mxu0 %v1850
    %2998 = vmatpush1.bf16.msra.mxu0 %v1849
    %2999 = vmatprep.subr.bf16.mxu0 %v1862
    %3000 = vmatpush1.bf16.msra.mxu0 %v1861
    %3001 = vmatprep.subr.bf16.mxu0 %v1874
    %3002 = vmatpush1.bf16.msra.mxu0 %v1873
    %3003 = vmatprep.subr.bf16.mxu0 %v1886
    %3004 = vmatpush1.bf16.msra.mxu0 %v1885
    %3005 = vmatprep.subr.bf16.mxu0 %v1898
    %3006 = vmatpush1.bf16.msra.mxu0 %v1897
    %3007 = vmatprep.subr.bf16.mxu0 %v1910
    %3008 = vmatpush1.bf16.msra.mxu0 %v1909
    %3009 = vmatprep.subr.bf16.mxu0 %v1922
    %3010 = vmatpush1.bf16.msra.mxu0 %v1921
    %3011 = vmatprep.subr.bf16.mxu0 %v1934
    %3012 = vmatpush1.bf16.msra.mxu0 %v1933
    %3013 = vmatprep.subr.bf16.mxu0 %v1946
    %3014 = vmatpush1.bf16.msra.mxu0 %v1945
    %3015 = vmatprep.subr.bf16.mxu0 %v1958
    %3016 = vmatpush1.bf16.msra.mxu0 %v1957
    %3017 = vmatprep.subr.bf16.mxu0 %v1970
    %3018 = vmatpush1.bf16.msra.mxu0 %v1969
    %3019 = vmatprep.subr.bf16.mxu0 %v1982
    %3020 = vmatpush1.bf16.msra.mxu0 %v1981
    %3021 = vmatprep.mubr.bf16.mxu0 %v252
    %3022 = vmatmul.mubr.bf16.gmra.mrb[0].mxu0 %v251
    %v3023 = vpop.f32.mrb[0].mxu0
    %v3024 = vadd.f32 0.0, %v3023
    %v3025 = vpop.f32.mrb[0].mxu0
    %v3026 = vadd.f32 0.0, %v3025
    %v3027 = vpop.f32.mrb[0].mxu0
    %v3028 = vadd.f32 0.0, %v3027
    %v3029 = vpop.f32.mrb[0].mxu0
    %v3030 = vadd.f32 0.0, %v3029
    %3031 = vdwg.mxu0
    %3032 = vmatprep.subr.bf16.mxu0 %v1994
    %3033 = vmatpush1.bf16.msra.mxu0 %v1993
    %3034 = vmatprep.subr.bf16.mxu0 %v2006
    %3035 = vmatpush1.bf16.msra.mxu0 %v2005
    %3036 = vmatprep.subr.bf16.mxu0 %v2018
    %3037 = vmatpush1.bf16.msra.mxu0 %v2017
    %3038 = vmatprep.subr.bf16.mxu0 %v2030
    %3039 = vmatpush1.bf16.msra.mxu0 %v2029
    %3040 = vmatprep.subr.bf16.mxu0 %v2042
    %3041 = vmatpush1.bf16.msra.mxu0 %v2041
    %3042 = vmatprep.subr.bf16.mxu0 %v2054
    %3043 = vmatpush1.bf16.msra.mxu0 %v2053
    %3044 = vmatprep.subr.bf16.mxu0 %v2066
    %3045 = vmatpush1.bf16.msra.mxu0 %v2065
    %3046 = vmatprep.subr.bf16.mxu0 %v2078
    %3047 = vmatpush1.bf16.msra.mxu0 %v2077
    %3048 = vmatprep.subr.bf16.mxu0 %v2090
    %3049 = vmatpush1.bf16.msra.mxu0 %v2089
    %3050 = vmatprep.subr.bf16.mxu0 %v2102
    %3051 = vmatpush1.bf16.msra.mxu0 %v2101
    %3052 = vmatprep.subr.bf16.mxu0 %v2114
    %3053 = vmatpush1.bf16.msra.mxu0 %v2113
    %3054 = vmatprep.subr.bf16.mxu0 %v2126
    %3055 = vmatpush1.bf16.msra.mxu0 %v2125
    %3056 = vmatprep.subr.bf16.mxu0 %v2138
    %3057 = vmatpush1.bf16.msra.mxu0 %v2137
    %3058 = vmatprep.subr.bf16.mxu0 %v2150
    %3059 = vmatpush1.bf16.msra.mxu0 %v2149
    %3060 = vmatprep.subr.bf16.mxu0 %v2162
    %3061 = vmatpush1.bf16.msra.mxu0 %v2161
    %3062 = vmatprep.subr.bf16.mxu0 %v2174
    %3063 = vmatpush1.bf16.msra.mxu0 %v2173
    %3064 = vmatprep.mubr.bf16.mxu0 %v254
    %3065 = vmatmul.mubr.bf16.gmra.mrb[0].mxu0 %v253
    %v3066 = vpop.f32.mrb[0].mxu0
    %v3067 = vadd.f32 %v3024, %v3066
    %v3068 = vpop.f32.mrb[0].mxu0
    %v3069 = vadd.f32 %v3026, %v3068
    %v3070 = vpop.f32.mrb[0].mxu0
    %v3071 = vadd.f32 %v3028, %v3070
    %v3072 = vpop.f32.mrb[0].mxu0
    %v3073 = vadd.f32 %v3030, %v3072
    %3074 = vdwg.mxu0
    %v3075 = vlaneseq
    %v3076 = vshrl.u32 %v3075, 7
    %v3077 = vlaneseq
    %v3078 = vand.u32 %v3077, 127
    %vm3079 = vcmp.le.s32.totalorder %v3078, %v3076
    %3080 = vmatprep.subr.mxu0 0.0
    %3081 = vmatpush1.xpose.msra.mxu0 %v2809
    %3082 = vmatprep.subr.mxu0 0.0
    %3083 = vmatpush1.xpose.msra.mxu0 0.0
    %3084 = vmatprep.subr.mxu0 0.0
    %3085 = vmatpush1.xpose.msra.mxu0 0.0
    %3086 = vmatprep.subr.mxu0 0.0
    %3087 = vmatpush1.xpose.msra.mxu0 0.0
    %3088 = vmatprep.subr.mxu0 0.0
    %3089 = vmatpush1.xpose.msra.mxu0 0.0
    %3090 = vmatprep.subr.mxu0 0.0
    %3091 = vmatpush1.xpose.msra.mxu0 0.0
    %3092 = vmatprep.subr.mxu0 0.0
    %3093 = vmatpush1.xpose.msra.mxu0 0.0
    %3094 = vmatprep.subr.mxu0 0.0
    %3095 = vmatpush1.xpose.msra.mxu0 0.0
    %3096 = vmatprep.subr.mxu0 0.0
    %3097 = vmatpush1.xpose.msra.mxu0 0.0
    %3098 = vmatprep.subr.mxu0 0.0
    %3099 = vmatpush1.xpose.msra.mxu0 0.0
    %3100 = vmatprep.subr.mxu0 0.0
    %3101 = vmatpush1.xpose.msra.mxu0 0.0
    %3102 = vmatprep.subr.mxu0 0.0
    %3103 = vmatpush1.xpose.msra.mxu0 0.0
    %3104 = vmatprep.subr.mxu0 0.0
    %3105 = vmatpush1.xpose.msra.mxu0 0.0
    %3106 = vmatprep.subr.mxu0 0.0
    %3107 = vmatpush1.xpose.msra.mxu0 0.0
    %3108 = vmatprep.subr.mxu0 0.0
    %3109 = vmatpush1.xpose.msra.mxu0 0.0
    %3110 = vmatprep.subr.mxu0 0.0
    %3111 = vmatpush1.xpose.msra.mxu0 0.0
    %3112 = vmatprep.subr.mxu0 0.0
    %3113 = vmatpush1.xpose.msra.mxu0 0.0
    %3114 = vmatprep.subr.mxu0 0.0
    %3115 = vmatpush1.xpose.msra.mxu0 0.0
    %3116 = vmatprep.subr.mxu0 0.0
    %3117 = vmatpush1.xpose.msra.mxu0 0.0
    %3118 = vmatprep.subr.mxu0 0.0
    %3119 = vmatpush1.xpose.msra.mxu0 0.0
    %3120 = vmatprep.subr.mxu0 0.0
    %3121 = vmatpush1.xpose.msra.mxu0 0.0
    %3122 = vmatprep.subr.mxu0 0.0
    %3123 = vmatpush1.xpose.msra.mxu0 0.0
    %3124 = vmatprep.subr.mxu0 0.0
    %3125 = vmatpush1.xpose.msra.mxu0 0.0
    %3126 = vmatprep.subr.mxu0 0.0
    %3127 = vmatpush1.xpose.msra.mxu0 0.0
    %3128 = vmatprep.subr.mxu0 0.0
    %3129 = vmatpush1.xpose.msra.mxu0 0.0
    %3130 = vmatprep.subr.mxu0 0.0
    %3131 = vmatpush1.xpose.msra.mxu0 0.0
    %3132 = vmatprep.subr.mxu0 0.0
    %3133 = vmatpush1.xpose.msra.mxu0 0.0
    %3134 = vmatprep.subr.mxu0 0.0
    %3135 = vmatpush1.xpose.msra.mxu0 0.0
    %3136 = vmatprep.subr.mxu0 0.0
    %3137 = vmatpush1.xpose.msra.mxu0 0.0
    %3138 = vmatprep.subr.mxu0 0.0
    %3139 = vmatpush1.xpose.msra.mxu0 0.0
    %3140 = vmatprep.subr.mxu0 0.0
    %3141 = vmatpush1.xpose.msra.mxu0 0.0
    %3142 = vmatprep.subr.mxu0 0.0
    %3143 = vmatpush1.xpose.msra.mxu0 0.0
    %3144 = vmatprep.mubr.f32.mxu0 0.0
    %3145 = vmatmul.mubr.f32.gmra.mrb[0].mxu0 %v2637
    %v3146 = vpop.f32.mrb[0].mxu0
    %v3147 = vadd.f32 0.0, %v3146
    %v3148 = vpop.f32.mrb[0].mxu0
    %3149 = vdwg.mxu0
    %v3150 = vmul.f32 %v3147, 0.088388346
    %v3151 = vsel %vm3079, %v3150, -1e+30
    %vm3152 = vcmask 64512
    %v3153 = vsel %vm3152, %v3151, -inf
    %3154 = vmax.xlane.f32.xlu0 %v3153
    %v3155 = vpop.xlane.xlu0 %3154
    %v3156 = vsub.f32 %v3151, %v3155
    %v3157 = vmul.f32 %v3156, 1.442695
    %v3158 = vpow.pop %v3157
    %v3159 = vsel %vm3152, %v3158, 0.0
    %3160 = vadd.xlane.f32.xlu0 %v3159
    %v3161 = vpop.xlane.xlu0 %3160
    %v3162 = vrcp.pop %v3161
    %v3163 = vmul.f32 %v3158, %v3162
    %v3165 = vsel %vm3152, %v3163, 0
    %3167 = vmatprep.subr.mxu0 0.0
    %3168 = vmatpush1.msra.mxu0 %v2981
    %3169 = vmatprep.subr.mxu0 0.0
    %3170 = vmatpush1.msra.mxu0 0.0
    %3171 = vmatprep.subr.mxu0 0.0
    %3172 = vmatpush1.msra.mxu0 0.0
    %3173 = vmatprep.subr.mxu0 0.0
    %3174 = vmatpush1.msra.mxu0 0.0
    %3175 = vmatprep.subr.mxu0 0.0
    %3176 = vmatpush1.msra.mxu0 0.0
    %3177 = vmatprep.subr.mxu0 0.0
    %3178 = vmatpush1.msra.mxu0 0.0
    %3179 = vmatprep.subr.mxu0 0.0
    %3180 = vmatpush1.msra.mxu0 0.0
    %3181 = vmatprep.subr.mxu0 0.0
    %3182 = vmatpush1.msra.mxu0 0.0
    %3183 = vmatprep.subr.mxu0 0.0
    %3184 = vmatpush1.msra.mxu0 0.0
    %3185 = vmatprep.subr.mxu0 0.0
    %3186 = vmatpush1.msra.mxu0 0.0
    %3187 = vmatprep.subr.mxu0 0.0
    %3188 = vmatpush1.msra.mxu0 0.0
    %3189 = vmatprep.subr.mxu0 0.0
    %3190 = vmatpush1.msra.mxu0 0.0
    %3191 = vmatprep.subr.mxu0 0.0
    %3192 = vmatpush1.msra.mxu0 0.0
    %3193 = vmatprep.subr.mxu0 0.0
    %3194 = vmatpush1.msra.mxu0 0.0
    %3195 = vmatprep.subr.mxu0 0.0
    %3196 = vmatpush1.msra.mxu0 0.0
    %3197 = vmatprep.subr.mxu0 0.0
    %3198 = vmatpush1.msra.mxu0 0.0
    %3199 = vmatprep.subr.mxu0 0.0
    %3200 = vmatpush1.msra.mxu0 0.0
    %3201 = vmatprep.subr.mxu0 0.0
    %3202 = vmatpush1.msra.mxu0 0.0
    %3203 = vmatprep.subr.mxu0 0.0
    %3204 = vmatpush1.msra.mxu0 0.0
    %3205 = vmatprep.subr.mxu0 0.0
    %3206 = vmatpush1.msra.mxu0 0.0
    %3207 = vmatprep.subr.mxu0 0.0
    %3208 = vmatpush1.msra.mxu0 0.0
    %3209 = vmatprep.subr.mxu0 0.0
    %3210 = vmatpush1.msra.mxu0 0.0
    %3211 = vmatprep.subr.mxu0 0.0
    %3212 = vmatpush1.msra.mxu0 0.0
    %3213 = vmatprep.subr.mxu0 0.0
    %3214 = vmatpush1.msra.mxu0 0.0
    %3215 = vmatprep.subr.mxu0 0.0
    %3216 = vmatpush1.msra.mxu0 0.0
    %3217 = vmatprep.subr.mxu0 0.0
    %3218 = vmatpush1.msra.mxu0 0.0
    %3219 = vmatprep.subr.mxu0 0.0
    %3220 = vmatpush1.msra.mxu0 0.0
    %3221 = vmatprep.subr.mxu0 0.0
    %3222 = vmatpush1.msra.mxu0 0.0
    %3223 = vmatprep.subr.mxu0 0.0
    %3224 = vmatpush1.msra.mxu0 0.0
    %3225 = vmatprep.subr.mxu0 0.0
    %3226 = vmatpush1.msra.mxu0 0.0
    %3227 = vmatprep.subr.mxu0 0.0
    %3228 = vmatpush1.msra.mxu0 0.0
    %3229 = vmatprep.subr.mxu0 0.0
    %3230 = vmatpush1.msra.mxu0 0.0
    %3231 = vmatprep.mubr.f32.mxu0 0.0
    %3232 = vmatmul.mubr.f32.gmra.mrb[0].mxu0 %v3165
    %v3233 = vpop.f32.mrb[0].mxu0
    %v3234 = vadd.f32 0.0, %v3233
    %v3235 = vpop.f32.mrb[0].mxu0
    %3236 = vdwg.mxu0
    %3237 = vmatprep.subr.mxu0 0.0
    %3238 = vmatpush1.xpose.msra.mxu0 %v2811
    %3239 = vmatprep.subr.mxu0 0.0
    %3240 = vmatpush1.xpose.msra.mxu0 0.0
    %3241 = vmatprep.subr.mxu0 0.0
    %3242 = vmatpush1.xpose.msra.mxu0 0.0
    %3243 = vmatprep.subr.mxu0 0.0
    %3244 = vmatpush1.xpose.msra.mxu0 0.0
    %3245 = vmatprep.subr.mxu0 0.0
    %3246 = vmatpush1.xpose.msra.mxu0 0.0
    %3247 = vmatprep.subr.mxu0 0.0
    %3248 = vmatpush1.xpose.msra.mxu0 0.0
    %3249 = vmatprep.subr.mxu0 0.0
    %3250 = vmatpush1.xpose.msra.mxu0 0.0
    %3251 = vmatprep.subr.mxu0 0.0
    %3252 = vmatpush1.xpose.msra.mxu0 0.0
    %3253 = vmatprep.subr.mxu0 0.0
    %3254 = vmatpush1.xpose.msra.mxu0 0.0
    %3255 = vmatprep.subr.mxu0 0.0
    %3256 = vmatpush1.xpose.msra.mxu0 0.0
    %3257 = vmatprep.subr.mxu0 0.0
    %3258 = vmatpush1.xpose.msra.mxu0 0.0
    %3259 = vmatprep.subr.mxu0 0.0
    %3260 = vmatpush1.xpose.msra.mxu0 0.0
    %3261 = vmatprep.subr.mxu0 0.0
    %3262 = vmatpush1.xpose.msra.mxu0 0.0
    %3263 = vmatprep.subr.mxu0 0.0
    %3264 = vmatpush1.xpose.msra.mxu0 0.0
    %3265 = vmatprep.subr.mxu0 0.0
    %3266 = vmatpush1.xpose.msra.mxu0 0.0
    %3267 = vmatprep.subr.mxu0 0.0
    %3268 = vmatpush1.xpose.msra.mxu0 0.0
    %3269 = vmatprep.subr.mxu0 0.0
    %3270 = vmatpush1.xpose.msra.mxu0 0.0
    %3271 = vmatprep.subr.mxu0 0.0
    %3272 = vmatpush1.xpose.msra.mxu0 0.0
    %3273 = vmatprep.subr.mxu0 0.0
    %3274 = vmatpush1.xpose.msra.mxu0 0.0
    %3275 = vmatprep.subr.mxu0 0.0
    %3276 = vmatpush1.xpose.msra.mxu0 0.0
    %3277 = vmatprep.subr.mxu0 0.0
    %3278 = vmatpush1.xpose.msra.mxu0 0.0
    %3279 = vmatprep.subr.mxu0 0.0
    %3280 = vmatpush1.xpose.msra.mxu0 0.0
    %3281 = vmatprep.subr.mxu0 0.0
    %3282 = vmatpush1.xpose.msra.mxu0 0.0
    %3283 = vmatprep.subr.mxu0 0.0
    %3284 = vmatpush1.xpose.msra.mxu0 0.0
    %3285 = vmatprep.subr.mxu0 0.0
    %3286 = vmatpush1.xpose.msra.mxu0 0.0
    %3287 = vmatprep.subr.mxu0 0.0
    %3288 = vmatpush1.xpose.msra.mxu0 0.0
    %3289 = vmatprep.subr.mxu0 0.0
    %3290 = vmatpush1.xpose.msra.mxu0 0.0
    %3291 = vmatprep.subr.mxu0 0.0
    %3292 = vmatpush1.xpose.msra.mxu0 0.0
    %3293 = vmatprep.subr.mxu0 0.0
    %3294 = vmatpush1.xpose.msra.mxu0 0.0
    %3295 = vmatprep.subr.mxu0 0.0
    %3296 = vmatpush1.xpose.msra.mxu0 0.0
    %3297 = vmatprep.subr.mxu0 0.0
    %3298 = vmatpush1.xpose.msra.mxu0 0.0
    %3299 = vmatprep.subr.mxu0 0.0
    %3300 = vmatpush1.xpose.msra.mxu0 0.0
    %3301 = vmatprep.mubr.f32.mxu0 0.0
    %3302 = vmatmul.mubr.f32.gmra.mrb[0].mxu0 %v2639
    %v3303 = vpop.f32.mrb[0].mxu0
    %v3304 = vadd.f32 0.0, %v3303
    %v3305 = vpop.f32.mrb[0].mxu0
    %3306 = vdwg.mxu0
    %v3307 = vmul.f32 %v3304, 0.088388346
    %v3308 = vsel %vm3079, %v3307, -1e+30
    %v3309 = vsel %vm3152, %v3308, -inf
    %3310 = vmax.xlane.f32.xlu0 %v3309
    %v3311 = vpop.xlane.xlu0 %3310
    %v3312 = vsub.f32 %v3308, %v3311
    %v3313 = vmul.f32 %v3312, 1.442695
    %v3314 = vpow.pop %v3313
    %v3315 = vsel %vm3152, %v3314, 0.0
    %3316 = vadd.xlane.f32.xlu0 %v3315
    %v3317 = vpop.xlane.xlu0 %3316
    %v3318 = vrcp.pop %v3317
    %v3319 = vmul.f32 %v3314, %v3318
    %v3321 = vsel %vm3152, %v3319, 0
    %3323 = vmatprep.subr.mxu0 0.0
    %3324 = vmatpush1.msra.mxu0 %v2983
    %3325 = vmatprep.subr.mxu0 0.0
    %3326 = vmatpush1.msra.mxu0 0.0
    %3327 = vmatprep.subr.mxu0 0.0
    %3328 = vmatpush1.msra.mxu0 0.0
    %3329 = vmatprep.subr.mxu0 0.0
    %3330 = vmatpush1.msra.mxu0 0.0
    %3331 = vmatprep.subr.mxu0 0.0
    %3332 = vmatpush1.msra.mxu0 0.0
    %3333 = vmatprep.subr.mxu0 0.0
    %3334 = vmatpush1.msra.mxu0 0.0
    %3335 = vmatprep.subr.mxu0 0.0
    %3336 = vmatpush1.msra.mxu0 0.0
    %3337 = vmatprep.subr.mxu0 0.0
    %3338 = vmatpush1.msra.mxu0 0.0
    %3339 = vmatprep.subr.mxu0 0.0
    %3340 = vmatpush1.msra.mxu0 0.0
    %3341 = vmatprep.subr.mxu0 0.0
    %3342 = vmatpush1.msra.mxu0 0.0
    %3343 = vmatprep.subr.mxu0 0.0
    %3344 = vmatpush1.msra.mxu0 0.0
    %3345 = vmatprep.subr.mxu0 0.0
    %3346 = vmatpush1.msra.mxu0 0.0
    %3347 = vmatprep.subr.mxu0 0.0
    %3348 = vmatpush1.msra.mxu0 0.0
    %3349 = vmatprep.subr.mxu0 0.0
    %3350 = vmatpush1.msra.mxu0 0.0
    %3351 = vmatprep.subr.mxu0 0.0
    %3352 = vmatpush1.msra.mxu0 0.0
    %3353 = vmatprep.subr.mxu0 0.0
    %3354 = vmatpush1.msra.mxu0 0.0
    %3355 = vmatprep.subr.mxu0 0.0
    %3356 = vmatpush1.msra.mxu0 0.0
    %3357 = vmatprep.subr.mxu0 0.0
    %3358 = vmatpush1.msra.mxu0 0.0
    %3359 = vmatprep.subr.mxu0 0.0
    %3360 = vmatpush1.msra.mxu0 0.0
    %3361 = vmatprep.subr.mxu0 0.0
    %3362 = vmatpush1.msra.mxu0 0.0
    %3363 = vmatprep.subr.mxu0 0.0
    %3364 = vmatpush1.msra.mxu0 0.0
    %3365 = vmatprep.subr.mxu0 0.0
    %3366 = vmatpush1.msra.mxu0 0.0
    %3367 = vmatprep.subr.mxu0 0.0
    %3368 = vmatpush1.msra.mxu0 0.0
    %3369 = vmatprep.subr.mxu0 0.0
    %3370 = vmatpush1.msra.mxu0 0.0
    %3371 = vmatprep.subr.mxu0 0.0
    %3372 = vmatpush1.msra.mxu0 0.0
    %3373 = vmatprep.subr.mxu0 0.0
    %3374 = vmatpush1.msra.mxu0 0.0
    %3375 = vmatprep.subr.mxu0 0.0
    %3376 = vmatpush1.msra.mxu0 0.0
    %3377 = vmatprep.subr.mxu0 0.0
    %3378 = vmatpush1.msra.mxu0 0.0
    %3379 = vmatprep.subr.mxu0 0.0
    %3380 = vmatpush1.msra.mxu0 0.0
    %3381 = vmatprep.subr.mxu0 0.0
    %3382 = vmatpush1.msra.mxu0 0.0
    %3383 = vmatprep.subr.mxu0 0.0
    %3384 = vmatpush1.msra.mxu0 0.0
    %3385 = vmatprep.subr.mxu0 0.0
    %3386 = vmatpush1.msra.mxu0 0.0
    %3387 = vmatprep.mubr.f32.mxu0 0.0
    %3388 = vmatmul.mubr.f32.gmra.mrb[0].mxu0 %v3321
    %v3389 = vpop.f32.mrb[0].mxu0
    %v3390 = vadd.f32 0.0, %v3389
    %v3391 = vpop.f32.mrb[0].mxu0
    %3392 = vdwg.mxu0
    %3393 = vmatprep.subr.mxu0 0.0
    %3394 = vmatpush1.xpose.msra.mxu0 %v2895
    %3395 = vmatprep.subr.mxu0 0.0
    %3396 = vmatpush1.xpose.msra.mxu0 0.0
    %3397 = vmatprep.subr.mxu0 0.0
    %3398 = vmatpush1.xpose.msra.mxu0 0.0
    %3399 = vmatprep.subr.mxu0 0.0
    %3400 = vmatpush1.xpose.msra.mxu0 0.0
    %3401 = vmatprep.subr.mxu0 0.0
    %3402 = vmatpush1.xpose.msra.mxu0 0.0
    %3403 = vmatprep.subr.mxu0 0.0
    %3404 = vmatpush1.xpose.msra.mxu0 0.0
    %3405 = vmatprep.subr.mxu0 0.0
    %3406 = vmatpush1.xpose.msra.mxu0 0.0
    %3407 = vmatprep.subr.mxu0 0.0
    %3408 = vmatpush1.xpose.msra.mxu0 0.0
    %3409 = vmatprep.subr.mxu0 0.0
    %3410 = vmatpush1.xpose.msra.mxu0 0.0
    %3411 = vmatprep.subr.mxu0 0.0
    %3412 = vmatpush1.xpose.msra.mxu0 0.0
    %3413 = vmatprep.subr.mxu0 0.0
    %3414 = vmatpush1.xpose.msra.mxu0 0.0
    %3415 = vmatprep.subr.mxu0 0.0
    %3416 = vmatpush1.xpose.msra.mxu0 0.0
    %3417 = vmatprep.subr.mxu0 0.0
    %3418 = vmatpush1.xpose.msra.mxu0 0.0
    %3419 = vmatprep.subr.mxu0 0.0
    %3420 = vmatpush1.xpose.msra.mxu0 0.0
    %3421 = vmatprep.subr.mxu0 0.0
    %3422 = vmatpush1.xpose.msra.mxu0 0.0
    %3423 = vmatprep.subr.mxu0 0.0
    %3424 = vmatpush1.xpose.msra.mxu0 0.0
    %3425 = vmatprep.subr.mxu0 0.0
    %3426 = vmatpush1.xpose.msra.mxu0 0.0
    %3427 = vmatprep.subr.mxu0 0.0
    %3428 = vmatpush1.xpose.msra.mxu0 0.0
    %3429 = vmatprep.subr.mxu0 0.0
    %3430 = vmatpush1.xpose.msra.mxu0 0.0
    %3431 = vmatprep.subr.mxu0 0.0
    %3432 = vmatpush1.xpose.msra.mxu0 0.0
    %3433 = vmatprep.subr.mxu0 0.0
    %3434 = vmatpush1.xpose.msra.mxu0 0.0
    %3435 = vmatprep.subr.mxu0 0.0
    %3436 = vmatpush1.xpose.msra.mxu0 0.0
    %3437 = vmatprep.subr.mxu0 0.0
    %3438 = vmatpush1.xpose.msra.mxu0 0.0
    %3439 = vmatprep.subr.mxu0 0.0
    %3440 = vmatpush1.xpose.msra.mxu0 0.0
    %3441 = vmatprep.subr.mxu0 0.0
    %3442 = vmatpush1.xpose.msra.mxu0 0.0
    %3443 = vmatprep.subr.mxu0 0.0
    %3444 = vmatpush1.xpose.msra.mxu0 0.0
    %3445 = vmatprep.subr.mxu0 0.0
    %3446 = vmatpush1.xpose.msra.mxu0 0.0
    %3447 = vmatprep.subr.mxu0 0.0
    %3448 = vmatpush1.xpose.msra.mxu0 0.0
    %3449 = vmatprep.subr.mxu0 0.0
    %3450 = vmatpush1.xpose.msra.mxu0 0.0
    %3451 = vmatprep.subr.mxu0 0.0
    %3452 = vmatpush1.xpose.msra.mxu0 0.0
    %3453 = vmatprep.subr.mxu0 0.0
    %3454 = vmatpush1.xpose.msra.mxu0 0.0
    %3455 = vmatprep.subr.mxu0 0.0
    %3456 = vmatpush1.xpose.msra.mxu0 0.0
    %3457 = vmatprep.mubr.f32.mxu0 0.0
    %3458 = vmatmul.mubr.f32.gmra.mrb[0].mxu0 %v2723
    %v3459 = vpop.f32.mrb[0].mxu0
    %v3460 = vadd.f32 0.0, %v3459
    %v3461 = vpop.f32.mrb[0].mxu0
    %3462 = vdwg.mxu0
    %v3463 = vmul.f32 %v3460, 0.088388346
    %v3464 = vsel %vm3079, %v3463, -1e+30
    %v3465 = vsel %vm3152, %v3464, -inf
    %3466 = vmax.xlane.f32.xlu0 %v3465
    %v3467 = vpop.xlane.xlu0 %3466
    %v3468 = vsub.f32 %v3464, %v3467
    %v3469 = vmul.f32 %v3468, 1.442695
    %v3470 = vpow.pop %v3469
    %v3471 = vsel %vm3152, %v3470, 0.0
    %3472 = vadd.xlane.f32.xlu0 %v3471
    %v3473 = vpop.xlane.xlu0 %3472
    %v3474 = vrcp.pop %v3473
    %v3475 = vmul.f32 %v3470, %v3474
    %v3477 = vsel %vm3152, %v3475, 0
    %3479 = vmatprep.subr.mxu0 0.0
    %3480 = vmatpush1.msra.mxu0 %v3067
    %3481 = vmatprep.subr.mxu0 0.0
    %3482 = vmatpush1.msra.mxu0 0.0
    %3483 = vmatprep.subr.mxu0 0.0
    %3484 = vmatpush1.msra.mxu0 0.0
    %3485 = vmatprep.subr.mxu0 0.0
    %3486 = vmatpush1.msra.mxu0 0.0
    %3487 = vmatprep.subr.mxu0 0.0
    %3488 = vmatpush1.msra.mxu0 0.0
    %3489 = vmatprep.subr.mxu0 0.0
    %3490 = vmatpush1.msra.mxu0 0.0
    %3491 = vmatprep.subr.mxu0 0.0
    %3492 = vmatpush1.msra.mxu0 0.0
    %3493 = vmatprep.subr.mxu0 0.0
    %3494 = vmatpush1.msra.mxu0 0.0
    %3495 = vmatprep.subr.mxu0 0.0
    %3496 = vmatpush1.msra.mxu0 0.0
    %3497 = vmatprep.subr.mxu0 0.0
    %3498 = vmatpush1.msra.mxu0 0.0
    %3499 = vmatprep.subr.mxu0 0.0
    %3500 = vmatpush1.msra.mxu0 0.0
    %3501 = vmatprep.subr.mxu0 0.0
    %3502 = vmatpush1.msra.mxu0 0.0
    %3503 = vmatprep.subr.mxu0 0.0
    %3504 = vmatpush1.msra.mxu0 0.0
    %3505 = vmatprep.subr.mxu0 0.0
    %3506 = vmatpush1.msra.mxu0 0.0
    %3507 = vmatprep.subr.mxu0 0.0
    %3508 = vmatpush1.msra.mxu0 0.0
    %3509 = vmatprep.subr.mxu0 0.0
    %3510 = vmatpush1.msra.mxu0 0.0
    %3511 = vmatprep.subr.mxu0 0.0
    %3512 = vmatpush1.msra.mxu0 0.0
    %3513 = vmatprep.subr.mxu0 0.0
    %3514 = vmatpush1.msra.mxu0 0.0
    %3515 = vmatprep.subr.mxu0 0.0
    %3516 = vmatpush1.msra.mxu0 0.0
    %3517 = vmatprep.subr.mxu0 0.0
    %3518 = vmatpush1.msra.mxu0 0.0
    %3519 = vmatprep.subr.mxu0 0.0
    %3520 = vmatpush1.msra.mxu0 0.0
    %3521 = vmatprep.subr.mxu0 0.0
    %3522 = vmatpush1.msra.mxu0 0.0
    %3523 = vmatprep.subr.mxu0 0.0
    %3524 = vmatpush1.msra.mxu0 0.0
    %3525 = vmatprep.subr.mxu0 0.0
    %3526 = vmatpush1.msra.mxu0 0.0
    %3527 = vmatprep.subr.mxu0 0.0
    %3528 = vmatpush1.msra.mxu0 0.0
    %3529 = vmatprep.subr.mxu0 0.0
    %3530 = vmatpush1.msra.mxu0 0.0
    %3531 = vmatprep.subr.mxu0 0.0
    %3532 = vmatpush1.msra.mxu0 0.0
    %3533 = vmatprep.subr.mxu0 0.0
    %3534 = vmatpush1.msra.mxu0 0.0
    %3535 = vmatprep.subr.mxu0 0.0
    %3536 = vmatpush1.msra.mxu0 0.0
    %3537 = vmatprep.subr.mxu0 0.0
    %3538 = vmatpush1.msra.mxu0 0.0
    %3539 = vmatprep.subr.mxu0 0.0
    %3540 = vmatpush1.msra.mxu0 0.0
    %3541 = vmatprep.subr.mxu0 0.0
    %3542 = vmatpush1.msra.mxu0 0.0
    %3543 = vmatprep.mubr.f32.mxu0 0.0
    %3544 = vmatmul.mubr.f32.gmra.mrb[0].mxu0 %v3477
    %v3545 = vpop.f32.mrb[0].mxu0
    %v3546 = vadd.f32 0.0, %v3545
    %v3547 = vpop.f32.mrb[0].mxu0
    %3548 = vdwg.mxu0
    %3549 = vmatprep.subr.mxu0 0.0
    %3550 = vmatpush1.xpose.msra.mxu0 %v2897
    %3551 = vmatprep.subr.mxu0 0.0
    %3552 = vmatpush1.xpose.msra.mxu0 0.0
    %3553 = vmatprep.subr.mxu0 0.0
    %3554 = vmatpush1.xpose.msra.mxu0 0.0
    %3555 = vmatprep.subr.mxu0 0.0
    %3556 = vmatpush1.xpose.msra.mxu0 0.0
    %3557 = vmatprep.subr.mxu0 0.0
    %3558 = vmatpush1.xpose.msra.mxu0 0.0
    %3559 = vmatprep.subr.mxu0 0.0
    %3560 = vmatpush1.xpose.msra.mxu0 0.0
    %3561 = vmatprep.subr.mxu0 0.0
    %3562 = vmatpush1.xpose.msra.mxu0 0.0
    %3563 = vmatprep.subr.mxu0 0.0
    %3564 = vmatpush1.xpose.msra.mxu0 0.0
    %3565 = vmatprep.subr.mxu0 0.0
    %3566 = vmatpush1.xpose.msra.mxu0 0.0
    %3567 = vmatprep.subr.mxu0 0.0
    %3568 = vmatpush1.xpose.msra.mxu0 0.0
    %3569 = vmatprep.subr.mxu0 0.0
    %3570 = vmatpush1.xpose.msra.mxu0 0.0
    %3571 = vmatprep.subr.mxu0 0.0
    %3572 = vmatpush1.xpose.msra.mxu0 0.0
    %3573 = vmatprep.subr.mxu0 0.0
    %3574 = vmatpush1.xpose.msra.mxu0 0.0
    %3575 = vmatprep.subr.mxu0 0.0
    %3576 = vmatpush1.xpose.msra.mxu0 0.0
    %3577 = vmatprep.subr.mxu0 0.0
    %3578 = vmatpush1.xpose.msra.mxu0 0.0
    %3579 = vmatprep.subr.mxu0 0.0
    %3580 = vmatpush1.xpose.msra.mxu0 0.0
    %3581 = vmatprep.subr.mxu0 0.0
    %3582 = vmatpush1.xpose.msra.mxu0 0.0
    %3583 = vmatprep.subr.mxu0 0.0
    %3584 = vmatpush1.xpose.msra.mxu0 0.0
    %3585 = vmatprep.subr.mxu0 0.0
    %3586 = vmatpush1.xpose.msra.mxu0 0.0
    %3587 = vmatprep.subr.mxu0 0.0
    %3588 = vmatpush1.xpose.msra.mxu0 0.0
    %3589 = vmatprep.subr.mxu0 0.0
    %3590 = vmatpush1.xpose.msra.mxu0 0.0
    %3591 = vmatprep.subr.mxu0 0.0
    %3592 = vmatpush1.xpose.msra.mxu0 0.0
    %3593 = vmatprep.subr.mxu0 0.0
    %3594 = vmatpush1.xpose.msra.mxu0 0.0
    %3595 = vmatprep.subr.mxu0 0.0
    %3596 = vmatpush1.xpose.msra.mxu0 0.0
    %3597 = vmatprep.subr.mxu0 0.0
    %3598 = vmatpush1.xpose.msra.mxu0 0.0
    %3599 = vmatprep.subr.mxu0 0.0
    %3600 = vmatpush1.xpose.msra.mxu0 0.0
    %3601 = vmatprep.subr.mxu0 0.0
    %3602 = vmatpush1.xpose.msra.mxu0 0.0
    %3603 = vmatprep.subr.mxu0 0.0
    %3604 = vmatpush1.xpose.msra.mxu0 0.0
    %3605 = vmatprep.subr.mxu0 0.0
    %3606 = vmatpush1.xpose.msra.mxu0 0.0
    %3607 = vmatprep.subr.mxu0 0.0
    %3608 = vmatpush1.xpose.msra.mxu0 0.0
    %3609 = vmatprep.subr.mxu0 0.0
    %3610 = vmatpush1.xpose.msra.mxu0 0.0
    %3611 = vmatprep.subr.mxu0 0.0
    %3612 = vmatpush1.xpose.msra.mxu0 0.0
    %3613 = vmatprep.mubr.f32.mxu0 0.0
    %3614 = vmatmul.mubr.f32.gmra.mrb[0].mxu0 %v2725
    %v3615 = vpop.f32.mrb[0].mxu0
    %v3616 = vadd.f32 0.0, %v3615
    %v3617 = vpop.f32.mrb[0].mxu0
    %3618 = vdwg.mxu0
    %v3619 = vmul.f32 %v3616, 0.088388346
    %v3620 = vsel %vm3079, %v3619, -1e+30
    %v3621 = vsel %vm3152, %v3620, -inf
    %3622 = vmax.xlane.f32.xlu0 %v3621
    %v3623 = vpop.xlane.xlu0 %3622
    %v3624 = vsub.f32 %v3620, %v3623
    %v3625 = vmul.f32 %v3624, 1.442695
    %v3626 = vpow.pop %v3625
    %v3627 = vsel %vm3152, %v3626, 0.0
    %3628 = vadd.xlane.f32.xlu0 %v3627
    %v3629 = vpop.xlane.xlu0 %3628
    %v3630 = vrcp.pop %v3629
    %v3631 = vmul.f32 %v3626, %v3630
    %v3633 = vsel %vm3152, %v3631, 0
    %3635 = vmatprep.subr.mxu0 0.0
    %3636 = vmatpush1.msra.mxu0 %v3069
    %3637 = vmatprep.subr.mxu0 0.0
    %3638 = vmatpush1.msra.mxu0 0.0
    %3639 = vmatprep.subr.mxu0 0.0
    %3640 = vmatpush1.msra.mxu0 0.0
    %3641 = vmatprep.subr.mxu0 0.0
    %3642 = vmatpush1.msra.mxu0 0.0
    %3643 = vmatprep.subr.mxu0 0.0
    %3644 = vmatpush1.msra.mxu0 0.0
    %3645 = vmatprep.subr.mxu0 0.0
    %3646 = vmatpush1.msra.mxu0 0.0
    %3647 = vmatprep.subr.mxu0 0.0
    %3648 = vmatpush1.msra.mxu0 0.0
    %3649 = vmatprep.subr.mxu0 0.0
    %3650 = vmatpush1.msra.mxu0 0.0
    %3651 = vmatprep.subr.mxu0 0.0
    %3652 = vmatpush1.msra.mxu0 0.0
    %3653 = vmatprep.subr.mxu0 0.0
    %3654 = vmatpush1.msra.mxu0 0.0
    %3655 = vmatprep.subr.mxu0 0.0
    %3656 = vmatpush1.msra.mxu0 0.0
    %3657 = vmatprep.subr.mxu0 0.0
    %3658 = vmatpush1.msra.mxu0 0.0
    %3659 = vmatprep.subr.mxu0 0.0
    %3660 = vmatpush1.msra.mxu0 0.0
    %3661 = vmatprep.subr.mxu0 0.0
    %3662 = vmatpush1.msra.mxu0 0.0
    %3663 = vmatprep.subr.mxu0 0.0
    %3664 = vmatpush1.msra.mxu0 0.0
    %3665 = vmatprep.subr.mxu0 0.0
    %3666 = vmatpush1.msra.mxu0 0.0
    %3667 = vmatprep.subr.mxu0 0.0
    %3668 = vmatpush1.msra.mxu0 0.0
    %3669 = vmatprep.subr.mxu0 0.0
    %3670 = vmatpush1.msra.mxu0 0.0
    %3671 = vmatprep.subr.mxu0 0.0
    %3672 = vmatpush1.msra.mxu0 0.0
    %3673 = vmatprep.subr.mxu0 0.0
    %3674 = vmatpush1.msra.mxu0 0.0
    %3675 = vmatprep.subr.mxu0 0.0
    %3676 = vmatpush1.msra.mxu0 0.0
    %3677 = vmatprep.subr.mxu0 0.0
    %3678 = vmatpush1.msra.mxu0 0.0
    %3679 = vmatprep.subr.mxu0 0.0
    %3680 = vmatpush1.msra.mxu0 0.0
    %3681 = vmatprep.subr.mxu0 0.0
    %3682 = vmatpush1.msra.mxu0 0.0
    %3683 = vmatprep.subr.mxu0 0.0
    %3684 = vmatpush1.msra.mxu0 0.0
    %3685 = vmatprep.subr.mxu0 0.0
    %3686 = vmatpush1.msra.mxu0 0.0
    %3687 = vmatprep.subr.mxu0 0.0
    %3688 = vmatpush1.msra.mxu0 0.0
    %3689 = vmatprep.subr.mxu0 0.0
    %3690 = vmatpush1.msra.mxu0 0.0
    %3691 = vmatprep.subr.mxu0 0.0
    %3692 = vmatpush1.msra.mxu0 0.0
    %3693 = vmatprep.subr.mxu0 0.0
    %3694 = vmatpush1.msra.mxu0 0.0
    %3695 = vmatprep.subr.mxu0 0.0
    %3696 = vmatpush1.msra.mxu0 0.0
    %3697 = vmatprep.subr.mxu0 0.0
    %3698 = vmatpush1.msra.mxu0 0.0
    %3699 = vmatprep.mubr.f32.mxu0 0.0
    %3700 = vmatmul.mubr.f32.gmra.mrb[0].mxu0 %v3633
    %v3701 = vpop.f32.mrb[0].mxu0
    %v3702 = vadd.f32 0.0, %v3701
    %v3703 = vpop.f32.mrb[0].mxu0
    %3704 = vdwg.mxu0
    %3705 = vmatprep.subr.mxu0 0.0
    %3706 = vmatpush1.xpose.msra.mxu0 %v2813
    %3707 = vmatprep.subr.mxu0 0.0
    %3708 = vmatpush1.xpose.msra.mxu0 0.0
    %3709 = vmatprep.subr.mxu0 0.0
    %3710 = vmatpush1.xpose.msra.mxu0 0.0
    %3711 = vmatprep.subr.mxu0 0.0
    %3712 = vmatpush1.xpose.msra.mxu0 0.0
    %3713 = vmatprep.subr.mxu0 0.0
    %3714 = vmatpush1.xpose.msra.mxu0 0.0
    %3715 = vmatprep.subr.mxu0 0.0
    %3716 = vmatpush1.xpose.msra.mxu0 0.0
    %3717 = vmatprep.subr.mxu0 0.0
    %3718 = vmatpush1.xpose.msra.mxu0 0.0
    %3719 = vmatprep.subr.mxu0 0.0
    %3720 = vmatpush1.xpose.msra.mxu0 0.0
    %3721 = vmatprep.subr.mxu0 0.0
    %3722 = vmatpush1.xpose.msra.mxu0 0.0
    %3723 = vmatprep.subr.mxu0 0.0
    %3724 = vmatpush1.xpose.msra.mxu0 0.0
    %3725 = vmatprep.subr.mxu0 0.0
    %3726 = vmatpush1.xpose.msra.mxu0 0.0
    %3727 = vmatprep.subr.mxu0 0.0
    %3728 = vmatpush1.xpose.msra.mxu0 0.0
    %3729 = vmatprep.subr.mxu0 0.0
    %3730 = vmatpush1.xpose.msra.mxu0 0.0
    %3731 = vmatprep.subr.mxu0 0.0
    %3732 = vmatpush1.xpose.msra.mxu0 0.0
    %3733 = vmatprep.subr.mxu0 0.0
    %3734 = vmatpush1.xpose.msra.mxu0 0.0
    %3735 = vmatprep.subr.mxu0 0.0
    %3736 = vmatpush1.xpose.msra.mxu0 0.0
    %3737 = vmatprep.subr.mxu0 0.0
    %3738 = vmatpush1.xpose.msra.mxu0 0.0
    %3739 = vmatprep.subr.mxu0 0.0
    %3740 = vmatpush1.xpose.msra.mxu0 0.0
    %3741 = vmatprep.subr.mxu0 0.0
    %3742 = vmatpush1.xpose.msra.mxu0 0.0
    %3743 = vmatprep.subr.mxu0 0.0
    %3744 = vmatpush1.xpose.msra.mxu0 0.0
    %3745 = vmatprep.subr.mxu0 0.0
    %3746 = vmatpush1.xpose.msra.mxu0 0.0
    %3747 = vmatprep.subr.mxu0 0.0
    %3748 = vmatpush1.xpose.msra.mxu0 0.0
    %3749 = vmatprep.subr.mxu0 0.0
    %3750 = vmatpush1.xpose.msra.mxu0 0.0
    %3751 = vmatprep.subr.mxu0 0.0
    %3752 = vmatpush1.xpose.msra.mxu0 0.0
    %3753 = vmatprep.subr.mxu0 0.0
    %3754 = vmatpush1.xpose.msra.mxu0 0.0
    %3755 = vmatprep.subr.mxu0 0.0
    %3756 = vmatpush1.xpose.msra.mxu0 0.0
    %3757 = vmatprep.subr.mxu0 0.0
    %3758 = vmatpush1.xpose.msra.mxu0 0.0
    %3759 = vmatprep.subr.mxu0 0.0
    %3760 = vmatpush1.xpose.msra.mxu0 0.0
    %3761 = vmatprep.subr.mxu0 0.0
    %3762 = vmatpush1.xpose.msra.mxu0 0.0
    %3763 = vmatprep.subr.mxu0 0.0
    %3764 = vmatpush1.xpose.msra.mxu0 0.0
    %3765 = vmatprep.subr.mxu0 0.0
    %3766 = vmatpush1.xpose.msra.mxu0 0.0
    %3767 = vmatprep.subr.mxu0 0.0
    %3768 = vmatpush1.xpose.msra.mxu0 0.0
    %3769 = vmatprep.mubr.f32.mxu0 0.0
    %3770 = vmatmul.mubr.f32.gmra.mrb[0].mxu0 %v2641
    %v3771 = vpop.f32.mrb[0].mxu0
    %v3772 = vadd.f32 0.0, %v3771
    %v3773 = vpop.f32.mrb[0].mxu0
    %3774 = vdwg.mxu0
    %v3775 = vmul.f32 %v3772, 0.088388346
    %v3776 = vsel %vm3079, %v3775, -1e+30
    %v3777 = vsel %vm3152, %v3776, -inf
    %3778 = vmax.xlane.f32.xlu0 %v3777
    %v3779 = vpop.xlane.xlu0 %3778
    %v3780 = vsub.f32 %v3776, %v3779
    %v3781 = vmul.f32 %v3780, 1.442695
    %v3782 = vpow.pop %v3781
    %v3783 = vsel %vm3152, %v3782, 0.0
    %3784 = vadd.xlane.f32.xlu0 %v3783
    %v3785 = vpop.xlane.xlu0 %3784
    %v3786 = vrcp.pop %v3785
    %v3787 = vmul.f32 %v3782, %v3786
    %v3789 = vsel %vm3152, %v3787, 0
    %3791 = vmatprep.subr.mxu0 0.0
    %3792 = vmatpush1.msra.mxu0 %v2985
    %3793 = vmatprep.subr.mxu0 0.0
    %3794 = vmatpush1.msra.mxu0 0.0
    %3795 = vmatprep.subr.mxu0 0.0
    %3796 = vmatpush1.msra.mxu0 0.0
    %3797 = vmatprep.subr.mxu0 0.0
    %3798 = vmatpush1.msra.mxu0 0.0
    %3799 = vmatprep.subr.mxu0 0.0
    %3800 = vmatpush1.msra.mxu0 0.0
    %3801 = vmatprep.subr.mxu0 0.0
    %3802 = vmatpush1.msra.mxu0 0.0
    %3803 = vmatprep.subr.mxu0 0.0
    %3804 = vmatpush1.msra.mxu0 0.0
    %3805 = vmatprep.subr.mxu0 0.0
    %3806 = vmatpush1.msra.mxu0 0.0
    %3807 = vmatprep.subr.mxu0 0.0
    %3808 = vmatpush1.msra.mxu0 0.0
    %3809 = vmatprep.subr.mxu0 0.0
    %3810 = vmatpush1.msra.mxu0 0.0
    %3811 = vmatprep.subr.mxu0 0.0
    %3812 = vmatpush1.msra.mxu0 0.0
    %3813 = vmatprep.subr.mxu0 0.0
    %3814 = vmatpush1.msra.mxu0 0.0
    %3815 = vmatprep.subr.mxu0 0.0
    %3816 = vmatpush1.msra.mxu0 0.0
    %3817 = vmatprep.subr.mxu0 0.0
    %3818 = vmatpush1.msra.mxu0 0.0
    %3819 = vmatprep.subr.mxu0 0.0
    %3820 = vmatpush1.msra.mxu0 0.0
    %3821 = vmatprep.subr.mxu0 0.0
    %3822 = vmatpush1.msra.mxu0 0.0
    %3823 = vmatprep.subr.mxu0 0.0
    %3824 = vmatpush1.msra.mxu0 0.0
    %3825 = vmatprep.subr.mxu0 0.0
    %3826 = vmatpush1.msra.mxu0 0.0
    %3827 = vmatprep.subr.mxu0 0.0
    %3828 = vmatpush1.msra.mxu0 0.0
    %3829 = vmatprep.subr.mxu0 0.0
    %3830 = vmatpush1.msra.mxu0 0.0
    %3831 = vmatprep.subr.mxu0 0.0
    %3832 = vmatpush1.msra.mxu0 0.0
    %3833 = vmatprep.subr.mxu0 0.0
    %3834 = vmatpush1.msra.mxu0 0.0
    %3835 = vmatprep.subr.mxu0 0.0
    %3836 = vmatpush1.msra.mxu0 0.0
    %3837 = vmatprep.subr.mxu0 0.0
    %3838 = vmatpush1.msra.mxu0 0.0
    %3839 = vmatprep.subr.mxu0 0.0
    %3840 = vmatpush1.msra.mxu0 0.0
    %3841 = vmatprep.subr.mxu0 0.0
    %3842 = vmatpush1.msra.mxu0 0.0
    %3843 = vmatprep.subr.mxu0 0.0
    %3844 = vmatpush1.msra.mxu0 0.0
    %3845 = vmatprep.subr.mxu0 0.0
    %3846 = vmatpush1.msra.mxu0 0.0
    %3847 = vmatprep.subr.mxu0 0.0
    %3848 = vmatpush1.msra.mxu0 0.0
    %3849 = vmatprep.subr.mxu0 0.0
    %3850 = vmatpush1.msra.mxu0 0.0
    %3851 = vmatprep.subr.mxu0 0.0
    %3852 = vmatpush1.msra.mxu0 0.0
    %3853 = vmatprep.subr.mxu0 0.0
    %3854 = vmatpush1.msra.mxu0 0.0
    %3855 = vmatprep.mubr.f32.mxu0 0.0
    %3856 = vmatmul.mubr.f32.gmra.mrb[0].mxu0 %v3789
    %v3857 = vpop.f32.mrb[0].mxu0
    %v3858 = vadd.f32 0.0, %v3857
    %v3859 = vpop.f32.mrb[0].mxu0
    %3860 = vdwg.mxu0
    %3861 = vmatprep.subr.mxu0 0.0
    %3862 = vmatpush1.xpose.msra.mxu0 %v2815
    %3863 = vmatprep.subr.mxu0 0.0
    %3864 = vmatpush1.xpose.msra.mxu0 0.0
    %3865 = vmatprep.subr.mxu0 0.0
    %3866 = vmatpush1.xpose.msra.mxu0 0.0
    %3867 = vmatprep.subr.mxu0 0.0
    %3868 = vmatpush1.xpose.msra.mxu0 0.0
    %3869 = vmatprep.subr.mxu0 0.0
    %3870 = vmatpush1.xpose.msra.mxu0 0.0
    %3871 = vmatprep.subr.mxu0 0.0
    %3872 = vmatpush1.xpose.msra.mxu0 0.0
    %3873 = vmatprep.subr.mxu0 0.0
    %3874 = vmatpush1.xpose.msra.mxu0 0.0
    %3875 = vmatprep.subr.mxu0 0.0
    %3876 = vmatpush1.xpose.msra.mxu0 0.0
    %3877 = vmatprep.subr.mxu0 0.0
    %3878 = vmatpush1.xpose.msra.mxu0 0.0
    %3879 = vmatprep.subr.mxu0 0.0
    %3880 = vmatpush1.xpose.msra.mxu0 0.0
    %3881 = vmatprep.subr.mxu0 0.0
    %3882 = vmatpush1.xpose.msra.mxu0 0.0
    %3883 = vmatprep.subr.mxu0 0.0
    %3884 = vmatpush1.xpose.msra.mxu0 0.0
    %3885 = vmatprep.subr.mxu0 0.0
    %3886 = vmatpush1.xpose.msra.mxu0 0.0
    %3887 = vmatprep.subr.mxu0 0.0
    %3888 = vmatpush1.xpose.msra.mxu0 0.0
    %3889 = vmatprep.subr.mxu0 0.0
    %3890 = vmatpush1.xpose.msra.mxu0 0.0
    %3891 = vmatprep.subr.mxu0 0.0
    %3892 = vmatpush1.xpose.msra.mxu0 0.0
    %3893 = vmatprep.subr.mxu0 0.0
    %3894 = vmatpush1.xpose.msra.mxu0 0.0
    %3895 = vmatprep.subr.mxu0 0.0
    %3896 = vmatpush1.xpose.msra.mxu0 0.0
    %3897 = vmatprep.subr.mxu0 0.0
    %3898 = vmatpush1.xpose.msra.mxu0 0.0
    %3899 = vmatprep.subr.mxu0 0.0
    %3900 = vmatpush1.xpose.msra.mxu0 0.0
    %3901 = vmatprep.subr.mxu0 0.0
    %3902 = vmatpush1.xpose.msra.mxu0 0.0
    %3903 = vmatprep.subr.mxu0 0.0
    %3904 = vmatpush1.xpose.msra.mxu0 0.0
    %3905 = vmatprep.subr.mxu0 0.0
    %3906 = vmatpush1.xpose.msra.mxu0 0.0
    %3907 = vmatprep.subr.mxu0 0.0
    %3908 = vmatpush1.xpose.msra.mxu0 0.0
    %3909 = vmatprep.subr.mxu0 0.0
    %3910 = vmatpush1.xpose.msra.mxu0 0.0
    %3911 = vmatprep.subr.mxu0 0.0
    %3912 = vmatpush1.xpose.msra.mxu0 0.0
    %3913 = vmatprep.subr.mxu0 0.0
    %3914 = vmatpush1.xpose.msra.mxu0 0.0
    %3915 = vmatprep.subr.mxu0 0.0
    %3916 = vmatpush1.xpose.msra.mxu0 0.0
    %3917 = vmatprep.subr.mxu0 0.0
    %3918 = vmatpush1.xpose.msra.mxu0 0.0
    %3919 = vmatprep.subr.mxu0 0.0
    %3920 = vmatpush1.xpose.msra.mxu0 0.0
    %3921 = vmatprep.subr.mxu0 0.0
    %3922 = vmatpush1.xpose.msra.mxu0 0.0
    %3923 = vmatprep.subr.mxu0 0.0
    %3924 = vmatpush1.xpose.msra.mxu0 0.0
    %3925 = vmatprep.mubr.f32.mxu0 0.0
    %3926 = vmatmul.mubr.f32.gmra.mrb[0].mxu0 %v2643
    %v3927 = vpop.f32.mrb[0].mxu0
    %v3928 = vadd.f32 0.0, %v3927
    %v3929 = vpop.f32.mrb[0].mxu0
    %3930 = vdwg.mxu0
    %v3931 = vmul.f32 %v3928, 0.088388346
    %v3932 = vsel %vm3079, %v3931, -1e+30
    %v3933 = vsel %vm3152, %v3932, -inf
    %3934 = vmax.xlane.f32.xlu0 %v3933
    %v3935 = vpop.xlane.xlu0 %3934
    %v3936 = vsub.f32 %v3932, %v3935
    %v3937 = vmul.f32 %v3936, 1.442695
    %v3938 = vpow.pop %v3937
    %v3939 = vsel %vm3152, %v3938, 0.0
    %3940 = vadd.xlane.f32.xlu0 %v3939
    %v3941 = vpop.xlane.xlu0 %3940
    %v3942 = vrcp.pop %v3941
    %v3943 = vmul.f32 %v3938, %v3942
    %v3945 = vsel %vm3152, %v3943, 0
    %3947 = vmatprep.subr.mxu0 0.0
    %3948 = vmatpush1.msra.mxu0 %v2987
    %3949 = vmatprep.subr.mxu0 0.0
    %3950 = vmatpush1.msra.mxu0 0.0
    %3951 = vmatprep.subr.mxu0 0.0
    %3952 = vmatpush1.msra.mxu0 0.0
    %3953 = vmatprep.subr.mxu0 0.0
    %3954 = vmatpush1.msra.mxu0 0.0
    %3955 = vmatprep.subr.mxu0 0.0
    %3956 = vmatpush1.msra.mxu0 0.0
    %3957 = vmatprep.subr.mxu0 0.0
    %3958 = vmatpush1.msra.mxu0 0.0
    %3959 = vmatprep.subr.mxu0 0.0
    %3960 = vmatpush1.msra.mxu0 0.0
    %3961 = vmatprep.subr.mxu0 0.0
    %3962 = vmatpush1.msra.mxu0 0.0
    %3963 = vmatprep.subr.mxu0 0.0
    %3964 = vmatpush1.msra.mxu0 0.0
    %3965 = vmatprep.subr.mxu0 0.0
    %3966 = vmatpush1.msra.mxu0 0.0
    %3967 = vmatprep.subr.mxu0 0.0
    %3968 = vmatpush1.msra.mxu0 0.0
    %3969 = vmatprep.subr.mxu0 0.0
    %3970 = vmatpush1.msra.mxu0 0.0
    %3971 = vmatprep.subr.mxu0 0.0
    %3972 = vmatpush1.msra.mxu0 0.0
    %3973 = vmatprep.subr.mxu0 0.0
    %3974 = vmatpush1.msra.mxu0 0.0
    %3975 = vmatprep.subr.mxu0 0.0
    %3976 = vmatpush1.msra.mxu0 0.0
    %3977 = vmatprep.subr.mxu0 0.0
    %3978 = vmatpush1.msra.mxu0 0.0
    %3979 = vmatprep.subr.mxu0 0.0
    %3980 = vmatpush1.msra.mxu0 0.0
    %3981 = vmatprep.subr.mxu0 0.0
    %3982 = vmatpush1.msra.mxu0 0.0
    %3983 = vmatprep.subr.mxu0 0.0
    %3984 = vmatpush1.msra.mxu0 0.0
    %3985 = vmatprep.subr.mxu0 0.0
    %3986 = vmatpush1.msra.mxu0 0.0
    %3987 = vmatprep.subr.mxu0 0.0
    %3988 = vmatpush1.msra.mxu0 0.0
    %3989 = vmatprep.subr.mxu0 0.0
    %3990 = vmatpush1.msra.mxu0 0.0
    %3991 = vmatprep.subr.mxu0 0.0
    %3992 = vmatpush1.msra.mxu0 0.0
    %3993 = vmatprep.subr.mxu0 0.0
    %3994 = vmatpush1.msra.mxu0 0.0
    %3995 = vmatprep.subr.mxu0 0.0
    %3996 = vmatpush1.msra.mxu0 0.0
    %3997 = vmatprep.subr.mxu0 0.0
    %3998 = vmatpush1.msra.mxu0 0.0
    %3999 = vmatprep.subr.mxu0 0.0
    %4000 = vmatpush1.msra.mxu0 0.0
    %4001 = vmatprep.subr.mxu0 0.0
    %4002 = vmatpush1.msra.mxu0 0.0
    %4003 = vmatprep.subr.mxu0 0.0
    %4004 = vmatpush1.msra.mxu0 0.0
    %4005 = vmatprep.subr.mxu0 0.0
    %4006 = vmatpush1.msra.mxu0 0.0
    %4007 = vmatprep.subr.mxu0 0.0
    %4008 = vmatpush1.msra.mxu0 0.0
    %4009 = vmatprep.subr.mxu0 0.0
    %4010 = vmatpush1.msra.mxu0 0.0
    %4011 = vmatprep.mubr.f32.mxu0 0.0
    %4012 = vmatmul.mubr.f32.gmra.mrb[0].mxu0 %v3945
    %v4013 = vpop.f32.mrb[0].mxu0
    %v4014 = vadd.f32 0.0, %v4013
    %v4015 = vpop.f32.mrb[0].mxu0
    %4016 = vdwg.mxu0
    %4017 = vmatprep.subr.mxu0 0.0
    %4018 = vmatpush1.xpose.msra.mxu0 %v2899
    %4019 = vmatprep.subr.mxu0 0.0
    %4020 = vmatpush1.xpose.msra.mxu0 0.0
    %4021 = vmatprep.subr.mxu0 0.0
    %4022 = vmatpush1.xpose.msra.mxu0 0.0
    %4023 = vmatprep.subr.mxu0 0.0
    %4024 = vmatpush1.xpose.msra.mxu0 0.0
    %4025 = vmatprep.subr.mxu0 0.0
    %4026 = vmatpush1.xpose.msra.mxu0 0.0
    %4027 = vmatprep.subr.mxu0 0.0
    %4028 = vmatpush1.xpose.msra.mxu0 0.0
    %4029 = vmatprep.subr.mxu0 0.0
    %4030 = vmatpush1.xpose.msra.mxu0 0.0
    %4031 = vmatprep.subr.mxu0 0.0
    %4032 = vmatpush1.xpose.msra.mxu0 0.0
    %4033 = vmatprep.subr.mxu0 0.0
    %4034 = vmatpush1.xpose.msra.mxu0 0.0
    %4035 = vmatprep.subr.mxu0 0.0
    %4036 = vmatpush1.xpose.msra.mxu0 0.0
    %4037 = vmatprep.subr.mxu0 0.0
    %4038 = vmatpush1.xpose.msra.mxu0 0.0
    %4039 = vmatprep.subr.mxu0 0.0
    %4040 = vmatpush1.xpose.msra.mxu0 0.0
    %4041 = vmatprep.subr.mxu0 0.0
    %4042 = vmatpush1.xpose.msra.mxu0 0.0
    %4043 = vmatprep.subr.mxu0 0.0
    %4044 = vmatpush1.xpose.msra.mxu0 0.0
    %4045 = vmatprep.subr.mxu0 0.0
    %4046 = vmatpush1.xpose.msra.mxu0 0.0
    %4047 = vmatprep.subr.mxu0 0.0
    %4048 = vmatpush1.xpose.msra.mxu0 0.0
    %4049 = vmatprep.subr.mxu0 0.0
    %4050 = vmatpush1.xpose.msra.mxu0 0.0
    %4051 = vmatprep.subr.mxu0 0.0
    %4052 = vmatpush1.xpose.msra.mxu0 0.0
    %4053 = vmatprep.subr.mxu0 0.0
    %4054 = vmatpush1.xpose.msra.mxu0 0.0
    %4055 = vmatprep.subr.mxu0 0.0
    %4056 = vmatpush1.xpose.msra.mxu0 0.0
    %4057 = vmatprep.subr.mxu0 0.0
    %4058 = vmatpush1.xpose.msra.mxu0 0.0
    %4059 = vmatprep.subr.mxu0 0.0
    %4060 = vmatpush1.xpose.msra.mxu0 0.0
    %4061 = vmatprep.subr.mxu0 0.0
    %4062 = vmatpush1.xpose.msra.mxu0 0.0
    %4063 = vmatprep.subr.mxu0 0.0
    %4064 = vmatpush1.xpose.msra.mxu0 0.0
    %4065 = vmatprep.subr.mxu0 0.0
    %4066 = vmatpush1.xpose.msra.mxu0 0.0
    %4067 = vmatprep.subr.mxu0 0.0
    %4068 = vmatpush1.xpose.msra.mxu0 0.0
    %4069 = vmatprep.subr.mxu0 0.0
    %4070 = vmatpush1.xpose.msra.mxu0 0.0
    %4071 = vmatprep.subr.mxu0 0.0
    %4072 = vmatpush1.xpose.msra.mxu0 0.0
    %4073 = vmatprep.subr.mxu0 0.0
    %4074 = vmatpush1.xpose.msra.mxu0 0.0
    %4075 = vmatprep.subr.mxu0 0.0
    %4076 = vmatpush1.xpose.msra.mxu0 0.0
    %4077 = vmatprep.subr.mxu0 0.0
    %4078 = vmatpush1.xpose.msra.mxu0 0.0
    %4079 = vmatprep.subr.mxu0 0.0
    %4080 = vmatpush1.xpose.msra.mxu0 0.0
    %4081 = vmatprep.mubr.f32.mxu0 0.0
    %4082 = vmatmul.mubr.f32.gmra.mrb[0].mxu0 %v2727
    %v4083 = vpop.f32.mrb[0].mxu0
    %v4084 = vadd.f32 0.0, %v4083
    %v4085 = vpop.f32.mrb[0].mxu0
    %4086 = vdwg.mxu0
    %v4087 = vmul.f32 %v4084, 0.088388346
    %v4088 = vsel %vm3079, %v4087, -1e+30
    %v4089 = vsel %vm3152, %v4088, -inf
    %4090 = vmax.xlane.f32.xlu0 %v4089
    %v4091 = vpop.xlane.xlu0 %4090
    %v4092 = vsub.f32 %v4088, %v4091
    %v4093 = vmul.f32 %v4092, 1.442695
    %v4094 = vpow.pop %v4093
    %v4095 = vsel %vm3152, %v4094, 0.0
    %4096 = vadd.xlane.f32.xlu0 %v4095
    %v4097 = vpop.xlane.xlu0 %4096
    %v4098 = vrcp.pop %v4097
    %v4099 = vmul.f32 %v4094, %v4098
    %v4101 = vsel %vm3152, %v4099, 0
    %4103 = vmatprep.subr.mxu0 0.0
    %4104 = vmatpush1.msra.mxu0 %v3071
    %4105 = vmatprep.subr.mxu0 0.0
    %4106 = vmatpush1.msra.mxu0 0.0
    %4107 = vmatprep.subr.mxu0 0.0
    %4108 = vmatpush1.msra.mxu0 0.0
    %4109 = vmatprep.subr.mxu0 0.0
    %4110 = vmatpush1.msra.mxu0 0.0
    %4111 = vmatprep.subr.mxu0 0.0
    %4112 = vmatpush1.msra.mxu0 0.0
    %4113 = vmatprep.subr.mxu0 0.0
    %4114 = vmatpush1.msra.mxu0 0.0
    %4115 = vmatprep.subr.mxu0 0.0
    %4116 = vmatpush1.msra.mxu0 0.0
    %4117 = vmatprep.subr.mxu0 0.0
    %4118 = vmatpush1.msra.mxu0 0.0
    %4119 = vmatprep.subr.mxu0 0.0
    %4120 = vmatpush1.msra.mxu0 0.0
    %4121 = vmatprep.subr.mxu0 0.0
    %4122 = vmatpush1.msra.mxu0 0.0
    %4123 = vmatprep.subr.mxu0 0.0
    %4124 = vmatpush1.msra.mxu0 0.0
    %4125 = vmatprep.subr.mxu0 0.0
    %4126 = vmatpush1.msra.mxu0 0.0
    %4127 = vmatprep.subr.mxu0 0.0
    %4128 = vmatpush1.msra.mxu0 0.0
    %4129 = vmatprep.subr.mxu0 0.0
    %4130 = vmatpush1.msra.mxu0 0.0
    %4131 = vmatprep.subr.mxu0 0.0
    %4132 = vmatpush1.msra.mxu0 0.0
    %4133 = vmatprep.subr.mxu0 0.0
    %4134 = vmatpush1.msra.mxu0 0.0
    %4135 = vmatprep.subr.mxu0 0.0
    %4136 = vmatpush1.msra.mxu0 0.0
    %4137 = vmatprep.subr.mxu0 0.0
    %4138 = vmatpush1.msra.mxu0 0.0
    %4139 = vmatprep.subr.mxu0 0.0
    %4140 = vmatpush1.msra.mxu0 0.0
    %4141 = vmatprep.subr.mxu0 0.0
    %4142 = vmatpush1.msra.mxu0 0.0
    %4143 = vmatprep.subr.mxu0 0.0
    %4144 = vmatpush1.msra.mxu0 0.0
    %4145 = vmatprep.subr.mxu0 0.0
    %4146 = vmatpush1.msra.mxu0 0.0
    %4147 = vmatprep.subr.mxu0 0.0
    %4148 = vmatpush1.msra.mxu0 0.0
    %4149 = vmatprep.subr.mxu0 0.0
    %4150 = vmatpush1.msra.mxu0 0.0
    %4151 = vmatprep.subr.mxu0 0.0
    %4152 = vmatpush1.msra.mxu0 0.0
    %4153 = vmatprep.subr.mxu0 0.0
    %4154 = vmatpush1.msra.mxu0 0.0
    %4155 = vmatprep.subr.mxu0 0.0
    %4156 = vmatpush1.msra.mxu0 0.0
    %4157 = vmatprep.subr.mxu0 0.0
    %4158 = vmatpush1.msra.mxu0 0.0
    %4159 = vmatprep.subr.mxu0 0.0
    %4160 = vmatpush1.msra.mxu0 0.0
    %4161 = vmatprep.subr.mxu0 0.0
    %4162 = vmatpush1.msra.mxu0 0.0
    %4163 = vmatprep.subr.mxu0 0.0
    %4164 = vmatpush1.msra.mxu0 0.0
    %4165 = vmatprep.subr.mxu0 0.0
    %4166 = vmatpush1.msra.mxu0 0.0
    %4167 = vmatprep.mubr.f32.mxu0 0.0
    %4168 = vmatmul.mubr.f32.gmra.mrb[0].mxu0 %v4101
    %v4169 = vpop.f32.mrb[0].mxu0
    %v4170 = vadd.f32 0.0, %v4169
    %v4171 = vpop.f32.mrb[0].mxu0
    %4172 = vdwg.mxu0
    %4173 = vmatprep.subr.mxu0 0.0
    %4174 = vmatpush1.xpose.msra.mxu0 %v2901
    %4175 = vmatprep.subr.mxu0 0.0
    %4176 = vmatpush1.xpose.msra.mxu0 0.0
    %4177 = vmatprep.subr.mxu0 0.0
    %4178 = vmatpush1.xpose.msra.mxu0 0.0
    %4179 = vmatprep.subr.mxu0 0.0
    %4180 = vmatpush1.xpose.msra.mxu0 0.0
    %4181 = vmatprep.subr.mxu0 0.0
    %4182 = vmatpush1.xpose.msra.mxu0 0.0
    %4183 = vmatprep.subr.mxu0 0.0
    %4184 = vmatpush1.xpose.msra.mxu0 0.0
    %4185 = vmatprep.subr.mxu0 0.0
    %4186 = vmatpush1.xpose.msra.mxu0 0.0
    %4187 = vmatprep.subr.mxu0 0.0
    %4188 = vmatpush1.xpose.msra.mxu0 0.0
    %4189 = vmatprep.subr.mxu0 0.0
    %4190 = vmatpush1.xpose.msra.mxu0 0.0
    %4191 = vmatprep.subr.mxu0 0.0
    %4192 = vmatpush1.xpose.msra.mxu0 0.0
    %4193 = vmatprep.subr.mxu0 0.0
    %4194 = vmatpush1.xpose.msra.mxu0 0.0
    %4195 = vmatprep.subr.mxu0 0.0
    %4196 = vmatpush1.xpose.msra.mxu0 0.0
    %4197 = vmatprep.subr.mxu0 0.0
    %4198 = vmatpush1.xpose.msra.mxu0 0.0
    %4199 = vmatprep.subr.mxu0 0.0
    %4200 = vmatpush1.xpose.msra.mxu0 0.0
    %4201 = vmatprep.subr.mxu0 0.0
    %4202 = vmatpush1.xpose.msra.mxu0 0.0
    %4203 = vmatprep.subr.mxu0 0.0
    %4204 = vmatpush1.xpose.msra.mxu0 0.0
    %4205 = vmatprep.subr.mxu0 0.0
    %4206 = vmatpush1.xpose.msra.mxu0 0.0
    %4207 = vmatprep.subr.mxu0 0.0
    %4208 = vmatpush1.xpose.msra.mxu0 0.0
    %4209 = vmatprep.subr.mxu0 0.0
    %4210 = vmatpush1.xpose.msra.mxu0 0.0
    %4211 = vmatprep.subr.mxu0 0.0
    %4212 = vmatpush1.xpose.msra.mxu0 0.0
    %4213 = vmatprep.subr.mxu0 0.0
    %4214 = vmatpush1.xpose.msra.mxu0 0.0
    %4215 = vmatprep.subr.mxu0 0.0
    %4216 = vmatpush1.xpose.msra.mxu0 0.0
    %4217 = vmatprep.subr.mxu0 0.0
    %4218 = vmatpush1.xpose.msra.mxu0 0.0
    %4219 = vmatprep.subr.mxu0 0.0
    %4220 = vmatpush1.xpose.msra.mxu0 0.0
    %4221 = vmatprep.subr.mxu0 0.0
    %4222 = vmatpush1.xpose.msra.mxu0 0.0
    %4223 = vmatprep.subr.mxu0 0.0
    %4224 = vmatpush1.xpose.msra.mxu0 0.0
    %4225 = vmatprep.subr.mxu0 0.0
    %4226 = vmatpush1.xpose.msra.mxu0 0.0
    %4227 = vmatprep.subr.mxu0 0.0
    %4228 = vmatpush1.xpose.msra.mxu0 0.0
    %4229 = vmatprep.subr.mxu0 0.0
    %4230 = vmatpush1.xpose.msra.mxu0 0.0
    %4231 = vmatprep.subr.mxu0 0.0
    %4232 = vmatpush1.xpose.msra.mxu0 0.0
    %4233 = vmatprep.subr.mxu0 0.0
    %4234 = vmatpush1.xpose.msra.mxu0 0.0
    %4235 = vmatprep.subr.mxu0 0.0
    %4236 = vmatpush1.xpose.msra.mxu0 0.0
    %4237 = vmatprep.mubr.f32.mxu0 0.0
    %4238 = vmatmul.mubr.f32.gmra.mrb[0].mxu0 %v2729
    %v4239 = vpop.f32.mrb[0].mxu0
    %v4240 = vadd.f32 0.0, %v4239
    %v4241 = vpop.f32.mrb[0].mxu0
    %4242 = vdwg.mxu0
    %v4243 = vmul.f32 %v4240, 0.088388346
    %v4244 = vsel %vm3079, %v4243, -1e+30
    %v4245 = vsel %vm3152, %v4244, -inf
    %4246 = vmax.xlane.f32.xlu0 %v4245
    %v4247 = vpop.xlane.xlu0 %4246
    %v4248 = vsub.f32 %v4244, %v4247
    %v4249 = vmul.f32 %v4248, 1.442695
    %v4250 = vpow.pop %v4249
    %v4251 = vsel %vm3152, %v4250, 0.0
    %4252 = vadd.xlane.f32.xlu0 %v4251
    %v4253 = vpop.xlane.xlu0 %4252
    %v4254 = vrcp.pop %v4253
    %v4255 = vmul.f32 %v4250, %v4254
    %v4257 = vsel %vm3152, %v4255, 0
    %4259 = vmatprep.subr.mxu0 0.0
    %4260 = vmatpush1.msra.mxu0 %v3073
    %4261 = vmatprep.subr.mxu0 0.0
    %4262 = vmatpush1.msra.mxu0 0.0
    %4263 = vmatprep.subr.mxu0 0.0
    %4264 = vmatpush1.msra.mxu0 0.0
    %4265 = vmatprep.subr.mxu0 0.0
    %4266 = vmatpush1.msra.mxu0 0.0
    %4267 = vmatprep.subr.mxu0 0.0
    %4268 = vmatpush1.msra.mxu0 0.0
    %4269 = vmatprep.subr.mxu0 0.0
    %4270 = vmatpush1.msra.mxu0 0.0
    %4271 = vmatprep.subr.mxu0 0.0
    %4272 = vmatpush1.msra.mxu0 0.0
    %4273 = vmatprep.subr.mxu0 0.0
    %4274 = vmatpush1.msra.mxu0 0.0
    %4275 = vmatprep.subr.mxu0 0.0
    %4276 = vmatpush1.msra.mxu0 0.0
    %4277 = vmatprep.subr.mxu0 0.0
    %4278 = vmatpush1.msra.mxu0 0.0
    %4279 = vmatprep.subr.mxu0 0.0
    %4280 = vmatpush1.msra.mxu0 0.0
    %4281 = vmatprep.subr.mxu0 0.0
    %4282 = vmatpush1.msra.mxu0 0.0
    %4283 = vmatprep.subr.mxu0 0.0
    %4284 = vmatpush1.msra.mxu0 0.0
    %4285 = vmatprep.subr.mxu0 0.0
    %4286 = vmatpush1.msra.mxu0 0.0
    %4287 = vmatprep.subr.mxu0 0.0
    %4288 = vmatpush1.msra.mxu0 0.0
    %4289 = vmatprep.subr.mxu0 0.0
    %4290 = vmatpush1.msra.mxu0 0.0
    %4291 = vmatprep.subr.mxu0 0.0
    %4292 = vmatpush1.msra.mxu0 0.0
    %4293 = vmatprep.subr.mxu0 0.0
    %4294 = vmatpush1.msra.mxu0 0.0
    %4295 = vmatprep.subr.mxu0 0.0
    %4296 = vmatpush1.msra.mxu0 0.0
    %4297 = vmatprep.subr.mxu0 0.0
    %4298 = vmatpush1.msra.mxu0 0.0
    %4299 = vmatprep.subr.mxu0 0.0
    %4300 = vmatpush1.msra.mxu0 0.0
    %4301 = vmatprep.subr.mxu0 0.0
    %4302 = vmatpush1.msra.mxu0 0.0
    %4303 = vmatprep.subr.mxu0 0.0
    %4304 = vmatpush1.msra.mxu0 0.0
    %4305 = vmatprep.subr.mxu0 0.0
    %4306 = vmatpush1.msra.mxu0 0.0
    %4307 = vmatprep.subr.mxu0 0.0
    %4308 = vmatpush1.msra.mxu0 0.0
    %4309 = vmatprep.subr.mxu0 0.0
    %4310 = vmatpush1.msra.mxu0 0.0
    %4311 = vmatprep.subr.mxu0 0.0
    %4312 = vmatpush1.msra.mxu0 0.0
    %4313 = vmatprep.subr.mxu0 0.0
    %4314 = vmatpush1.msra.mxu0 0.0
    %4315 = vmatprep.subr.mxu0 0.0
    %4316 = vmatpush1.msra.mxu0 0.0
    %4317 = vmatprep.subr.mxu0 0.0
    %4318 = vmatpush1.msra.mxu0 0.0
    %4319 = vmatprep.subr.mxu0 0.0
    %4320 = vmatpush1.msra.mxu0 0.0
    %4321 = vmatprep.subr.mxu0 0.0
    %4322 = vmatpush1.msra.mxu0 0.0
    %4323 = vmatprep.mubr.f32.mxu0 0.0
    %4324 = vmatmul.mubr.f32.gmra.mrb[0].mxu0 %v4257
    %v4325 = vpop.f32.mrb[0].mxu0
    %v4326 = vadd.f32 0.0, %v4325
    %v4327 = vpop.f32.mrb[0].mxu0
    %4328 = vdwg.mxu0
    %v4329 = vpack.c.bf16 %v3858, %v3234
    %v4330 = vpack.c.bf16 %v4014, %v3390
    %v4331 = vpack.c.bf16 %v4170, %v3546
    %v4332 = vpack.c.bf16 %v4326, %v3702
    %v4333 = vld [vmem:[#allocation9] sm:$0xff]
    %v4334 = vld [vmem:[#allocation9 + $0x8] sm:$0xff]
    %v4335 = vld [vmem:[#allocation9 + $0x10] sm:$0xff]
    %v4336 = vld [vmem:[#allocation9 + $0x18] sm:$0xff]
    %v4337 = vld [vmem:[#allocation9 + $0x20] sm:$0xff]
    %v4338 = vld [vmem:[#allocation9 + $0x28] sm:$0xff]
    %v4339 = vld [vmem:[#allocation9 + $0x30] sm:$0xff]
    %v4340 = vld [vmem:[#allocation9 + $0x38] sm:$0xff]
    %v4341 = vld [vmem:[#allocation9 + $0x40] sm:$0xff]
    %v4342 = vld [vmem:[#allocation9 + $0x48] sm:$0xff]
    %v4343 = vld [vmem:[#allocation9 + $0x50] sm:$0xff]
    %v4344 = vld [vmem:[#allocation9 + $0x58] sm:$0xff]
    %v4345 = vld [vmem:[#allocation9 + $0x60] sm:$0xff]
    %v4346 = vld [vmem:[#allocation9 + $0x68] sm:$0xff]
    %v4347 = vld [vmem:[#allocation9 + $0x70] sm:$0xff]
    %v4348 = vld [vmem:[#allocation9 + $0x78] sm:$0xff]
    %v4349 = vld [vmem:[#allocation9 + $0x80] sm:$0xff]
    %v4350 = vld [vmem:[#allocation9 + $0x88] sm:$0xff]
    %v4351 = vld [vmem:[#allocation9 + $0x90] sm:$0xff]
    %v4352 = vld [vmem:[#allocation9 + $0x98] sm:$0xff]
    %v4353 = vld [vmem:[#allocation9 + $0xa0] sm:$0xff]
    %v4354 = vld [vmem:[#allocation9 + $0xa8] sm:$0xff]
    %v4355 = vld [vmem:[#allocation9 + $0xb0] sm:$0xff]
    %v4356 = vld [vmem:[#allocation9 + $0xb8] sm:$0xff]
    %v4357 = vld [vmem:[#allocation9 + $0xc0] sm:$0xff]
    %v4358 = vld [vmem:[#allocation9 + $0xc8] sm:$0xff]
    %v4359 = vld [vmem:[#allocation9 + $0xd0] sm:$0xff]
    %v4360 = vld [vmem:[#allocation9 + $0xd8] sm:$0xff]
    %v4361 = vld [vmem:[#allocation9 + $0xe0] sm:$0xff]
    %v4362 = vld [vmem:[#allocation9 + $0xe8] sm:$0xff]
    %v4363 = vld [vmem:[#allocation9 + $0xf0] sm:$0xff]
    %v4364 = vld [vmem:[#allocation9 + $0xf8] sm:$0xff]
    %v4365 = vld [vmem:[#allocation9 + $0x100] sm:$0xff]
    %v4366 = vld [vmem:[#allocation9 + $0x108] sm:$0xff]
    %v4367 = vld [vmem:[#allocation9 + $0x110] sm:$0xff]
    %v4368 = vld [vmem:[#allocation9 + $0x118] sm:$0xff]
    %v4369 = vld [vmem:[#allocation9 + $0x120] sm:$0xff]
    %v4370 = vld [vmem:[#allocation9 + $0x128] sm:$0xff]
    %v4371 = vld [vmem:[#allocation9 + $0x130] sm:$0xff]
    %v4372 = vld [vmem:[#allocation9 + $0x138] sm:$0xff]
    %v4373 = vld [vmem:[#allocation9 + $0x140] sm:$0xff]
    %v4374 = vld [vmem:[#allocation9 + $0x148] sm:$0xff]
    %v4375 = vld [vmem:[#allocation9 + $0x150] sm:$0xff]
    %v4376 = vld [vmem:[#allocation9 + $0x158] sm:$0xff]
    %v4377 = vld [vmem:[#allocation9 + $0x160] sm:$0xff]
    %v4378 = vld [vmem:[#allocation9 + $0x168] sm:$0xff]
    %v4379 = vld [vmem:[#allocation9 + $0x170] sm:$0xff]
    %v4380 = vld [vmem:[#allocation9 + $0x178] sm:$0xff]
    %v4381 = vld [vmem:[#allocation9 + $0x180] sm:$0xff]
    %v4382 = vld [vmem:[#allocation9 + $0x188] sm:$0xff]
    %v4383 = vld [vmem:[#allocation9 + $0x190] sm:$0xff]
    %v4384 = vld [vmem:[#allocation9 + $0x198] sm:$0xff]
    %v4385 = vld [vmem:[#allocation9 + $0x1a0] sm:$0xff]
    %v4386 = vld [vmem:[#allocation9 + $0x1a8] sm:$0xff]
    %v4387 = vld [vmem:[#allocation9 + $0x1b0] sm:$0xff]
    %v4388 = vld [vmem:[#allocation9 + $0x1b8] sm:$0xff]
    %v4389 = vld [vmem:[#allocation9 + $0x1c0] sm:$0xff]
    %v4390 = vld [vmem:[#allocation9 + $0x1c8] sm:$0xff]
    %v4391 = vld [vmem:[#allocation9 + $0x1d0] sm:$0xff]
    %v4392 = vld [vmem:[#allocation9 + $0x1d8] sm:$0xff]
    %v4393 = vld [vmem:[#allocation9 + $0x1e0] sm:$0xff]
    %v4394 = vld [vmem:[#allocation9 + $0x1e8] sm:$0xff]
    %v4395 = vld [vmem:[#allocation9 + $0x1f0] sm:$0xff]
    %v4396 = vld [vmem:[#allocation9 + $0x1f8] sm:$0xff]
    %v4397 = vld [vmem:[#allocation9 + $0x200] sm:$0xff]
    %v4398 = vld [vmem:[#allocation9 + $0x208] sm:$0xff]
    %v4399 = vld [vmem:[#allocation9 + $0x210] sm:$0xff]
    %v4400 = vld [vmem:[#allocation9 + $0x218] sm:$0xff]
    %v4401 = vld [vmem:[#allocation9 + $0x220] sm:$0xff]
    %v4402 = vld [vmem:[#allocation9 + $0x228] sm:$0xff]
    %v4403 = vld [vmem:[#allocation9 + $0x230] sm:$0xff]
    %v4404 = vld [vmem:[#allocation9 + $0x238] sm:$0xff]
    %v4405 = vld [vmem:[#allocation9 + $0x240] sm:$0xff]
    %v4406 = vld [vmem:[#allocation9 + $0x248] sm:$0xff]
    %v4407 = vld [vmem:[#allocation9 + $0x250] sm:$0xff]
    %v4408 = vld [vmem:[#allocation9 + $0x258] sm:$0xff]
    %v4409 = vld [vmem:[#allocation9 + $0x260] sm:$0xff]
    %v4410 = vld [vmem:[#allocation9 + $0x268] sm:$0xff]
    %v4411 = vld [vmem:[#allocation9 + $0x270] sm:$0xff]
    %v4412 = vld [vmem:[#allocation9 + $0x278] sm:$0xff]
    %v4413 = vld [vmem:[#allocation9 + $0x280] sm:$0xff]
    %v4414 = vld [vmem:[#allocation9 + $0x288] sm:$0xff]
    %v4415 = vld [vmem:[#allocation9 + $0x290] sm:$0xff]
    %v4416 = vld [vmem:[#allocation9 + $0x298] sm:$0xff]
    %v4417 = vld [vmem:[#allocation9 + $0x2a0] sm:$0xff]
    %v4418 = vld [vmem:[#allocation9 + $0x2a8] sm:$0xff]
    %v4419 = vld [vmem:[#allocation9 + $0x2b0] sm:$0xff]
    %v4420 = vld [vmem:[#allocation9 + $0x2b8] sm:$0xff]
    %v4421 = vld [vmem:[#allocation9 + $0x2c0] sm:$0xff]
    %v4422 = vld [vmem:[#allocation9 + $0x2c8] sm:$0xff]
    %v4423 = vld [vmem:[#allocation9 + $0x2d0] sm:$0xff]
    %v4424 = vld [vmem:[#allocation9 + $0x2d8] sm:$0xff]
    %v4425 = vld [vmem:[#allocation9 + $0x2e0] sm:$0xff]
    %v4426 = vld [vmem:[#allocation9 + $0x2e8] sm:$0xff]
    %v4427 = vld [vmem:[#allocation9 + $0x2f0] sm:$0xff]
    %v4428 = vld [vmem:[#allocation9 + $0x2f8] sm:$0xff]
    %v4429 = vld [vmem:[#allocation9 + $0x300] sm:$0xff]
    %v4430 = vld [vmem:[#allocation9 + $0x308] sm:$0xff]
    %v4431 = vld [vmem:[#allocation9 + $0x310] sm:$0xff]
    %v4432 = vld [vmem:[#allocation9 + $0x318] sm:$0xff]
    %v4433 = vld [vmem:[#allocation9 + $0x320] sm:$0xff]
    %v4434 = vld [vmem:[#allocation9 + $0x328] sm:$0xff]
    %v4435 = vld [vmem:[#allocation9 + $0x330] sm:$0xff]
    %v4436 = vld [vmem:[#allocation9 + $0x338] sm:$0xff]
    %v4437 = vld [vmem:[#allocation9 + $0x340] sm:$0xff]
    %v4438 = vld [vmem:[#allocation9 + $0x348] sm:$0xff]
    %v4439 = vld [vmem:[#allocation9 + $0x350] sm:$0xff]
    %v4440 = vld [vmem:[#allocation9 + $0x358] sm:$0xff]
    %v4441 = vld [vmem:[#allocation9 + $0x360] sm:$0xff]
    %v4442 = vld [vmem:[#allocation9 + $0x368] sm:$0xff]
    %v4443 = vld [vmem:[#allocation9 + $0x370] sm:$0xff]
    %v4444 = vld [vmem:[#allocation9 + $0x378] sm:$0xff]
    %v4445 = vld [vmem:[#allocation9 + $0x380] sm:$0xff]
    %v4446 = vld [vmem:[#allocation9 + $0x388] sm:$0xff]
    %v4447 = vld [vmem:[#allocation9 + $0x390] sm:$0xff]
    %v4448 = vld [vmem:[#allocation9 + $0x398] sm:$0xff]
    %v4449 = vld [vmem:[#allocation9 + $0x3a0] sm:$0xff]
    %v4450 = vld [vmem:[#allocation9 + $0x3a8] sm:$0xff]
    %v4451 = vld [vmem:[#allocation9 + $0x3b0] sm:$0xff]
    %v4452 = vld [vmem:[#allocation9 + $0x3b8] sm:$0xff]
    %v4453 = vld [vmem:[#allocation9 + $0x3c0] sm:$0xff]
    %v4454 = vld [vmem:[#allocation9 + $0x3c8] sm:$0xff]
    %v4455 = vld [vmem:[#allocation9 + $0x3d0] sm:$0xff]
    %v4456 = vld [vmem:[#allocation9 + $0x3d8] sm:$0xff]
    %v4457 = vld [vmem:[#allocation9 + $0x3e0] sm:$0xff]
    %v4458 = vld [vmem:[#allocation9 + $0x3e8] sm:$0xff]
    %v4459 = vld [vmem:[#allocation9 + $0x3f0] sm:$0xff]
    %v4460 = vld [vmem:[#allocation9 + $0x3f8] sm:$0xff]
    %v4461 = vld [vmem:[#allocation10] sm:$0xf]
    %v4463 = vlaneseq
    %v4464 = vshrl.u32 %v4463, 7
    %v4465 = vsub.s32 0, %v4464
    %v4466 = vrot.slane %v4461, %v4465
    %v4467 = vlaneseq
    %v4468 = vshrl.u32 %v4467, 7
    %v4469 = vsub.s32 1, %v4468
    %v4470 = vrot.slane %v4461, %v4469
    %v4471 = vlaneseq
    %v4472 = vshrl.u32 %v4471, 7
    %v4473 = vsub.s32 2, %v4472
    %v4474 = vrot.slane %v4461, %v4473
    %v4475 = vlaneseq
    %v4476 = vshrl.u32 %v4475, 7
    %v4477 = vsub.s32 3, %v4476
    %v4478 = vrot.slane %v4461, %v4477
    %v4611 = vunpack.c.l.b16 %v4333
    %v4612 = vunpack.c.h.b16 %v4333
    %v4613 = vunpack.c.l.b16 %v4334
    %v4614 = vunpack.c.h.b16 %v4334
    %v4615 = vunpack.c.l.b16 %v4335
    %v4616 = vunpack.c.h.b16 %v4335
    %v4617 = vunpack.c.l.b16 %v4336
    %v4618 = vunpack.c.h.b16 %v4336
    %v4619 = vunpack.c.l.b16 %v4337
    %v4620 = vunpack.c.h.b16 %v4337
    %v4621 = vunpack.c.l.b16 %v4338
    %v4622 = vunpack.c.h.b16 %v4338
    %v4623 = vunpack.c.l.b16 %v4339
    %v4624 = vunpack.c.h.b16 %v4339
    %v4625 = vunpack.c.l.b16 %v4340
    %v4626 = vunpack.c.h.b16 %v4340
    %v4627 = vunpack.c.l.b16 %v4341
    %v4628 = vunpack.c.h.b16 %v4341
    %v4629 = vunpack.c.l.b16 %v4342
    %v4630 = vunpack.c.h.b16 %v4342
    %v4631 = vunpack.c.l.b16 %v4343
    %v4632 = vunpack.c.h.b16 %v4343
    %v4633 = vunpack.c.l.b16 %v4344
    %v4634 = vunpack.c.h.b16 %v4344
    %v4635 = vunpack.c.l.b16 %v4345
    %v4636 = vunpack.c.h.b16 %v4345
    %v4637 = vunpack.c.l.b16 %v4346
    %v4638 = vunpack.c.h.b16 %v4346
    %v4639 = vunpack.c.l.b16 %v4347
    %v4640 = vunpack.c.h.b16 %v4347
    %v4641 = vunpack.c.l.b16 %v4348
    %v4642 = vunpack.c.h.b16 %v4348
    %v4643 = vunpack.c.l.b16 %v4349
    %v4644 = vunpack.c.h.b16 %v4349
    %v4645 = vunpack.c.l.b16 %v4350
    %v4646 = vunpack.c.h.b16 %v4350
    %v4647 = vunpack.c.l.b16 %v4351
    %v4648 = vunpack.c.h.b16 %v4351
    %v4649 = vunpack.c.l.b16 %v4352
    %v4650 = vunpack.c.h.b16 %v4352
    %v4651 = vunpack.c.l.b16 %v4353
    %v4652 = vunpack.c.h.b16 %v4353
    %v4653 = vunpack.c.l.b16 %v4354
    %v4654 = vunpack.c.h.b16 %v4354
    %v4655 = vunpack.c.l.b16 %v4355
    %v4656 = vunpack.c.h.b16 %v4355
    %v4657 = vunpack.c.l.b16 %v4356
    %v4658 = vunpack.c.h.b16 %v4356
    %v4659 = vunpack.c.l.b16 %v4357
    %v4660 = vunpack.c.h.b16 %v4357
    %v4661 = vunpack.c.l.b16 %v4358
    %v4662 = vunpack.c.h.b16 %v4358
    %v4663 = vunpack.c.l.b16 %v4359
    %v4664 = vunpack.c.h.b16 %v4359
    %v4665 = vunpack.c.l.b16 %v4360
    %v4666 = vunpack.c.h.b16 %v4360
    %v4667 = vunpack.c.l.b16 %v4361
    %v4668 = vunpack.c.h.b16 %v4361
    %v4669 = vunpack.c.l.b16 %v4362
    %v4670 = vunpack.c.h.b16 %v4362
    %v4671 = vunpack.c.l.b16 %v4363
    %v4672 = vunpack.c.h.b16 %v4363
    %v4673 = vunpack.c.l.b16 %v4364
    %v4674 = vunpack.c.h.b16 %v4364
    %v4675 = vunpack.c.l.b16 %v4365
    %v4676 = vunpack.c.h.b16 %v4365
    %v4677 = vunpack.c.l.b16 %v4366
    %v4678 = vunpack.c.h.b16 %v4366
    %v4679 = vunpack.c.l.b16 %v4367
    %v4680 = vunpack.c.h.b16 %v4367
    %v4681 = vunpack.c.l.b16 %v4368
    %v4682 = vunpack.c.h.b16 %v4368
    %v4683 = vunpack.c.l.b16 %v4369
    %v4684 = vunpack.c.h.b16 %v4369
    %v4685 = vunpack.c.l.b16 %v4370
    %v4686 = vunpack.c.h.b16 %v4370
    %v4687 = vunpack.c.l.b16 %v4371
    %v4688 = vunpack.c.h.b16 %v4371
    %v4689 = vunpack.c.l.b16 %v4372
    %v4690 = vunpack.c.h.b16 %v4372
    %v4691 = vunpack.c.l.b16 %v4373
    %v4692 = vunpack.c.h.b16 %v4373
    %v4693 = vunpack.c.l.b16 %v4374
    %v4694 = vunpack.c.h.b16 %v4374
    %v4695 = vunpack.c.l.b16 %v4375
    %v4696 = vunpack.c.h.b16 %v4375
    %v4697 = vunpack.c.l.b16 %v4376
    %v4698 = vunpack.c.h.b16 %v4376
    %v4699 = vunpack.c.l.b16 %v4377
    %v4700 = vunpack.c.h.b16 %v4377
    %v4701 = vunpack.c.l.b16 %v4378
    %v4702 = vunpack.c.h.b16 %v4378
    %v4703 = vunpack.c.l.b16 %v4379
    %v4704 = vunpack.c.h.b16 %v4379
    %v4705 = vunpack.c.l.b16 %v4380
    %v4706 = vunpack.c.h.b16 %v4380
    %v4707 = vunpack.c.l.b16 %v4381
    %v4708 = vunpack.c.h.b16 %v4381
    %v4709 = vunpack.c.l.b16 %v4382
    %v4710 = vunpack.c.h.b16 %v4382
    %v4711 = vunpack.c.l.b16 %v4383
    %v4712 = vunpack.c.h.b16 %v4383
    %v4713 = vunpack.c.l.b16 %v4384
    %v4714 = vunpack.c.h.b16 %v4384
    %v4715 = vunpack.c.l.b16 %v4385
    %v4716 = vunpack.c.h.b16 %v4385
    %v4717 = vunpack.c.l.b16 %v4386
    %v4718 = vunpack.c.h.b16 %v4386
    %v4719 = vunpack.c.l.b16 %v4387
    %v4720 = vunpack.c.h.b16 %v4387
    %v4721 = vunpack.c.l.b16 %v4388
    %v4722 = vunpack.c.h.b16 %v4388
    %v4723 = vunpack.c.l.b16 %v4389
    %v4724 = vunpack.c.h.b16 %v4389
    %v4725 = vunpack.c.l.b16 %v4390
    %v4726 = vunpack.c.h.b16 %v4390
    %v4727 = vunpack.c.l.b16 %v4391
    %v4728 = vunpack.c.h.b16 %v4391
    %v4729 = vunpack.c.l.b16 %v4392
    %v4730 = vunpack.c.h.b16 %v4392
    %v4731 = vunpack.c.l.b16 %v4393
    %v4732 = vunpack.c.h.b16 %v4393
    %v4733 = vunpack.c.l.b16 %v4394
    %v4734 = vunpack.c.h.b16 %v4394
    %v4735 = vunpack.c.l.b16 %v4395
    %v4736 = vunpack.c.h.b16 %v4395
    %v4737 = vunpack.c.l.b16 %v4396
    %v4738 = vunpack.c.h.b16 %v4396
    %v4739 = vunpack.c.l.b16 %v4397
    %v4740 = vunpack.c.h.b16 %v4397
    %v4741 = vunpack.c.l.b16 %v4398
    %v4742 = vunpack.c.h.b16 %v4398
    %v4743 = vunpack.c.l.b16 %v4399
    %v4744 = vunpack.c.h.b16 %v4399
    %v4745 = vunpack.c.l.b16 %v4400
    %v4746 = vunpack.c.h.b16 %v4400
    %v4747 = vunpack.c.l.b16 %v4401
    %v4748 = vunpack.c.h.b16 %v4401
    %v4749 = vunpack.c.l.b16 %v4402
    %v4750 = vunpack.c.h.b16 %v4402
    %v4751 = vunpack.c.l.b16 %v4403
    %v4752 = vunpack.c.h.b16 %v4403
    %v4753 = vunpack.c.l.b16 %v4404
    %v4754 = vunpack.c.h.b16 %v4404
    %v4755 = vunpack.c.l.b16 %v4405
    %v4756 = vunpack.c.h.b16 %v4405
    %v4757 = vunpack.c.l.b16 %v4406
    %v4758 = vunpack.c.h.b16 %v4406
    %v4759 = vunpack.c.l.b16 %v4407
    %v4760 = vunpack.c.h.b16 %v4407
    %v4761 = vunpack.c.l.b16 %v4408
    %v4762 = vunpack.c.h.b16 %v4408
    %v4763 = vunpack.c.l.b16 %v4409
    %v4764 = vunpack.c.h.b16 %v4409
    %v4765 = vunpack.c.l.b16 %v4410
    %v4766 = vunpack.c.h.b16 %v4410
    %v4767 = vunpack.c.l.b16 %v4411
    %v4768 = vunpack.c.h.b16 %v4411
    %v4769 = vunpack.c.l.b16 %v4412
    %v4770 = vunpack.c.h.b16 %v4412
    %v4771 = vunpack.c.l.b16 %v4413
    %v4772 = vunpack.c.h.b16 %v4413
    %v4773 = vunpack.c.l.b16 %v4414
    %v4774 = vunpack.c.h.b16 %v4414
    %v4775 = vunpack.c.l.b16 %v4415
    %v4776 = vunpack.c.h.b16 %v4415
    %v4777 = vunpack.c.l.b16 %v4416
    %v4778 = vunpack.c.h.b16 %v4416
    %v4779 = vunpack.c.l.b16 %v4417
    %v4780 = vunpack.c.h.b16 %v4417
    %v4781 = vunpack.c.l.b16 %v4418
    %v4782 = vunpack.c.h.b16 %v4418
    %v4783 = vunpack.c.l.b16 %v4419
    %v4784 = vunpack.c.h.b16 %v4419
    %v4785 = vunpack.c.l.b16 %v4420
    %v4786 = vunpack.c.h.b16 %v4420
    %v4787 = vunpack.c.l.b16 %v4421
    %v4788 = vunpack.c.h.b16 %v4421
    %v4789 = vunpack.c.l.b16 %v4422
    %v4790 = vunpack.c.h.b16 %v4422
    %v4791 = vunpack.c.l.b16 %v4423
    %v4792 = vunpack.c.h.b16 %v4423
    %v4793 = vunpack.c.l.b16 %v4424
    %v4794 = vunpack.c.h.b16 %v4424
    %v4795 = vunpack.c.l.b16 %v4425
    %v4796 = vunpack.c.h.b16 %v4425
    %v4797 = vunpack.c.l.b16 %v4426
    %v4798 = vunpack.c.h.b16 %v4426
    %v4799 = vunpack.c.l.b16 %v4427
    %v4800 = vunpack.c.h.b16 %v4427
    %v4801 = vunpack.c.l.b16 %v4428
    %v4802 = vunpack.c.h.b16 %v4428
    %v4803 = vunpack.c.l.b16 %v4429
    %v4804 = vunpack.c.h.b16 %v4429
    %v4805 = vunpack.c.l.b16 %v4430
    %v4806 = vunpack.c.h.b16 %v4430
    %v4807 = vunpack.c.l.b16 %v4431
    %v4808 = vunpack.c.h.b16 %v4431
    %v4809 = vunpack.c.l.b16 %v4432
    %v4810 = vunpack.c.h.b16 %v4432
    %v4811 = vunpack.c.l.b16 %v4433
    %v4812 = vunpack.c.h.b16 %v4433
    %v4813 = vunpack.c.l.b16 %v4434
    %v4814 = vunpack.c.h.b16 %v4434
    %v4815 = vunpack.c.l.b16 %v4435
    %v4816 = vunpack.c.h.b16 %v4435
    %v4817 = vunpack.c.l.b16 %v4436
    %v4818 = vunpack.c.h.b16 %v4436
    %v4819 = vunpack.c.l.b16 %v4437
    %v4820 = vunpack.c.h.b16 %v4437
    %v4821 = vunpack.c.l.b16 %v4438
    %v4822 = vunpack.c.h.b16 %v4438
    %v4823 = vunpack.c.l.b16 %v4439
    %v4824 = vunpack.c.h.b16 %v4439
    %v4825 = vunpack.c.l.b16 %v4440
    %v4826 = vunpack.c.h.b16 %v4440
    %v4827 = vunpack.c.l.b16 %v4441
    %v4828 = vunpack.c.h.b16 %v4441
    %v4829 = vunpack.c.l.b16 %v4442
    %v4830 = vunpack.c.h.b16 %v4442
    %v4831 = vunpack.c.l.b16 %v4443
    %v4832 = vunpack.c.h.b16 %v4443
    %v4833 = vunpack.c.l.b16 %v4444
    %v4834 = vunpack.c.h.b16 %v4444
    %v4835 = vunpack.c.l.b16 %v4445
    %v4836 = vunpack.c.h.b16 %v4445
    %v4837 = vunpack.c.l.b16 %v4446
    %v4838 = vunpack.c.h.b16 %v4446
    %v4839 = vunpack.c.l.b16 %v4447
    %v4840 = vunpack.c.h.b16 %v4447
    %v4841 = vunpack.c.l.b16 %v4448
    %v4842 = vunpack.c.h.b16 %v4448
    %v4843 = vunpack.c.l.b16 %v4449
    %v4844 = vunpack.c.h.b16 %v4449
    %v4845 = vunpack.c.l.b16 %v4450
    %v4846 = vunpack.c.h.b16 %v4450
    %v4847 = vunpack.c.l.b16 %v4451
    %v4848 = vunpack.c.h.b16 %v4451
    %v4849 = vunpack.c.l.b16 %v4452
    %v4850 = vunpack.c.h.b16 %v4452
    %v4851 = vunpack.c.l.b16 %v4453
    %v4852 = vunpack.c.h.b16 %v4453
    %v4853 = vunpack.c.l.b16 %v4454
    %v4854 = vunpack.c.h.b16 %v4454
    %v4855 = vunpack.c.l.b16 %v4455
    %v4856 = vunpack.c.h.b16 %v4455
    %v4857 = vunpack.c.l.b16 %v4456
    %v4858 = vunpack.c.h.b16 %v4456
    %v4859 = vunpack.c.l.b16 %v4457
    %v4860 = vunpack.c.h.b16 %v4457
    %v4861 = vunpack.c.l.b16 %v4458
    %v4862 = vunpack.c.h.b16 %v4458
    %v4863 = vunpack.c.l.b16 %v4459
    %v4864 = vunpack.c.h.b16 %v4459
    %v4865 = vunpack.c.l.b16 %v4460
    %v4866 = vunpack.c.h.b16 %v4460
    %v4867 = vpack.c.b16 %v4615, %v4611
    %v4868 = vpack.c.b16 %v4616, %v4612
    %v4869 = vpack.c.b16 %v4617, %v4613
    %v4870 = vpack.c.b16 %v4618, %v4614
    %v4871 = vpack.c.b16 %v4623, %v4619
    %v4872 = vpack.c.b16 %v4624, %v4620
    %v4873 = vpack.c.b16 %v4625, %v4621
    %v4874 = vpack.c.b16 %v4626, %v4622
    %v4875 = vpack.c.b16 %v4631, %v4627
    %v4876 = vpack.c.b16 %v4632, %v4628
    %v4877 = vpack.c.b16 %v4633, %v4629
    %v4878 = vpack.c.b16 %v4634, %v4630
    %v4879 = vpack.c.b16 %v4639, %v4635
    %v4880 = vpack.c.b16 %v4640, %v4636
    %v4881 = vpack.c.b16 %v4641, %v4637
    %v4882 = vpack.c.b16 %v4642, %v4638
    %v4883 = vpack.c.b16 %v4647, %v4643
    %v4884 = vpack.c.b16 %v4648, %v4644
    %v4885 = vpack.c.b16 %v4649, %v4645
    %v4886 = vpack.c.b16 %v4650, %v4646
    %v4887 = vpack.c.b16 %v4655, %v4651
    %v4888 = vpack.c.b16 %v4656, %v4652
    %v4889 = vpack.c.b16 %v4657, %v4653
    %v4890 = vpack.c.b16 %v4658, %v4654
    %v4891 = vpack.c.b16 %v4663, %v4659
    %v4892 = vpack.c.b16 %v4664, %v4660
    %v4893 = vpack.c.b16 %v4665, %v4661
    %v4894 = vpack.c.b16 %v4666, %v4662
    %v4895 = vpack.c.b16 %v4671, %v4667
    %v4896 = vpack.c.b16 %v4672, %v4668
    %v4897 = vpack.c.b16 %v4673, %v4669
    %v4898 = vpack.c.b16 %v4674, %v4670
    %v4899 = vpack.c.b16 %v4679, %v4675
    %v4900 = vpack.c.b16 %v4680, %v4676
    %v4901 = vpack.c.b16 %v4681, %v4677
    %v4902 = vpack.c.b16 %v4682, %v4678
    %v4903 = vpack.c.b16 %v4687, %v4683
    %v4904 = vpack.c.b16 %v4688, %v4684
    %v4905 = vpack.c.b16 %v4689, %v4685
    %v4906 = vpack.c.b16 %v4690, %v4686
    %v4907 = vpack.c.b16 %v4695, %v4691
    %v4908 = vpack.c.b16 %v4696, %v4692
    %v4909 = vpack.c.b16 %v4697, %v4693
    %v4910 = vpack.c.b16 %v4698, %v4694
    %v4911 = vpack.c.b16 %v4703, %v4699
    %v4912 = vpack.c.b16 %v4704, %v4700
    %v4913 = vpack.c.b16 %v4705, %v4701
    %v4914 = vpack.c.b16 %v4706, %v4702
    %v4915 = vpack.c.b16 %v4711, %v4707
    %v4916 = vpack.c.b16 %v4712, %v4708
    %v4917 = vpack.c.b16 %v4713, %v4709
    %v4918 = vpack.c.b16 %v4714, %v4710
    %v4919 = vpack.c.b16 %v4719, %v4715
    %v4920 = vpack.c.b16 %v4720, %v4716
    %v4921 = vpack.c.b16 %v4721, %v4717
    %v4922 = vpack.c.b16 %v4722, %v4718
    %v4923 = vpack.c.b16 %v4727, %v4723
    %v4924 = vpack.c.b16 %v4728, %v4724
    %v4925 = vpack.c.b16 %v4729, %v4725
    %v4926 = vpack.c.b16 %v4730, %v4726
    %v4927 = vpack.c.b16 %v4735, %v4731
    %v4928 = vpack.c.b16 %v4736, %v4732
    %v4929 = vpack.c.b16 %v4737, %v4733
    %v4930 = vpack.c.b16 %v4738, %v4734
    %v4931 = vpack.c.b16 %v4743, %v4739
    %v4932 = vpack.c.b16 %v4744, %v4740
    %v4933 = vpack.c.b16 %v4745, %v4741
    %v4934 = vpack.c.b16 %v4746, %v4742
    %v4935 = vpack.c.b16 %v4751, %v4747
    %v4936 = vpack.c.b16 %v4752, %v4748
    %v4937 = vpack.c.b16 %v4753, %v4749
    %v4938 = vpack.c.b16 %v4754, %v4750
    %v4939 = vpack.c.b16 %v4759, %v4755
    %v4940 = vpack.c.b16 %v4760, %v4756
    %v4941 = vpack.c.b16 %v4761, %v4757
    %v4942 = vpack.c.b16 %v4762, %v4758
    %v4943 = vpack.c.b16 %v4767, %v4763
    %v4944 = vpack.c.b16 %v4768, %v4764
    %v4945 = vpack.c.b16 %v4769, %v4765
    %v4946 = vpack.c.b16 %v4770, %v4766
    %v4947 = vpack.c.b16 %v4775, %v4771
    %v4948 = vpack.c.b16 %v4776, %v4772
    %v4949 = vpack.c.b16 %v4777, %v4773
    %v4950 = vpack.c.b16 %v4778, %v4774
    %v4951 = vpack.c.b16 %v4783, %v4779
    %v4952 = vpack.c.b16 %v4784, %v4780
    %v4953 = vpack.c.b16 %v4785, %v4781
    %v4954 = vpack.c.b16 %v4786, %v4782
    %v4955 = vpack.c.b16 %v4791, %v4787
    %v4956 = vpack.c.b16 %v4792, %v4788
    %v4957 = vpack.c.b16 %v4793, %v4789
    %v4958 = vpack.c.b16 %v4794, %v4790
    %v4959 = vpack.c.b16 %v4799, %v4795
    %v4960 = vpack.c.b16 %v4800, %v4796
    %v4961 = vpack.c.b16 %v4801, %v4797
    %v4962 = vpack.c.b16 %v4802, %v4798
    %v4963 = vpack.c.b16 %v4807, %v4803
    %v4964 = vpack.c.b16 %v4808, %v4804
    %v4965 = vpack.c.b16 %v4809, %v4805
    %v4966 = vpack.c.b16 %v4810, %v4806
    %v4967 = vpack.c.b16 %v4815, %v4811
    %v4968 = vpack.c.b16 %v4816, %v4812
    %v4969 = vpack.c.b16 %v4817, %v4813
    %v4970 = vpack.c.b16 %v4818, %v4814
    %v4971 = vpack.c.b16 %v4823, %v4819
    %v4972 = vpack.c.b16 %v4824, %v4820
    %v4973 = vpack.c.b16 %v4825, %v4821
    %v4974 = vpack.c.b16 %v4826, %v4822
    %v4975 = vpack.c.b16 %v4831, %v4827
    %v4976 = vpack.c.b16 %v4832, %v4828
    %v4977 = vpack.c.b16 %v4833, %v4829
    %v4978 = vpack.c.b16 %v4834, %v4830
    %v4979 = vpack.c.b16 %v4839, %v4835
    %v4980 = vpack.c.b16 %v4840, %v4836
    %v4981 = vpack.c.b16 %v4841, %v4837
    %v4982 = vpack.c.b16 %v4842, %v4838
    %v4983 = vpack.c.b16 %v4847, %v4843
    %v4984 = vpack.c.b16 %v4848, %v4844
    %v4985 = vpack.c.b16 %v4849, %v4845
    %v4986 = vpack.c.b16 %v4850, %v4846
    %v4987 = vpack.c.b16 %v4855, %v4851
    %v4988 = vpack.c.b16 %v4856, %v4852
    %v4989 = vpack.c.b16 %v4857, %v4853
    %v4990 = vpack.c.b16 %v4858, %v4854
    %v4991 = vpack.c.b16 %v4863, %v4859
    %v4992 = vpack.c.b16 %v4864, %v4860
    %v4993 = vpack.c.b16 %v4865, %v4861
    %v4994 = vpack.c.b16 %v4866, %v4862
    %5123 = vmatprep.subr.bf16.mxu0 %v4868
    %5124 = vmatpush1.bf16.msra.mxu0 %v4867
    %5125 = vmatprep.subr.bf16.mxu0 %v4872
    %5126 = vmatpush1.bf16.msra.mxu0 %v4871
    %5127 = vmatprep.subr.bf16.mxu0 %v4876
    %5128 = vmatpush1.bf16.msra.mxu0 %v4875
    %5129 = vmatprep.subr.bf16.mxu0 %v4880
    %5130 = vmatpush1.bf16.msra.mxu0 %v4879
    %5131 = vmatprep.subr.bf16.mxu0 %v4884
    %5132 = vmatpush1.bf16.msra.mxu0 %v4883
    %5133 = vmatprep.subr.bf16.mxu0 %v4888
    %5134 = vmatpush1.bf16.msra.mxu0 %v4887
    %5135 = vmatprep.subr.bf16.mxu0 %v4892
    %5136 = vmatpush1.bf16.msra.mxu0 %v4891
    %5137 = vmatprep.subr.bf16.mxu0 %v4896
    %5138 = vmatpush1.bf16.msra.mxu0 %v4895
    %5139 = vmatprep.subr.bf16.mxu0 %v4900
    %5140 = vmatpush1.bf16.msra.mxu0 %v4899
    %5141 = vmatprep.subr.bf16.mxu0 %v4904
    %5142 = vmatpush1.bf16.msra.mxu0 %v4903
    %5143 = vmatprep.subr.bf16.mxu0 %v4908
    %5144 = vmatpush1.bf16.msra.mxu0 %v4907
    %5145 = vmatprep.subr.bf16.mxu0 %v4912
    %5146 = vmatpush1.bf16.msra.mxu0 %v4911
    %5147 = vmatprep.subr.bf16.mxu0 %v4916
    %5148 = vmatpush1.bf16.msra.mxu0 %v4915
    %5149 = vmatprep.subr.bf16.mxu0 %v4920
    %5150 = vmatpush1.bf16.msra.mxu0 %v4919
    %5151 = vmatprep.subr.bf16.mxu0 %v4924
    %5152 = vmatpush1.bf16.msra.mxu0 %v4923
    %5153 = vmatprep.subr.bf16.mxu0 %v4928
    %5154 = vmatpush1.bf16.msra.mxu0 %v4927
    %5155 = vmatprep.mubr.bf16.mxu0 %v4330
    %5156 = vmatmul.mubr.bf16.gmra.mrb[0].mxu0 %v4329
    %v5157 = vpop.f32.mrb[0].mxu0
    %v5158 = vadd.f32 %v4466, %v5157
    %v5159 = vpop.f32.mrb[0].mxu0
    %v5160 = vadd.f32 %v4470, %v5159
    %v5161 = vpop.f32.mrb[0].mxu0
    %v5162 = vadd.f32 %v4466, %v5161
    %v5163 = vpop.f32.mrb[0].mxu0
    %v5164 = vadd.f32 %v4470, %v5163
    %5165 = vdwg.mxu0
    %5166 = vmatprep.subr.bf16.mxu0 %v4932
    %5167 = vmatpush1.bf16.msra.mxu0 %v4931
    %5168 = vmatprep.subr.bf16.mxu0 %v4936
    %5169 = vmatpush1.bf16.msra.mxu0 %v4935
    %5170 = vmatprep.subr.bf16.mxu0 %v4940
    %5171 = vmatpush1.bf16.msra.mxu0 %v4939
    %5172 = vmatprep.subr.bf16.mxu0 %v4944
    %5173 = vmatpush1.bf16.msra.mxu0 %v4943
    %5174 = vmatprep.subr.bf16.mxu0 %v4948
    %5175 = vmatpush1.bf16.msra.mxu0 %v4947
    %5176 = vmatprep.subr.bf16.mxu0 %v4952
    %5177 = vmatpush1.bf16.msra.mxu0 %v4951
    %5178 = vmatprep.subr.bf16.mxu0 %v4956
    %5179 = vmatpush1.bf16.msra.mxu0 %v4955
    %5180 = vmatprep.subr.bf16.mxu0 %v4960
    %5181 = vmatpush1.bf16.msra.mxu0 %v4959
    %5182 = vmatprep.subr.bf16.mxu0 %v4964
    %5183 = vmatpush1.bf16.msra.mxu0 %v4963
    %5184 = vmatprep.subr.bf16.mxu0 %v4968
    %5185 = vmatpush1.bf16.msra.mxu0 %v4967
    %5186 = vmatprep.subr.bf16.mxu0 %v4972
    %5187 = vmatpush1.bf16.msra.mxu0 %v4971
    %5188 = vmatprep.subr.bf16.mxu0 %v4976
    %5189 = vmatpush1.bf16.msra.mxu0 %v4975
    %5190 = vmatprep.subr.bf16.mxu0 %v4980
    %5191 = vmatpush1.bf16.msra.mxu0 %v4979
    %5192 = vmatprep.subr.bf16.mxu0 %v4984
    %5193 = vmatpush1.bf16.msra.mxu0 %v4983
    %5194 = vmatprep.subr.bf16.mxu0 %v4988
    %5195 = vmatpush1.bf16.msra.mxu0 %v4987
    %5196 = vmatprep.subr.bf16.mxu0 %v4992
    %5197 = vmatpush1.bf16.msra.mxu0 %v4991
    %5198 = vmatprep.mubr.bf16.mxu0 %v4332
    %5199 = vmatmul.mubr.bf16.gmra.mrb[0].mxu0 %v4331
    %v5200 = vpop.f32.mrb[0].mxu0
    %v5201 = vadd.f32 %v5158, %v5200
    %v5202 = vpop.f32.mrb[0].mxu0
    %v5203 = vadd.f32 %v5160, %v5202
    %v5204 = vpop.f32.mrb[0].mxu0
    %v5205 = vadd.f32 %v5162, %v5204
    %v5206 = vpop.f32.mrb[0].mxu0
    %v5207 = vadd.f32 %v5164, %v5206
    %5208 = vdwg.mxu0
    %5209 = vmatprep.subr.bf16.mxu0 %v4870
    %5210 = vmatpush1.bf16.msra.mxu0 %v4869
    %5211 = vmatprep.subr.bf16.mxu0 %v4874
    %5212 = vmatpush1.bf16.msra.mxu0 %v4873
    %5213 = vmatprep.subr.bf16.mxu0 %v4878
    %5214 = vmatpush1.bf16.msra.mxu0 %v4877
    %5215 = vmatprep.subr.bf16.mxu0 %v4882
    %5216 = vmatpush1.bf16.msra.mxu0 %v4881
    %5217 = vmatprep.subr.bf16.mxu0 %v4886
    %5218 = vmatpush1.bf16.msra.mxu0 %v4885
    %5219 = vmatprep.subr.bf16.mxu0 %v4890
    %5220 = vmatpush1.bf16.msra.mxu0 %v4889
    %5221 = vmatprep.subr.bf16.mxu0 %v4894
    %5222 = vmatpush1.bf16.msra.mxu0 %v4893
    %5223 = vmatprep.subr.bf16.mxu0 %v4898
    %5224 = vmatpush1.bf16.msra.mxu0 %v4897
    %5225 = vmatprep.subr.bf16.mxu0 %v4902
    %5226 = vmatpush1.bf16.msra.mxu0 %v4901
    %5227 = vmatprep.subr.bf16.mxu0 %v4906
    %5228 = vmatpush1.bf16.msra.mxu0 %v4905
    %5229 = vmatprep.subr.bf16.mxu0 %v4910
    %5230 = vmatpush1.bf16.msra.mxu0 %v4909
    %5231 = vmatprep.subr.bf16.mxu0 %v4914
    %5232 = vmatpush1.bf16.msra.mxu0 %v4913
    %5233 = vmatprep.subr.bf16.mxu0 %v4918
    %5234 = vmatpush1.bf16.msra.mxu0 %v4917
    %5235 = vmatprep.subr.bf16.mxu0 %v4922
    %5236 = vmatpush1.bf16.msra.mxu0 %v4921
    %5237 = vmatprep.subr.bf16.mxu0 %v4926
    %5238 = vmatpush1.bf16.msra.mxu0 %v4925
    %5239 = vmatprep.subr.bf16.mxu0 %v4930
    %5240 = vmatpush1.bf16.msra.mxu0 %v4929
    %5241 = vmatprep.mubr.bf16.mxu0 %v4330
    %5242 = vmatmul.mubr.bf16.gmra.mrb[0].mxu0 %v4329
    %v5243 = vpop.f32.mrb[0].mxu0
    %v5244 = vadd.f32 %v4474, %v5243
    %v5245 = vpop.f32.mrb[0].mxu0
    %v5246 = vadd.f32 %v4478, %v5245
    %v5247 = vpop.f32.mrb[0].mxu0
    %v5248 = vadd.f32 %v4474, %v5247
    %v5249 = vpop.f32.mrb[0].mxu0
    %v5250 = vadd.f32 %v4478, %v5249
    %5251 = vdwg.mxu0
    %5252 = vmatprep.subr.bf16.mxu0 %v4934
    %5253 = vmatpush1.bf16.msra.mxu0 %v4933
    %5254 = vmatprep.subr.bf16.mxu0 %v4938
    %5255 = vmatpush1.bf16.msra.mxu0 %v4937
    %5256 = vmatprep.subr.bf16.mxu0 %v4942
    %5257 = vmatpush1.bf16.msra.mxu0 %v4941
    %5258 = vmatprep.subr.bf16.mxu0 %v4946
    %5259 = vmatpush1.bf16.msra.mxu0 %v4945
    %5260 = vmatprep.subr.bf16.mxu0 %v4950
    %5261 = vmatpush1.bf16.msra.mxu0 %v4949
    %5262 = vmatprep.subr.bf16.mxu0 %v4954
    %5263 = vmatpush1.bf16.msra.mxu0 %v4953
    %5264 = vmatprep.subr.bf16.mxu0 %v4958
    %5265 = vmatpush1.bf16.msra.mxu0 %v4957
    %5266 = vmatprep.subr.bf16.mxu0 %v4962
    %5267 = vmatpush1.bf16.msra.mxu0 %v4961
    %5268 = vmatprep.subr.bf16.mxu0 %v4966
    %5269 = vmatpush1.bf16.msra.mxu0 %v4965
    %5270 = vmatprep.subr.bf16.mxu0 %v4970
    %5271 = vmatpush1.bf16.msra.mxu0 %v4969
    %5272 = vmatprep.subr.bf16.mxu0 %v4974
    %5273 = vmatpush1.bf16.msra.mxu0 %v4973
    %5274 = vmatprep.subr.bf16.mxu0 %v4978
    %5275 = vmatpush1.bf16.msra.mxu0 %v4977
    %5276 = vmatprep.subr.bf16.mxu0 %v4982
    %5277 = vmatpush1.bf16.msra.mxu0 %v4981
    %5278 = vmatprep.subr.bf16.mxu0 %v4986
    %5279 = vmatpush1.bf16.msra.mxu0 %v4985
    %5280 = vmatprep.subr.bf16.mxu0 %v4990
    %5281 = vmatpush1.bf16.msra.mxu0 %v4989
    %5282 = vmatprep.subr.bf16.mxu0 %v4994
    %5283 = vmatpush1.bf16.msra.mxu0 %v4993
    %5284 = vmatprep.mubr.bf16.mxu0 %v4332
    %5285 = vmatmul.mubr.bf16.gmra.mrb[0].mxu0 %v4331
    %v5286 = vpop.f32.mrb[0].mxu0
    %v5287 = vadd.f32 %v5244, %v5286
    %v5288 = vpop.f32.mrb[0].mxu0
    %v5289 = vadd.f32 %v5246, %v5288
    %v5290 = vpop.f32.mrb[0].mxu0
    %v5291 = vadd.f32 %v5248, %v5290
    %v5292 = vpop.f32.mrb[0].mxu0
    %v5293 = vadd.f32 %v5250, %v5292
    %5294 = vdwg.mxu0
    %v5295 = vadd.f32 %v130, %v5201
    %v5296 = vadd.f32 %v131, %v5203
    %v5297 = vadd.f32 %v132, %v5287
    %v5298 = vadd.f32 %v133, %v5289
    %v5299 = vadd.f32 %v134, %v5205
    %v5300 = vadd.f32 %v135, %v5207
    %v5301 = vadd.f32 %v136, %v5291
    %v5302 = vadd.f32 %v137, %v5293
    %5303 = vst [vmem:[%s8] sm:$0xff] %v5295
    %5304 = vst [vmem:[%s8 + $0x8] sm:$0xff] %v5296
    %5305 = vst [vmem:[%s8 + $0x10] sm:$0xff] %v5297
    %5306 = vst [vmem:[%s8 + $0x18] sm:$0xff] %v5298
    %5307 = vst [vmem:[%s8 + $0x20] sm:$0xff] %v5299
    %5308 = vst [vmem:[%s8 + $0x28] sm:$0xff] %v5300
    %5309 = vst [vmem:[%s8 + $0x30] sm:$0xff] %v5301
    %5310 = vst [vmem:[%s8 + $0x38] sm:$0xff] %v5302
    %v5311 = vadd.f32 %v5295, %v5296
    %v5312 = vadd.f32 %v5311, %v5297
    %v5313 = vadd.f32 %v5312, %v5298
    %5314 = vadd.xlane.f32.xlu0 %v5313
    %v5315 = vpop.xlane.xlu0 %5314
    %v5316 = vadd.f32 %v5299, %v5300
    %v5317 = vadd.f32 %v5316, %v5301
    %v5318 = vadd.f32 %v5317, %v5302
    %5319 = vadd.xlane.f32.xlu0 %v5318
    %v5320 = vpop.xlane.xlu0 %5319
    %v5321 = vmul.f32 %v5315, %v148
    %v5322 = vmul.f32 %v5320, %v148
    %v5323 = vsub.f32 %v5295, %v5321
    %v5324 = vsub.f32 %v5296, %v5321
    %v5325 = vsub.f32 %v5297, %v5321
    %v5326 = vsub.f32 %v5298, %v5321
    %v5327 = vsub.f32 %v5299, %v5322
    %v5328 = vsub.f32 %v5300, %v5322
    %v5329 = vsub.f32 %v5301, %v5322
    %v5330 = vsub.f32 %v5302, %v5322
    %v5331 = vmul.f32 %v5323, %v5323
    %v5332 = vmul.f32 %v5324, %v5324
    %v5333 = vmul.f32 %v5325, %v5325
    %v5334 = vmul.f32 %v5326, %v5326
    %v5335 = vmul.f32 %v5327, %v5327
    %v5336 = vmul.f32 %v5328, %v5328
    %v5337 = vmul.f32 %v5329, %v5329
    %v5338 = vmul.f32 %v5330, %v5330
    %v5339 = vadd.f32 %v5331, %v5332
    %v5340 = vadd.f32 %v5339, %v5333
    %v5341 = vadd.f32 %v5340, %v5334
    %5342 = vadd.xlane.f32.xlu0 %v5341
    %v5343 = vpop.xlane.xlu0 %5342
    %v5344 = vadd.f32 %v5335, %v5336
    %v5345 = vadd.f32 %v5344, %v5337
    %v5346 = vadd.f32 %v5345, %v5338
    %5347 = vadd.xlane.f32.xlu0 %v5346
    %v5348 = vpop.xlane.xlu0 %5347
    %v5349 = vmul.f32 %v5343, %v148
    %v5350 = vmul.f32 %v5348, %v148
    %v5351 = vadd.f32 %v5349, 1e-05
    %v5352 = vadd.f32 %v5350, 1e-05
    %v5353 = vrsqrt.pop %v5351
    %v5354 = vrsqrt.pop %v5352
    %v5355 = vmul.f32 %v5323, %v5353
    %v5356 = vmul.f32 %v5324, %v5353
    %v5357 = vmul.f32 %v5325, %v5353
    %v5358 = vmul.f32 %v5326, %v5353
    %v5359 = vmul.f32 %v5327, %v5354
    %v5360 = vmul.f32 %v5328, %v5354
    %v5361 = vmul.f32 %v5329, %v5354
    %v5362 = vmul.f32 %v5330, %v5354
    %v5363 = vld [vmem:[#allocation12] sm:$0xf]
    %v5365 = vlaneseq
    %v5366 = vshrl.u32 %v5365, 7
    %v5367 = vsub.s32 0, %v5366
    %v5368 = vrot.slane %v5363, %v5367
    %v5369 = vlaneseq
    %v5370 = vshrl.u32 %v5369, 7
    %v5371 = vsub.s32 1, %v5370
    %v5372 = vrot.slane %v5363, %v5371
    %v5373 = vlaneseq
    %v5374 = vshrl.u32 %v5373, 7
    %v5375 = vsub.s32 2, %v5374
    %v5376 = vrot.slane %v5363, %v5375
    %v5377 = vlaneseq
    %v5378 = vshrl.u32 %v5377, 7
    %v5379 = vsub.s32 3, %v5378
    %v5380 = vrot.slane %v5363, %v5379
    %v5385 = vmul.f32 %v5355, %v5368
    %v5386 = vmul.f32 %v5356, %v5372
    %v5387 = vmul.f32 %v5357, %v5376
    %v5388 = vmul.f32 %v5358, %v5380
    %v5389 = vmul.f32 %v5359, %v5368
    %v5390 = vmul.f32 %v5360, %v5372
    %v5391 = vmul.f32 %v5361, %v5376
    %v5392 = vmul.f32 %v5362, %v5380
    %v5393 = vld [vmem:[#allocation13] sm:$0xf]
    %v5395 = vlaneseq
    %v5396 = vshrl.u32 %v5395, 7
    %v5397 = vsub.s32 0, %v5396
    %v5398 = vrot.slane %v5393, %v5397
    %v5399 = vlaneseq
    %v5400 = vshrl.u32 %v5399, 7
    %v5401 = vsub.s32 1, %v5400
    %v5402 = vrot.slane %v5393, %v5401
    %v5403 = vlaneseq
    %v5404 = vshrl.u32 %v5403, 7
    %v5405 = vsub.s32 2, %v5404
    %v5406 = vrot.slane %v5393, %v5405
    %v5407 = vlaneseq
    %v5408 = vshrl.u32 %v5407, 7
    %v5409 = vsub.s32 3, %v5408
    %v5410 = vrot.slane %v5393, %v5409
    %v5415 = vadd.f32 %v5385, %v5398
    %v5416 = vadd.f32 %v5386, %v5402
    %v5417 = vadd.f32 %v5387, %v5406
    %v5418 = vadd.f32 %v5388, %v5410
    %v5419 = vadd.f32 %v5389, %v5398
    %v5420 = vadd.f32 %v5390, %v5402
    %v5421 = vadd.f32 %v5391, %v5406
    %v5422 = vadd.f32 %v5392, %v5410
    %5423 = vst [vmem:[%s9] sm:$0xff] %v5415
    %5424 = vst [vmem:[%s9 + $0x8] sm:$0xff] %v5416
    %5425 = vst [vmem:[%s9 + $0x10] sm:$0xff] %v5417
    %5426 = vst [vmem:[%s9 + $0x18] sm:$0xff] %v5418
    %5427 = vst [vmem:[%s9 + $0x20] sm:$0xff] %v5419
    %5428 = vst [vmem:[%s9 + $0x28] sm:$0xff] %v5420
    %5429 = vst [vmem:[%s9 + $0x30] sm:$0xff] %v5421
    %5430 = vst [vmem:[%s9 + $0x38] sm:$0xff] %v5422
    // Predicated region
    $region66: #{block_forward.2} parent=1 // pred_check
      _
    $region67: #{block_forward.2} parent=1 // pred_check_branch
      %5432 = sbr.rel (0) target = $region69
    $region68: #{block_forward.2} parent=1 // pred_region
      _
    $region69: #{block_forward.2} parent=1 // pred_fallthru
      _
    // Predicated region
    $region70: #{block_forward.2} parent=1 // pred_check
      _
    $region71: #{block_forward.2} parent=1 // pred_check_branch
      %5434 = sbr.rel (0) target = $region73
    $region72: #{block_forward.2} parent=1 // pred_region
      _
    $region73: #{block_forward.2} parent=1 // pred_fallthru
      _
    // Predicated region
    $region74: #{block_forward.2} parent=1 // pred_check
      _
    $region75: #{block_forward.2} parent=1 // pred_check_branch
      %5436 = sbr.rel (0) target = $region77
    $region76: #{block_forward.2} parent=1 // pred_region
      _
    $region77: #{block_forward.2} parent=1 // pred_fallthru
      _
    // Predicated region
    $region78: #{block_forward.2} parent=1 // pred_check
      _
    $region79: #{block_forward.2} parent=1 // pred_check_branch
      %5438 = sbr.rel (0) target = $region81
    $region80: #{block_forward.2} parent=1 // pred_region
      _
    $region81: #{block_forward.2} parent=1 // pred_fallthru
      _
    %5439 = vsyncpa [#allocation3], 1
    %5440 = vsyncpa [#allocation5], 1
    %5441 = vsyncpa [#allocation8], 1
    %5442 = vsyncpa [#allocation11], 1
    %5443 = vsyncpa [#allocation14], 1

// kernel: block_forward.3
$region0: #{block_forward.3}
  #allocation0 [shape = 'u32[]', space=smem, size = 0x4, offset = 0x4, fixed_abs, tag = 'smem constant byte address 0x4 - core index']
  #allocation1 [shape = 'u32[144,128]{1,0:T(1,128)}', space=vmem, size = 0x12000, scoped, tag = 'internal scratch']
  %s0 = inlined_call_operand.vmem [shape: f32[16,512], index: 0, kind: input, shape index: {}]
  %s1 = inlined_call_operand.vmem [shape: f32[4,16,1], index: 1, kind: input, shape index: {}]
  %s2 = inlined_call_operand.vmem [shape: bf16[4,512,2048], index: 2, kind: input, shape index: {}]
  %s3 = inlined_call_operand.vmem [shape: f32[4,1,2048], index: 3, kind: input, shape index: {}]
  %s4 = inlined_call_operand.vmem [shape: bf16[4,2048,512], index: 4, kind: input, shape index: {}]
  %s5 = inlined_call_operand.vmem [shape: f32[4,1,512], index: 5, kind: input, shape index: {}]
  %s6 = inlined_call_operand.vmem [shape: f32[2,16,512], index: 6, kind: output, shape index: {}]
  %s7 = sld [smem:[#allocation0]]
  $region61: #{block_forward.3} parent=0
    _
  %s9 = ssub.s32 1, %s7
  %s10 = scalar_select 0, %s9, %s7
  loop: start=0, step=1, limit=6
  $region2: #{block_forward.3} parent=0 // loop_pre_header
    _
  $region3: #{block_forward.3} parent=0 // loop_header
    %s12 = sphi 0, %s16
    %p13 = scmp.ge.s32.totalorder %s12, 6
    %s19 = sphi 0, %s31
    %s20 = sphi 0, %s27
    %s21 = sphi 0, %s19
    %s22 = sphi 0, %s20
    %s23 = sphi 0, %s21
    %s24 = sphi 0, %s22
    %s32 = sphi 0, %s32
    %s34 = sphi 0, %s32
    %s35 = sphi 0, %s34
    %s49 = sphi 0, %s35
    %s59 = sphi 0, %s61
    %s62 = sphi 0, %s59
    %s63 = sphi 0, %s62
    %s79 = sphi 0, %s63
    %s89 = sphi 0, %s91
    %s92 = sphi 0, %s89
    %s93 = sphi 0, %s92
    %s109 = sphi 0, %s93
    %s119 = sphi 0, %s121
    %s122 = sphi 0, %s119
    %s123 = sphi 0, %s122
    %s139 = sphi 0, %s123
    %s149 = sphi 0, %s151
    %s152 = sphi 0, %s149
    %s153 = sphi 0, %s152
    %s169 = sphi 0, %s153
    %s179 = sphi 0, %s181
    %s182 = sphi 0, %s179
    %s183 = sphi 0, %s182
    %s199 = sphi 0, %s183
    %s205 = sphi 0, %s207
    %s208 = sphi 0, %s205
    %s209 = sphi 0, %s208
    %s225 = sphi 0, %s209
  $region4: #{block_forward.3} parent=0 // loop_header_branch
    %15 = sbr.rel (%p13) target = $region8
  $region5: #{block_forward.3} parent=0 // loop_body
    %s17 = ssub.s32 %s12, 1
    %s18 = ssub.s32 %s12, 2
    %s25 = sadd.s32 1, %s20
    %p26 = scmp.ge.s32.totalorder %s25, 2
    %s27 = scalar_select %p26, 0, %s25
    %s28 = sadd.s32 1, %s19
    %s29 = scalar_select %p26, %s28, %s19
    %p30 = scmp.ge.s32.totalorder %s29, 2
    %s31 = scalar_select %p30, 0, %s29
    %s33 = sadd.s32 %s32, 1
    %p36 = scmp.eq.s32.totalorder %s12, 3
    %p37 = scmp.ne.s32.totalorder %s32, %s34
    %p38 = scmp.eq.s32.totalorder %s12, 0
    %p39 = por %p37, %p38
    %p40 = scmp.ne.s32.totalorder %s32, %s34
    %p41 = scmp.eq.s32.totalorder %s17, 3
    %p42 = por %p40, %p41
    %p43 = scmp.ne.s32.totalorder %s34, %s35
    %p44 = scmp.eq.s32.totalorder %s17, 0
    %p45 = por %p43, %p44
    %p46 = scmp.ne.s32.totalorder %s34, %s35
    %p47 = scmp.eq.s32.totalorder %s18, 3
    %p48 = por %p46, %p47
    %p50 = scmp.ne.s32.totalorder %s35, %s49
    %p51 = scmp.eq.s32.totalorder %s18, 0
    %p52 = por %p50, %p51
    %s53 = smul.u32 %s19, 2
    %s54 = sadd.s32 %s53, %s20
    %s55 = smul.u32 %s31, 2
    %s56 = sadd.s32 %s55, %s27
    %s57 = ssub.s32 %s54, %s56
    %p58 = scmp.eq.s32.totalorder %s57, 0
    %s60 = sadd.s32 %s59, 1
    %s61 = scalar_select %p58, %s59, %s60
    %p64 = pneg %p58
    %p65 = scmp.eq.s32.totalorder %s12, 3
    %p66 = por %p64, %p65
    %p67 = scmp.ne.s32.totalorder %s59, %s62
    %p68 = scmp.eq.s32.totalorder %s12, 0
    %p69 = por %p67, %p68
    %p70 = scmp.ne.s32.totalorder %s59, %s62
    %p71 = scmp.eq.s32.totalorder %s17, 3
    %p72 = por %p70, %p71
    %p73 = scmp.ne.s32.totalorder %s62, %s63
    %p74 = scmp.eq.s32.totalorder %s17, 0
    %p75 = por %p73, %p74
    %p76 = scmp.ne.s32.totalorder %s62, %s63
    %p77 = scmp.eq.s32.totalorder %s18, 3
    %p78 = por %p76, %p77
    %p80 = scmp.ne.s32.totalorder %s63, %s79
    %p81 = scmp.eq.s32.totalorder %s18, 0
    %p82 = por %p80, %p81
    %s83 = smul.u32 %s19, 2
    %s84 = sadd.s32 %s83, %s20
    %s85 = smul.u32 %s31, 2
    %s86 = sadd.s32 %s85, %s27
    %s87 = ssub.s32 %s84, %s86
    %p88 = scmp.eq.s32.totalorder %s87, 0
    %s90 = sadd.s32 %s89, 1
    %s91 = scalar_select %p88, %s89, %s90
    %p94 = pneg %p88
    %p95 = scmp.eq.s32.totalorder %s12, 3
    %p96 = por %p94, %p95
    %p97 = scmp.ne.s32.totalorder %s89, %s92
    %p98 = scmp.eq.s32.totalorder %s12, 0
    %p99 = por %p97, %p98
    %p100 = scmp.ne.s32.totalorder %s89, %s92
    %p101 = scmp.eq.s32.totalorder %s17, 3
    %p102 = por %p100, %p101
    %p103 = scmp.ne.s32.totalorder %s92, %s93
    %p104 = scmp.eq.s32.totalorder %s17, 0
    %p105 = por %p103, %p104
    %p106 = scmp.ne.s32.totalorder %s92, %s93
    %p107 = scmp.eq.s32.totalorder %s18, 3
    %p108 = por %p106, %p107
    %p110 = scmp.ne.s32.totalorder %s93, %s109
    %p111 = scmp.eq.s32.totalorder %s18, 0
    %p112 = por %p110, %p111
    %s113 = smul.u32 %s19, 2
    %s114 = sadd.s32 %s113, %s20
    %s115 = smul.u32 %s31, 2
    %s116 = sadd.s32 %s115, %s27
    %s117 = ssub.s32 %s114, %s116
    %p118 = scmp.eq.s32.totalorder %s117, 0
    %s120 = sadd.s32 %s119, 1
    %s121 = scalar_select %p118, %s119, %s120
    %p124 = pneg %p118
    %p125 = scmp.eq.s32.totalorder %s12, 3
    %p126 = por %p124, %p125
    %p127 = scmp.ne.s32.totalorder %s119, %s122
    %p128 = scmp.eq.s32.totalorder %s12, 0
    %p129 = por %p127, %p128
    %p130 = scmp.ne.s32.totalorder %s119, %s122
    %p131 = scmp.eq.s32.totalorder %s17, 3
    %p132 = por %p130, %p131
    %p133 = scmp.ne.s32.totalorder %s122, %s123
    %p134 = scmp.eq.s32.totalorder %s17, 0
    %p135 = por %p133, %p134
    %p136 = scmp.ne.s32.totalorder %s122, %s123
    %p137 = scmp.eq.s32.totalorder %s18, 3
    %p138 = por %p136, %p137
    %p140 = scmp.ne.s32.totalorder %s123, %s139
    %p141 = scmp.eq.s32.totalorder %s18, 0
    %p142 = por %p140, %p141
    %s143 = smul.u32 %s19, 2
    %s144 = sadd.s32 %s143, %s20
    %s145 = smul.u32 %s31, 2
    %s146 = sadd.s32 %s145, %s27
    %s147 = ssub.s32 %s144, %s146
    %p148 = scmp.eq.s32.totalorder %s147, 0
    %s150 = sadd.s32 %s149, 1
    %s151 = scalar_select %p148, %s149, %s150
    %p154 = pneg %p148
    %p155 = scmp.eq.s32.totalorder %s12, 3
    %p156 = por %p154, %p155
    %p157 = scmp.ne.s32.totalorder %s149, %s152
    %p158 = scmp.eq.s32.totalorder %s12, 0
    %p159 = por %p157, %p158
    %p160 = scmp.ne.s32.totalorder %s149, %s152
    %p161 = scmp.eq.s32.totalorder %s17, 3
    %p162 = por %p160, %p161
    %p163 = scmp.ne.s32.totalorder %s152, %s153
    %p164 = scmp.eq.s32.totalorder %s17, 0
    %p165 = por %p163, %p164
    %p166 = scmp.ne.s32.totalorder %s152, %s153
    %p167 = scmp.eq.s32.totalorder %s18, 3
    %p168 = por %p166, %p167
    %p170 = scmp.ne.s32.totalorder %s153, %s169
    %p171 = scmp.eq.s32.totalorder %s18, 0
    %p172 = por %p170, %p171
    %s173 = smul.u32 %s19, 2
    %s174 = sadd.s32 %s173, %s20
    %s175 = smul.u32 %s31, 2
    %s176 = sadd.s32 %s175, %s27
    %s177 = ssub.s32 %s174, %s176
    %p178 = scmp.eq.s32.totalorder %s177, 0
    %s180 = sadd.s32 %s179, 1
    %s181 = scalar_select %p178, %s179, %s180
    %p184 = pneg %p178
    %p185 = scmp.eq.s32.totalorder %s12, 3
    %p186 = por %p184, %p185
    %p187 = scmp.ne.s32.totalorder %s179, %s182
    %p188 = scmp.eq.s32.totalorder %s12, 0
    %p189 = por %p187, %p188
    %p190 = scmp.ne.s32.totalorder %s179, %s182
    %p191 = scmp.eq.s32.totalorder %s17, 3
    %p192 = por %p190, %p191
    %p193 = scmp.ne.s32.totalorder %s182, %s183
    %p194 = scmp.eq.s32.totalorder %s17, 0
    %p195 = por %p193, %p194
    %p196 = scmp.ne.s32.totalorder %s182, %s183
    %p197 = scmp.eq.s32.totalorder %s18, 3
    %p198 = por %p196, %p197
    %p200 = scmp.ne.s32.totalorder %s183, %s199
    %p201 = scmp.eq.s32.totalorder %s18, 0
    %p202 = por %p200, %p201
    %s203 = ssub.s32 %s19, %s31
    %p204 = scmp.eq.s32.totalorder %s203, 0
    %s206 = sadd.s32 %s205, 1
    %s207 = scalar_select %p204, %s205, %s206
    %p210 = pneg %p204
    %p211 = scmp.eq.s32.totalorder %s12, 3
    %p212 = por %p210, %p211
    %p213 = scmp.ne.s32.totalorder %s205, %s208
    %p214 = scmp.eq.s32.totalorder %s12, 0
    %p215 = por %p213, %p214
    %p216 = scmp.ne.s32.totalorder %s205, %s208
    %p217 = scmp.eq.s32.totalorder %s17, 3
    %p218 = por %p216, %p217
    %p219 = scmp.ne.s32.totalorder %s208, %s209
    %p220 = scmp.eq.s32.totalorder %s17, 0
    %p221 = por %p219, %p220
    %p222 = scmp.ne.s32.totalorder %s208, %s209
    %p223 = scmp.eq.s32.totalorder %s18, 3
    %p224 = por %p222, %p223
    %p226 = scmp.ne.s32.totalorder %s209, %s225
    %p227 = scmp.eq.s32.totalorder %s18, 0
    %p228 = por %p226, %p227
    %p229 = scmp.le.s32.totalorder 1, %s12
    %p230 = scmp.lt.s32.totalorder %s12, 5
    %p231 = pnand %p229, %p230
    %p232 = pneg %p231
    // Predicated region
    $region9: #{block_forward.3} parent=5 // pred_check
      _
    $region10: #{block_forward.3} parent=5 // pred_check_branch
      %234 = sbr.rel (%p231) target = $region12
    $region11: #{block_forward.3} parent=5 // pred_region
      %s235 = ssub.s32 %s12, 1
      // Predicated region
      $region13: #{block_forward.3} parent=11 // pred_check
        %p236 = pneg %p45
      $region14: #{block_forward.3} parent=11 // pred_check_branch
        %238 = sbr.rel (%p236) target = $region16
      $region15: #{block_forward.3} parent=11 // pred_region
        _
      $region16: #{block_forward.3} parent=11 // pred_fallthru
        _
    $region12: #{block_forward.3} parent=5 // pred_fallthru
      _
    %p239 = scmp.lt.s32.totalorder %s12, 4
    // Predicated region
    $region17: #{block_forward.3} parent=5 // pred_check
      %p240 = pneg %p239
    $region18: #{block_forward.3} parent=5 // pred_check_branch
      %242 = sbr.rel (%p240) target = $region20
    $region19: #{block_forward.3} parent=5 // pred_region
      // Predicated region
      $region21: #{block_forward.3} parent=19 // pred_check
        %p243 = pneg %p69
      $region22: #{block_forward.3} parent=19 // pred_check_branch
        %245 = sbr.rel (%p243) target = $region24
      $region23: #{block_forward.3} parent=19 // pred_region
        %s246 = smul.u32 %s19, 2
        %s247 = sadd.s32 %s246, %s20
        %p248 = scmp.lt.s32.totalorder %s247, 3
        %s249 = scalar_select %p248, %s247, 3
        %s250 = smul.addr %s249, 2
        %s251 = smul.addr %s250, 8
        %s252 = scalar_lea.vmem %s1, %s251
        %s253 = smul.u32 %s19, 2
        %s254 = sadd.s32 %s253, %s20
      $region24: #{block_forward.3} parent=19 // pred_fallthru
        _
      // Predicated region
      $region25: #{block_forward.3} parent=19 // pred_check
        %p255 = pneg %p99
      $region26: #{block_forward.3} parent=19 // pred_check_branch
        %257 = sbr.rel (%p255) target = $region28
      $region27: #{block_forward.3} parent=19 // pred_region
        %s258 = smul.u32 %s19, 2
        %s259 = sadd.s32 %s258, %s20
        %p260 = scmp.lt.s32.totalorder %s259, 3
        %s261 = scalar_select %p260, %s259, 3
        %s262 = smul.addr %s261, 1024
        %s263 = smul.addr %s262, 4
        %s264 = scalar_lea.vmem %s2, %s263
        %s265 = smul.u32 %s19, 2
        %s266 = sadd.s32 %s265, %s20
      $region28: #{block_forward.3} parent=19 // pred_fallthru
        _
      // Predicated region
      $region29: #{block_forward.3} parent=19 // pred_check
        %p267 = pneg %p129
      $region30: #{block_forward.3} parent=19 // pred_check_branch
        %269 = sbr.rel (%p267) target = $region32
      $region31: #{block_forward.3} parent=19 // pred_region
        %s270 = smul.u32 %s19, 2
        %s271 = sadd.s32 %s270, %s20
        %p272 = scmp.lt.s32.totalorder %s271, 3
        %s273 = scalar_select %p272, %s271, 3
        %s274 = smul.addr %s273, 16
        %s275 = scalar_lea.vmem %s3, %s274
        %s276 = smul.u32 %s19, 2
        %s277 = sadd.s32 %s276, %s20
      $region32: #{block_forward.3} parent=19 // pred_fallthru
        _
      // Predicated region
      $region33: #{block_forward.3} parent=19 // pred_check
        %p278 = pneg %p159
      $region34: #{block_forward.3} parent=19 // pred_check_branch
        %280 = sbr.rel (%p278) target = $region36
      $region35: #{block_forward.3} parent=19 // pred_region
        %s281 = smul.u32 %s19, 2
        %s282 = sadd.s32 %s281, %s20
        %p283 = scmp.lt.s32.totalorder %s282, 3
        %s284 = scalar_select %p283, %s282, 3
        %s285 = smul.addr %s284, 1024
        %s286 = smul.addr %s285, 4
        %s287 = scalar_lea.vmem %s4, %s286
        %s288 = smul.u32 %s19, 2
        %s289 = sadd.s32 %s288, %s20
      $region36: #{block_forward.3} parent=19 // pred_fallthru
        _
      // Predicated region
      $region37: #{block_forward.3} parent=19 // pred_check
        %p290 = pneg %p189
      $region38: #{block_forward.3} parent=19 // pred_check_branch
        %292 = sbr.rel (%p290) target = $region40
      $region39: #{block_forward.3} parent=19 // pred_region
        %s293 = smul.u32 %s19, 2
        %s294 = sadd.s32 %s293, %s20
        %p295 = scmp.lt.s32.totalorder %s294, 3
        %s296 = scalar_select %p295, %s294, 3
        %s297 = smul.addr %s296, 4
        %s298 = scalar_lea.vmem %s5, %s297
        %s299 = smul.u32 %s19, 2
        %s300 = sadd.s32 %s299, %s20
      $region40: #{block_forward.3} parent=19 // pred_fallthru
        _
    $region20: #{block_forward.3} parent=5 // pred_fallthru
      _
    %p301 = scmp.le.s32.totalorder 1, %s12
    %p302 = scmp.lt.s32.totalorder %s12, 5
    %p303 = pnand %p301, %p302
    %p304 = pneg %p303
    // Predicated region
    $region41: #{block_forward.3} parent=5 // pred_check
      _
    $region42: #{block_forward.3} parent=5 // pred_check_branch
      %306 = sbr.rel (%p303) target = $region44
    $region43: #{block_forward.3} parent=5 // pred_region
      %s307 = ssub.s32 %s12, 1
      %p308 = pneg %p45
      %p309 = pneg %p42
      %s310 = smul.u32 %s21, 2
      %s311 = sadd.s32 %s310, %s22
      %p312 = scmp.lt.s32.totalorder %s311, 3
      %s313 = scalar_select %p312, %s311, 3
      %s314 = smul.addr %s313, 2
      %s315 = smul.addr %s314, 8
      %s316 = scalar_lea.vmem %s1, %s315
      %p317 = pneg %p75
      %p318 = pneg %p72
      %s319 = smul.u32 %s21, 2
      %s320 = sadd.s32 %s319, %s22
      %p321 = scmp.lt.s32.totalorder %s320, 3
      %s322 = scalar_select %p321, %s320, 3
      %s323 = smul.addr %s322, 1024
      %s324 = smul.addr %s323, 4
      %s325 = scalar_lea.vmem %s2, %s324
      %p326 = pneg %p105
      %p327 = pneg %p102
      %s328 = smul.u32 %s21, 2
      %s329 = sadd.s32 %s328, %s22
      %p330 = scmp.lt.s32.totalorder %s329, 3
      %s331 = scalar_select %p330, %s329, 3
      %s332 = smul.addr %s331, 16
      %s333 = scalar_lea.vmem %s3, %s332
      %p334 = pneg %p135
      %p335 = pneg %p132
      %s336 = smul.u32 %s21, 2
      %s337 = sadd.s32 %s336, %s22
      %p338 = scmp.lt.s32.totalorder %s337, 3
      %s339 = scalar_select %p338, %s337, 3
      %s340 = smul.addr %s339, 1024
      %s341 = smul.addr %s340, 4
      %s342 = scalar_lea.vmem %s4, %s341
      %p343 = pneg %p165
      %p344 = pneg %p162
      %s345 = smul.u32 %s21, 2
      %s346 = sadd.s32 %s345, %s22
      %p347 = scmp.lt.s32.totalorder %s346, 3
      %s348 = scalar_select %p347, %s346, 3
      %s349 = smul.addr %s348, 4
      %s350 = scalar_lea.vmem %s5, %s349
      %p351 = pneg %p195
      %p352 = pneg %p192
      %p353 = pneg %p221
      %p354 = pneg %p218
      %p355 = scmp.lt.s32.totalorder %s21, 1
      %s356 = scalar_select %p355, %s21, 1
      %s357 = smul.addr %s356, 8
      %s358 = smul.addr %s357, 8
      %s359 = scalar_lea.vmem %s6, %s358
      %s360 = smul.u32 %s21, 2
      %s361 = sadd.s32 %s360, %s22
      %p362 = scmp.lt.s32.totalorder %s361, 3
      %s363 = scalar_select %p362, %s361, 3
      %s364 = smul.addr %s363, 2
      %s365 = smul.addr %s364, 8
      %s366 = scalar_lea.vmem %s1, %s365
      %s367 = smul.u32 %s21, 2
      %s368 = sadd.s32 %s367, %s22
      %s369 = smul.u32 %s21, 2
      %s370 = sadd.s32 %s369, %s22
      %p371 = scmp.lt.s32.totalorder %s370, 3
      %s372 = scalar_select %p371, %s370, 3
      %s373 = smul.addr %s372, 1024
      %s374 = smul.addr %s373, 4
      %s375 = scalar_lea.vmem %s2, %s374
      %s376 = smul.u32 %s21, 2
      %s377 = sadd.s32 %s376, %s22
      %s378 = smul.u32 %s21, 2
      %s379 = sadd.s32 %s378, %s22
      %p380 = scmp.lt.s32.totalorder %s379, 3
      %s381 = scalar_select %p380, %s379, 3
      %s382 = smul.addr %s381, 16
      %s383 = scalar_lea.vmem %s3, %s382
      %s384 = smul.u32 %s21, 2
      %s385 = sadd.s32 %s384, %s22
      %s386 = smul.u32 %s21, 2
      %s387 = sadd.s32 %s386, %s22
      %p388 = scmp.lt.s32.totalorder %s387, 3
      %s389 = scalar_select %p388, %s387, 3
      %s390 = smul.addr %s389, 1024
      %s391 = smul.addr %s390, 4
      %s392 = scalar_lea.vmem %s4, %s391
      %s393 = smul.u32 %s21, 2
      %s394 = sadd.s32 %s393, %s22
      %s395 = smul.u32 %s21, 2
      %s396 = sadd.s32 %s395, %s22
      %p397 = scmp.lt.s32.totalorder %s396, 3
      %s398 = scalar_select %p397, %s396, 3
      %s399 = smul.addr %s398, 4
      %s400 = scalar_lea.vmem %s5, %s399
      %s401 = smul.u32 %s21, 2
      %s402 = sadd.s32 %s401, %s22
      %p403 = scmp.lt.s32.totalorder %s21, 1
      %s404 = scalar_select %p403, %s21, 1
      %s405 = smul.addr %s404, 8
      %s406 = smul.addr %s405, 8
      %s407 = scalar_lea.vmem %s6, %s406
      %p408 = scmp.eq.s32.totalorder %s22, 0
      // Predicated region
      $region45: #{block_forward.3} parent=43 // pred_check
        %p409 = pneg %p408
      $region46: #{block_forward.3} parent=43 // pred_check_branch
        %411 = sbr.rel (%p409) target = $region48
      $region47: #{block_forward.3} parent=43 // pred_region
        %412 = vst [vmem:[%s407] sm:$0xff] 0.0
        %413 = vst [vmem:[%s407 + $0x8] sm:$0xff] 0.0
        %414 = vst [vmem:[%s407 + $0x10] sm:$0xff] 0.0
        %415 = vst [vmem:[%s407 + $0x18] sm:$0xff] 0.0
        %416 = vst [vmem:[%s407 + $0x20] sm:$0xff] 0.0
        %417 = vst [vmem:[%s407 + $0x28] sm:$0xff] 0.0
        %418 = vst [vmem:[%s407 + $0x30] sm:$0xff] 0.0
        %419 = vst [vmem:[%s407 + $0x38] sm:$0xff] 0.0
      $region48: #{block_forward.3} parent=43 // pred_fallthru
        _
      %v420 = vld [vmem:[%s0] sm:$0xff]
      %v421 = vld [vmem:[%s0 + $0x8] sm:$0xff]
      %v422 = vld [vmem:[%s0 + $0x10] sm:$0xff]
      %v423 = vld [vmem:[%s0 + $0x18] sm:$0xff]
      %v424 = vld [vmem:[%s0 + $0x20] sm:$0xff]
      %v425 = vld [vmem:[%s0 + $0x28] sm:$0xff]
      %v426 = vld [vmem:[%s0 + $0x30] sm:$0xff]
      %v427 = vld [vmem:[%s0 + $0x38] sm:$0xff]
      %v428 = vpack.c.bf16 %v424, %v420
      %v429 = vpack.c.bf16 %v425, %v421
      %v430 = vpack.c.bf16 %v426, %v422
      %v431 = vpack.c.bf16 %v427, %v423
      %v432 = vld [vmem:[%s375] sm:$0xff]
      %v433 = vld [vmem:[%s375 + $0x8] sm:$0xff]
      %v434 = vld [vmem:[%s375 + $0x10] sm:$0xff]
      %v435 = vld [vmem:[%s375 + $0x18] sm:$0xff]
      %v436 = vld [vmem:[%s375 + $0x20] sm:$0xff]
      %v437 = vld [vmem:[%s375 + $0x28] sm:$0xff]
      %v438 = vld [vmem:[%s375 + $0x30] sm:$0xff]
      %v439 = vld [vmem:[%s375 + $0x38] sm:$0xff]
      %v440 = vld [vmem:[%s375 + $0x40] sm:$0xff]
      %v441 = vld [vmem:[%s375 + $0x48] sm:$0xff]
      %v442 = vld [vmem:[%s375 + $0x50] sm:$0xff]
      %v443 = vld [vmem:[%s375 + $0x58] sm:$0xff]
      %v444 = vld [vmem:[%s375 + $0x60] sm:$0xff]
      %v445 = vld [vmem:[%s375 + $0x68] sm:$0xff]
      %v446 = vld [vmem:[%s375 + $0x70] sm:$0xff]
      %v447 = vld [vmem:[%s375 + $0x78] sm:$0xff]
      %v448 = vld [vmem:[%s375 + $0x80] sm:$0xff]
      %v449 = vld [vmem:[%s375 + $0x88] sm:$0xff]
      %v450 = vld [vmem:[%s375 + $0x90] sm:$0xff]
      %v451 = vld [vmem:[%s375 + $0x98] sm:$0xff]
      %v452 = vld [vmem:[%s375 + $0xa0] sm:$0xff]
      %v453 = vld [vmem:[%s375 + $0xa8] sm:$0xff]
      %v454 = vld [vmem:[%s375 + $0xb0] sm:$0xff]
      %v455 = vld [vmem:[%s375 + $0xb8] sm:$0xff]
      %v456 = vld [vmem:[%s375 + $0xc0] sm:$0xff]
      %v457 = vld [vmem:[%s375 + $0xc8] sm:$0xff]
      %v458 = vld [vmem:[%s375 + $0xd0] sm:$0xff]
      %v459 = vld [vmem:[%s375 + $0xd8] sm:$0xff]
      %v460 = vld [vmem:[%s375 + $0xe0] sm:$0xff]
      %v461 = vld [vmem:[%s375 + $0xe8] sm:$0xff]
      %v462 = vld [vmem:[%s375 + $0xf0] sm:$0xff]
      %v463 = vld [vmem:[%s375 + $0xf8] sm:$0xff]
      %v464 = vld [vmem:[%s375 + $0x100] sm:$0xff]
      %v465 = vld [vmem:[%s375 + $0x108] sm:$0xff]
      %v466 = vld [vmem:[%s375 + $0x110] sm:$0xff]
      %v467 = vld [vmem:[%s375 + $0x118] sm:$0xff]
      %v468 = vld [vmem:[%s375 + $0x120] sm:$0xff]
      %v469 = vld [vmem:[%s375 + $0x128] sm:$0xff]
      %v470 = vld [vmem:[%s375 + $0x130] sm:$0xff]
      %v471 = vld [vmem:[%s375 + $0x138] sm:$0xff]
      %v472 = vld [vmem:[%s375 + $0x140] sm:$0xff]
      %v473 = vld [vmem:[%s375 + $0x148] sm:$0xff]
      %v474 = vld [vmem:[%s375 + $0x150] sm:$0xff]
      %v475 = vld [vmem:[%s375 + $0x158] sm:$0xff]
      %v476 = vld [vmem:[%s375 + $0x160] sm:$0xff]
      %v477 = vld [vmem:[%s375 + $0x168] sm:$0xff]
      %v478 = vld [vmem:[%s375 + $0x170] sm:$0xff]
      %v479 = vld [vmem:[%s375 + $0x178] sm:$0xff]
      %v480 = vld [vmem:[%s375 + $0x180] sm:$0xff]
      %v481 = vld [vmem:[%s375 + $0x188] sm:$0xff]
      %v482 = vld [vmem:[%s375 + $0x190] sm:$0xff]
      %v483 = vld [vmem:[%s375 + $0x198] sm:$0xff]
      %v484 = vld [vmem:[%s375 + $0x1a0] sm:$0xff]
      %v485 = vld [vmem:[%s375 + $0x1a8] sm:$0xff]
      %v486 = vld [vmem:[%s375 + $0x1b0] sm:$0xff]
      %v487 = vld [vmem:[%s375 + $0x1b8] sm:$0xff]
      %v488 = vld [vmem:[%s375 + $0x1c0] sm:$0xff]
      %v489 = vld [vmem:[%s375 + $0x1c8] sm:$0xff]
      %v490 = vld [vmem:[%s375 + $0x1d0] sm:$0xff]
      %v491 = vld [vmem:[%s375 + $0x1d8] sm:$0xff]
      %v492 = vld [vmem:[%s375 + $0x1e0] sm:$0xff]
      %v493 = vld [vmem:[%s375 + $0x1e8] sm:$0xff]
      %v494 = vld [vmem:[%s375 + $0x1f0] sm:$0xff]
      %v495 = vld [vmem:[%s375 + $0x1f8] sm:$0xff]
      %v496 = vld [vmem:[%s375 + $0x200] sm:$0xff]
      %v497 = vld [vmem:[%s375 + $0x208] sm:$0xff]
      %v498 = vld [vmem:[%s375 + $0x210] sm:$0xff]
      %v499 = vld [vmem:[%s375 + $0x218] sm:$0xff]
      %v500 = vld [vmem:[%s375 + $0x220] sm:$0xff]
      %v501 = vld [vmem:[%s375 + $0x228] sm:$0xff]
      %v502 = vld [vmem:[%s375 + $0x230] sm:$0xff]
      %v503 = vld [vmem:[%s375 + $0x238] sm:$0xff]
      %v504 = vld [vmem:[%s375 + $0x240] sm:$0xff]
      %v505 = vld [vmem:[%s375 + $0x248] sm:$0xff]
      %v506 = vld [vmem:[%s375 + $0x250] sm:$0xff]
      %v507 = vld [vmem:[%s375 + $0x258] sm:$0xff]
      %v508 = vld [vmem:[%s375 + $0x260] sm:$0xff]
      %v509 = vld [vmem:[%s375 + $0x268] sm:$0xff]
      %v510 = vld [vmem:[%s375 + $0x270] sm:$0xff]
      %v511 = vld [vmem:[%s375 + $0x278] sm:$0xff]
      %v512 = vld [vmem:[%s375 + $0x280] sm:$0xff]
      %v513 = vld [vmem:[%s375 + $0x288] sm:$0xff]
      %v514 = vld [vmem:[%s375 + $0x290] sm:$0xff]
      %v515 = vld [vmem:[%s375 + $0x298] sm:$0xff]
      %v516 = vld [vmem:[%s375 + $0x2a0] sm:$0xff]
      %v517 = vld [vmem:[%s375 + $0x2a8] sm:$0xff]
      %v518 = vld [vmem:[%s375 + $0x2b0] sm:$0xff]
      %v519 = vld [vmem:[%s375 + $0x2b8] sm:$0xff]
      %v520 = vld [vmem:[%s375 + $0x2c0] sm:$0xff]
      %v521 = vld [vmem:[%s375 + $0x2c8] sm:$0xff]
      %v522 = vld [vmem:[%s375 + $0x2d0] sm:$0xff]
      %v523 = vld [vmem:[%s375 + $0x2d8] sm:$0xff]
      %v524 = vld [vmem:[%s375 + $0x2e0] sm:$0xff]
      %v525 = vld [vmem:[%s375 + $0x2e8] sm:$0xff]
      %v526 = vld [vmem:[%s375 + $0x2f0] sm:$0xff]
      %v527 = vld [vmem:[%s375 + $0x2f8] sm:$0xff]
      %v528 = vld [vmem:[%s375 + $0x300] sm:$0xff]
      %v529 = vld [vmem:[%s375 + $0x308] sm:$0xff]
      %v530 = vld [vmem:[%s375 + $0x310] sm:$0xff]
      %v531 = vld [vmem:[%s375 + $0x318] sm:$0xff]
      %v532 = vld [vmem:[%s375 + $0x320] sm:$0xff]
      %v533 = vld [vmem:[%s375 + $0x328] sm:$0xff]
      %v534 = vld [vmem:[%s375 + $0x330] sm:$0xff]
      %v535 = vld [vmem:[%s375 + $0x338] sm:$0xff]
      %v536 = vld [vmem:[%s375 + $0x340] sm:$0xff]
      %v537 = vld [vmem:[%s375 + $0x348] sm:$0xff]
      %v538 = vld [vmem:[%s375 + $0x350] sm:$0xff]
      %v539 = vld [vmem:[%s375 + $0x358] sm:$0xff]
      %v540 = vld [vmem:[%s375 + $0x360] sm:$0xff]
      %v541 = vld [vmem:[%s375 + $0x368] sm:$0xff]
      %v542 = vld [vmem:[%s375 + $0x370] sm:$0xff]
      %v543 = vld [vmem:[%s375 + $0x378] sm:$0xff]
      %v544 = vld [vmem:[%s375 + $0x380] sm:$0xff]
      %v545 = vld [vmem:[%s375 + $0x388] sm:$0xff]
      %v546 = vld [vmem:[%s375 + $0x390] sm:$0xff]
      %v547 = vld [vmem:[%s375 + $0x398] sm:$0xff]
      %v548 = vld [vmem:[%s375 + $0x3a0] sm:$0xff]
      %v549 = vld [vmem:[%s375 + $0x3a8] sm:$0xff]
      %v550 = vld [vmem:[%s375 + $0x3b0] sm:$0xff]
      %v551 = vld [vmem:[%s375 + $0x3b8] sm:$0xff]
      %v552 = vld [vmem:[%s375 + $0x3c0] sm:$0xff]
      %v553 = vld [vmem:[%s375 + $0x3c8] sm:$0xff]
      %v554 = vld [vmem:[%s375 + $0x3d0] sm:$0xff]
      %v555 = vld [vmem:[%s375 + $0x3d8] sm:$0xff]
      %v556 = vld [vmem:[%s375 + $0x3e0] sm:$0xff]
      %v557 = vld [vmem:[%s375 + $0x3e8] sm:$0xff]
      %v558 = vld [vmem:[%s375 + $0x3f0] sm:$0xff]
      %v559 = vld [vmem:[%s375 + $0x3f8] sm:$0xff]
      %v560 = vld [vmem:[%s375 + $0x400] sm:$0xff]
      %v561 = vld [vmem:[%s375 + $0x408] sm:$0xff]
      %v562 = vld [vmem:[%s375 + $0x410] sm:$0xff]
      %v563 = vld [vmem:[%s375 + $0x418] sm:$0xff]
      %v564 = vld [vmem:[%s375 + $0x420] sm:$0xff]
      %v565 = vld [vmem:[%s375 + $0x428] sm:$0xff]
      %v566 = vld [vmem:[%s375 + $0x430] sm:$0xff]
      %v567 = vld [vmem:[%s375 + $0x438] sm:$0xff]
      %v568 = vld [vmem:[%s375 + $0x440] sm:$0xff]
      %v569 = vld [vmem:[%s375 + $0x448] sm:$0xff]
      %v570 = vld [vmem:[%s375 + $0x450] sm:$0xff]
      %v571 = vld [vmem:[%s375 + $0x458] sm:$0xff]
      %v572 = vld [vmem:[%s375 + $0x460] sm:$0xff]
      %v573 = vld [vmem:[%s375 + $0x468] sm:$0xff]
      %v574 = vld [vmem:[%s375 + $0x470] sm:$0xff]
      %v575 = vld [vmem:[%s375 + $0x478] sm:$0xff]
      %v576 = vld [vmem:[%s375 + $0x480] sm:$0xff]
      %v577 = vld [vmem:[%s375 + $0x488] sm:$0xff]
      %v578 = vld [vmem:[%s375 + $0x490] sm:$0xff]
      %v579 = vld [vmem:[%s375 + $0x498] sm:$0xff]
      %v580 = vld [vmem:[%s375 + $0x4a0] sm:$0xff]
      %v581 = vld [vmem:[%s375 + $0x4a8] sm:$0xff]
      %v582 = vld [vmem:[%s375 + $0x4b0] sm:$0xff]
      %v583 = vld [vmem:[%s375 + $0x4b8] sm:$0xff]
      %v584 = vld [vmem:[%s375 + $0x4c0] sm:$0xff]
      %v585 = vld [vmem:[%s375 + $0x4c8] sm:$0xff]
      %v586 = vld [vmem:[%s375 + $0x4d0] sm:$0xff]
      %v587 = vld [vmem:[%s375 + $0x4d8] sm:$0xff]
      %v588 = vld [vmem:[%s375 + $0x4e0] sm:$0xff]
      %v589 = vld [vmem:[%s375 + $0x4e8] sm:$0xff]
      %v590 = vld [vmem:[%s375 + $0x4f0] sm:$0xff]
      %v591 = vld [vmem:[%s375 + $0x4f8] sm:$0xff]
      %v592 = vld [vmem:[%s375 + $0x500] sm:$0xff]
      %v593 = vld [vmem:[%s375 + $0x508] sm:$0xff]
      %v594 = vld [vmem:[%s375 + $0x510] sm:$0xff]
      %v595 = vld [vmem:[%s375 + $0x518] sm:$0xff]
      %v596 = vld [vmem:[%s375 + $0x520] sm:$0xff]
      %v597 = vld [vmem:[%s375 + $0x528] sm:$0xff]
      %v598 = vld [vmem:[%s375 + $0x530] sm:$0xff]
      %v599 = vld [vmem:[%s375 + $0x538] sm:$0xff]
      %v600 = vld [vmem:[%s375 + $0x540] sm:$0xff]
      %v601 = vld [vmem:[%s375 + $0x548] sm:$0xff]
      %v602 = vld [vmem:[%s375 + $0x550] sm:$0xff]
      %v603 = vld [vmem:[%s375 + $0x558] sm:$0xff]
      %v604 = vld [vmem:[%s375 + $0x560] sm:$0xff]
      %v605 = vld [vmem:[%s375 + $0x568] sm:$0xff]
      %v606 = vld [vmem:[%s375 + $0x570] sm:$0xff]
      %v607 = vld [vmem:[%s375 + $0x578] sm:$0xff]
      %v608 = vld [vmem:[%s375 + $0x580] sm:$0xff]
      %v609 = vld [vmem:[%s375 + $0x588] sm:$0xff]
      %v610 = vld [vmem:[%s375 + $0x590] sm:$0xff]
      %v611 = vld [vmem:[%s375 + $0x598] sm:$0xff]
      %v612 = vld [vmem:[%s375 + $0x5a0] sm:$0xff]
      %v613 = vld [vmem:[%s375 + $0x5a8] sm:$0xff]
      %v614 = vld [vmem:[%s375 + $0x5b0] sm:$0xff]
      %v615 = vld [vmem:[%s375 + $0x5b8] sm:$0xff]
      %v616 = vld [vmem:[%s375 + $0x5c0] sm:$0xff]
      %v617 = vld [vmem:[%s375 + $0x5c8] sm:$0xff]
      %v618 = vld [vmem:[%s375 + $0x5d0] sm:$0xff]
      %v619 = vld [vmem:[%s375 + $0x5d8] sm:$0xff]
      %v620 = vld [vmem:[%s375 + $0x5e0] sm:$0xff]
      %v621 = vld [vmem:[%s375 + $0x5e8] sm:$0xff]
      %v622 = vld [vmem:[%s375 + $0x5f0] sm:$0xff]
      %v623 = vld [vmem:[%s375 + $0x5f8] sm:$0xff]
      %v624 = vld [vmem:[%s375 + $0x600] sm:$0xff]
      %v625 = vld [vmem:[%s375 + $0x608] sm:$0xff]
      %v626 = vld [vmem:[%s375 + $0x610] sm:$0xff]
      %v627 = vld [vmem:[%s375 + $0x618] sm:$0xff]
      %v628 = vld [vmem:[%s375 + $0x620] sm:$0xff]
      %v629 = vld [vmem:[%s375 + $0x628] sm:$0xff]
      %v630 = vld [vmem:[%s375 + $0x630] sm:$0xff]
      %v631 = vld [vmem:[%s375 + $0x638] sm:$0xff]
      %v632 = vld [vmem:[%s375 + $0x640] sm:$0xff]
      %v633 = vld [vmem:[%s375 + $0x648] sm:$0xff]
      %v634 = vld [vmem:[%s375 + $0x650] sm:$0xff]
      %v635 = vld [vmem:[%s375 + $0x658] sm:$0xff]
      %v636 = vld [vmem:[%s375 + $0x660] sm:$0xff]
      %v637 = vld [vmem:[%s375 + $0x668] sm:$0xff]
      %v638 = vld [vmem:[%s375 + $0x670] sm:$0xff]
      %v639 = vld [vmem:[%s375 + $0x678] sm:$0xff]
      %v640 = vld [vmem:[%s375 + $0x680] sm:$0xff]
      %v641 = vld [vmem:[%s375 + $0x688] sm:$0xff]
      %v642 = vld [vmem:[%s375 + $0x690] sm:$0xff]
      %v643 = vld [vmem:[%s375 + $0x698] sm:$0xff]
      %v644 = vld [vmem:[%s375 + $0x6a0] sm:$0xff]
      %v645 = vld [vmem:[%s375 + $0x6a8] sm:$0xff]
      %v646 = vld [vmem:[%s375 + $0x6b0] sm:$0xff]
      %v647 = vld [vmem:[%s375 + $0x6b8] sm:$0xff]
      %v648 = vld [vmem:[%s375 + $0x6c0] sm:$0xff]
      %v649 = vld [vmem:[%s375 + $0x6c8] sm:$0xff]
      %v650 = vld [vmem:[%s375 + $0x6d0] sm:$0xff]
      %v651 = vld [vmem:[%s375 + $0x6d8] sm:$0xff]
      %v652 = vld [vmem:[%s375 + $0x6e0] sm:$0xff]
      %v653 = vld [vmem:[%s375 + $0x6e8] sm:$0xff]
      %v654 = vld [vmem:[%s375 + $0x6f0] sm:$0xff]
      %v655 = vld [vmem:[%s375 + $0x6f8] sm:$0xff]
      %v656 = vld [vmem:[%s375 + $0x700] sm:$0xff]
      %v657 = vld [vmem:[%s375 + $0x708] sm:$0xff]
      %v658 = vld [vmem:[%s375 + $0x710] sm:$0xff]
      %v659 = vld [vmem:[%s375 + $0x718] sm:$0xff]
      %v660 = vld [vmem:[%s375 + $0x720] sm:$0xff]
      %v661 = vld [vmem:[%s375 + $0x728] sm:$0xff]
      %v662 = vld [vmem:[%s375 + $0x730] sm:$0xff]
      %v663 = vld [vmem:[%s375 + $0x738] sm:$0xff]
      %v664 = vld [vmem:[%s375 + $0x740] sm:$0xff]
      %v665 = vld [vmem:[%s375 + $0x748] sm:$0xff]
      %v666 = vld [vmem:[%s375 + $0x750] sm:$0xff]
      %v667 = vld [vmem:[%s375 + $0x758] sm:$0xff]
      %v668 = vld [vmem:[%s375 + $0x760] sm:$0xff]
      %v669 = vld [vmem:[%s375 + $0x768] sm:$0xff]
      %v670 = vld [vmem:[%s375 + $0x770] sm:$0xff]
      %v671 = vld [vmem:[%s375 + $0x778] sm:$0xff]
      %v672 = vld [vmem:[%s375 + $0x780] sm:$0xff]
      %v673 = vld [vmem:[%s375 + $0x788] sm:$0xff]
      %v674 = vld [vmem:[%s375 + $0x790] sm:$0xff]
      %v675 = vld [vmem:[%s375 + $0x798] sm:$0xff]
      %v676 = vld [vmem:[%s375 + $0x7a0] sm:$0xff]
      %v677 = vld [vmem:[%s375 + $0x7a8] sm:$0xff]
      %v678 = vld [vmem:[%s375 + $0x7b0] sm:$0xff]
      %v679 = vld [vmem:[%s375 + $0x7b8] sm:$0xff]
      %v680 = vld [vmem:[%s375 + $0x7c0] sm:$0xff]
      %v681 = vld [vmem:[%s375 + $0x7c8] sm:$0xff]
      %v682 = vld [vmem:[%s375 + $0x7d0] sm:$0xff]
      %v683 = vld [vmem:[%s375 + $0x7d8] sm:$0xff]
      %v684 = vld [vmem:[%s375 + $0x7e0] sm:$0xff]
      %v685 = vld [vmem:[%s375 + $0x7e8] sm:$0xff]
      %v686 = vld [vmem:[%s375 + $0x7f0] sm:$0xff]
      %v687 = vld [vmem:[%s375 + $0x7f8] sm:$0xff]
      %v688 = vld [vmem:[%s375 + $0x800] sm:$0xff]
      %v689 = vld [vmem:[%s375 + $0x808] sm:$0xff]
      %v690 = vld [vmem:[%s375 + $0x810] sm:$0xff]
      %v691 = vld [vmem:[%s375 + $0x818] sm:$0xff]
      %v692 = vld [vmem:[%s375 + $0x820] sm:$0xff]
      %v693 = vld [vmem:[%s375 + $0x828] sm:$0xff]
      %v694 = vld [vmem:[%s375 + $0x830] sm:$0xff]
      %v695 = vld [vmem:[%s375 + $0x838] sm:$0xff]
      %v696 = vld [vmem:[%s375 + $0x840] sm:$0xff]
      %v697 = vld [vmem:[%s375 + $0x848] sm:$0xff]
      %v698 = vld [vmem:[%s375 + $0x850] sm:$0xff]
      %v699 = vld [vmem:[%s375 + $0x858] sm:$0xff]
      %v700 = vld [vmem:[%s375 + $0x860] sm:$0xff]
      %v701 = vld [vmem:[%s375 + $0x868] sm:$0xff]
      %v702 = vld [vmem:[%s375 + $0x870] sm:$0xff]
      %v703 = vld [vmem:[%s375 + $0x878] sm:$0xff]
      %v704 = vld [vmem:[%s375 + $0x880] sm:$0xff]
      %v705 = vld [vmem:[%s375 + $0x888] sm:$0xff]
      %v706 = vld [vmem:[%s375 + $0x890] sm:$0xff]
      %v707 = vld [vmem:[%s375 + $0x898] sm:$0xff]
      %v708 = vld [vmem:[%s375 + $0x8a0] sm:$0xff]
      %v709 = vld [vmem:[%s375 + $0x8a8] sm:$0xff]
      %v710 = vld [vmem:[%s375 + $0x8b0] sm:$0xff]
      %v711 = vld [vmem:[%s375 + $0x8b8] sm:$0xff]
      %v712 = vld [vmem:[%s375 + $0x8c0] sm:$0xff]
      %v713 = vld [vmem:[%s375 + $0x8c8] sm:$0xff]
      %v714 = vld [vmem:[%s375 + $0x8d0] sm:$0xff]
      %v715 = vld [vmem:[%s375 + $0x8d8] sm:$0xff]
      %v716 = vld [vmem:[%s375 + $0x8e0] sm:$0xff]
      %v717 = vld [vmem:[%s375 + $0x8e8] sm:$0xff]
      %v718 = vld [vmem:[%s375 + $0x8f0] sm:$0xff]
      %v719 = vld [vmem:[%s375 + $0x8f8] sm:$0xff]
      %v720 = vld [vmem:[%s375 + $0x900] sm:$0xff]
      %v721 = vld [vmem:[%s375 + $0x908] sm:$0xff]
      %v722 = vld [vmem:[%s375 + $0x910] sm:$0xff]
      %v723 = vld [vmem:[%s375 + $0x918] sm:$0xff]
      %v724 = vld [vmem:[%s375 + $0x920] sm:$0xff]
      %v725 = vld [vmem:[%s375 + $0x928] sm:$0xff]
      %v726 = vld [vmem:[%s375 + $0x930] sm:$0xff]
      %v727 = vld [vmem:[%s375 + $0x938] sm:$0xff]
      %v728 = vld [vmem:[%s375 + $0x940] sm:$0xff]
      %v729 = vld [vmem:[%s375 + $0x948] sm:$0xff]
      %v730 = vld [vmem:[%s375 + $0x950] sm:$0xff]
      %v731 = vld [vmem:[%s375 + $0x958] sm:$0xff]
      %v732 = vld [vmem:[%s375 + $0x960] sm:$0xff]
      %v733 = vld [vmem:[%s375 + $0x968] sm:$0xff]
      %v734 = vld [vmem:[%s375 + $0x970] sm:$0xff]
      %v735 = vld [vmem:[%s375 + $0x978] sm:$0xff]
      %v736 = vld [vmem:[%s375 + $0x980] sm:$0xff]
      %v737 = vld [vmem:[%s375 + $0x988] sm:$0xff]
      %v738 = vld [vmem:[%s375 + $0x990] sm:$0xff]
      %v739 = vld [vmem:[%s375 + $0x998] sm:$0xff]
      %v740 = vld [vmem:[%s375 + $0x9a0] sm:$0xff]
      %v741 = vld [vmem:[%s375 + $0x9a8] sm:$0xff]
      %v742 = vld [vmem:[%s375 + $0x9b0] sm:$0xff]
      %v743 = vld [vmem:[%s375 + $0x9b8] sm:$0xff]
      %v744 = vld [vmem:[%s375 + $0x9c0] sm:$0xff]
      %v745 = vld [vmem:[%s375 + $0x9c8] sm:$0xff]
      %v746 = vld [vmem:[%s375 + $0x9d0] sm:$0xff]
      %v747 = vld [vmem:[%s375 + $0x9d8] sm:$0xff]
      %v748 = vld [vmem:[%s375 + $0x9e0] sm:$0xff]
      %v749 = vld [vmem:[%s375 + $0x9e8] sm:$0xff]
      %v750 = vld [vmem:[%s375 + $0x9f0] sm:$0xff]
      %v751 = vld [vmem:[%s375 + $0x9f8] sm:$0xff]
      %v752 = vld [vmem:[%s375 + $0xa00] sm:$0xff]
      %v753 = vld [vmem:[%s375 + $0xa08] sm:$0xff]
      %v754 = vld [vmem:[%s375 + $0xa10] sm:$0xff]
      %v755 = vld [vmem:[%s375 + $0xa18] sm:$0xff]
      %v756 = vld [vmem:[%s375 + $0xa20] sm:$0xff]
      %v757 = vld [vmem:[%s375 + $0xa28] sm:$0xff]
      %v758 = vld [vmem:[%s375 + $0xa30] sm:$0xff]
      %v759 = vld [vmem:[%s375 + $0xa38] sm:$0xff]
      %v760 = vld [vmem:[%s375 + $0xa40] sm:$0xff]
      %v761 = vld [vmem:[%s375 + $0xa48] sm:$0xff]
      %v762 = vld [vmem:[%s375 + $0xa50] sm:$0xff]
      %v763 = vld [vmem:[%s375 + $0xa58] sm:$0xff]
      %v764 = vld [vmem:[%s375 + $0xa60] sm:$0xff]
      %v765 = vld [vmem:[%s375 + $0xa68] sm:$0xff]
      %v766 = vld [vmem:[%s375 + $0xa70] sm:$0xff]
      %v767 = vld [vmem:[%s375 + $0xa78] sm:$0xff]
      %v768 = vld [vmem:[%s375 + $0xa80] sm:$0xff]
      %v769 = vld [vmem:[%s375 + $0xa88] sm:$0xff]
      %v770 = vld [vmem:[%s375 + $0xa90] sm:$0xff]
      %v771 = vld [vmem:[%s375 + $0xa98] sm:$0xff]
      %v772 = vld [vmem:[%s375 + $0xaa0] sm:$0xff]
      %v773 = vld [vmem:[%s375 + $0xaa8] sm:$0xff]
      %v774 = vld [vmem:[%s375 + $0xab0] sm:$0xff]
      %v775 = vld [vmem:[%s375 + $0xab8] sm:$0xff]
      %v776 = vld [vmem:[%s375 + $0xac0] sm:$0xff]
      %v777 = vld [vmem:[%s375 + $0xac8] sm:$0xff]
      %v778 = vld [vmem:[%s375 + $0xad0] sm:$0xff]
      %v779 = vld [vmem:[%s375 + $0xad8] sm:$0xff]
      %v780 = vld [vmem:[%s375 + $0xae0] sm:$0xff]
      %v781 = vld [vmem:[%s375 + $0xae8] sm:$0xff]
      %v782 = vld [vmem:[%s375 + $0xaf0] sm:$0xff]
      %v783 = vld [vmem:[%s375 + $0xaf8] sm:$0xff]
      %v784 = vld [vmem:[%s375 + $0xb00] sm:$0xff]
      %v785 = vld [vmem:[%s375 + $0xb08] sm:$0xff]
      %v786 = vld [vmem:[%s375 + $0xb10] sm:$0xff]
      %v787 = vld [vmem:[%s375 + $0xb18] sm:$0xff]
      %v788 = vld [vmem:[%s375 + $0xb20] sm:$0xff]
      %v789 = vld [vmem:[%s375 + $0xb28] sm:$0xff]
      %v790 = vld [vmem:[%s375 + $0xb30] sm:$0xff]
      %v791 = vld [vmem:[%s375 + $0xb38] sm:$0xff]
      %v792 = vld [vmem:[%s375 + $0xb40] sm:$0xff]
      %v793 = vld [vmem:[%s375 + $0xb48] sm:$0xff]
      %v794 = vld [vmem:[%s375 + $0xb50] sm:$0xff]
      %v795 = vld [vmem:[%s375 + $0xb58] sm:$0xff]
      %v796 = vld [vmem:[%s375 + $0xb60] sm:$0xff]
      %v797 = vld [vmem:[%s375 + $0xb68] sm:$0xff]
      %v798 = vld [vmem:[%s375 + $0xb70] sm:$0xff]
      %v799 = vld [vmem:[%s375 + $0xb78] sm:$0xff]
      %v800 = vld [vmem:[%s375 + $0xb80] sm:$0xff]
      %v801 = vld [vmem:[%s375 + $0xb88] sm:$0xff]
      %v802 = vld [vmem:[%s375 + $0xb90] sm:$0xff]
      %v803 = vld [vmem:[%s375 + $0xb98] sm:$0xff]
      %v804 = vld [vmem:[%s375 + $0xba0] sm:$0xff]
      %v805 = vld [vmem:[%s375 + $0xba8] sm:$0xff]
      %v806 = vld [vmem:[%s375 + $0xbb0] sm:$0xff]
      %v807 = vld [vmem:[%s375 + $0xbb8] sm:$0xff]
      %v808 = vld [vmem:[%s375 + $0xbc0] sm:$0xff]
      %v809 = vld [vmem:[%s375 + $0xbc8] sm:$0xff]
      %v810 = vld [vmem:[%s375 + $0xbd0] sm:$0xff]
      %v811 = vld [vmem:[%s375 + $0xbd8] sm:$0xff]
      %v812 = vld [vmem:[%s375 + $0xbe0] sm:$0xff]
      %v813 = vld [vmem:[%s375 + $0xbe8] sm:$0xff]
      %v814 = vld [vmem:[%s375 + $0xbf0] sm:$0xff]
      %v815 = vld [vmem:[%s375 + $0xbf8] sm:$0xff]
      %v816 = vld [vmem:[%s375 + $0xc00] sm:$0xff]
      %v817 = vld [vmem:[%s375 + $0xc08] sm:$0xff]
      %v818 = vld [vmem:[%s375 + $0xc10] sm:$0xff]
      %v819 = vld [vmem:[%s375 + $0xc18] sm:$0xff]
      %v820 = vld [vmem:[%s375 + $0xc20] sm:$0xff]
      %v821 = vld [vmem:[%s375 + $0xc28] sm:$0xff]
      %v822 = vld [vmem:[%s375 + $0xc30] sm:$0xff]
      %v823 = vld [vmem:[%s375 + $0xc38] sm:$0xff]
      %v824 = vld [vmem:[%s375 + $0xc40] sm:$0xff]
      %v825 = vld [vmem:[%s375 + $0xc48] sm:$0xff]
      %v826 = vld [vmem:[%s375 + $0xc50] sm:$0xff]
      %v827 = vld [vmem:[%s375 + $0xc58] sm:$0xff]
      %v828 = vld [vmem:[%s375 + $0xc60] sm:$0xff]
      %v829 = vld [vmem:[%s375 + $0xc68] sm:$0xff]
      %v830 = vld [vmem:[%s375 + $0xc70] sm:$0xff]
      %v831 = vld [vmem:[%s375 + $0xc78] sm:$0xff]
      %v832 = vld [vmem:[%s375 + $0xc80] sm:$0xff]
      %v833 = vld [vmem:[%s375 + $0xc88] sm:$0xff]
      %v834 = vld [vmem:[%s375 + $0xc90] sm:$0xff]
      %v835 = vld [vmem:[%s375 + $0xc98] sm:$0xff]
      %v836 = vld [vmem:[%s375 + $0xca0] sm:$0xff]
      %v837 = vld [vmem:[%s375 + $0xca8] sm:$0xff]
      %v838 = vld [vmem:[%s375 + $0xcb0] sm:$0xff]
      %v839 = vld [vmem:[%s375 + $0xcb8] sm:$0xff]
      %v840 = vld [vmem:[%s375 + $0xcc0] sm:$0xff]
      %v841 = vld [vmem:[%s375 + $0xcc8] sm:$0xff]
      %v842 = vld [vmem:[%s375 + $0xcd0] sm:$0xff]
      %v843 = vld [vmem:[%s375 + $0xcd8] sm:$0xff]
      %v844 = vld [vmem:[%s375 + $0xce0] sm:$0xff]
      %v845 = vld [vmem:[%s375 + $0xce8] sm:$0xff]
      %v846 = vld [vmem:[%s375 + $0xcf0] sm:$0xff]
      %v847 = vld [vmem:[%s375 + $0xcf8] sm:$0xff]
      %v848 = vld [vmem:[%s375 + $0xd00] sm:$0xff]
      %v849 = vld [vmem:[%s375 + $0xd08] sm:$0xff]
      %v850 = vld [vmem:[%s375 + $0xd10] sm:$0xff]
      %v851 = vld [vmem:[%s375 + $0xd18] sm:$0xff]
      %v852 = vld [vmem:[%s375 + $0xd20] sm:$0xff]
      %v853 = vld [vmem:[%s375 + $0xd28] sm:$0xff]
      %v854 = vld [vmem:[%s375 + $0xd30] sm:$0xff]
      %v855 = vld [vmem:[%s375 + $0xd38] sm:$0xff]
      %v856 = vld [vmem:[%s375 + $0xd40] sm:$0xff]
      %v857 = vld [vmem:[%s375 + $0xd48] sm:$0xff]
      %v858 = vld [vmem:[%s375 + $0xd50] sm:$0xff]
      %v859 = vld [vmem:[%s375 + $0xd58] sm:$0xff]
      %v860 = vld [vmem:[%s375 + $0xd60] sm:$0xff]
      %v861 = vld [vmem:[%s375 + $0xd68] sm:$0xff]
      %v862 = vld [vmem:[%s375 + $0xd70] sm:$0xff]
      %v863 = vld [vmem:[%s375 + $0xd78] sm:$0xff]
      %v864 = vld [vmem:[%s375 + $0xd80] sm:$0xff]
      %v865 = vld [vmem:[%s375 + $0xd88] sm:$0xff]
      %v866 = vld [vmem:[%s375 + $0xd90] sm:$0xff]
      %v867 = vld [vmem:[%s375 + $0xd98] sm:$0xff]
      %v868 = vld [vmem:[%s375 + $0xda0] sm:$0xff]
      %v869 = vld [vmem:[%s375 + $0xda8] sm:$0xff]
      %v870 = vld [vmem:[%s375 + $0xdb0] sm:$0xff]
      %v871 = vld [vmem:[%s375 + $0xdb8] sm:$0xff]
      %v872 = vld [vmem:[%s375 + $0xdc0] sm:$0xff]
      %v873 = vld [vmem:[%s375 + $0xdc8] sm:$0xff]
      %v874 = vld [vmem:[%s375 + $0xdd0] sm:$0xff]
      %v875 = vld [vmem:[%s375 + $0xdd8] sm:$0xff]
      %v876 = vld [vmem:[%s375 + $0xde0] sm:$0xff]
      %v877 = vld [vmem:[%s375 + $0xde8] sm:$0xff]
      %v878 = vld [vmem:[%s375 + $0xdf0] sm:$0xff]
      %v879 = vld [vmem:[%s375 + $0xdf8] sm:$0xff]
      %v880 = vld [vmem:[%s375 + $0xe00] sm:$0xff]
      %v881 = vld [vmem:[%s375 + $0xe08] sm:$0xff]
      %v882 = vld [vmem:[%s375 + $0xe10] sm:$0xff]
      %v883 = vld [vmem:[%s375 + $0xe18] sm:$0xff]
      %v884 = vld [vmem:[%s375 + $0xe20] sm:$0xff]
      %v885 = vld [vmem:[%s375 + $0xe28] sm:$0xff]
      %v886 = vld [vmem:[%s375 + $0xe30] sm:$0xff]
      %v887 = vld [vmem:[%s375 + $0xe38] sm:$0xff]
      %v888 = vld [vmem:[%s375 + $0xe40] sm:$0xff]
      %v889 = vld [vmem:[%s375 + $0xe48] sm:$0xff]
      %v890 = vld [vmem:[%s375 + $0xe50] sm:$0xff]
      %v891 = vld [vmem:[%s375 + $0xe58] sm:$0xff]
      %v892 = vld [vmem:[%s375 + $0xe60] sm:$0xff]
      %v893 = vld [vmem:[%s375 + $0xe68] sm:$0xff]
      %v894 = vld [vmem:[%s375 + $0xe70] sm:$0xff]
      %v895 = vld [vmem:[%s375 + $0xe78] sm:$0xff]
      %v896 = vld [vmem:[%s375 + $0xe80] sm:$0xff]
      %v897 = vld [vmem:[%s375 + $0xe88] sm:$0xff]
      %v898 = vld [vmem:[%s375 + $0xe90] sm:$0xff]
      %v899 = vld [vmem:[%s375 + $0xe98] sm:$0xff]
      %v900 = vld [vmem:[%s375 + $0xea0] sm:$0xff]
      %v901 = vld [vmem:[%s375 + $0xea8] sm:$0xff]
      %v902 = vld [vmem:[%s375 + $0xeb0] sm:$0xff]
      %v903 = vld [vmem:[%s375 + $0xeb8] sm:$0xff]
      %v904 = vld [vmem:[%s375 + $0xec0] sm:$0xff]
      %v905 = vld [vmem:[%s375 + $0xec8] sm:$0xff]
      %v906 = vld [vmem:[%s375 + $0xed0] sm:$0xff]
      %v907 = vld [vmem:[%s375 + $0xed8] sm:$0xff]
      %v908 = vld [vmem:[%s375 + $0xee0] sm:$0xff]
      %v909 = vld [vmem:[%s375 + $0xee8] sm:$0xff]
      %v910 = vld [vmem:[%s375 + $0xef0] sm:$0xff]
      %v911 = vld [vmem:[%s375 + $0xef8] sm:$0xff]
      %v912 = vld [vmem:[%s375 + $0xf00] sm:$0xff]
      %v913 = vld [vmem:[%s375 + $0xf08] sm:$0xff]
      %v914 = vld [vmem:[%s375 + $0xf10] sm:$0xff]
      %v915 = vld [vmem:[%s375 + $0xf18] sm:$0xff]
      %v916 = vld [vmem:[%s375 + $0xf20] sm:$0xff]
      %v917 = vld [vmem:[%s375 + $0xf28] sm:$0xff]
      %v918 = vld [vmem:[%s375 + $0xf30] sm:$0xff]
      %v919 = vld [vmem:[%s375 + $0xf38] sm:$0xff]
      %v920 = vld [vmem:[%s375 + $0xf40] sm:$0xff]
      %v921 = vld [vmem:[%s375 + $0xf48] sm:$0xff]
      %v922 = vld [vmem:[%s375 + $0xf50] sm:$0xff]
      %v923 = vld [vmem:[%s375 + $0xf58] sm:$0xff]
      %v924 = vld [vmem:[%s375 + $0xf60] sm:$0xff]
      %v925 = vld [vmem:[%s375 + $0xf68] sm:$0xff]
      %v926 = vld [vmem:[%s375 + $0xf70] sm:$0xff]
      %v927 = vld [vmem:[%s375 + $0xf78] sm:$0xff]
      %v928 = vld [vmem:[%s375 + $0xf80] sm:$0xff]
      %v929 = vld [vmem:[%s375 + $0xf88] sm:$0xff]
      %v930 = vld [vmem:[%s375 + $0xf90] sm:$0xff]
      %v931 = vld [vmem:[%s375 + $0xf98] sm:$0xff]
      %v932 = vld [vmem:[%s375 + $0xfa0] sm:$0xff]
      %v933 = vld [vmem:[%s375 + $0xfa8] sm:$0xff]
      %v934 = vld [vmem:[%s375 + $0xfb0] sm:$0xff]
      %v935 = vld [vmem:[%s375 + $0xfb8] sm:$0xff]
      %v936 = vld [vmem:[%s375 + $0xfc0] sm:$0xff]
      %v937 = vld [vmem:[%s375 + $0xfc8] sm:$0xff]
      %v938 = vld [vmem:[%s375 + $0xfd0] sm:$0xff]
      %v939 = vld [vmem:[%s375 + $0xfd8] sm:$0xff]
      %v940 = vld [vmem:[%s375 + $0xfe0] sm:$0xff]
      %v941 = vld [vmem:[%s375 + $0xfe8] sm:$0xff]
      %v942 = vld [vmem:[%s375 + $0xff0] sm:$0xff]
      %v943 = vld [vmem:[%s375 + $0xff8] sm:$0xff]
      %v944 = vld [vmem:[%s383] sm:$0xff]
      %v945 = vld [vmem:[%s383 + $0x8] sm:$0xff]
      %v948 = vlaneseq
      %v949 = vshrl.u32 %v948, 7
      %v950 = vsub.s32 0, %v949
      %v951 = vrot.slane %v944, %v950
      %v952 = vlaneseq
      %v953 = vshrl.u32 %v952, 7
      %v954 = vsub.s32 1, %v953
      %v955 = vrot.slane %v944, %v954
      %v956 = vlaneseq
      %v957 = vshrl.u32 %v956, 7
      %v958 = vsub.s32 2, %v957
      %v959 = vrot.slane %v944, %v958
      %v960 = vlaneseq
      %v961 = vshrl.u32 %v960, 7
      %v962 = vsub.s32 3, %v961
      %v963 = vrot.slane %v944, %v962
      %v964 = vlaneseq
      %v965 = vshrl.u32 %v964, 7
      %v966 = vsub.s32 4, %v965
      %v967 = vrot.slane %v944, %v966
      %v968 = vlaneseq
      %v969 = vshrl.u32 %v968, 7
      %v970 = vsub.s32 5, %v969
      %v971 = vrot.slane %v944, %v970
      %v972 = vlaneseq
      %v973 = vshrl.u32 %v972, 7
      %v974 = vsub.s32 6, %v973
      %v975 = vrot.slane %v944, %v974
      %v976 = vlaneseq
      %v977 = vshrl.u32 %v976, 7
      %v978 = vsub.s32 7, %v977
      %v979 = vrot.slane %v944, %v978
      %v980 = vlaneseq
      %v981 = vshrl.u32 %v980, 7
      %v982 = vsub.s32 0, %v981
      %v983 = vrot.slane %v945, %v982
      %v984 = vlaneseq
      %v985 = vshrl.u32 %v984, 7
      %v986 = vsub.s32 1, %v985
      %v987 = vrot.slane %v945, %v986
      %v988 = vlaneseq
      %v989 = vshrl.u32 %v988, 7
      %v990 = vsub.s32 2, %v989
      %v991 = vrot.slane %v945, %v990
      %v992 = vlaneseq
      %v993 = vshrl.u32 %v992, 7
      %v994 = vsub.s32 3, %v993
      %v995 = vrot.slane %v945, %v994
      %v996 = vlaneseq
      %v997 = vshrl.u32 %v996, 7
      %v998 = vsub.s32 4, %v997
      %v999 = vrot.slane %v945, %v998
      %v1000 = vlaneseq
      %v1001 = vshrl.u32 %v1000, 7
      %v1002 = vsub.s32 5, %v1001
      %v1003 = vrot.slane %v945, %v1002
      %v1004 = vlaneseq
      %v1005 = vshrl.u32 %v1004, 7
      %v1006 = vsub.s32 6, %v1005
      %v1007 = vrot.slane %v945, %v1006
      %v1008 = vlaneseq
      %v1009 = vshrl.u32 %v1008, 7
      %v1010 = vsub.s32 7, %v1009
      %v1011 = vrot.slane %v945, %v1010
      %v1540 = vunpack.c.l.b16 %v432
      %v1541 = vunpack.c.h.b16 %v432
      %v1542 = vunpack.c.l.b16 %v433
      %v1543 = vunpack.c.h.b16 %v433
      %v1544 = vunpack.c.l.b16 %v434
      %v1545 = vunpack.c.h.b16 %v434
      %v1546 = vunpack.c.l.b16 %v435
      %v1547 = vunpack.c.h.b16 %v435
      %v1548 = vunpack.c.l.b16 %v436
      %v1549 = vunpack.c.h.b16 %v436
      %v1550 = vunpack.c.l.b16 %v437
      %v1551 = vunpack.c.h.b16 %v437
      %v1552 = vunpack.c.l.b16 %v438
      %v1553 = vunpack.c.h.b16 %v438
      %v1554 = vunpack.c.l.b16 %v439
      %v1555 = vunpack.c.h.b16 %v439
      %v1556 = vunpack.c.l.b16 %v440
      %v1557 = vunpack.c.h.b16 %v440
      %v1558 = vunpack.c.l.b16 %v441
      %v1559 = vunpack.c.h.b16 %v441
      %v1560 = vunpack.c.l.b16 %v442
      %v1561 = vunpack.c.h.b16 %v442
      %v1562 = vunpack.c.l.b16 %v443
      %v1563 = vunpack.c.h.b16 %v443
      %v1564 = vunpack.c.l.b16 %v444
      %v1565 = vunpack.c.h.b16 %v444
      %v1566 = vunpack.c.l.b16 %v445
      %v1567 = vunpack.c.h.b16 %v445
      %v1568 = vunpack.c.l.b16 %v446
      %v1569 = vunpack.c.h.b16 %v446
      %v1570 = vunpack.c.l.b16 %v447
      %v1571 = vunpack.c.h.b16 %v447
      %v1572 = vunpack.c.l.b16 %v448
      %v1573 = vunpack.c.h.b16 %v448
      %v1574 = vunpack.c.l.b16 %v449
      %v1575 = vunpack.c.h.b16 %v449
      %v1576 = vunpack.c.l.b16 %v450
      %v1577 = vunpack.c.h.b16 %v450
      %v1578 = vunpack.c.l.b16 %v451
      %v1579 = vunpack.c.h.b16 %v451
      %v1580 = vunpack.c.l.b16 %v452
      %v1581 = vunpack.c.h.b16 %v452
      %v1582 = vunpack.c.l.b16 %v453
      %v1583 = vunpack.c.h.b16 %v453
      %v1584 = vunpack.c.l.b16 %v454
      %v1585 = vunpack.c.h.b16 %v454
      %v1586 = vunpack.c.l.b16 %v455
      %v1587 = vunpack.c.h.b16 %v455
      %v1588 = vunpack.c.l.b16 %v456
      %v1589 = vunpack.c.h.b16 %v456
      %v1590 = vunpack.c.l.b16 %v457
      %v1591 = vunpack.c.h.b16 %v457
      %v1592 = vunpack.c.l.b16 %v458
      %v1593 = vunpack.c.h.b16 %v458
      %v1594 = vunpack.c.l.b16 %v459
      %v1595 = vunpack.c.h.b16 %v459
      %v1596 = vunpack.c.l.b16 %v460
      %v1597 = vunpack.c.h.b16 %v460
      %v1598 = vunpack.c.l.b16 %v461
      %v1599 = vunpack.c.h.b16 %v461
      %v1600 = vunpack.c.l.b16 %v462
      %v1601 = vunpack.c.h.b16 %v462
      %v1602 = vunpack.c.l.b16 %v463
      %v1603 = vunpack.c.h.b16 %v463
      %v1604 = vunpack.c.l.b16 %v464
      %v1605 = vunpack.c.h.b16 %v464
      %v1606 = vunpack.c.l.b16 %v465
      %v1607 = vunpack.c.h.b16 %v465
      %v1608 = vunpack.c.l.b16 %v466
      %v1609 = vunpack.c.h.b16 %v466
      %v1610 = vunpack.c.l.b16 %v467
      %v1611 = vunpack.c.h.b16 %v467
      %v1612 = vunpack.c.l.b16 %v468
      %v1613 = vunpack.c.h.b16 %v468
      %v1614 = vunpack.c.l.b16 %v469
      %v1615 = vunpack.c.h.b16 %v469
      %v1616 = vunpack.c.l.b16 %v470
      %v1617 = vunpack.c.h.b16 %v470
      %v1618 = vunpack.c.l.b16 %v471
      %v1619 = vunpack.c.h.b16 %v471
      %v1620 = vunpack.c.l.b16 %v472
      %v1621 = vunpack.c.h.b16 %v472
      %v1622 = vunpack.c.l.b16 %v473
      %v1623 = vunpack.c.h.b16 %v473
      %v1624 = vunpack.c.l.b16 %v474
      %v1625 = vunpack.c.h.b16 %v474
      %v1626 = vunpack.c.l.b16 %v475
      %v1627 = vunpack.c.h.b16 %v475
      %v1628 = vunpack.c.l.b16 %v476
      %v1629 = vunpack.c.h.b16 %v476
      %v1630 = vunpack.c.l.b16 %v477
      %v1631 = vunpack.c.h.b16 %v477
      %v1632 = vunpack.c.l.b16 %v478
      %v1633 = vunpack.c.h.b16 %v478
      %v1634 = vunpack.c.l.b16 %v479
      %v1635 = vunpack.c.h.b16 %v479
      %v1636 = vunpack.c.l.b16 %v480
      %v1637 = vunpack.c.h.b16 %v480
      %v1638 = vunpack.c.l.b16 %v481
      %v1639 = vunpack.c.h.b16 %v481
      %v1640 = vunpack.c.l.b16 %v482
      %v1641 = vunpack.c.h.b16 %v482
      %v1642 = vunpack.c.l.b16 %v483
      %v1643 = vunpack.c.h.b16 %v483
      %v1644 = vunpack.c.l.b16 %v484
      %v1645 = vunpack.c.h.b16 %v484
      %v1646 = vunpack.c.l.b16 %v485
      %v1647 = vunpack.c.h.b16 %v485
      %v1648 = vunpack.c.l.b16 %v486
      %v1649 = vunpack.c.h.b16 %v486
      %v1650 = vunpack.c.l.b16 %v487
      %v1651 = vunpack.c.h.b16 %v487
      %v1652 = vunpack.c.l.b16 %v488
      %v1653 = vunpack.c.h.b16 %v488
      %v1654 = vunpack.c.l.b16 %v489
      %v1655 = vunpack.c.h.b16 %v489
      %v1656 = vunpack.c.l.b16 %v490
      %v1657 = vunpack.c.h.b16 %v490
      %v1658 = vunpack.c.l.b16 %v491
      %v1659 = vunpack.c.h.b16 %v491
      %v1660 = vunpack.c.l.b16 %v492
      %v1661 = vunpack.c.h.b16 %v492
      %v1662 = vunpack.c.l.b16 %v493
      %v1663 = vunpack.c.h.b16 %v493
      %v1664 = vunpack.c.l.b16 %v494
      %v1665 = vunpack.c.h.b16 %v494
      %v1666 = vunpack.c.l.b16 %v495
      %v1667 = vunpack.c.h.b16 %v495
      %v1668 = vunpack.c.l.b16 %v496
      %v1669 = vunpack.c.h.b16 %v496
      %v1670 = vunpack.c.l.b16 %v497
      %v1671 = vunpack.c.h.b16 %v497
      %v1672 = vunpack.c.l.b16 %v498
      %v1673 = vunpack.c.h.b16 %v498
      %v1674 = vunpack.c.l.b16 %v499
      %v1675 = vunpack.c.h.b16 %v499
      %v1676 = vunpack.c.l.b16 %v500
      %v1677 = vunpack.c.h.b16 %v500
      %v1678 = vunpack.c.l.b16 %v501
      %v1679 = vunpack.c.h.b16 %v501
      %v1680 = vunpack.c.l.b16 %v502
      %v1681 = vunpack.c.h.b16 %v502
      %v1682 = vunpack.c.l.b16 %v503
      %v1683 = vunpack.c.h.b16 %v503
      %v1684 = vunpack.c.l.b16 %v504
      %v1685 = vunpack.c.h.b16 %v504
      %v1686 = vunpack.c.l.b16 %v505
      %v1687 = vunpack.c.h.b16 %v505
      %v1688 = vunpack.c.l.b16 %v506
      %v1689 = vunpack.c.h.b16 %v506
      %v1690 = vunpack.c.l.b16 %v507
      %v1691 = vunpack.c.h.b16 %v507
      %v1692 = vunpack.c.l.b16 %v508
      %v1693 = vunpack.c.h.b16 %v508
      %v1694 = vunpack.c.l.b16 %v509
      %v1695 = vunpack.c.h.b16 %v509
      %v1696 = vunpack.c.l.b16 %v510
      %v1697 = vunpack.c.h.b16 %v510
      %v1698 = vunpack.c.l.b16 %v511
      %v1699 = vunpack.c.h.b16 %v511
      %v1700 = vunpack.c.l.b16 %v512
      %v1701 = vunpack.c.h.b16 %v512
      %v1702 = vunpack.c.l.b16 %v513
      %v1703 = vunpack.c.h.b16 %v513
      %v1704 = vunpack.c.l.b16 %v514
      %v1705 = vunpack.c.h.b16 %v514
      %v1706 = vunpack.c.l.b16 %v515
      %v1707 = vunpack.c.h.b16 %v515
      %v1708 = vunpack.c.l.b16 %v516
      %v1709 = vunpack.c.h.b16 %v516
      %v1710 = vunpack.c.l.b16 %v517
      %v1711 = vunpack.c.h.b16 %v517
      %v1712 = vunpack.c.l.b16 %v518
      %v1713 = vunpack.c.h.b16 %v518
      %v1714 = vunpack.c.l.b16 %v519
      %v1715 = vunpack.c.h.b16 %v519
      %v1716 = vunpack.c.l.b16 %v520
      %v1717 = vunpack.c.h.b16 %v520
      %v1718 = vunpack.c.l.b16 %v521
      %v1719 = vunpack.c.h.b16 %v521
      %v1720 = vunpack.c.l.b16 %v522
      %v1721 = vunpack.c.h.b16 %v522
      %v1722 = vunpack.c.l.b16 %v523
      %v1723 = vunpack.c.h.b16 %v523
      %v1724 = vunpack.c.l.b16 %v524
      %v1725 = vunpack.c.h.b16 %v524
      %v1726 = vunpack.c.l.b16 %v525
      %v1727 = vunpack.c.h.b16 %v525
      %v1728 = vunpack.c.l.b16 %v526
      %v1729 = vunpack.c.h.b16 %v526
      %v1730 = vunpack.c.l.b16 %v527
      %v1731 = vunpack.c.h.b16 %v527
      %v1732 = vunpack.c.l.b16 %v528
      %v1733 = vunpack.c.h.b16 %v528
      %v1734 = vunpack.c.l.b16 %v529
      %v1735 = vunpack.c.h.b16 %v529
      %v1736 = vunpack.c.l.b16 %v530
      %v1737 = vunpack.c.h.b16 %v530
      %v1738 = vunpack.c.l.b16 %v531
      %v1739 = vunpack.c.h.b16 %v531
      %v1740 = vunpack.c.l.b16 %v532
      %v1741 = vunpack.c.h.b16 %v532
      %v1742 = vunpack.c.l.b16 %v533
      %v1743 = vunpack.c.h.b16 %v533
      %v1744 = vunpack.c.l.b16 %v534
      %v1745 = vunpack.c.h.b16 %v534
      %v1746 = vunpack.c.l.b16 %v535
      %v1747 = vunpack.c.h.b16 %v535
      %v1748 = vunpack.c.l.b16 %v536
      %v1749 = vunpack.c.h.b16 %v536
      %v1750 = vunpack.c.l.b16 %v537
      %v1751 = vunpack.c.h.b16 %v537
      %v1752 = vunpack.c.l.b16 %v538
      %v1753 = vunpack.c.h.b16 %v538
      %v1754 = vunpack.c.l.b16 %v539
      %v1755 = vunpack.c.h.b16 %v539
      %v1756 = vunpack.c.l.b16 %v540
      %v1757 = vunpack.c.h.b16 %v540
      %v1758 = vunpack.c.l.b16 %v541
      %v1759 = vunpack.c.h.b16 %v541
      %v1760 = vunpack.c.l.b16 %v542
      %v1761 = vunpack.c.h.b16 %v542
      %v1762 = vunpack.c.l.b16 %v543
      %v1763 = vunpack.c.h.b16 %v543
      %v1764 = vunpack.c.l.b16 %v544
      %v1765 = vunpack.c.h.b16 %v544
      %v1766 = vunpack.c.l.b16 %v545
      %v1767 = vunpack.c.h.b16 %v545
      %v1768 = vunpack.c.l.b16 %v546
      %v1769 = vunpack.c.h.b16 %v546
      %v1770 = vunpack.c.l.b16 %v547
      %v1771 = vunpack.c.h.b16 %v547
      %v1772 = vunpack.c.l.b16 %v548
      %v1773 = vunpack.c.h.b16 %v548
      %v1774 = vunpack.c.l.b16 %v549
      %v1775 = vunpack.c.h.b16 %v549
      %v1776 = vunpack.c.l.b16 %v550
      %v1777 = vunpack.c.h.b16 %v550
      %v1778 = vunpack.c.l.b16 %v551
      %v1779 = vunpack.c.h.b16 %v551
      %v1780 = vunpack.c.l.b16 %v552
      %v1781 = vunpack.c.h.b16 %v552
      %v1782 = vunpack.c.l.b16 %v553
      %v1783 = vunpack.c.h.b16 %v553
      %v1784 = vunpack.c.l.b16 %v554
      %v1785 = vunpack.c.h.b16 %v554
      %v1786 = vunpack.c.l.b16 %v555
      %v1787 = vunpack.c.h.b16 %v555
      %v1788 = vunpack.c.l.b16 %v556
      %v1789 = vunpack.c.h.b16 %v556
      %v1790 = vunpack.c.l.b16 %v557
      %v1791 = vunpack.c.h.b16 %v557
      %v1792 = vunpack.c.l.b16 %v558
      %v1793 = vunpack.c.h.b16 %v558
      %v1794 = vunpack.c.l.b16 %v559
      %v1795 = vunpack.c.h.b16 %v559
      %v1796 = vunpack.c.l.b16 %v560
      %v1797 = vunpack.c.h.b16 %v560
      %v1798 = vunpack.c.l.b16 %v561
      %v1799 = vunpack.c.h.b16 %v561
      %v1800 = vunpack.c.l.b16 %v562
      %v1801 = vunpack.c.h.b16 %v562
      %v1802 = vunpack.c.l.b16 %v563
      %v1803 = vunpack.c.h.b16 %v563
      %v1804 = vunpack.c.l.b16 %v564
      %v1805 = vunpack.c.h.b16 %v564
      %v1806 = vunpack.c.l.b16 %v565
      %v1807 = vunpack.c.h.b16 %v565
      %v1808 = vunpack.c.l.b16 %v566
      %v1809 = vunpack.c.h.b16 %v566
      %v1810 = vunpack.c.l.b16 %v567
      %v1811 = vunpack.c.h.b16 %v567
      %v1812 = vunpack.c.l.b16 %v568
      %v1813 = vunpack.c.h.b16 %v568
      %v1814 = vunpack.c.l.b16 %v569
      %v1815 = vunpack.c.h.b16 %v569
      %v1816 = vunpack.c.l.b16 %v570
      %v1817 = vunpack.c.h.b16 %v570
      %v1818 = vunpack.c.l.b16 %v571
      %v1819 = vunpack.c.h.b16 %v571
      %v1820 = vunpack.c.l.b16 %v572
      %v1821 = vunpack.c.h.b16 %v572
      %v1822 = vunpack.c.l.b16 %v573
      %v1823 = vunpack.c.h.b16 %v573
      %v1824 = vunpack.c.l.b16 %v574
      %v1825 = vunpack.c.h.b16 %v574
      %v1826 = vunpack.c.l.b16 %v575
      %v1827 = vunpack.c.h.b16 %v575
      %v1828 = vunpack.c.l.b16 %v576
      %v1829 = vunpack.c.h.b16 %v576
      %v1830 = vunpack.c.l.b16 %v577
      %v1831 = vunpack.c.h.b16 %v577
      %v1832 = vunpack.c.l.b16 %v578
      %v1833 = vunpack.c.h.b16 %v578
      %v1834 = vunpack.c.l.b16 %v579
      %v1835 = vunpack.c.h.b16 %v579
      %v1836 = vunpack.c.l.b16 %v580
      %v1837 = vunpack.c.h.b16 %v580
      %v1838 = vunpack.c.l.b16 %v581
      %v1839 = vunpack.c.h.b16 %v581
      %v1840 = vunpack.c.l.b16 %v582
      %v1841 = vunpack.c.h.b16 %v582
      %v1842 = vunpack.c.l.b16 %v583
      %v1843 = vunpack.c.h.b16 %v583
      %v1844 = vunpack.c.l.b16 %v584
      %v1845 = vunpack.c.h.b16 %v584
      %v1846 = vunpack.c.l.b16 %v585
      %v1847 = vunpack.c.h.b16 %v585
      %v1848 = vunpack.c.l.b16 %v586
      %v1849 = vunpack.c.h.b16 %v586
      %v1850 = vunpack.c.l.b16 %v587
      %v1851 = vunpack.c.h.b16 %v587
      %v1852 = vunpack.c.l.b16 %v588
      %v1853 = vunpack.c.h.b16 %v588
      %v1854 = vunpack.c.l.b16 %v589
      %v1855 = vunpack.c.h.b16 %v589
      %v1856 = vunpack.c.l.b16 %v590
      %v1857 = vunpack.c.h.b16 %v590
      %v1858 = vunpack.c.l.b16 %v591
      %v1859 = vunpack.c.h.b16 %v591
      %v1860 = vunpack.c.l.b16 %v592
      %v1861 = vunpack.c.h.b16 %v592
      %v1862 = vunpack.c.l.b16 %v593
      %v1863 = vunpack.c.h.b16 %v593
      %v1864 = vunpack.c.l.b16 %v594
      %v1865 = vunpack.c.h.b16 %v594
      %v1866 = vunpack.c.l.b16 %v595
      %v1867 = vunpack.c.h.b16 %v595
      %v1868 = vunpack.c.l.b16 %v596
      %v1869 = vunpack.c.h.b16 %v596
      %v1870 = vunpack.c.l.b16 %v597
      %v1871 = vunpack.c.h.b16 %v597
      %v1872 = vunpack.c.l.b16 %v598
      %v1873 = vunpack.c.h.b16 %v598
      %v1874 = vunpack.c.l.b16 %v599
      %v1875 = vunpack.c.h.b16 %v599
      %v1876 = vunpack.c.l.b16 %v600
      %v1877 = vunpack.c.h.b16 %v600
      %v1878 = vunpack.c.l.b16 %v601
      %v1879 = vunpack.c.h.b16 %v601
      %v1880 = vunpack.c.l.b16 %v602
      %v1881 = vunpack.c.h.b16 %v602
      %v1882 = vunpack.c.l.b16 %v603
      %v1883 = vunpack.c.h.b16 %v603
      %v1884 = vunpack.c.l.b16 %v604
      %v1885 = vunpack.c.h.b16 %v604
      %v1886 = vunpack.c.l.b16 %v605
      %v1887 = vunpack.c.h.b16 %v605
      %v1888 = vunpack.c.l.b16 %v606
      %v1889 = vunpack.c.h.b16 %v606
      %v1890 = vunpack.c.l.b16 %v607
      %v1891 = vunpack.c.h.b16 %v607
      %v1892 = vunpack.c.l.b16 %v608
      %v1893 = vunpack.c.h.b16 %v608
      %v1894 = vunpack.c.l.b16 %v609
      %v1895 = vunpack.c.h.b16 %v609
      %v1896 = vunpack.c.l.b16 %v610
      %v1897 = vunpack.c.h.b16 %v610
      %v1898 = vunpack.c.l.b16 %v611
      %v1899 = vunpack.c.h.b16 %v611
      %v1900 = vunpack.c.l.b16 %v612
      %v1901 = vunpack.c.h.b16 %v612
      %v1902 = vunpack.c.l.b16 %v613
      %v1903 = vunpack.c.h.b16 %v613
      %v1904 = vunpack.c.l.b16 %v614
      %v1905 = vunpack.c.h.b16 %v614
      %v1906 = vunpack.c.l.b16 %v615
      %v1907 = vunpack.c.h.b16 %v615
      %v1908 = vunpack.c.l.b16 %v616
      %v1909 = vunpack.c.h.b16 %v616
      %v1910 = vunpack.c.l.b16 %v617
      %v1911 = vunpack.c.h.b16 %v617
      %v1912 = vunpack.c.l.b16 %v618
      %v1913 = vunpack.c.h.b16 %v618
      %v1914 = vunpack.c.l.b16 %v619
      %v1915 = vunpack.c.h.b16 %v619
      %v1916 = vunpack.c.l.b16 %v620
      %v1917 = vunpack.c.h.b16 %v620
      %v1918 = vunpack.c.l.b16 %v621
      %v1919 = vunpack.c.h.b16 %v621
      %v1920 = vunpack.c.l.b16 %v622
      %v1921 = vunpack.c.h.b16 %v622
      %v1922 = vunpack.c.l.b16 %v623
      %v1923 = vunpack.c.h.b16 %v623
      %v1924 = vunpack.c.l.b16 %v624
      %v1925 = vunpack.c.h.b16 %v624
      %v1926 = vunpack.c.l.b16 %v625
      %v1927 = vunpack.c.h.b16 %v625
      %v1928 = vunpack.c.l.b16 %v626
      %v1929 = vunpack.c.h.b16 %v626
      %v1930 = vunpack.c.l.b16 %v627
      %v1931 = vunpack.c.h.b16 %v627
      %v1932 = vunpack.c.l.b16 %v628
      %v1933 = vunpack.c.h.b16 %v628
      %v1934 = vunpack.c.l.b16 %v629
      %v1935 = vunpack.c.h.b16 %v629
      %v1936 = vunpack.c.l.b16 %v630
      %v1937 = vunpack.c.h.b16 %v630
      %v1938 = vunpack.c.l.b16 %v631
      %v1939 = vunpack.c.h.b16 %v631
      %v1940 = vunpack.c.l.b16 %v632
      %v1941 = vunpack.c.h.b16 %v632
      %v1942 = vunpack.c.l.b16 %v633
      %v1943 = vunpack.c.h.b16 %v633
      %v1944 = vunpack.c.l.b16 %v634
      %v1945 = vunpack.c.h.b16 %v634
      %v1946 = vunpack.c.l.b16 %v635
      %v1947 = vunpack.c.h.b16 %v635
      %v1948 = vunpack.c.l.b16 %v636
      %v1949 = vunpack.c.h.b16 %v636
      %v1950 = vunpack.c.l.b16 %v637
      %v1951 = vunpack.c.h.b16 %v637
      %v1952 = vunpack.c.l.b16 %v638
      %v1953 = vunpack.c.h.b16 %v638
      %v1954 = vunpack.c.l.b16 %v639
      %v1955 = vunpack.c.h.b16 %v639
      %v1956 = vunpack.c.l.b16 %v640
      %v1957 = vunpack.c.h.b16 %v640
      %v1958 = vunpack.c.l.b16 %v641
      %v1959 = vunpack.c.h.b16 %v641
      %v1960 = vunpack.c.l.b16 %v642
      %v1961 = vunpack.c.h.b16 %v642
      %v1962 = vunpack.c.l.b16 %v643
      %v1963 = vunpack.c.h.b16 %v643
      %v1964 = vunpack.c.l.b16 %v644
      %v1965 = vunpack.c.h.b16 %v644
      %v1966 = vunpack.c.l.b16 %v645
      %v1967 = vunpack.c.h.b16 %v645
      %v1968 = vunpack.c.l.b16 %v646
      %v1969 = vunpack.c.h.b16 %v646
      %v1970 = vunpack.c.l.b16 %v647
      %v1971 = vunpack.c.h.b16 %v647
      %v1972 = vunpack.c.l.b16 %v648
      %v1973 = vunpack.c.h.b16 %v648
      %v1974 = vunpack.c.l.b16 %v649
      %v1975 = vunpack.c.h.b16 %v649
      %v1976 = vunpack.c.l.b16 %v650
      %v1977 = vunpack.c.h.b16 %v650
      %v1978 = vunpack.c.l.b16 %v651
      %v1979 = vunpack.c.h.b16 %v651
      %v1980 = vunpack.c.l.b16 %v652
      %v1981 = vunpack.c.h.b16 %v652
      %v1982 = vunpack.c.l.b16 %v653
      %v1983 = vunpack.c.h.b16 %v653
      %v1984 = vunpack.c.l.b16 %v654
      %v1985 = vunpack.c.h.b16 %v654
      %v1986 = vunpack.c.l.b16 %v655
      %v1987 = vunpack.c.h.b16 %v655
      %v1988 = vunpack.c.l.b16 %v656
      %v1989 = vunpack.c.h.b16 %v656
      %v1990 = vunpack.c.l.b16 %v657
      %v1991 = vunpack.c.h.b16 %v657
      %v1992 = vunpack.c.l.b16 %v658
      %v1993 = vunpack.c.h.b16 %v658
      %v1994 = vunpack.c.l.b16 %v659
      %v1995 = vunpack.c.h.b16 %v659
      %v1996 = vunpack.c.l.b16 %v660
      %v1997 = vunpack.c.h.b16 %v660
      %v1998 = vunpack.c.l.b16 %v661
      %v1999 = vunpack.c.h.b16 %v661
      %v2000 = vunpack.c.l.b16 %v662
      %v2001 = vunpack.c.h.b16 %v662
      %v2002 = vunpack.c.l.b16 %v663
      %v2003 = vunpack.c.h.b16 %v663
      %v2004 = vunpack.c.l.b16 %v664
      %v2005 = vunpack.c.h.b16 %v664
      %v2006 = vunpack.c.l.b16 %v665
      %v2007 = vunpack.c.h.b16 %v665
      %v2008 = vunpack.c.l.b16 %v666
      %v2009 = vunpack.c.h.b16 %v666
      %v2010 = vunpack.c.l.b16 %v667
      %v2011 = vunpack.c.h.b16 %v667
      %v2012 = vunpack.c.l.b16 %v668
      %v2013 = vunpack.c.h.b16 %v668
      %v2014 = vunpack.c.l.b16 %v669
      %v2015 = vunpack.c.h.b16 %v669
      %v2016 = vunpack.c.l.b16 %v670
      %v2017 = vunpack.c.h.b16 %v670
      %v2018 = vunpack.c.l.b16 %v671
      %v2019 = vunpack.c.h.b16 %v671
      %v2020 = vunpack.c.l.b16 %v672
      %v2021 = vunpack.c.h.b16 %v672
      %v2022 = vunpack.c.l.b16 %v673
      %v2023 = vunpack.c.h.b16 %v673
      %v2024 = vunpack.c.l.b16 %v674
      %v2025 = vunpack.c.h.b16 %v674
      %v2026 = vunpack.c.l.b16 %v675
      %v2027 = vunpack.c.h.b16 %v675
      %v2028 = vunpack.c.l.b16 %v676
      %v2029 = vunpack.c.h.b16 %v676
      %v2030 = vunpack.c.l.b16 %v677
      %v2031 = vunpack.c.h.b16 %v677
      %v2032 = vunpack.c.l.b16 %v678
      %v2033 = vunpack.c.h.b16 %v678
      %v2034 = vunpack.c.l.b16 %v679
      %v2035 = vunpack.c.h.b16 %v679
      %v2036 = vunpack.c.l.b16 %v680
      %v2037 = vunpack.c.h.b16 %v680
      %v2038 = vunpack.c.l.b16 %v681
      %v2039 = vunpack.c.h.b16 %v681
      %v2040 = vunpack.c.l.b16 %v682
      %v2041 = vunpack.c.h.b16 %v682
      %v2042 = vunpack.c.l.b16 %v683
      %v2043 = vunpack.c.h.b16 %v683
      %v2044 = vunpack.c.l.b16 %v684
      %v2045 = vunpack.c.h.b16 %v684
      %v2046 = vunpack.c.l.b16 %v685
      %v2047 = vunpack.c.h.b16 %v685
      %v2048 = vunpack.c.l.b16 %v686
      %v2049 = vunpack.c.h.b16 %v686
      %v2050 = vunpack.c.l.b16 %v687
      %v2051 = vunpack.c.h.b16 %v687
      %v2052 = vunpack.c.l.b16 %v688
      %v2053 = vunpack.c.h.b16 %v688
      %v2054 = vunpack.c.l.b16 %v689
      %v2055 = vunpack.c.h.b16 %v689
      %v2056 = vunpack.c.l.b16 %v690
      %v2057 = vunpack.c.h.b16 %v690
      %v2058 = vunpack.c.l.b16 %v691
      %v2059 = vunpack.c.h.b16 %v691
      %v2060 = vunpack.c.l.b16 %v692
      %v2061 = vunpack.c.h.b16 %v692
      %v2062 = vunpack.c.l.b16 %v693
      %v2063 = vunpack.c.h.b16 %v693
      %v2064 = vunpack.c.l.b16 %v694
      %v2065 = vunpack.c.h.b16 %v694
      %v2066 = vunpack.c.l.b16 %v695
      %v2067 = vunpack.c.h.b16 %v695
      %v2068 = vunpack.c.l.b16 %v696
      %v2069 = vunpack.c.h.b16 %v696
      %v2070 = vunpack.c.l.b16 %v697
      %v2071 = vunpack.c.h.b16 %v697
      %v2072 = vunpack.c.l.b16 %v698
      %v2073 = vunpack.c.h.b16 %v698
      %v2074 = vunpack.c.l.b16 %v699
      %v2075 = vunpack.c.h.b16 %v699
      %v2076 = vunpack.c.l.b16 %v700
      %v2077 = vunpack.c.h.b16 %v700
      %v2078 = vunpack.c.l.b16 %v701
      %v2079 = vunpack.c.h.b16 %v701
      %v2080 = vunpack.c.l.b16 %v702
      %v2081 = vunpack.c.h.b16 %v702
      %v2082 = vunpack.c.l.b16 %v703
      %v2083 = vunpack.c.h.b16 %v703
      %v2084 = vunpack.c.l.b16 %v704
      %v2085 = vunpack.c.h.b16 %v704
      %v2086 = vunpack.c.l.b16 %v705
      %v2087 = vunpack.c.h.b16 %v705
      %v2088 = vunpack.c.l.b16 %v706
      %v2089 = vunpack.c.h.b16 %v706
      %v2090 = vunpack.c.l.b16 %v707
      %v2091 = vunpack.c.h.b16 %v707
      %v2092 = vunpack.c.l.b16 %v708
      %v2093 = vunpack.c.h.b16 %v708
      %v2094 = vunpack.c.l.b16 %v709
      %v2095 = vunpack.c.h.b16 %v709
      %v2096 = vunpack.c.l.b16 %v710
      %v2097 = vunpack.c.h.b16 %v710
      %v2098 = vunpack.c.l.b16 %v711
      %v2099 = vunpack.c.h.b16 %v711
      %v2100 = vunpack.c.l.b16 %v712
      %v2101 = vunpack.c.h.b16 %v712
      %v2102 = vunpack.c.l.b16 %v713
      %v2103 = vunpack.c.h.b16 %v713
      %v2104 = vunpack.c.l.b16 %v714
      %v2105 = vunpack.c.h.b16 %v714
      %v2106 = vunpack.c.l.b16 %v715
      %v2107 = vunpack.c.h.b16 %v715
      %v2108 = vunpack.c.l.b16 %v716
      %v2109 = vunpack.c.h.b16 %v716
      %v2110 = vunpack.c.l.b16 %v717
      %v2111 = vunpack.c.h.b16 %v717
      %v2112 = vunpack.c.l.b16 %v718
      %v2113 = vunpack.c.h.b16 %v718
      %v2114 = vunpack.c.l.b16 %v719
      %v2115 = vunpack.c.h.b16 %v719
      %v2116 = vunpack.c.l.b16 %v720
      %v2117 = vunpack.c.h.b16 %v720
      %v2118 = vunpack.c.l.b16 %v721
      %v2119 = vunpack.c.h.b16 %v721
      %v2120 = vunpack.c.l.b16 %v722
      %v2121 = vunpack.c.h.b16 %v722
      %v2122 = vunpack.c.l.b16 %v723
      %v2123 = vunpack.c.h.b16 %v723
      %v2124 = vunpack.c.l.b16 %v724
      %v2125 = vunpack.c.h.b16 %v724
      %v2126 = vunpack.c.l.b16 %v725
      %v2127 = vunpack.c.h.b16 %v725
      %v2128 = vunpack.c.l.b16 %v726
      %v2129 = vunpack.c.h.b16 %v726
      %v2130 = vunpack.c.l.b16 %v727
      %v2131 = vunpack.c.h.b16 %v727
      %v2132 = vunpack.c.l.b16 %v728
      %v2133 = vunpack.c.h.b16 %v728
      %v2134 = vunpack.c.l.b16 %v729
      %v2135 = vunpack.c.h.b16 %v729
      %v2136 = vunpack.c.l.b16 %v730
      %v2137 = vunpack.c.h.b16 %v730
      %v2138 = vunpack.c.l.b16 %v731
      %v2139 = vunpack.c.h.b16 %v731
      %v2140 = vunpack.c.l.b16 %v732
      %v2141 = vunpack.c.h.b16 %v732
      %v2142 = vunpack.c.l.b16 %v733
      %v2143 = vunpack.c.h.b16 %v733
      %v2144 = vunpack.c.l.b16 %v734
      %v2145 = vunpack.c.h.b16 %v734
      %v2146 = vunpack.c.l.b16 %v735
      %v2147 = vunpack.c.h.b16 %v735
      %v2148 = vunpack.c.l.b16 %v736
      %v2149 = vunpack.c.h.b16 %v736
      %v2150 = vunpack.c.l.b16 %v737
      %v2151 = vunpack.c.h.b16 %v737
      %v2152 = vunpack.c.l.b16 %v738
      %v2153 = vunpack.c.h.b16 %v738
      %v2154 = vunpack.c.l.b16 %v739
      %v2155 = vunpack.c.h.b16 %v739
      %v2156 = vunpack.c.l.b16 %v740
      %v2157 = vunpack.c.h.b16 %v740
      %v2158 = vunpack.c.l.b16 %v741
      %v2159 = vunpack.c.h.b16 %v741
      %v2160 = vunpack.c.l.b16 %v742
      %v2161 = vunpack.c.h.b16 %v742
      %v2162 = vunpack.c.l.b16 %v743
      %v2163 = vunpack.c.h.b16 %v743
      %v2164 = vunpack.c.l.b16 %v744
      %v2165 = vunpack.c.h.b16 %v744
      %v2166 = vunpack.c.l.b16 %v745
      %v2167 = vunpack.c.h.b16 %v745
      %v2168 = vunpack.c.l.b16 %v746
      %v2169 = vunpack.c.h.b16 %v746
      %v2170 = vunpack.c.l.b16 %v747
      %v2171 = vunpack.c.h.b16 %v747
      %v2172 = vunpack.c.l.b16 %v748
      %v2173 = vunpack.c.h.b16 %v748
      %v2174 = vunpack.c.l.b16 %v749
      %v2175 = vunpack.c.h.b16 %v749
      %v2176 = vunpack.c.l.b16 %v750
      %v2177 = vunpack.c.h.b16 %v750
      %v2178 = vunpack.c.l.b16 %v751
      %v2179 = vunpack.c.h.b16 %v751
      %v2180 = vunpack.c.l.b16 %v752
      %v2181 = vunpack.c.h.b16 %v752
      %v2182 = vunpack.c.l.b16 %v753
      %v2183 = vunpack.c.h.b16 %v753
      %v2184 = vunpack.c.l.b16 %v754
      %v2185 = vunpack.c.h.b16 %v754
      %v2186 = vunpack.c.l.b16 %v755
      %v2187 = vunpack.c.h.b16 %v755
      %v2188 = vunpack.c.l.b16 %v756
      %v2189 = vunpack.c.h.b16 %v756
      %v2190 = vunpack.c.l.b16 %v757
      %v2191 = vunpack.c.h.b16 %v757
      %v2192 = vunpack.c.l.b16 %v758
      %v2193 = vunpack.c.h.b16 %v758
      %v2194 = vunpack.c.l.b16 %v759
      %v2195 = vunpack.c.h.b16 %v759
      %v2196 = vunpack.c.l.b16 %v760
      %v2197 = vunpack.c.h.b16 %v760
      %v2198 = vunpack.c.l.b16 %v761
      %v2199 = vunpack.c.h.b16 %v761
      %v2200 = vunpack.c.l.b16 %v762
      %v2201 = vunpack.c.h.b16 %v762
      %v2202 = vunpack.c.l.b16 %v763
      %v2203 = vunpack.c.h.b16 %v763
      %v2204 = vunpack.c.l.b16 %v764
      %v2205 = vunpack.c.h.b16 %v764
      %v2206 = vunpack.c.l.b16 %v765
      %v2207 = vunpack.c.h.b16 %v765
      %v2208 = vunpack.c.l.b16 %v766
      %v2209 = vunpack.c.h.b16 %v766
      %v2210 = vunpack.c.l.b16 %v767
      %v2211 = vunpack.c.h.b16 %v767
      %v2212 = vunpack.c.l.b16 %v768
      %v2213 = vunpack.c.h.b16 %v768
      %v2214 = vunpack.c.l.b16 %v769
      %v2215 = vunpack.c.h.b16 %v769
      %v2216 = vunpack.c.l.b16 %v770
      %v2217 = vunpack.c.h.b16 %v770
      %v2218 = vunpack.c.l.b16 %v771
      %v2219 = vunpack.c.h.b16 %v771
      %v2220 = vunpack.c.l.b16 %v772
      %v2221 = vunpack.c.h.b16 %v772
      %v2222 = vunpack.c.l.b16 %v773
      %v2223 = vunpack.c.h.b16 %v773
      %v2224 = vunpack.c.l.b16 %v774
      %v2225 = vunpack.c.h.b16 %v774
      %v2226 = vunpack.c.l.b16 %v775
      %v2227 = vunpack.c.h.b16 %v775
      %v2228 = vunpack.c.l.b16 %v776
      %v2229 = vunpack.c.h.b16 %v776
      %v2230 = vunpack.c.l.b16 %v777
      %v2231 = vunpack.c.h.b16 %v777
      %v2232 = vunpack.c.l.b16 %v778
      %v2233 = vunpack.c.h.b16 %v778
      %v2234 = vunpack.c.l.b16 %v779
      %v2235 = vunpack.c.h.b16 %v779
      %v2236 = vunpack.c.l.b16 %v780
      %v2237 = vunpack.c.h.b16 %v780
      %v2238 = vunpack.c.l.b16 %v781
      %v2239 = vunpack.c.h.b16 %v781
      %v2240 = vunpack.c.l.b16 %v782
      %v2241 = vunpack.c.h.b16 %v782
      %v2242 = vunpack.c.l.b16 %v783
      %v2243 = vunpack.c.h.b16 %v783
      %v2244 = vunpack.c.l.b16 %v784
      %v2245 = vunpack.c.h.b16 %v784
      %v2246 = vunpack.c.l.b16 %v785
      %v2247 = vunpack.c.h.b16 %v785
      %v2248 = vunpack.c.l.b16 %v786
      %v2249 = vunpack.c.h.b16 %v786
      %v2250 = vunpack.c.l.b16 %v787
      %v2251 = vunpack.c.h.b16 %v787
      %v2252 = vunpack.c.l.b16 %v788
      %v2253 = vunpack.c.h.b16 %v788
      %v2254 = vunpack.c.l.b16 %v789
      %v2255 = vunpack.c.h.b16 %v789
      %v2256 = vunpack.c.l.b16 %v790
      %v2257 = vunpack.c.h.b16 %v790
      %v2258 = vunpack.c.l.b16 %v791
      %v2259 = vunpack.c.h.b16 %v791
      %v2260 = vunpack.c.l.b16 %v792
      %v2261 = vunpack.c.h.b16 %v792
      %v2262 = vunpack.c.l.b16 %v793
      %v2263 = vunpack.c.h.b16 %v793
      %v2264 = vunpack.c.l.b16 %v794
      %v2265 = vunpack.c.h.b16 %v794
      %v2266 = vunpack.c.l.b16 %v795
      %v2267 = vunpack.c.h.b16 %v795
      %v2268 = vunpack.c.l.b16 %v796
      %v2269 = vunpack.c.h.b16 %v796
      %v2270 = vunpack.c.l.b16 %v797
      %v2271 = vunpack.c.h.b16 %v797
      %v2272 = vunpack.c.l.b16 %v798
      %v2273 = vunpack.c.h.b16 %v798
      %v2274 = vunpack.c.l.b16 %v799
      %v2275 = vunpack.c.h.b16 %v799
      %v2276 = vunpack.c.l.b16 %v800
      %v2277 = vunpack.c.h.b16 %v800
      %v2278 = vunpack.c.l.b16 %v801
      %v2279 = vunpack.c.h.b16 %v801
      %v2280 = vunpack.c.l.b16 %v802
      %v2281 = vunpack.c.h.b16 %v802
      %v2282 = vunpack.c.l.b16 %v803
      %v2283 = vunpack.c.h.b16 %v803
      %v2284 = vunpack.c.l.b16 %v804
      %v2285 = vunpack.c.h.b16 %v804
      %v2286 = vunpack.c.l.b16 %v805
      %v2287 = vunpack.c.h.b16 %v805
      %v2288 = vunpack.c.l.b16 %v806
      %v2289 = vunpack.c.h.b16 %v806
      %v2290 = vunpack.c.l.b16 %v807
      %v2291 = vunpack.c.h.b16 %v807
      %v2292 = vunpack.c.l.b16 %v808
      %v2293 = vunpack.c.h.b16 %v808
      %v2294 = vunpack.c.l.b16 %v809
      %v2295 = vunpack.c.h.b16 %v809
      %v2296 = vunpack.c.l.b16 %v810
      %v2297 = vunpack.c.h.b16 %v810
      %v2298 = vunpack.c.l.b16 %v811
      %v2299 = vunpack.c.h.b16 %v811
      %v2300 = vunpack.c.l.b16 %v812
      %v2301 = vunpack.c.h.b16 %v812
      %v2302 = vunpack.c.l.b16 %v813
      %v2303 = vunpack.c.h.b16 %v813
      %v2304 = vunpack.c.l.b16 %v814
      %v2305 = vunpack.c.h.b16 %v814
      %v2306 = vunpack.c.l.b16 %v815
      %v2307 = vunpack.c.h.b16 %v815
      %v2308 = vunpack.c.l.b16 %v816
      %v2309 = vunpack.c.h.b16 %v816
      %v2310 = vunpack.c.l.b16 %v817
      %v2311 = vunpack.c.h.b16 %v817
      %v2312 = vunpack.c.l.b16 %v818
      %v2313 = vunpack.c.h.b16 %v818
      %v2314 = vunpack.c.l.b16 %v819
      %v2315 = vunpack.c.h.b16 %v819
      %v2316 = vunpack.c.l.b16 %v820
      %v2317 = vunpack.c.h.b16 %v820
      %v2318 = vunpack.c.l.b16 %v821
      %v2319 = vunpack.c.h.b16 %v821
      %v2320 = vunpack.c.l.b16 %v822
      %v2321 = vunpack.c.h.b16 %v822
      %v2322 = vunpack.c.l.b16 %v823
      %v2323 = vunpack.c.h.b16 %v823
      %v2324 = vunpack.c.l.b16 %v824
      %v2325 = vunpack.c.h.b16 %v824
      %v2326 = vunpack.c.l.b16 %v825
      %v2327 = vunpack.c.h.b16 %v825
      %v2328 = vunpack.c.l.b16 %v826
      %v2329 = vunpack.c.h.b16 %v826
      %v2330 = vunpack.c.l.b16 %v827
      %v2331 = vunpack.c.h.b16 %v827
      %v2332 = vunpack.c.l.b16 %v828
      %v2333 = vunpack.c.h.b16 %v828
      %v2334 = vunpack.c.l.b16 %v829
      %v2335 = vunpack.c.h.b16 %v829
      %v2336 = vunpack.c.l.b16 %v830
      %v2337 = vunpack.c.h.b16 %v830
      %v2338 = vunpack.c.l.b16 %v831
      %v2339 = vunpack.c.h.b16 %v831
      %v2340 = vunpack.c.l.b16 %v832
      %v2341 = vunpack.c.h.b16 %v832
      %v2342 = vunpack.c.l.b16 %v833
      %v2343 = vunpack.c.h.b16 %v833
      %v2344 = vunpack.c.l.b16 %v834
      %v2345 = vunpack.c.h.b16 %v834
      %v2346 = vunpack.c.l.b16 %v835
      %v2347 = vunpack.c.h.b16 %v835
      %v2348 = vunpack.c.l.b16 %v836
      %v2349 = vunpack.c.h.b16 %v836
      %v2350 = vunpack.c.l.b16 %v837
      %v2351 = vunpack.c.h.b16 %v837
      %v2352 = vunpack.c.l.b16 %v838
      %v2353 = vunpack.c.h.b16 %v838
      %v2354 = vunpack.c.l.b16 %v839
      %v2355 = vunpack.c.h.b16 %v839
      %v2356 = vunpack.c.l.b16 %v840
      %v2357 = vunpack.c.h.b16 %v840
      %v2358 = vunpack.c.l.b16 %v841
      %v2359 = vunpack.c.h.b16 %v841
      %v2360 = vunpack.c.l.b16 %v842
      %v2361 = vunpack.c.h.b16 %v842
      %v2362 = vunpack.c.l.b16 %v843
      %v2363 = vunpack.c.h.b16 %v843
      %v2364 = vunpack.c.l.b16 %v844
      %v2365 = vunpack.c.h.b16 %v844
      %v2366 = vunpack.c.l.b16 %v845
      %v2367 = vunpack.c.h.b16 %v845
      %v2368 = vunpack.c.l.b16 %v846
      %v2369 = vunpack.c.h.b16 %v846
      %v2370 = vunpack.c.l.b16 %v847
      %v2371 = vunpack.c.h.b16 %v847
      %v2372 = vunpack.c.l.b16 %v848
      %v2373 = vunpack.c.h.b16 %v848
      %v2374 = vunpack.c.l.b16 %v849
      %v2375 = vunpack.c.h.b16 %v849
      %v2376 = vunpack.c.l.b16 %v850
      %v2377 = vunpack.c.h.b16 %v850
      %v2378 = vunpack.c.l.b16 %v851
      %v2379 = vunpack.c.h.b16 %v851
      %v2380 = vunpack.c.l.b16 %v852
      %v2381 = vunpack.c.h.b16 %v852
      %v2382 = vunpack.c.l.b16 %v853
      %v2383 = vunpack.c.h.b16 %v853
      %v2384 = vunpack.c.l.b16 %v854
      %v2385 = vunpack.c.h.b16 %v854
      %v2386 = vunpack.c.l.b16 %v855
      %v2387 = vunpack.c.h.b16 %v855
      %v2388 = vunpack.c.l.b16 %v856
      %v2389 = vunpack.c.h.b16 %v856
      %v2390 = vunpack.c.l.b16 %v857
      %v2391 = vunpack.c.h.b16 %v857
      %v2392 = vunpack.c.l.b16 %v858
      %v2393 = vunpack.c.h.b16 %v858
      %v2394 = vunpack.c.l.b16 %v859
      %v2395 = vunpack.c.h.b16 %v859
      %v2396 = vunpack.c.l.b16 %v860
      %v2397 = vunpack.c.h.b16 %v860
      %v2398 = vunpack.c.l.b16 %v861
      %v2399 = vunpack.c.h.b16 %v861
      %v2400 = vunpack.c.l.b16 %v862
      %v2401 = vunpack.c.h.b16 %v862
      %v2402 = vunpack.c.l.b16 %v863
      %v2403 = vunpack.c.h.b16 %v863
      %v2404 = vunpack.c.l.b16 %v864
      %v2405 = vunpack.c.h.b16 %v864
      %v2406 = vunpack.c.l.b16 %v865
      %v2407 = vunpack.c.h.b16 %v865
      %v2408 = vunpack.c.l.b16 %v866
      %v2409 = vunpack.c.h.b16 %v866
      %v2410 = vunpack.c.l.b16 %v867
      %v2411 = vunpack.c.h.b16 %v867
      %v2412 = vunpack.c.l.b16 %v868
      %v2413 = vunpack.c.h.b16 %v868
      %v2414 = vunpack.c.l.b16 %v869
      %v2415 = vunpack.c.h.b16 %v869
      %v2416 = vunpack.c.l.b16 %v870
      %v2417 = vunpack.c.h.b16 %v870
      %v2418 = vunpack.c.l.b16 %v871
      %v2419 = vunpack.c.h.b16 %v871
      %v2420 = vunpack.c.l.b16 %v872
      %v2421 = vunpack.c.h.b16 %v872
      %v2422 = vunpack.c.l.b16 %v873
      %v2423 = vunpack.c.h.b16 %v873
      %v2424 = vunpack.c.l.b16 %v874
      %v2425 = vunpack.c.h.b16 %v874
      %v2426 = vunpack.c.l.b16 %v875
      %v2427 = vunpack.c.h.b16 %v875
      %v2428 = vunpack.c.l.b16 %v876
      %v2429 = vunpack.c.h.b16 %v876
      %v2430 = vunpack.c.l.b16 %v877
      %v2431 = vunpack.c.h.b16 %v877
      %v2432 = vunpack.c.l.b16 %v878
      %v2433 = vunpack.c.h.b16 %v878
      %v2434 = vunpack.c.l.b16 %v879
      %v2435 = vunpack.c.h.b16 %v879
      %v2436 = vunpack.c.l.b16 %v880
      %v2437 = vunpack.c.h.b16 %v880
      %v2438 = vunpack.c.l.b16 %v881
      %v2439 = vunpack.c.h.b16 %v881
      %v2440 = vunpack.c.l.b16 %v882
      %v2441 = vunpack.c.h.b16 %v882
      %v2442 = vunpack.c.l.b16 %v883
      %v2443 = vunpack.c.h.b16 %v883
      %v2444 = vunpack.c.l.b16 %v884
      %v2445 = vunpack.c.h.b16 %v884
      %v2446 = vunpack.c.l.b16 %v885
      %v2447 = vunpack.c.h.b16 %v885
      %v2448 = vunpack.c.l.b16 %v886
      %v2449 = vunpack.c.h.b16 %v886
      %v2450 = vunpack.c.l.b16 %v887
      %v2451 = vunpack.c.h.b16 %v887
      %v2452 = vunpack.c.l.b16 %v888
      %v2453 = vunpack.c.h.b16 %v888
      %v2454 = vunpack.c.l.b16 %v889
      %v2455 = vunpack.c.h.b16 %v889
      %v2456 = vunpack.c.l.b16 %v890
      %v2457 = vunpack.c.h.b16 %v890
      %v2458 = vunpack.c.l.b16 %v891
      %v2459 = vunpack.c.h.b16 %v891
      %v2460 = vunpack.c.l.b16 %v892
      %v2461 = vunpack.c.h.b16 %v892
      %v2462 = vunpack.c.l.b16 %v893
      %v2463 = vunpack.c.h.b16 %v893
      %v2464 = vunpack.c.l.b16 %v894
      %v2465 = vunpack.c.h.b16 %v894
      %v2466 = vunpack.c.l.b16 %v895
      %v2467 = vunpack.c.h.b16 %v895
      %v2468 = vunpack.c.l.b16 %v896
      %v2469 = vunpack.c.h.b16 %v896
      %v2470 = vunpack.c.l.b16 %v897
      %v2471 = vunpack.c.h.b16 %v897
      %v2472 = vunpack.c.l.b16 %v898
      %v2473 = vunpack.c.h.b16 %v898
      %v2474 = vunpack.c.l.b16 %v899
      %v2475 = vunpack.c.h.b16 %v899
      %v2476 = vunpack.c.l.b16 %v900
      %v2477 = vunpack.c.h.b16 %v900
      %v2478 = vunpack.c.l.b16 %v901
      %v2479 = vunpack.c.h.b16 %v901
      %v2480 = vunpack.c.l.b16 %v902
      %v2481 = vunpack.c.h.b16 %v902
      %v2482 = vunpack.c.l.b16 %v903
      %v2483 = vunpack.c.h.b16 %v903
      %v2484 = vunpack.c.l.b16 %v904
      %v2485 = vunpack.c.h.b16 %v904
      %v2486 = vunpack.c.l.b16 %v905
      %v2487 = vunpack.c.h.b16 %v905
      %v2488 = vunpack.c.l.b16 %v906
      %v2489 = vunpack.c.h.b16 %v906
      %v2490 = vunpack.c.l.b16 %v907
      %v2491 = vunpack.c.h.b16 %v907
      %v2492 = vunpack.c.l.b16 %v908
      %v2493 = vunpack.c.h.b16 %v908
      %v2494 = vunpack.c.l.b16 %v909
      %v2495 = vunpack.c.h.b16 %v909
      %v2496 = vunpack.c.l.b16 %v910
      %v2497 = vunpack.c.h.b16 %v910
      %v2498 = vunpack.c.l.b16 %v911
      %v2499 = vunpack.c.h.b16 %v911
      %v2500 = vunpack.c.l.b16 %v912
      %v2501 = vunpack.c.h.b16 %v912
      %v2502 = vunpack.c.l.b16 %v913
      %v2503 = vunpack.c.h.b16 %v913
      %v2504 = vunpack.c.l.b16 %v914
      %v2505 = vunpack.c.h.b16 %v914
      %v2506 = vunpack.c.l.b16 %v915
      %v2507 = vunpack.c.h.b16 %v915
      %v2508 = vunpack.c.l.b16 %v916
      %v2509 = vunpack.c.h.b16 %v916
      %v2510 = vunpack.c.l.b16 %v917
      %v2511 = vunpack.c.h.b16 %v917
      %v2512 = vunpack.c.l.b16 %v918
      %v2513 = vunpack.c.h.b16 %v918
      %v2514 = vunpack.c.l.b16 %v919
      %v2515 = vunpack.c.h.b16 %v919
      %v2516 = vunpack.c.l.b16 %v920
      %v2517 = vunpack.c.h.b16 %v920
      %v2518 = vunpack.c.l.b16 %v921
      %v2519 = vunpack.c.h.b16 %v921
      %v2520 = vunpack.c.l.b16 %v922
      %v2521 = vunpack.c.h.b16 %v922
      %v2522 = vunpack.c.l.b16 %v923
      %v2523 = vunpack.c.h.b16 %v923
      %v2524 = vunpack.c.l.b16 %v924
      %v2525 = vunpack.c.h.b16 %v924
      %v2526 = vunpack.c.l.b16 %v925
      %v2527 = vunpack.c.h.b16 %v925
      %v2528 = vunpack.c.l.b16 %v926
      %v2529 = vunpack.c.h.b16 %v926
      %v2530 = vunpack.c.l.b16 %v927
      %v2531 = vunpack.c.h.b16 %v927
      %v2532 = vunpack.c.l.b16 %v928
      %v2533 = vunpack.c.h.b16 %v928
      %v2534 = vunpack.c.l.b16 %v929
      %v2535 = vunpack.c.h.b16 %v929
      %v2536 = vunpack.c.l.b16 %v930
      %v2537 = vunpack.c.h.b16 %v930
      %v2538 = vunpack.c.l.b16 %v931
      %v2539 = vunpack.c.h.b16 %v931
      %v2540 = vunpack.c.l.b16 %v932
      %v2541 = vunpack.c.h.b16 %v932
      %v2542 = vunpack.c.l.b16 %v933
      %v2543 = vunpack.c.h.b16 %v933
      %v2544 = vunpack.c.l.b16 %v934
      %v2545 = vunpack.c.h.b16 %v934
      %v2546 = vunpack.c.l.b16 %v935
      %v2547 = vunpack.c.h.b16 %v935
      %v2548 = vunpack.c.l.b16 %v936
      %v2549 = vunpack.c.h.b16 %v936
      %v2550 = vunpack.c.l.b16 %v937
      %v2551 = vunpack.c.h.b16 %v937
      %v2552 = vunpack.c.l.b16 %v938
      %v2553 = vunpack.c.h.b16 %v938
      %v2554 = vunpack.c.l.b16 %v939
      %v2555 = vunpack.c.h.b16 %v939
      %v2556 = vunpack.c.l.b16 %v940
      %v2557 = vunpack.c.h.b16 %v940
      %v2558 = vunpack.c.l.b16 %v941
      %v2559 = vunpack.c.h.b16 %v941
      %v2560 = vunpack.c.l.b16 %v942
      %v2561 = vunpack.c.h.b16 %v942
      %v2562 = vunpack.c.l.b16 %v943
      %v2563 = vunpack.c.h.b16 %v943
      %v2564 = vpack.c.b16 %v1556, %v1540
      %v2565 = vpack.c.b16 %v1557, %v1541
      %v2566 = vpack.c.b16 %v1558, %v1542
      %v2567 = vpack.c.b16 %v1559, %v1543
      %v2568 = vpack.c.b16 %v1560, %v1544
      %v2569 = vpack.c.b16 %v1561, %v1545
      %v2570 = vpack.c.b16 %v1562, %v1546
      %v2571 = vpack.c.b16 %v1563, %v1547
      %v2572 = vpack.c.b16 %v1564, %v1548
      %v2573 = vpack.c.b16 %v1565, %v1549
      %v2574 = vpack.c.b16 %v1566, %v1550
      %v2575 = vpack.c.b16 %v1567, %v1551
      %v2576 = vpack.c.b16 %v1568, %v1552
      %v2577 = vpack.c.b16 %v1569, %v1553
      %v2578 = vpack.c.b16 %v1570, %v1554
      %v2579 = vpack.c.b16 %v1571, %v1555
      %v2580 = vpack.c.b16 %v1588, %v1572
      %v2581 = vpack.c.b16 %v1589, %v1573
      %v2582 = vpack.c.b16 %v1590, %v1574
      %v2583 = vpack.c.b16 %v1591, %v1575
      %v2584 = vpack.c.b16 %v1592, %v1576
      %v2585 = vpack.c.b16 %v1593, %v1577
      %v2586 = vpack.c.b16 %v1594, %v1578
      %v2587 = vpack.c.b16 %v1595, %v1579
      %v2588 = vpack.c.b16 %v1596, %v1580
      %v2589 = vpack.c.b16 %v1597, %v1581
      %v2590 = vpack.c.b16 %v1598, %v1582
      %v2591 = vpack.c.b16 %v1599, %v1583
      %v2592 = vpack.c.b16 %v1600, %v1584
      %v2593 = vpack.c.b16 %v1601, %v1585
      %v2594 = vpack.c.b16 %v1602, %v1586
      %v2595 = vpack.c.b16 %v1603, %v1587
      %v2596 = vpack.c.b16 %v1620, %v1604
      %v2597 = vpack.c.b16 %v1621, %v1605
      %v2598 = vpack.c.b16 %v1622, %v1606
      %v2599 = vpack.c.b16 %v1623, %v1607
      %v2600 = vpack.c.b16 %v1624, %v1608
      %v2601 = vpack.c.b16 %v1625, %v1609
      %v2602 = vpack.c.b16 %v1626, %v1610
      %v2603 = vpack.c.b16 %v1627, %v1611
      %v2604 = vpack.c.b16 %v1628, %v1612
      %v2605 = vpack.c.b16 %v1629, %v1613
      %v2606 = vpack.c.b16 %v1630, %v1614
      %v2607 = vpack.c.b16 %v1631, %v1615
      %v2608 = vpack.c.b16 %v1632, %v1616
      %v2609 = vpack.c.b16 %v1633, %v1617
      %v2610 = vpack.c.b16 %v1634, %v1618
      %v2611 = vpack.c.b16 %v1635, %v1619
      %v2612 = vpack.c.b16 %v1652, %v1636
      %v2613 = vpack.c.b16 %v1653, %v1637
      %v2614 = vpack.c.b16 %v1654, %v1638
      %v2615 = vpack.c.b16 %v1655, %v1639
      %v2616 = vpack.c.b16 %v1656, %v1640
      %v2617 = vpack.c.b16 %v1657, %v1641
      %v2618 = vpack.c.b16 %v1658, %v1642
      %v2619 = vpack.c.b16 %v1659, %v1643
      %v2620 = vpack.c.b16 %v1660, %v1644
      %v2621 = vpack.c.b16 %v1661, %v1645
      %v2622 = vpack.c.b16 %v1662, %v1646
      %v2623 = vpack.c.b16 %v1663, %v1647
      %v2624 = vpack.c.b16 %v1664, %v1648
      %v2625 = vpack.c.b16 %v1665, %v1649
      %v2626 = vpack.c.b16 %v1666, %v1650
      %v2627 = vpack.c.b16 %v1667, %v1651
      %v2628 = vpack.c.b16 %v1684, %v1668
      %v2629 = vpack.c.b16 %v1685, %v1669
      %v2630 = vpack.c.b16 %v1686, %v1670
      %v2631 = vpack.c.b16 %v1687, %v1671
      %v2632 = vpack.c.b16 %v1688, %v1672
      %v2633 = vpack.c.b16 %v1689, %v1673
      %v2634 = vpack.c.b16 %v1690, %v1674
      %v2635 = vpack.c.b16 %v1691, %v1675
      %v2636 = vpack.c.b16 %v1692, %v1676
      %v2637 = vpack.c.b16 %v1693, %v1677
      %v2638 = vpack.c.b16 %v1694, %v1678
      %v2639 = vpack.c.b16 %v1695, %v1679
      %v2640 = vpack.c.b16 %v1696, %v1680
      %v2641 = vpack.c.b16 %v1697, %v1681
      %v2642 = vpack.c.b16 %v1698, %v1682
      %v2643 = vpack.c.b16 %v1699, %v1683
      %v2644 = vpack.c.b16 %v1716, %v1700
      %v2645 = vpack.c.b16 %v1717, %v1701
      %v2646 = vpack.c.b16 %v1718, %v1702
      %v2647 = vpack.c.b16 %v1719, %v1703
      %v2648 = vpack.c.b16 %v1720, %v1704
      %v2649 = vpack.c.b16 %v1721, %v1705
      %v2650 = vpack.c.b16 %v1722, %v1706
      %v2651 = vpack.c.b16 %v1723, %v1707
      %v2652 = vpack.c.b16 %v1724, %v1708
      %v2653 = vpack.c.b16 %v1725, %v1709
      %v2654 = vpack.c.b16 %v1726, %v1710
      %v2655 = vpack.c.b16 %v1727, %v1711
      %v2656 = vpack.c.b16 %v1728, %v1712
      %v2657 = vpack.c.b16 %v1729, %v1713
      %v2658 = vpack.c.b16 %v1730, %v1714
      %v2659 = vpack.c.b16 %v1731, %v1715
      %v2660 = vpack.c.b16 %v1748, %v1732
      %v2661 = vpack.c.b16 %v1749, %v1733
      %v2662 = vpack.c.b16 %v1750, %v1734
      %v2663 = vpack.c.b16 %v1751, %v1735
      %v2664 = vpack.c.b16 %v1752, %v1736
      %v2665 = vpack.c.b16 %v1753, %v1737
      %v2666 = vpack.c.b16 %v1754, %v1738
      %v2667 = vpack.c.b16 %v1755, %v1739
      %v2668 = vpack.c.b16 %v1756, %v1740
      %v2669 = vpack.c.b16 %v1757, %v1741
      %v2670 = vpack.c.b16 %v1758, %v1742
      %v2671 = vpack.c.b16 %v1759, %v1743
      %v2672 = vpack.c.b16 %v1760, %v1744
      %v2673 = vpack.c.b16 %v1761, %v1745
      %v2674 = vpack.c.b16 %v1762, %v1746
      %v2675 = vpack.c.b16 %v1763, %v1747
      %v2676 = vpack.c.b16 %v1780, %v1764
      %v2677 = vpack.c.b16 %v1781, %v1765
      %v2678 = vpack.c.b16 %v1782, %v1766
      %v2679 = vpack.c.b16 %v1783, %v1767
      %v2680 = vpack.c.b16 %v1784, %v1768
      %v2681 = vpack.c.b16 %v1785, %v1769
      %v2682 = vpack.c.b16 %v1786, %v1770
      %v2683 = vpack.c.b16 %v1787, %v1771
      %v2684 = vpack.c.b16 %v1788, %v1772
      %v2685 = vpack.c.b16 %v1789, %v1773
      %v2686 = vpack.c.b16 %v1790, %v1774
      %v2687 = vpack.c.b16 %v1791, %v1775
      %v2688 = vpack.c.b16 %v1792, %v1776
      %v2689 = vpack.c.b16 %v1793, %v1777
      %v2690 = vpack.c.b16 %v1794, %v1778
      %v2691 = vpack.c.b16 %v1795, %v1779
      %v2692 = vpack.c.b16 %v1812, %v1796
      %v2693 = vpack.c.b16 %v1813, %v1797
      %v2694 = vpack.c.b16 %v1814, %v1798
      %v2695 = vpack.c.b16 %v1815, %v1799
      %v2696 = vpack.c.b16 %v1816, %v1800
      %v2697 = vpack.c.b16 %v1817, %v1801
      %v2698 = vpack.c.b16 %v1818, %v1802
      %v2699 = vpack.c.b16 %v1819, %v1803
      %v2700 = vpack.c.b16 %v1820, %v1804
      %v2701 = vpack.c.b16 %v1821, %v1805
      %v2702 = vpack.c.b16 %v1822, %v1806
      %v2703 = vpack.c.b16 %v1823, %v1807
      %v2704 = vpack.c.b16 %v1824, %v1808
      %v2705 = vpack.c.b16 %v1825, %v1809
      %v2706 = vpack.c.b16 %v1826, %v1810
      %v2707 = vpack.c.b16 %v1827, %v1811
      %v2708 = vpack.c.b16 %v1844, %v1828
      %v2709 = vpack.c.b16 %v1845, %v1829
      %v2710 = vpack.c.b16 %v1846, %v1830
      %v2711 = vpack.c.b16 %v1847, %v1831
      %v2712 = vpack.c.b16 %v1848, %v1832
      %v2713 = vpack.c.b16 %v1849, %v1833
      %v2714 = vpack.c.b16 %v1850, %v1834
      %v2715 = vpack.c.b16 %v1851, %v1835
      %v2716 = vpack.c.b16 %v1852, %v1836
      %v2717 = vpack.c.b16 %v1853, %v1837
      %v2718 = vpack.c.b16 %v1854, %v1838
      %v2719 = vpack.c.b16 %v1855, %v1839
      %v2720 = vpack.c.b16 %v1856, %v1840
      %v2721 = vpack.c.b16 %v1857, %v1841
      %v2722 = vpack.c.b16 %v1858, %v1842
      %v2723 = vpack.c.b16 %v1859, %v1843
      %v2724 = vpack.c.b16 %v1876, %v1860
      %v2725 = vpack.c.b16 %v1877, %v1861
      %v2726 = vpack.c.b16 %v1878, %v1862
      %v2727 = vpack.c.b16 %v1879, %v1863
      %v2728 = vpack.c.b16 %v1880, %v1864
      %v2729 = vpack.c.b16 %v1881, %v1865
      %v2730 = vpack.c.b16 %v1882, %v1866
      %v2731 = vpack.c.b16 %v1883, %v1867
      %v2732 = vpack.c.b16 %v1884, %v1868
      %v2733 = vpack.c.b16 %v1885, %v1869
      %v2734 = vpack.c.b16 %v1886, %v1870
      %v2735 = vpack.c.b16 %v1887, %v1871
      %v2736 = vpack.c.b16 %v1888, %v1872
      %v2737 = vpack.c.b16 %v1889, %v1873
      %v2738 = vpack.c.b16 %v1890, %v1874
      %v2739 = vpack.c.b16 %v1891, %v1875
      %v2740 = vpack.c.b16 %v1908, %v1892
      %v2741 = vpack.c.b16 %v1909, %v1893
      %v2742 = vpack.c.b16 %v1910, %v1894
      %v2743 = vpack.c.b16 %v1911, %v1895
      %v2744 = vpack.c.b16 %v1912, %v1896
      %v2745 = vpack.c.b16 %v1913, %v1897
      %v2746 = vpack.c.b16 %v1914, %v1898
      %v2747 = vpack.c.b16 %v1915, %v1899
      %v2748 = vpack.c.b16 %v1916, %v1900
      %v2749 = vpack.c.b16 %v1917, %v1901
      %v2750 = vpack.c.b16 %v1918, %v1902
      %v2751 = vpack.c.b16 %v1919, %v1903
      %v2752 = vpack.c.b16 %v1920, %v1904
      %v2753 = vpack.c.b16 %v1921, %v1905
      %v2754 = vpack.c.b16 %v1922, %v1906
      %v2755 = vpack.c.b16 %v1923, %v1907
      %v2756 = vpack.c.b16 %v1940, %v1924
      %v2757 = vpack.c.b16 %v1941, %v1925
      %v2758 = vpack.c.b16 %v1942, %v1926
      %v2759 = vpack.c.b16 %v1943, %v1927
      %v2760 = vpack.c.b16 %v1944, %v1928
      %v2761 = vpack.c.b16 %v1945, %v1929
      %v2762 = vpack.c.b16 %v1946, %v1930
      %v2763 = vpack.c.b16 %v1947, %v1931
      %v2764 = vpack.c.b16 %v1948, %v1932
      %v2765 = vpack.c.b16 %v1949, %v1933
      %v2766 = vpack.c.b16 %v1950, %v1934
      %v2767 = vpack.c.b16 %v1951, %v1935
      %v2768 = vpack.c.b16 %v1952, %v1936
      %v2769 = vpack.c.b16 %v1953, %v1937
      %v2770 = vpack.c.b16 %v1954, %v1938
      %v2771 = vpack.c.b16 %v1955, %v1939
      %v2772 = vpack.c.b16 %v1972, %v1956
      %v2773 = vpack.c.b16 %v1973, %v1957
      %v2774 = vpack.c.b16 %v1974, %v1958
      %v2775 = vpack.c.b16 %v1975, %v1959
      %v2776 = vpack.c.b16 %v1976, %v1960
      %v2777 = vpack.c.b16 %v1977, %v1961
      %v2778 = vpack.c.b16 %v1978, %v1962
      %v2779 = vpack.c.b16 %v1979, %v1963
      %v2780 = vpack.c.b16 %v1980, %v1964
      %v2781 = vpack.c.b16 %v1981, %v1965
      %v2782 = vpack.c.b16 %v1982, %v1966
      %v2783 = vpack.c.b16 %v1983, %v1967
      %v2784 = vpack.c.b16 %v1984, %v1968
      %v2785 = vpack.c.b16 %v1985, %v1969
      %v2786 = vpack.c.b16 %v1986, %v1970
      %v2787 = vpack.c.b16 %v1987, %v1971
      %v2788 = vpack.c.b16 %v2004, %v1988
      %v2789 = vpack.c.b16 %v2005, %v1989
      %v2790 = vpack.c.b16 %v2006, %v1990
      %v2791 = vpack.c.b16 %v2007, %v1991
      %v2792 = vpack.c.b16 %v2008, %v1992
      %v2793 = vpack.c.b16 %v2009, %v1993
      %v2794 = vpack.c.b16 %v2010, %v1994
      %v2795 = vpack.c.b16 %v2011, %v1995
      %v2796 = vpack.c.b16 %v2012, %v1996
      %v2797 = vpack.c.b16 %v2013, %v1997
      %v2798 = vpack.c.b16 %v2014, %v1998
      %v2799 = vpack.c.b16 %v2015, %v1999
      %v2800 = vpack.c.b16 %v2016, %v2000
      %v2801 = vpack.c.b16 %v2017, %v2001
      %v2802 = vpack.c.b16 %v2018, %v2002
      %v2803 = vpack.c.b16 %v2019, %v2003
      %v2804 = vpack.c.b16 %v2036, %v2020
      %v2805 = vpack.c.b16 %v2037, %v2021
      %v2806 = vpack.c.b16 %v2038, %v2022
      %v2807 = vpack.c.b16 %v2039, %v2023
      %v2808 = vpack.c.b16 %v2040, %v2024
      %v2809 = vpack.c.b16 %v2041, %v2025
      %v2810 = vpack.c.b16 %v2042, %v2026
      %v2811 = vpack.c.b16 %v2043, %v2027
      %v2812 = vpack.c.b16 %v2044, %v2028
      %v2813 = vpack.c.b16 %v2045, %v2029
      %v2814 = vpack.c.b16 %v2046, %v2030
      %v2815 = vpack.c.b16 %v2047, %v2031
      %v2816 = vpack.c.b16 %v2048, %v2032
      %v2817 = vpack.c.b16 %v2049, %v2033
      %v2818 = vpack.c.b16 %v2050, %v2034
      %v2819 = vpack.c.b16 %v2051, %v2035
      %v2820 = vpack.c.b16 %v2068, %v2052
      %v2821 = vpack.c.b16 %v2069, %v2053
      %v2822 = vpack.c.b16 %v2070, %v2054
      %v2823 = vpack.c.b16 %v2071, %v2055
      %v2824 = vpack.c.b16 %v2072, %v2056
      %v2825 = vpack.c.b16 %v2073, %v2057
      %v2826 = vpack.c.b16 %v2074, %v2058
      %v2827 = vpack.c.b16 %v2075, %v2059
      %v2828 = vpack.c.b16 %v2076, %v2060
      %v2829 = vpack.c.b16 %v2077, %v2061
      %v2830 = vpack.c.b16 %v2078, %v2062
      %v2831 = vpack.c.b16 %v2079, %v2063
      %v2832 = vpack.c.b16 %v2080, %v2064
      %v2833 = vpack.c.b16 %v2081, %v2065
      %v2834 = vpack.c.b16 %v2082, %v2066
      %v2835 = vpack.c.b16 %v2083, %v2067
      %v2836 = vpack.c.b16 %v2100, %v2084
      %v2837 = vpack.c.b16 %v2101, %v2085
      %v2838 = vpack.c.b16 %v2102, %v2086
      %v2839 = vpack.c.b16 %v2103, %v2087
      %v2840 = vpack.c.b16 %v2104, %v2088
      %v2841 = vpack.c.b16 %v2105, %v2089
      %v2842 = vpack.c.b16 %v2106, %v2090
      %v2843 = vpack.c.b16 %v2107, %v2091
      %v2844 = vpack.c.b16 %v2108, %v2092
      %v2845 = vpack.c.b16 %v2109, %v2093
      %v2846 = vpack.c.b16 %v2110, %v2094
      %v2847 = vpack.c.b16 %v2111, %v2095
      %v2848 = vpack.c.b16 %v2112, %v2096
      %v2849 = vpack.c.b16 %v2113, %v2097
      %v2850 = vpack.c.b16 %v2114, %v2098
      %v2851 = vpack.c.b16 %v2115, %v2099
      %v2852 = vpack.c.b16 %v2132, %v2116
      %v2853 = vpack.c.b16 %v2133, %v2117
      %v2854 = vpack.c.b16 %v2134, %v2118
      %v2855 = vpack.c.b16 %v2135, %v2119
      %v2856 = vpack.c.b16 %v2136, %v2120
      %v2857 = vpack.c.b16 %v2137, %v2121
      %v2858 = vpack.c.b16 %v2138, %v2122
      %v2859 = vpack.c.b16 %v2139, %v2123
      %v2860 = vpack.c.b16 %v2140, %v2124
      %v2861 = vpack.c.b16 %v2141, %v2125
      %v2862 = vpack.c.b16 %v2142, %v2126
      %v2863 = vpack.c.b16 %v2143, %v2127
      %v2864 = vpack.c.b16 %v2144, %v2128
      %v2865 = vpack.c.b16 %v2145, %v2129
      %v2866 = vpack.c.b16 %v2146, %v2130
      %v2867 = vpack.c.b16 %v2147, %v2131
      %v2868 = vpack.c.b16 %v2164, %v2148
      %v2869 = vpack.c.b16 %v2165, %v2149
      %v2870 = vpack.c.b16 %v2166, %v2150
      %v2871 = vpack.c.b16 %v2167, %v2151
      %v2872 = vpack.c.b16 %v2168, %v2152
      %v2873 = vpack.c.b16 %v2169, %v2153
      %v2874 = vpack.c.b16 %v2170, %v2154
      %v2875 = vpack.c.b16 %v2171, %v2155
      %v2876 = vpack.c.b16 %v2172, %v2156
      %v2877 = vpack.c.b16 %v2173, %v2157
      %v2878 = vpack.c.b16 %v2174, %v2158
      %v2879 = vpack.c.b16 %v2175, %v2159
      %v2880 = vpack.c.b16 %v2176, %v2160
      %v2881 = vpack.c.b16 %v2177, %v2161
      %v2882 = vpack.c.b16 %v2178, %v2162
      %v2883 = vpack.c.b16 %v2179, %v2163
      %v2884 = vpack.c.b16 %v2196, %v2180
      %v2885 = vpack.c.b16 %v2197, %v2181
      %v2886 = vpack.c.b16 %v2198, %v2182
      %v2887 = vpack.c.b16 %v2199, %v2183
      %v2888 = vpack.c.b16 %v2200, %v2184
      %v2889 = vpack.c.b16 %v2201, %v2185
      %v2890 = vpack.c.b16 %v2202, %v2186
      %v2891 = vpack.c.b16 %v2203, %v2187
      %v2892 = vpack.c.b16 %v2204, %v2188
      %v2893 = vpack.c.b16 %v2205, %v2189
      %v2894 = vpack.c.b16 %v2206, %v2190
      %v2895 = vpack.c.b16 %v2207, %v2191
      %v2896 = vpack.c.b16 %v2208, %v2192
      %v2897 = vpack.c.b16 %v2209, %v2193
      %v2898 = vpack.c.b16 %v2210, %v2194
      %v2899 = vpack.c.b16 %v2211, %v2195
      %v2900 = vpack.c.b16 %v2228, %v2212
      %v2901 = vpack.c.b16 %v2229, %v2213
      %v2902 = vpack.c.b16 %v2230, %v2214
      %v2903 = vpack.c.b16 %v2231, %v2215
      %v2904 = vpack.c.b16 %v2232, %v2216
      %v2905 = vpack.c.b16 %v2233, %v2217
      %v2906 = vpack.c.b16 %v2234, %v2218
      %v2907 = vpack.c.b16 %v2235, %v2219
      %v2908 = vpack.c.b16 %v2236, %v2220
      %v2909 = vpack.c.b16 %v2237, %v2221
      %v2910 = vpack.c.b16 %v2238, %v2222
      %v2911 = vpack.c.b16 %v2239, %v2223
      %v2912 = vpack.c.b16 %v2240, %v2224
      %v2913 = vpack.c.b16 %v2241, %v2225
      %v2914 = vpack.c.b16 %v2242, %v2226
      %v2915 = vpack.c.b16 %v2243, %v2227
      %v2916 = vpack.c.b16 %v2260, %v2244
      %v2917 = vpack.c.b16 %v2261, %v2245
      %v2918 = vpack.c.b16 %v2262, %v2246
      %v2919 = vpack.c.b16 %v2263, %v2247
      %v2920 = vpack.c.b16 %v2264, %v2248
      %v2921 = vpack.c.b16 %v2265, %v2249
      %v2922 = vpack.c.b16 %v2266, %v2250
      %v2923 = vpack.c.b16 %v2267, %v2251
      %v2924 = vpack.c.b16 %v2268, %v2252
      %v2925 = vpack.c.b16 %v2269, %v2253
      %v2926 = vpack.c.b16 %v2270, %v2254
      %v2927 = vpack.c.b16 %v2271, %v2255
      %v2928 = vpack.c.b16 %v2272, %v2256
      %v2929 = vpack.c.b16 %v2273, %v2257
      %v2930 = vpack.c.b16 %v2274, %v2258
      %v2931 = vpack.c.b16 %v2275, %v2259
      %v2932 = vpack.c.b16 %v2292, %v2276
      %v2933 = vpack.c.b16 %v2293, %v2277
      %v2934 = vpack.c.b16 %v2294, %v2278
      %v2935 = vpack.c.b16 %v2295, %v2279
      %v2936 = vpack.c.b16 %v2296, %v2280
      %v2937 = vpack.c.b16 %v2297, %v2281
      %v2938 = vpack.c.b16 %v2298, %v2282
      %v2939 = vpack.c.b16 %v2299, %v2283
      %v2940 = vpack.c.b16 %v2300, %v2284
      %v2941 = vpack.c.b16 %v2301, %v2285
      %v2942 = vpack.c.b16 %v2302, %v2286
      %v2943 = vpack.c.b16 %v2303, %v2287
      %v2944 = vpack.c.b16 %v2304, %v2288
      %v2945 = vpack.c.b16 %v2305, %v2289
      %v2946 = vpack.c.b16 %v2306, %v2290
      %v2947 = vpack.c.b16 %v2307, %v2291
      %v2948 = vpack.c.b16 %v2324, %v2308
      %v2949 = vpack.c.b16 %v2325, %v2309
      %v2950 = vpack.c.b16 %v2326, %v2310
      %v2951 = vpack.c.b16 %v2327, %v2311
      %v2952 = vpack.c.b16 %v2328, %v2312
      %v2953 = vpack.c.b16 %v2329, %v2313
      %v2954 = vpack.c.b16 %v2330, %v2314
      %v2955 = vpack.c.b16 %v2331, %v2315
      %v2956 = vpack.c.b16 %v2332, %v2316
      %v2957 = vpack.c.b16 %v2333, %v2317
      %v2958 = vpack.c.b16 %v2334, %v2318
      %v2959 = vpack.c.b16 %v2335, %v2319
      %v2960 = vpack.c.b16 %v2336, %v2320
      %v2961 = vpack.c.b16 %v2337, %v2321
      %v2962 = vpack.c.b16 %v2338, %v2322
      %v2963 = vpack.c.b16 %v2339, %v2323
      %v2964 = vpack.c.b16 %v2356, %v2340
      %v2965 = vpack.c.b16 %v2357, %v2341
      %v2966 = vpack.c.b16 %v2358, %v2342
      %v2967 = vpack.c.b16 %v2359, %v2343
      %v2968 = vpack.c.b16 %v2360, %v2344
      %v2969 = vpack.c.b16 %v2361, %v2345
      %v2970 = vpack.c.b16 %v2362, %v2346
      %v2971 = vpack.c.b16 %v2363, %v2347
      %v2972 = vpack.c.b16 %v2364, %v2348
      %v2973 = vpack.c.b16 %v2365, %v2349
      %v2974 = vpack.c.b16 %v2366, %v2350
      %v2975 = vpack.c.b16 %v2367, %v2351
      %v2976 = vpack.c.b16 %v2368, %v2352
      %v2977 = vpack.c.b16 %v2369, %v2353
      %v2978 = vpack.c.b16 %v2370, %v2354
      %v2979 = vpack.c.b16 %v2371, %v2355
      %v2980 = vpack.c.b16 %v2388, %v2372
      %v2981 = vpack.c.b16 %v2389, %v2373
      %v2982 = vpack.c.b16 %v2390, %v2374
      %v2983 = vpack.c.b16 %v2391, %v2375
      %v2984 = vpack.c.b16 %v2392, %v2376
      %v2985 = vpack.c.b16 %v2393, %v2377
      %v2986 = vpack.c.b16 %v2394, %v2378
      %v2987 = vpack.c.b16 %v2395, %v2379
      %v2988 = vpack.c.b16 %v2396, %v2380
      %v2989 = vpack.c.b16 %v2397, %v2381
      %v2990 = vpack.c.b16 %v2398, %v2382
      %v2991 = vpack.c.b16 %v2399, %v2383
      %v2992 = vpack.c.b16 %v2400, %v2384
      %v2993 = vpack.c.b16 %v2401, %v2385
      %v2994 = vpack.c.b16 %v2402, %v2386
      %v2995 = vpack.c.b16 %v2403, %v2387
      %v2996 = vpack.c.b16 %v2420, %v2404
      %v2997 = vpack.c.b16 %v2421, %v2405
      %v2998 = vpack.c.b16 %v2422, %v2406
      %v2999 = vpack.c.b16 %v2423, %v2407
      %v3000 = vpack.c.b16 %v2424, %v2408
      %v3001 = vpack.c.b16 %v2425, %v2409
      %v3002 = vpack.c.b16 %v2426, %v2410
      %v3003 = vpack.c.b16 %v2427, %v2411
      %v3004 = vpack.c.b16 %v2428, %v2412
      %v3005 = vpack.c.b16 %v2429, %v2413
      %v3006 = vpack.c.b16 %v2430, %v2414
      %v3007 = vpack.c.b16 %v2431, %v2415
      %v3008 = vpack.c.b16 %v2432, %v2416
      %v3009 = vpack.c.b16 %v2433, %v2417
      %v3010 = vpack.c.b16 %v2434, %v2418
      %v3011 = vpack.c.b16 %v2435, %v2419
      %v3012 = vpack.c.b16 %v2452, %v2436
      %v3013 = vpack.c.b16 %v2453, %v2437
      %v3014 = vpack.c.b16 %v2454, %v2438
      %v3015 = vpack.c.b16 %v2455, %v2439
      %v3016 = vpack.c.b16 %v2456, %v2440
      %v3017 = vpack.c.b16 %v2457, %v2441
      %v3018 = vpack.c.b16 %v2458, %v2442
      %v3019 = vpack.c.b16 %v2459, %v2443
      %v3020 = vpack.c.b16 %v2460, %v2444
      %v3021 = vpack.c.b16 %v2461, %v2445
      %v3022 = vpack.c.b16 %v2462, %v2446
      %v3023 = vpack.c.b16 %v2463, %v2447
      %v3024 = vpack.c.b16 %v2464, %v2448
      %v3025 = vpack.c.b16 %v2465, %v2449
      %v3026 = vpack.c.b16 %v2466, %v2450
      %v3027 = vpack.c.b16 %v2467, %v2451
      %v3028 = vpack.c.b16 %v2484, %v2468
      %v3029 = vpack.c.b16 %v2485, %v2469
      %v3030 = vpack.c.b16 %v2486, %v2470
      %v3031 = vpack.c.b16 %v2487, %v2471
      %v3032 = vpack.c.b16 %v2488, %v2472
      %v3033 = vpack.c.b16 %v2489, %v2473
      %v3034 = vpack.c.b16 %v2490, %v2474
      %v3035 = vpack.c.b16 %v2491, %v2475
      %v3036 = vpack.c.b16 %v2492, %v2476
      %v3037 = vpack.c.b16 %v2493, %v2477
      %v3038 = vpack.c.b16 %v2494, %v2478
      %v3039 = vpack.c.b16 %v2495, %v2479
      %v3040 = vpack.c.b16 %v2496, %v2480
      %v3041 = vpack.c.b16 %v2497, %v2481
      %v3042 = vpack.c.b16 %v2498, %v2482
      %v3043 = vpack.c.b16 %v2499, %v2483
      %v3044 = vpack.c.b16 %v2516, %v2500
      %v3045 = vpack.c.b16 %v2517, %v2501
      %v3046 = vpack.c.b16 %v2518, %v2502
      %v3047 = vpack.c.b16 %v2519, %v2503
      %v3048 = vpack.c.b16 %v2520, %v2504
      %v3049 = vpack.c.b16 %v2521, %v2505
      %v3050 = vpack.c.b16 %v2522, %v2506
      %v3051 = vpack.c.b16 %v2523, %v2507
      %v3052 = vpack.c.b16 %v2524, %v2508
      %v3053 = vpack.c.b16 %v2525, %v2509
      %v3054 = vpack.c.b16 %v2526, %v2510
      %v3055 = vpack.c.b16 %v2527, %v2511
      %v3056 = vpack.c.b16 %v2528, %v2512
      %v3057 = vpack.c.b16 %v2529, %v2513
      %v3058 = vpack.c.b16 %v2530, %v2514
      %v3059 = vpack.c.b16 %v2531, %v2515
      %v3060 = vpack.c.b16 %v2548, %v2532
      %v3061 = vpack.c.b16 %v2549, %v2533
      %v3062 = vpack.c.b16 %v2550, %v2534
      %v3063 = vpack.c.b16 %v2551, %v2535
      %v3064 = vpack.c.b16 %v2552, %v2536
      %v3065 = vpack.c.b16 %v2553, %v2537
      %v3066 = vpack.c.b16 %v2554, %v2538
      %v3067 = vpack.c.b16 %v2555, %v2539
      %v3068 = vpack.c.b16 %v2556, %v2540
      %v3069 = vpack.c.b16 %v2557, %v2541
      %v3070 = vpack.c.b16 %v2558, %v2542
      %v3071 = vpack.c.b16 %v2559, %v2543
      %v3072 = vpack.c.b16 %v2560, %v2544
      %v3073 = vpack.c.b16 %v2561, %v2545
      %v3074 = vpack.c.b16 %v2562, %v2546
      %v3075 = vpack.c.b16 %v2563, %v2547
      %3588 = vmatprep.subr.bf16.mxu0 %v2565
      %3589 = vmatpush1.bf16.msra.mxu0 %v2564
      %3590 = vmatprep.subr.bf16.mxu0 %v2581
      %3591 = vmatpush1.bf16.msra.mxu0 %v2580
      %3592 = vmatprep.subr.bf16.mxu0 %v2597
      %3593 = vmatpush1.bf16.msra.mxu0 %v2596
      %3594 = vmatprep.subr.bf16.mxu0 %v2613
      %3595 = vmatpush1.bf16.msra.mxu0 %v2612
      %3596 = vmatprep.subr.bf16.mxu0 %v2629
      %3597 = vmatpush1.bf16.msra.mxu0 %v2628
      %3598 = vmatprep.subr.bf16.mxu0 %v2645
      %3599 = vmatpush1.bf16.msra.mxu0 %v2644
      %3600 = vmatprep.subr.bf16.mxu0 %v2661
      %3601 = vmatpush1.bf16.msra.mxu0 %v2660
      %3602 = vmatprep.subr.bf16.mxu0 %v2677
      %3603 = vmatpush1.bf16.msra.mxu0 %v2676
      %3604 = vmatprep.subr.bf16.mxu0 %v2693
      %3605 = vmatpush1.bf16.msra.mxu0 %v2692
      %3606 = vmatprep.subr.bf16.mxu0 %v2709
      %3607 = vmatpush1.bf16.msra.mxu0 %v2708
      %3608 = vmatprep.subr.bf16.mxu0 %v2725
      %3609 = vmatpush1.bf16.msra.mxu0 %v2724
      %3610 = vmatprep.subr.bf16.mxu0 %v2741
      %3611 = vmatpush1.bf16.msra.mxu0 %v2740
      %3612 = vmatprep.subr.bf16.mxu0 %v2757
      %3613 = vmatpush1.bf16.msra.mxu0 %v2756
      %3614 = vmatprep.subr.bf16.mxu0 %v2773
      %3615 = vmatpush1.bf16.msra.mxu0 %v2772
      %3616 = vmatprep.subr.bf16.mxu0 %v2789
      %3617 = vmatpush1.bf16.msra.mxu0 %v2788
      %3618 = vmatprep.subr.bf16.mxu0 %v2805
      %3619 = vmatpush1.bf16.msra.mxu0 %v2804
      %3620 = vmatprep.mubr.bf16.mxu0 %v429
      %3621 = vmatmul.mubr.bf16.gmra.mrb[0].mxu0 %v428
      %v3622 = vpop.f32.mrb[0].mxu0
      %v3623 = vadd.f32 %v951, %v3622
      %v3624 = vpop.f32.mrb[0].mxu0
      %v3625 = vadd.f32 %v955, %v3624
      %v3626 = vpop.f32.mrb[0].mxu0
      %v3627 = vadd.f32 %v951, %v3626
      %v3628 = vpop.f32.mrb[0].mxu0
      %v3629 = vadd.f32 %v955, %v3628
      %3630 = vdwg.mxu0
      %3631 = vmatprep.subr.bf16.mxu0 %v2821
      %3632 = vmatpush1.bf16.msra.mxu0 %v2820
      %3633 = vmatprep.subr.bf16.mxu0 %v2837
      %3634 = vmatpush1.bf16.msra.mxu0 %v2836
      %3635 = vmatprep.subr.bf16.mxu0 %v2853
      %3636 = vmatpush1.bf16.msra.mxu0 %v2852
      %3637 = vmatprep.subr.bf16.mxu0 %v2869
      %3638 = vmatpush1.bf16.msra.mxu0 %v2868
      %3639 = vmatprep.subr.bf16.mxu0 %v2885
      %3640 = vmatpush1.bf16.msra.mxu0 %v2884
      %3641 = vmatprep.subr.bf16.mxu0 %v2901
      %3642 = vmatpush1.bf16.msra.mxu0 %v2900
      %3643 = vmatprep.subr.bf16.mxu0 %v2917
      %3644 = vmatpush1.bf16.msra.mxu0 %v2916
      %3645 = vmatprep.subr.bf16.mxu0 %v2933
      %3646 = vmatpush1.bf16.msra.mxu0 %v2932
      %3647 = vmatprep.subr.bf16.mxu0 %v2949
      %3648 = vmatpush1.bf16.msra.mxu0 %v2948
      %3649 = vmatprep.subr.bf16.mxu0 %v2965
      %3650 = vmatpush1.bf16.msra.mxu0 %v2964
      %3651 = vmatprep.subr.bf16.mxu0 %v2981
      %3652 = vmatpush1.bf16.msra.mxu0 %v2980
      %3653 = vmatprep.subr.bf16.mxu0 %v2997
      %3654 = vmatpush1.bf16.msra.mxu0 %v2996
      %3655 = vmatprep.subr.bf16.mxu0 %v3013
      %3656 = vmatpush1.bf16.msra.mxu0 %v3012
      %3657 = vmatprep.subr.bf16.mxu0 %v3029
      %3658 = vmatpush1.bf16.msra.mxu0 %v3028
      %3659 = vmatprep.subr.bf16.mxu0 %v3045
      %3660 = vmatpush1.bf16.msra.mxu0 %v3044
      %3661 = vmatprep.subr.bf16.mxu0 %v3061
      %3662 = vmatpush1.bf16.msra.mxu0 %v3060
      %3663 = vmatprep.mubr.bf16.mxu0 %v431
      %3664 = vmatmul.mubr.bf16.gmra.mrb[0].mxu0 %v430
      %v3665 = vpop.f32.mrb[0].mxu0
      %v3666 = vadd.f32 %v3623, %v3665
      %v3667 = vpop.f32.mrb[0].mxu0
      %v3668 = vadd.f32 %v3625, %v3667
      %v3669 = vpop.f32.mrb[0].mxu0
      %v3670 = vadd.f32 %v3627, %v3669
      %v3671 = vpop.f32.mrb[0].mxu0
      %v3672 = vadd.f32 %v3629, %v3671
      %3673 = vdwg.mxu0
      %3674 = vmatprep.subr.bf16.mxu0 %v2567
      %3675 = vmatpush1.bf16.msra.mxu0 %v2566
      %3676 = vmatprep.subr.bf16.mxu0 %v2583
      %3677 = vmatpush1.bf16.msra.mxu0 %v2582
      %3678 = vmatprep.subr.bf16.mxu0 %v2599
      %3679 = vmatpush1.bf16.msra.mxu0 %v2598
      %3680 = vmatprep.subr.bf16.mxu0 %v2615
      %3681 = vmatpush1.bf16.msra.mxu0 %v2614
      %3682 = vmatprep.subr.bf16.mxu0 %v2631
      %3683 = vmatpush1.bf16.msra.mxu0 %v2630
      %3684 = vmatprep.subr.bf16.mxu0 %v2647
      %3685 = vmatpush1.bf16.msra.mxu0 %v2646
      %3686 = vmatprep.subr.bf16.mxu0 %v2663
      %3687 = vmatpush1.bf16.msra.mxu0 %v2662
      %3688 = vmatprep.subr.bf16.mxu0 %v2679
      %3689 = vmatpush1.bf16.msra.mxu0 %v2678
      %3690 = vmatprep.subr.bf16.mxu0 %v2695
      %3691 = vmatpush1.bf16.msra.mxu0 %v2694
      %3692 = vmatprep.subr.bf16.mxu0 %v2711
      %3693 = vmatpush1.bf16.msra.mxu0 %v2710
      %3694 = vmatprep.subr.bf16.mxu0 %v2727
      %3695 = vmatpush1.bf16.msra.mxu0 %v2726
      %3696 = vmatprep.subr.bf16.mxu0 %v2743
      %3697 = vmatpush1.bf16.msra.mxu0 %v2742
      %3698 = vmatprep.subr.bf16.mxu0 %v2759
      %3699 = vmatpush1.bf16.msra.mxu0 %v2758
      %3700 = vmatprep.subr.bf16.mxu0 %v2775
      %3701 = vmatpush1.bf16.msra.mxu0 %v2774
      %3702 = vmatprep.subr.bf16.mxu0 %v2791
      %3703 = vmatpush1.bf16.msra.mxu0 %v2790
      %3704 = vmatprep.subr.bf16.mxu0 %v2807
      %3705 = vmatpush1.bf16.msra.mxu0 %v2806
      %3706 = vmatprep.mubr.bf16.mxu0 %v429
      %3707 = vmatmul.mubr.bf16.gmra.mrb[0].mxu0 %v428
      %v3708 = vpop.f32.mrb[0].mxu0
      %v3709 = vadd.f32 %v959, %v3708
      %v3710 = vpop.f32.mrb[0].mxu0
      %v3711 = vadd.f32 %v963, %v3710
      %v3712 = vpop.f32.mrb[0].mxu0
      %v3713 = vadd.f32 %v959, %v3712
      %v3714 = vpop.f32.mrb[0].mxu0
      %v3715 = vadd.f32 %v963, %v3714
      %3716 = vdwg.mxu0
      %3717 = vmatprep.subr.bf16.mxu0 %v2823
      %3718 = vmatpush1.bf16.msra.mxu0 %v2822
      %3719 = vmatprep.subr.bf16.mxu0 %v2839
      %3720 = vmatpush1.bf16.msra.mxu0 %v2838
      %3721 = vmatprep.subr.bf16.mxu0 %v2855
      %3722 = vmatpush1.bf16.msra.mxu0 %v2854
      %3723 = vmatprep.subr.bf16.mxu0 %v2871
      %3724 = vmatpush1.bf16.msra.mxu0 %v2870
      %3725 = vmatprep.subr.bf16.mxu0 %v2887
      %3726 = vmatpush1.bf16.msra.mxu0 %v2886
      %3727 = vmatprep.subr.bf16.mxu0 %v2903
      %3728 = vmatpush1.bf16.msra.mxu0 %v2902
      %3729 = vmatprep.subr.bf16.mxu0 %v2919
      %3730 = vmatpush1.bf16.msra.mxu0 %v2918
      %3731 = vmatprep.subr.bf16.mxu0 %v2935
      %3732 = vmatpush1.bf16.msra.mxu0 %v2934
      %3733 = vmatprep.subr.bf16.mxu0 %v2951
      %3734 = vmatpush1.bf16.msra.mxu0 %v2950
      %3735 = vmatprep.subr.bf16.mxu0 %v2967
      %3736 = vmatpush1.bf16.msra.mxu0 %v2966
      %3737 = vmatprep.subr.bf16.mxu0 %v2983
      %3738 = vmatpush1.bf16.msra.mxu0 %v2982
      %3739 = vmatprep.subr.bf16.mxu0 %v2999
      %3740 = vmatpush1.bf16.msra.mxu0 %v2998
      %3741 = vmatprep.subr.bf16.mxu0 %v3015
      %3742 = vmatpush1.bf16.msra.mxu0 %v3014
      %3743 = vmatprep.subr.bf16.mxu0 %v3031
      %3744 = vmatpush1.bf16.msra.mxu0 %v3030
      %3745 = vmatprep.subr.bf16.mxu0 %v3047
      %3746 = vmatpush1.bf16.msra.mxu0 %v3046
      %3747 = vmatprep.subr.bf16.mxu0 %v3063
      %3748 = vmatpush1.bf16.msra.mxu0 %v3062
      %3749 = vmatprep.mubr.bf16.mxu0 %v431
      %3750 = vmatmul.mubr.bf16.gmra.mrb[0].mxu0 %v430
      %v3751 = vpop.f32.mrb[0].mxu0
      %v3752 = vadd.f32 %v3709, %v3751
      %v3753 = vpop.f32.mrb[0].mxu0
      %v3754 = vadd.f32 %v3711, %v3753
      %v3755 = vpop.f32.mrb[0].mxu0
      %v3756 = vadd.f32 %v3713, %v3755
      %v3757 = vpop.f32.mrb[0].mxu0
      %v3758 = vadd.f32 %v3715, %v3757
      %3759 = vdwg.mxu0
      %3760 = vmatprep.subr.bf16.mxu0 %v2569
      %3761 = vmatpush1.bf16.msra.mxu0 %v2568
      %3762 = vmatprep.subr.bf16.mxu0 %v2585
      %3763 = vmatpush1.bf16.msra.mxu0 %v2584
      %3764 = vmatprep.subr.bf16.mxu0 %v2601
      %3765 = vmatpush1.bf16.msra.mxu0 %v2600
      %3766 = vmatprep.subr.bf16.mxu0 %v2617
      %3767 = vmatpush1.bf16.msra.mxu0 %v2616
      %3768 = vmatprep.subr.bf16.mxu0 %v2633
      %3769 = vmatpush1.bf16.msra.mxu0 %v2632
      %3770 = vmatprep.subr.bf16.mxu0 %v2649
      %3771 = vmatpush1.bf16.msra.mxu0 %v2648
      %3772 = vmatprep.subr.bf16.mxu0 %v2665
      %3773 = vmatpush1.bf16.msra.mxu0 %v2664
      %3774 = vmatprep.subr.bf16.mxu0 %v2681
      %3775 = vmatpush1.bf16.msra.mxu0 %v2680
      %3776 = vmatprep.subr.bf16.mxu0 %v2697
      %3777 = vmatpush1.bf16.msra.mxu0 %v2696
      %3778 = vmatprep.subr.bf16.mxu0 %v2713
      %3779 = vmatpush1.bf16.msra.mxu0 %v2712
      %3780 = vmatprep.subr.bf16.mxu0 %v2729
      %3781 = vmatpush1.bf16.msra.mxu0 %v2728
      %3782 = vmatprep.subr.bf16.mxu0 %v2745
      %3783 = vmatpush1.bf16.msra.mxu0 %v2744
      %3784 = vmatprep.subr.bf16.mxu0 %v2761
      %3785 = vmatpush1.bf16.msra.mxu0 %v2760
      %3786 = vmatprep.subr.bf16.mxu0 %v2777
      %3787 = vmatpush1.bf16.msra.mxu0 %v2776
      %3788 = vmatprep.subr.bf16.mxu0 %v2793
      %3789 = vmatpush1.bf16.msra.mxu0 %v2792
      %3790 = vmatprep.subr.bf16.mxu0 %v2809
      %3791 = vmatpush1.bf16.msra.mxu0 %v2808
      %3792 = vmatprep.mubr.bf16.mxu0 %v429
      %3793 = vmatmul.mubr.bf16.gmra.mrb[0].mxu0 %v428
      %v3794 = vpop.f32.mrb[0].mxu0
      %v3795 = vadd.f32 %v967, %v3794
      %v3796 = vpop.f32.mrb[0].mxu0
      %v3797 = vadd.f32 %v971, %v3796
      %v3798 = vpop.f32.mrb[0].mxu0
      %v3799 = vadd.f32 %v967, %v3798
      %v3800 = vpop.f32.mrb[0].mxu0
      %v3801 = vadd.f32 %v971, %v3800
      %3802 = vdwg.mxu0
      %3803 = vmatprep.subr.bf16.mxu0 %v2825
      %3804 = vmatpush1.bf16.msra.mxu0 %v2824
      %3805 = vmatprep.subr.bf16.mxu0 %v2841
      %3806 = vmatpush1.bf16.msra.mxu0 %v2840
      %3807 = vmatprep.subr.bf16.mxu0 %v2857
      %3808 = vmatpush1.bf16.msra.mxu0 %v2856
      %3809 = vmatprep.subr.bf16.mxu0 %v2873
      %3810 = vmatpush1.bf16.msra.mxu0 %v2872
      %3811 = vmatprep.subr.bf16.mxu0 %v2889
      %3812 = vmatpush1.bf16.msra.mxu0 %v2888
      %3813 = vmatprep.subr.bf16.mxu0 %v2905
      %3814 = vmatpush1.bf16.msra.mxu0 %v2904
      %3815 = vmatprep.subr.bf16.mxu0 %v2921
      %3816 = vmatpush1.bf16.msra.mxu0 %v2920
      %3817 = vmatprep.subr.bf16.mxu0 %v2937
      %3818 = vmatpush1.bf16.msra.mxu0 %v2936
      %3819 = vmatprep.subr.bf16.mxu0 %v2953
      %3820 = vmatpush1.bf16.msra.mxu0 %v2952
      %3821 = vmatprep.subr.bf16.mxu0 %v2969
      %3822 = vmatpush1.bf16.msra.mxu0 %v2968
      %3823 = vmatprep.subr.bf16.mxu0 %v2985
      %3824 = vmatpush1.bf16.msra.mxu0 %v2984
      %3825 = vmatprep.subr.bf16.mxu0 %v3001
      %3826 = vmatpush1.bf16.msra.mxu0 %v3000
      %3827 = vmatprep.subr.bf16.mxu0 %v3017
      %3828 = vmatpush1.bf16.msra.mxu0 %v3016
      %3829 = vmatprep.subr.bf16.mxu0 %v3033
      %3830 = vmatpush1.bf16.msra.mxu0 %v3032
      %3831 = vmatprep.subr.bf16.mxu0 %v3049
      %3832 = vmatpush1.bf16.msra.mxu0 %v3048
      %3833 = vmatprep.subr.bf16.mxu0 %v3065
      %3834 = vmatpush1.bf16.msra.mxu0 %v3064
      %3835 = vmatprep.mubr.bf16.mxu0 %v431
      %3836 = vmatmul.mubr.bf16.gmra.mrb[0].mxu0 %v430
      %v3837 = vpop.f32.mrb[0].mxu0
      %v3838 = vadd.f32 %v3795, %v3837
      %v3839 = vpop.f32.mrb[0].mxu0
      %v3840 = vadd.f32 %v3797, %v3839
      %v3841 = vpop.f32.mrb[0].mxu0
      %v3842 = vadd.f32 %v3799, %v3841
      %v3843 = vpop.f32.mrb[0].mxu0
      %v3844 = vadd.f32 %v3801, %v3843
      %3845 = vdwg.mxu0
      %3846 = vmatprep.subr.bf16.mxu0 %v2571
      %3847 = vmatpush1.bf16.msra.mxu0 %v2570
      %3848 = vmatprep.subr.bf16.mxu0 %v2587
      %3849 = vmatpush1.bf16.msra.mxu0 %v2586
      %3850 = vmatprep.subr.bf16.mxu0 %v2603
      %3851 = vmatpush1.bf16.msra.mxu0 %v2602
      %3852 = vmatprep.subr.bf16.mxu0 %v2619
      %3853 = vmatpush1.bf16.msra.mxu0 %v2618
      %3854 = vmatprep.subr.bf16.mxu0 %v2635
      %3855 = vmatpush1.bf16.msra.mxu0 %v2634
      %3856 = vmatprep.subr.bf16.mxu0 %v2651
      %3857 = vmatpush1.bf16.msra.mxu0 %v2650
      %3858 = vmatprep.subr.bf16.mxu0 %v2667
      %3859 = vmatpush1.bf16.msra.mxu0 %v2666
      %3860 = vmatprep.subr.bf16.mxu0 %v2683
      %3861 = vmatpush1.bf16.msra.mxu0 %v2682
      %3862 = vmatprep.subr.bf16.mxu0 %v2699
      %3863 = vmatpush1.bf16.msra.mxu0 %v2698
      %3864 = vmatprep.subr.bf16.mxu0 %v2715
      %3865 = vmatpush1.bf16.msra.mxu0 %v2714
      %3866 = vmatprep.subr.bf16.mxu0 %v2731
      %3867 = vmatpush1.bf16.msra.mxu0 %v2730
      %3868 = vmatprep.subr.bf16.mxu0 %v2747
      %3869 = vmatpush1.bf16.msra.mxu0 %v2746
      %3870 = vmatprep.subr.bf16.mxu0 %v2763
      %3871 = vmatpush1.bf16.msra.mxu0 %v2762
      %3872 = vmatprep.subr.bf16.mxu0 %v2779
      %3873 = vmatpush1.bf16.msra.mxu0 %v2778
      %3874 = vmatprep.subr.bf16.mxu0 %v2795
      %3875 = vmatpush1.bf16.msra.mxu0 %v2794
      %3876 = vmatprep.subr.bf16.mxu0 %v2811
      %3877 = vmatpush1.bf16.msra.mxu0 %v2810
      %3878 = vmatprep.mubr.bf16.mxu0 %v429
      %3879 = vmatmul.mubr.bf16.gmra.mrb[0].mxu0 %v428
      %v3880 = vpop.f32.mrb[0].mxu0
      %v3881 = vadd.f32 %v975, %v3880
      %v3882 = vpop.f32.mrb[0].mxu0
      %v3883 = vadd.f32 %v979, %v3882
      %v3884 = vpop.f32.mrb[0].mxu0
      %v3885 = vadd.f32 %v975, %v3884
      %v3886 = vpop.f32.mrb[0].mxu0
      %v3887 = vadd.f32 %v979, %v3886
      %3888 = vdwg.mxu0
      %3889 = vmatprep.subr.bf16.mxu0 %v2827
      %3890 = vmatpush1.bf16.msra.mxu0 %v2826
      %3891 = vmatprep.subr.bf16.mxu0 %v2843
      %3892 = vmatpush1.bf16.msra.mxu0 %v2842
      %3893 = vmatprep.subr.bf16.mxu0 %v2859
      %3894 = vmatpush1.bf16.msra.mxu0 %v2858
      %3895 = vmatprep.subr.bf16.mxu0 %v2875
      %3896 = vmatpush1.bf16.msra.mxu0 %v2874
      %3897 = vmatprep.subr.bf16.mxu0 %v2891
      %3898 = vmatpush1.bf16.msra.mxu0 %v2890
      %3899 = vmatprep.subr.bf16.mxu0 %v2907
      %3900 = vmatpush1.bf16.msra.mxu0 %v2906
      %3901 = vmatprep.subr.bf16.mxu0 %v2923
      %3902 = vmatpush1.bf16.msra.mxu0 %v2922
      %3903 = vmatprep.subr.bf16.mxu0 %v2939
      %3904 = vmatpush1.bf16.msra.mxu0 %v2938
      %3905 = vmatprep.subr.bf16.mxu0 %v2955
      %3906 = vmatpush1.bf16.msra.mxu0 %v2954
      %3907 = vmatprep.subr.bf16.mxu0 %v2971
      %3908 = vmatpush1.bf16.msra.mxu0 %v2970
      %3909 = vmatprep.subr.bf16.mxu0 %v2987
      %3910 = vmatpush1.bf16.msra.mxu0 %v2986
      %3911 = vmatprep.subr.bf16.mxu0 %v3003
      %3912 = vmatpush1.bf16.msra.mxu0 %v3002
      %3913 = vmatprep.subr.bf16.mxu0 %v3019
      %3914 = vmatpush1.bf16.msra.mxu0 %v3018
      %3915 = vmatprep.subr.bf16.mxu0 %v3035
      %3916 = vmatpush1.bf16.msra.mxu0 %v3034
      %3917 = vmatprep.subr.bf16.mxu0 %v3051
      %3918 = vmatpush1.bf16.msra.mxu0 %v3050
      %3919 = vmatprep.subr.bf16.mxu0 %v3067
      %3920 = vmatpush1.bf16.msra.mxu0 %v3066
      %3921 = vmatprep.mubr.bf16.mxu0 %v431
      %3922 = vmatmul.mubr.bf16.gmra.mrb[0].mxu0 %v430
      %v3923 = vpop.f32.mrb[0].mxu0
      %v3924 = vadd.f32 %v3881, %v3923
      %v3925 = vpop.f32.mrb[0].mxu0
      %v3926 = vadd.f32 %v3883, %v3925
      %v3927 = vpop.f32.mrb[0].mxu0
      %v3928 = vadd.f32 %v3885, %v3927
      %v3929 = vpop.f32.mrb[0].mxu0
      %v3930 = vadd.f32 %v3887, %v3929
      %3931 = vdwg.mxu0
      %3932 = vmatprep.subr.bf16.mxu0 %v2573
      %3933 = vmatpush1.bf16.msra.mxu0 %v2572
      %3934 = vmatprep.subr.bf16.mxu0 %v2589
      %3935 = vmatpush1.bf16.msra.mxu0 %v2588
      %3936 = vmatprep.subr.bf16.mxu0 %v2605
      %3937 = vmatpush1.bf16.msra.mxu0 %v2604
      %3938 = vmatprep.subr.bf16.mxu0 %v2621
      %3939 = vmatpush1.bf16.msra.mxu0 %v2620
      %3940 = vmatprep.subr.bf16.mxu0 %v2637
      %3941 = vmatpush1.bf16.msra.mxu0 %v2636
      %3942 = vmatprep.subr.bf16.mxu0 %v2653
      %3943 = vmatpush1.bf16.msra.mxu0 %v2652
      %3944 = vmatprep.subr.bf16.mxu0 %v2669
      %3945 = vmatpush1.bf16.msra.mxu0 %v2668
      %3946 = vmatprep.subr.bf16.mxu0 %v2685
      %3947 = vmatpush1.bf16.msra.mxu0 %v2684
      %3948 = vmatprep.subr.bf16.mxu0 %v2701
      %3949 = vmatpush1.bf16.msra.mxu0 %v2700
      %3950 = vmatprep.subr.bf16.mxu0 %v2717
      %3951 = vmatpush1.bf16.msra.mxu0 %v2716
      %3952 = vmatprep.subr.bf16.mxu0 %v2733
      %3953 = vmatpush1.bf16.msra.mxu0 %v2732
      %3954 = vmatprep.subr.bf16.mxu0 %v2749
      %3955 = vmatpush1.bf16.msra.mxu0 %v2748
      %3956 = vmatprep.subr.bf16.mxu0 %v2765
      %3957 = vmatpush1.bf16.msra.mxu0 %v2764
      %3958 = vmatprep.subr.bf16.mxu0 %v2781
      %3959 = vmatpush1.bf16.msra.mxu0 %v2780
      %3960 = vmatprep.subr.bf16.mxu0 %v2797
      %3961 = vmatpush1.bf16.msra.mxu0 %v2796
      %3962 = vmatprep.subr.bf16.mxu0 %v2813
      %3963 = vmatpush1.bf16.msra.mxu0 %v2812
      %3964 = vmatprep.mubr.bf16.mxu0 %v429
      %3965 = vmatmul.mubr.bf16.gmra.mrb[0].mxu0 %v428
      %v3966 = vpop.f32.mrb[0].mxu0
      %v3967 = vadd.f32 %v983, %v3966
      %v3968 = vpop.f32.mrb[0].mxu0
      %v3969 = vadd.f32 %v987, %v3968
      %v3970 = vpop.f32.mrb[0].mxu0
      %v3971 = vadd.f32 %v983, %v3970
      %v3972 = vpop.f32.mrb[0].mxu0
      %v3973 = vadd.f32 %v987, %v3972
      %3974 = vdwg.mxu0
      %3975 = vmatprep.subr.bf16.mxu0 %v2829
      %3976 = vmatpush1.bf16.msra.mxu0 %v2828
      %3977 = vmatprep.subr.bf16.mxu0 %v2845
      %3978 = vmatpush1.bf16.msra.mxu0 %v2844
      %3979 = vmatprep.subr.bf16.mxu0 %v2861
      %3980 = vmatpush1.bf16.msra.mxu0 %v2860
      %3981 = vmatprep.subr.bf16.mxu0 %v2877
      %3982 = vmatpush1.bf16.msra.mxu0 %v2876
      %3983 = vmatprep.subr.bf16.mxu0 %v2893
      %3984 = vmatpush1.bf16.msra.mxu0 %v2892
      %3985 = vmatprep.subr.bf16.mxu0 %v2909
      %3986 = vmatpush1.bf16.msra.mxu0 %v2908
      %3987 = vmatprep.subr.bf16.mxu0 %v2925
      %3988 = vmatpush1.bf16.msra.mxu0 %v2924
      %3989 = vmatprep.subr.bf16.mxu0 %v2941
      %3990 = vmatpush1.bf16.msra.mxu0 %v2940
      %3991 = vmatprep.subr.bf16.mxu0 %v2957
      %3992 = vmatpush1.bf16.msra.mxu0 %v2956
      %3993 = vmatprep.subr.bf16.mxu0 %v2973
      %3994 = vmatpush1.bf16.msra.mxu0 %v2972
      %3995 = vmatprep.subr.bf16.mxu0 %v2989
      %3996 = vmatpush1.bf16.msra.mxu0 %v2988
      %3997 = vmatprep.subr.bf16.mxu0 %v3005
      %3998 = vmatpush1.bf16.msra.mxu0 %v3004
      %3999 = vmatprep.subr.bf16.mxu0 %v3021
      %4000 = vmatpush1.bf16.msra.mxu0 %v3020
      %4001 = vmatprep.subr.bf16.mxu0 %v3037
      %4002 = vmatpush1.bf16.msra.mxu0 %v3036
      %4003 = vmatprep.subr.bf16.mxu0 %v3053
      %4004 = vmatpush1.bf16.msra.mxu0 %v3052
      %4005 = vmatprep.subr.bf16.mxu0 %v3069
      %4006 = vmatpush1.bf16.msra.mxu0 %v3068
      %4007 = vmatprep.mubr.bf16.mxu0 %v431
      %4008 = vmatmul.mubr.bf16.gmra.mrb[0].mxu0 %v430
      %v4009 = vpop.f32.mrb[0].mxu0
      %v4010 = vadd.f32 %v3967, %v4009
      %v4011 = vpop.f32.mrb[0].mxu0
      %v4012 = vadd.f32 %v3969, %v4011
      %v4013 = vpop.f32.mrb[0].mxu0
      %v4014 = vadd.f32 %v3971, %v4013
      %v4015 = vpop.f32.mrb[0].mxu0
      %v4016 = vadd.f32 %v3973, %v4015
      %4017 = vdwg.mxu0
      %4018 = vmatprep.subr.bf16.mxu0 %v2575
      %4019 = vmatpush1.bf16.msra.mxu0 %v2574
      %4020 = vmatprep.subr.bf16.mxu0 %v2591
      %4021 = vmatpush1.bf16.msra.mxu0 %v2590
      %4022 = vmatprep.subr.bf16.mxu0 %v2607
      %4023 = vmatpush1.bf16.msra.mxu0 %v2606
      %4024 = vmatprep.subr.bf16.mxu0 %v2623
      %4025 = vmatpush1.bf16.msra.mxu0 %v2622
      %4026 = vmatprep.subr.bf16.mxu0 %v2639
      %4027 = vmatpush1.bf16.msra.mxu0 %v2638
      %4028 = vmatprep.subr.bf16.mxu0 %v2655
      %4029 = vmatpush1.bf16.msra.mxu0 %v2654
      %4030 = vmatprep.subr.bf16.mxu0 %v2671
      %4031 = vmatpush1.bf16.msra.mxu0 %v2670
      %4032 = vmatprep.subr.bf16.mxu0 %v2687
      %4033 = vmatpush1.bf16.msra.mxu0 %v2686
      %4034 = vmatprep.subr.bf16.mxu0 %v2703
      %4035 = vmatpush1.bf16.msra.mxu0 %v2702
      %4036 = vmatprep.subr.bf16.mxu0 %v2719
      %4037 = vmatpush1.bf16.msra.mxu0 %v2718
      %4038 = vmatprep.subr.bf16.mxu0 %v2735
      %4039 = vmatpush1.bf16.msra.mxu0 %v2734
      %4040 = vmatprep.subr.bf16.mxu0 %v2751
      %4041 = vmatpush1.bf16.msra.mxu0 %v2750
      %4042 = vmatprep.subr.bf16.mxu0 %v2767
      %4043 = vmatpush1.bf16.msra.mxu0 %v2766
      %4044 = vmatprep.subr.bf16.mxu0 %v2783
      %4045 = vmatpush1.bf16.msra.mxu0 %v2782
      %4046 = vmatprep.subr.bf16.mxu0 %v2799
      %4047 = vmatpush1.bf16.msra.mxu0 %v2798
      %4048 = vmatprep.subr.bf16.mxu0 %v2815
      %4049 = vmatpush1.bf16.msra.mxu0 %v2814
      %4050 = vmatprep.mubr.bf16.mxu0 %v429
      %4051 = vmatmul.mubr.bf16.gmra.mrb[0].mxu0 %v428
      %v4052 = vpop.f32.mrb[0].mxu0
      %v4053 = vadd.f32 %v991, %v4052
      %v4054 = vpop.f32.mrb[0].mxu0
      %v4055 = vadd.f32 %v995, %v4054
      %v4056 = vpop.f32.mrb[0].mxu0
      %v4057 = vadd.f32 %v991, %v4056
      %v4058 = vpop.f32.mrb[0].mxu0
      %v4059 = vadd.f32 %v995, %v4058
      %4060 = vdwg.mxu0
      %4061 = vmatprep.subr.bf16.mxu0 %v2831
      %4062 = vmatpush1.bf16.msra.mxu0 %v2830
      %4063 = vmatprep.subr.bf16.mxu0 %v2847
      %4064 = vmatpush1.bf16.msra.mxu0 %v2846
      %4065 = vmatprep.subr.bf16.mxu0 %v2863
      %4066 = vmatpush1.bf16.msra.mxu0 %v2862
      %4067 = vmatprep.subr.bf16.mxu0 %v2879
      %4068 = vmatpush1.bf16.msra.mxu0 %v2878
      %4069 = vmatprep.subr.bf16.mxu0 %v2895
      %4070 = vmatpush1.bf16.msra.mxu0 %v2894
      %4071 = vmatprep.subr.bf16.mxu0 %v2911
      %4072 = vmatpush1.bf16.msra.mxu0 %v2910
      %4073 = vmatprep.subr.bf16.mxu0 %v2927
      %4074 = vmatpush1.bf16.msra.mxu0 %v2926
      %4075 = vmatprep.subr.bf16.mxu0 %v2943
      %4076 = vmatpush1.bf16.msra.mxu0 %v2942
      %4077 = vmatprep.subr.bf16.mxu0 %v2959
      %4078 = vmatpush1.bf16.msra.mxu0 %v2958
      %4079 = vmatprep.subr.bf16.mxu0 %v2975
      %4080 = vmatpush1.bf16.msra.mxu0 %v2974
      %4081 = vmatprep.subr.bf16.mxu0 %v2991
      %4082 = vmatpush1.bf16.msra.mxu0 %v2990
      %4083 = vmatprep.subr.bf16.mxu0 %v3007
      %4084 = vmatpush1.bf16.msra.mxu0 %v3006
      %4085 = vmatprep.subr.bf16.mxu0 %v3023
      %4086 = vmatpush1.bf16.msra.mxu0 %v3022
      %4087 = vmatprep.subr.bf16.mxu0 %v3039
      %4088 = vmatpush1.bf16.msra.mxu0 %v3038
      %4089 = vmatprep.subr.bf16.mxu0 %v3055
      %4090 = vmatpush1.bf16.msra.mxu0 %v3054
      %4091 = vmatprep.subr.bf16.mxu0 %v3071
      %4092 = vmatpush1.bf16.msra.mxu0 %v3070
      %4093 = vmatprep.mubr.bf16.mxu0 %v431
      %4094 = vmatmul.mubr.bf16.gmra.mrb[0].mxu0 %v430
      %v4095 = vpop.f32.mrb[0].mxu0
      %v4096 = vadd.f32 %v4053, %v4095
      %v4097 = vpop.f32.mrb[0].mxu0
      %v4098 = vadd.f32 %v4055, %v4097
      %v4099 = vpop.f32.mrb[0].mxu0
      %v4100 = vadd.f32 %v4057, %v4099
      %v4101 = vpop.f32.mrb[0].mxu0
      %v4102 = vadd.f32 %v4059, %v4101
      %4103 = vdwg.mxu0
      %4104 = vmatprep.subr.bf16.mxu0 %v2577
      %4105 = vmatpush1.bf16.msra.mxu0 %v2576
      %4106 = vmatprep.subr.bf16.mxu0 %v2593
      %4107 = vmatpush1.bf16.msra.mxu0 %v2592
      %4108 = vmatprep.subr.bf16.mxu0 %v2609
      %4109 = vmatpush1.bf16.msra.mxu0 %v2608
      %4110 = vmatprep.subr.bf16.mxu0 %v2625
      %4111 = vmatpush1.bf16.msra.mxu0 %v2624
      %4112 = vmatprep.subr.bf16.mxu0 %v2641
      %4113 = vmatpush1.bf16.msra.mxu0 %v2640
      %4114 = vmatprep.subr.bf16.mxu0 %v2657
      %4115 = vmatpush1.bf16.msra.mxu0 %v2656
      %4116 = vmatprep.subr.bf16.mxu0 %v2673
      %4117 = vmatpush1.bf16.msra.mxu0 %v2672
      %4118 = vmatprep.subr.bf16.mxu0 %v2689
      %4119 = vmatpush1.bf16.msra.mxu0 %v2688
      %4120 = vmatprep.subr.bf16.mxu0 %v2705
      %4121 = vmatpush1.bf16.msra.mxu0 %v2704
      %4122 = vmatprep.subr.bf16.mxu0 %v2721
      %4123 = vmatpush1.bf16.msra.mxu0 %v2720
      %4124 = vmatprep.subr.bf16.mxu0 %v2737
      %4125 = vmatpush1.bf16.msra.mxu0 %v2736
      %4126 = vmatprep.subr.bf16.mxu0 %v2753
      %4127 = vmatpush1.bf16.msra.mxu0 %v2752
      %4128 = vmatprep.subr.bf16.mxu0 %v2769
      %4129 = vmatpush1.bf16.msra.mxu0 %v2768
      %4130 = vmatprep.subr.bf16.mxu0 %v2785
      %4131 = vmatpush1.bf16.msra.mxu0 %v2784
      %4132 = vmatprep.subr.bf16.mxu0 %v2801
      %4133 = vmatpush1.bf16.msra.mxu0 %v2800
      %4134 = vmatprep.subr.bf16.mxu0 %v2817
      %4135 = vmatpush1.bf16.msra.mxu0 %v2816
      %4136 = vmatprep.mubr.bf16.mxu0 %v429
      %4137 = vmatmul.mubr.bf16.gmra.mrb[0].mxu0 %v428
      %v4138 = vpop.f32.mrb[0].mxu0
      %v4139 = vadd.f32 %v999, %v4138
      %v4140 = vpop.f32.mrb[0].mxu0
      %v4141 = vadd.f32 %v1003, %v4140
      %v4142 = vpop.f32.mrb[0].mxu0
      %v4143 = vadd.f32 %v999, %v4142
      %v4144 = vpop.f32.mrb[0].mxu0
      %v4145 = vadd.f32 %v1003, %v4144
      %4146 = vdwg.mxu0
      %4147 = vmatprep.subr.bf16.mxu0 %v2833
      %4148 = vmatpush1.bf16.msra.mxu0 %v2832
      %4149 = vmatprep.subr.bf16.mxu0 %v2849
      %4150 = vmatpush1.bf16.msra.mxu0 %v2848
      %4151 = vmatprep.subr.bf16.mxu0 %v2865
      %4152 = vmatpush1.bf16.msra.mxu0 %v2864
      %4153 = vmatprep.subr.bf16.mxu0 %v2881
      %4154 = vmatpush1.bf16.msra.mxu0 %v2880
      %4155 = vmatprep.subr.bf16.mxu0 %v2897
      %4156 = vmatpush1.bf16.msra.mxu0 %v2896
      %4157 = vmatprep.subr.bf16.mxu0 %v2913
      %4158 = vmatpush1.bf16.msra.mxu0 %v2912
      %4159 = vmatprep.subr.bf16.mxu0 %v2929
      %4160 = vmatpush1.bf16.msra.mxu0 %v2928
      %4161 = vmatprep.subr.bf16.mxu0 %v2945
      %4162 = vmatpush1.bf16.msra.mxu0 %v2944
      %4163 = vmatprep.subr.bf16.mxu0 %v2961
      %4164 = vmatpush1.bf16.msra.mxu0 %v2960
      %4165 = vmatprep.subr.bf16.mxu0 %v2977
      %4166 = vmatpush1.bf16.msra.mxu0 %v2976
      %4167 = vmatprep.subr.bf16.mxu0 %v2993
      %4168 = vmatpush1.bf16.msra.mxu0 %v2992
      %4169 = vmatprep.subr.bf16.mxu0 %v3009
      %4170 = vmatpush1.bf16.msra.mxu0 %v3008
      %4171 = vmatprep.subr.bf16.mxu0 %v3025
      %4172 = vmatpush1.bf16.msra.mxu0 %v3024
      %4173 = vmatprep.subr.bf16.mxu0 %v3041
      %4174 = vmatpush1.bf16.msra.mxu0 %v3040
      %4175 = vmatprep.subr.bf16.mxu0 %v3057
      %4176 = vmatpush1.bf16.msra.mxu0 %v3056
      %4177 = vmatprep.subr.bf16.mxu0 %v3073
      %4178 = vmatpush1.bf16.msra.mxu0 %v3072
      %4179 = vmatprep.mubr.bf16.mxu0 %v431
      %4180 = vmatmul.mubr.bf16.gmra.mrb[0].mxu0 %v430
      %v4181 = vpop.f32.mrb[0].mxu0
      %v4182 = vadd.f32 %v4139, %v4181
      %v4183 = vpop.f32.mrb[0].mxu0
      %v4184 = vadd.f32 %v4141, %v4183
      %v4185 = vpop.f32.mrb[0].mxu0
      %v4186 = vadd.f32 %v4143, %v4185
      %v4187 = vpop.f32.mrb[0].mxu0
      %v4188 = vadd.f32 %v4145, %v4187
      %4189 = vdwg.mxu0
      %4190 = vmatprep.subr.bf16.mxu0 %v2579
      %4191 = vmatpush1.bf16.msra.mxu0 %v2578
      %4192 = vmatprep.subr.bf16.mxu0 %v2595
      %4193 = vmatpush1.bf16.msra.mxu0 %v2594
      %4194 = vmatprep.subr.bf16.mxu0 %v2611
      %4195 = vmatpush1.bf16.msra.mxu0 %v2610
      %4196 = vmatprep.subr.bf16.mxu0 %v2627
      %4197 = vmatpush1.bf16.msra.mxu0 %v2626
      %4198 = vmatprep.subr.bf16.mxu0 %v2643
      %4199 = vmatpush1.bf16.msra.mxu0 %v2642
      %4200 = vmatprep.subr.bf16.mxu0 %v2659
      %4201 = vmatpush1.bf16.msra.mxu0 %v2658
      %4202 = vmatprep.subr.bf16.mxu0 %v2675
      %4203 = vmatpush1.bf16.msra.mxu0 %v2674
      %4204 = vmatprep.subr.bf16.mxu0 %v2691
      %4205 = vmatpush1.bf16.msra.mxu0 %v2690
      %4206 = vmatprep.subr.bf16.mxu0 %v2707
      %4207 = vmatpush1.bf16.msra.mxu0 %v2706
      %4208 = vmatprep.subr.bf16.mxu0 %v2723
      %4209 = vmatpush1.bf16.msra.mxu0 %v2722
      %4210 = vmatprep.subr.bf16.mxu0 %v2739
      %4211 = vmatpush1.bf16.msra.mxu0 %v2738
      %4212 = vmatprep.subr.bf16.mxu0 %v2755
      %4213 = vmatpush1.bf16.msra.mxu0 %v2754
      %4214 = vmatprep.subr.bf16.mxu0 %v2771
      %4215 = vmatpush1.bf16.msra.mxu0 %v2770
      %4216 = vmatprep.subr.bf16.mxu0 %v2787
      %4217 = vmatpush1.bf16.msra.mxu0 %v2786
      %4218 = vmatprep.subr.bf16.mxu0 %v2803
      %4219 = vmatpush1.bf16.msra.mxu0 %v2802
      %4220 = vmatprep.subr.bf16.mxu0 %v2819
      %4221 = vmatpush1.bf16.msra.mxu0 %v2818
      %4222 = vmatprep.mubr.bf16.mxu0 %v429
      %4223 = vmatmul.mubr.bf16.gmra.mrb[0].mxu0 %v428
      %v4224 = vpop.f32.mrb[0].mxu0
      %v4225 = vadd.f32 %v1007, %v4224
      %v4226 = vpop.f32.mrb[0].mxu0
      %v4227 = vadd.f32 %v1011, %v4226
      %v4228 = vpop.f32.mrb[0].mxu0
      %v4229 = vadd.f32 %v1007, %v4228
      %v4230 = vpop.f32.mrb[0].mxu0
      %v4231 = vadd.f32 %v1011, %v4230
      %4232 = vdwg.mxu0
      %4233 = vmatprep.subr.bf16.mxu0 %v2835
      %4234 = vmatpush1.bf16.msra.mxu0 %v2834
      %4235 = vmatprep.subr.bf16.mxu0 %v2851
      %4236 = vmatpush1.bf16.msra.mxu0 %v2850
      %4237 = vmatprep.subr.bf16.mxu0 %v2867
      %4238 = vmatpush1.bf16.msra.mxu0 %v2866
      %4239 = vmatprep.subr.bf16.mxu0 %v2883
      %4240 = vmatpush1.bf16.msra.mxu0 %v2882
      %4241 = vmatprep.subr.bf16.mxu0 %v2899
      %4242 = vmatpush1.bf16.msra.mxu0 %v2898
      %4243 = vmatprep.subr.bf16.mxu0 %v2915
      %4244 = vmatpush1.bf16.msra.mxu0 %v2914
      %4245 = vmatprep.subr.bf16.mxu0 %v2931
      %4246 = vmatpush1.bf16.msra.mxu0 %v2930
      %4247 = vmatprep.subr.bf16.mxu0 %v2947
      %4248 = vmatpush1.bf16.msra.mxu0 %v2946
      %4249 = vmatprep.subr.bf16.mxu0 %v2963
      %4250 = vmatpush1.bf16.msra.mxu0 %v2962
      %4251 = vmatprep.subr.bf16.mxu0 %v2979
      %4252 = vmatpush1.bf16.msra.mxu0 %v2978
      %4253 = vmatprep.subr.bf16.mxu0 %v2995
      %4254 = vmatpush1.bf16.msra.mxu0 %v2994
      %4255 = vmatprep.subr.bf16.mxu0 %v3011
      %4256 = vmatpush1.bf16.msra.mxu0 %v3010
      %4257 = vmatprep.subr.bf16.mxu0 %v3027
      %4258 = vmatpush1.bf16.msra.mxu0 %v3026
      %4259 = vmatprep.subr.bf16.mxu0 %v3043
      %4260 = vmatpush1.bf16.msra.mxu0 %v3042
      %4261 = vmatprep.subr.bf16.mxu0 %v3059
      %4262 = vmatpush1.bf16.msra.mxu0 %v3058
      %4263 = vmatprep.subr.bf16.mxu0 %v3075
      %4264 = vmatpush1.bf16.msra.mxu0 %v3074
      %4265 = vmatprep.mubr.bf16.mxu0 %v431
      %4266 = vmatmul.mubr.bf16.gmra.mrb[0].mxu0 %v430
      %v4267 = vpop.f32.mrb[0].mxu0
      %v4268 = vadd.f32 %v4225, %v4267
      %v4269 = vpop.f32.mrb[0].mxu0
      %v4270 = vadd.f32 %v4227, %v4269
      %v4271 = vpop.f32.mrb[0].mxu0
      %v4272 = vadd.f32 %v4229, %v4271
      %v4273 = vpop.f32.mrb[0].mxu0
      %v4274 = vadd.f32 %v4231, %v4273
      %4275 = vdwg.mxu0
      %v4276 = vmax.f32 %v3666, 0.0
      %v4277 = vmax.f32 %v3668, 0.0
      %v4278 = vmax.f32 %v3752, 0.0
      %v4279 = vmax.f32 %v3754, 0.0
      %v4280 = vmax.f32 %v3838, 0.0
      %v4281 = vmax.f32 %v3840, 0.0
      %v4282 = vmax.f32 %v3924, 0.0
      %v4283 = vmax.f32 %v3926, 0.0
      %v4284 = vmax.f32 %v4010, 0.0
      %v4285 = vmax.f32 %v4012, 0.0
      %v4286 = vmax.f32 %v4096, 0.0
      %v4287 = vmax.f32 %v4098, 0.0
      %v4288 = vmax.f32 %v4182, 0.0
      %v4289 = vmax.f32 %v4184, 0.0
      %v4290 = vmax.f32 %v4268, 0.0
      %v4291 = vmax.f32 %v4270, 0.0
      %v4292 = vmax.f32 %v3670, 0.0
      %v4293 = vmax.f32 %v3672, 0.0
      %v4294 = vmax.f32 %v3756, 0.0
      %v4295 = vmax.f32 %v3758, 0.0
      %v4296 = vmax.f32 %v3842, 0.0
      %v4297 = vmax.f32 %v3844, 0.0
      %v4298 = vmax.f32 %v3928, 0.0
      %v4299 = vmax.f32 %v3930, 0.0
      %v4300 = vmax.f32 %v4014, 0.0
      %v4301 = vmax.f32 %v4016, 0.0
      %v4302 = vmax.f32 %v4100, 0.0
      %v4303 = vmax.f32 %v4102, 0.0
      %v4304 = vmax.f32 %v4186, 0.0
      %v4305 = vmax.f32 %v4188, 0.0
      %v4306 = vmax.f32 %v4272, 0.0
      %v4307 = vmax.f32 %v4274, 0.0
      %v4308 = vpack.c.bf16 %v4292, %v4276
      %v4309 = vpack.c.bf16 %v4293, %v4277
      %v4310 = vpack.c.bf16 %v4294, %v4278
      %v4311 = vpack.c.bf16 %v4295, %v4279
      %v4312 = vpack.c.bf16 %v4296, %v4280
      %v4313 = vpack.c.bf16 %v4297, %v4281
      %v4314 = vpack.c.bf16 %v4298, %v4282
      %v4315 = vpack.c.bf16 %v4299, %v4283
      %v4316 = vpack.c.bf16 %v4300, %v4284
      %v4317 = vpack.c.bf16 %v4301, %v4285
      %v4318 = vpack.c.bf16 %v4302, %v4286
      %v4319 = vpack.c.bf16 %v4303, %v4287
      %v4320 = vpack.c.bf16 %v4304, %v4288
      %v4321 = vpack.c.bf16 %v4305, %v4289
      %v4322 = vpack.c.bf16 %v4306, %v4290
      %v4323 = vpack.c.bf16 %v4307, %v4291
      %v4324 = vld [vmem:[%s392] sm:$0xff]
      %v4325 = vld [vmem:[%s392 + $0x8] sm:$0xff]
      %v4326 = vld [vmem:[%s392 + $0x10] sm:$0xff]
      %v4327 = vld [vmem:[%s392 + $0x18] sm:$0xff]
      %v4328 = vld [vmem:[%s392 + $0x20] sm:$0xff]
      %v4329 = vld [vmem:[%s392 + $0x28] sm:$0xff]
      %v4330 = vld [vmem:[%s392 + $0x30] sm:$0xff]
      %v4331 = vld [vmem:[%s392 + $0x38] sm:$0xff]
      %v4332 = vld [vmem:[%s392 + $0x40] sm:$0xff]
      %v4333 = vld [vmem:[%s392 + $0x48] sm:$0xff]
      %v4334 = vld [vmem:[%s392 + $0x50] sm:$0xff]
      %v4335 = vld [vmem:[%s392 + $0x58] sm:$0xff]
      %v4336 = vld [vmem:[%s392 + $0x60] sm:$0xff]
      %v4337 = vld [vmem:[%s392 + $0x68] sm:$0xff]
      %v4338 = vld [vmem:[%s392 + $0x70] sm:$0xff]
      %v4339 = vld [vmem:[%s392 + $0x78] sm:$0xff]
      %v4340 = vld [vmem:[%s392 + $0x80] sm:$0xff]
      %v4341 = vld [vmem:[%s392 + $0x88] sm:$0xff]
      %v4342 = vld [vmem:[%s392 + $0x90] sm:$0xff]
      %v4343 = vld [vmem:[%s392 + $0x98] sm:$0xff]
      %v4344 = vld [vmem:[%s392 + $0xa0] sm:$0xff]
      %v4345 = vld [vmem:[%s392 + $0xa8] sm:$0xff]
      %v4346 = vld [vmem:[%s392 + $0xb0] sm:$0xff]
      %v4347 = vld [vmem:[%s392 + $0xb8] sm:$0xff]
      %v4348 = vld [vmem:[%s392 + $0xc0] sm:$0xff]
      %v4349 = vld [vmem:[%s392 + $0xc8] sm:$0xff]
      %v4350 = vld [vmem:[%s392 + $0xd0] sm:$0xff]
      %v4351 = vld [vmem:[%s392 + $0xd8] sm:$0xff]
      %v4352 = vld [vmem:[%s392 + $0xe0] sm:$0xff]
      %v4353 = vld [vmem:[%s392 + $0xe8] sm:$0xff]
      %v4354 = vld [vmem:[%s392 + $0xf0] sm:$0xff]
      %v4355 = vld [vmem:[%s392 + $0xf8] sm:$0xff]
      %v4356 = vld [vmem:[%s392 + $0x100] sm:$0xff]
      %v4357 = vld [vmem:[%s392 + $0x108] sm:$0xff]
      %v4358 = vld [vmem:[%s392 + $0x110] sm:$0xff]
      %v4359 = vld [vmem:[%s392 + $0x118] sm:$0xff]
      %v4360 = vld [vmem:[%s392 + $0x120] sm:$0xff]
      %v4361 = vld [vmem:[%s392 + $0x128] sm:$0xff]
      %v4362 = vld [vmem:[%s392 + $0x130] sm:$0xff]
      %v4363 = vld [vmem:[%s392 + $0x138] sm:$0xff]
      %v4364 = vld [vmem:[%s392 + $0x140] sm:$0xff]
      %v4365 = vld [vmem:[%s392 + $0x148] sm:$0xff]
      %v4366 = vld [vmem:[%s392 + $0x150] sm:$0xff]
      %v4367 = vld [vmem:[%s392 + $0x158] sm:$0xff]
      %v4368 = vld [vmem:[%s392 + $0x160] sm:$0xff]
      %v4369 = vld [vmem:[%s392 + $0x168] sm:$0xff]
      %v4370 = vld [vmem:[%s392 + $0x170] sm:$0xff]
      %v4371 = vld [vmem:[%s392 + $0x178] sm:$0xff]
      %v4372 = vld [vmem:[%s392 + $0x180] sm:$0xff]
      %v4373 = vld [vmem:[%s392 + $0x188] sm:$0xff]
      %v4374 = vld [vmem:[%s392 + $0x190] sm:$0xff]
      %v4375 = vld [vmem:[%s392 + $0x198] sm:$0xff]
      %v4376 = vld [vmem:[%s392 + $0x1a0] sm:$0xff]
      %v4377 = vld [vmem:[%s392 + $0x1a8] sm:$0xff]
      %v4378 = vld [vmem:[%s392 + $0x1b0] sm:$0xff]
      %v4379 = vld [vmem:[%s392 + $0x1b8] sm:$0xff]
      %v4380 = vld [vmem:[%s392 + $0x1c0] sm:$0xff]
      %v4381 = vld [vmem:[%s392 + $0x1c8] sm:$0xff]
      %v4382 = vld [vmem:[%s392 + $0x1d0] sm:$0xff]
      %v4383 = vld [vmem:[%s392 + $0x1d8] sm:$0xff]
      %v4384 = vld [vmem:[%s392 + $0x1e0] sm:$0xff]
      %v4385 = vld [vmem:[%s392 + $0x1e8] sm:$0xff]
      %v4386 = vld [vmem:[%s392 + $0x1f0] sm:$0xff]
      %v4387 = vld [vmem:[%s392 + $0x1f8] sm:$0xff]
      %v4388 = vld [vmem:[%s392 + $0x200] sm:$0xff]
      %v4389 = vld [vmem:[%s392 + $0x208] sm:$0xff]
      %v4390 = vld [vmem:[%s392 + $0x210] sm:$0xff]
      %v4391 = vld [vmem:[%s392 + $0x218] sm:$0xff]
      %v4392 = vld [vmem:[%s392 + $0x220] sm:$0xff]
      %v4393 = vld [vmem:[%s392 + $0x228] sm:$0xff]
      %v4394 = vld [vmem:[%s392 + $0x230] sm:$0xff]
      %v4395 = vld [vmem:[%s392 + $0x238] sm:$0xff]
      %v4396 = vld [vmem:[%s392 + $0x240] sm:$0xff]
      %v4397 = vld [vmem:[%s392 + $0x248] sm:$0xff]
      %v4398 = vld [vmem:[%s392 + $0x250] sm:$0xff]
      %v4399 = vld [vmem:[%s392 + $0x258] sm:$0xff]
      %v4400 = vld [vmem:[%s392 + $0x260] sm:$0xff]
      %v4401 = vld [vmem:[%s392 + $0x268] sm:$0xff]
      %v4402 = vld [vmem:[%s392 + $0x270] sm:$0xff]
      %v4403 = vld [vmem:[%s392 + $0x278] sm:$0xff]
      %v4404 = vld [vmem:[%s392 + $0x280] sm:$0xff]
      %v4405 = vld [vmem:[%s392 + $0x288] sm:$0xff]
      %v4406 = vld [vmem:[%s392 + $0x290] sm:$0xff]
      %v4407 = vld [vmem:[%s392 + $0x298] sm:$0xff]
      %v4408 = vld [vmem:[%s392 + $0x2a0] sm:$0xff]
      %v4409 = vld [vmem:[%s392 + $0x2a8] sm:$0xff]
      %v4410 = vld [vmem:[%s392 + $0x2b0] sm:$0xff]
      %v4411 = vld [vmem:[%s392 + $0x2b8] sm:$0xff]
      %v4412 = vld [vmem:[%s392 + $0x2c0] sm:$0xff]
      %v4413 = vld [vmem:[%s392 + $0x2c8] sm:$0xff]
      %v4414 = vld [vmem:[%s392 + $0x2d0] sm:$0xff]
      %v4415 = vld [vmem:[%s392 + $0x2d8] sm:$0xff]
      %v4416 = vld [vmem:[%s392 + $0x2e0] sm:$0xff]
      %v4417 = vld [vmem:[%s392 + $0x2e8] sm:$0xff]
      %v4418 = vld [vmem:[%s392 + $0x2f0] sm:$0xff]
      %v4419 = vld [vmem:[%s392 + $0x2f8] sm:$0xff]
      %v4420 = vld [vmem:[%s392 + $0x300] sm:$0xff]
      %v4421 = vld [vmem:[%s392 + $0x308] sm:$0xff]
      %v4422 = vld [vmem:[%s392 + $0x310] sm:$0xff]
      %v4423 = vld [vmem:[%s392 + $0x318] sm:$0xff]
      %v4424 = vld [vmem:[%s392 + $0x320] sm:$0xff]
      %v4425 = vld [vmem:[%s392 + $0x328] sm:$0xff]
      %v4426 = vld [vmem:[%s392 + $0x330] sm:$0xff]
      %v4427 = vld [vmem:[%s392 + $0x338] sm:$0xff]
      %v4428 = vld [vmem:[%s392 + $0x340] sm:$0xff]
      %v4429 = vld [vmem:[%s392 + $0x348] sm:$0xff]
      %v4430 = vld [vmem:[%s392 + $0x350] sm:$0xff]
      %v4431 = vld [vmem:[%s392 + $0x358] sm:$0xff]
      %v4432 = vld [vmem:[%s392 + $0x360] sm:$0xff]
      %v4433 = vld [vmem:[%s392 + $0x368] sm:$0xff]
      %v4434 = vld [vmem:[%s392 + $0x370] sm:$0xff]
      %v4435 = vld [vmem:[%s392 + $0x378] sm:$0xff]
      %v4436 = vld [vmem:[%s392 + $0x380] sm:$0xff]
      %v4437 = vld [vmem:[%s392 + $0x388] sm:$0xff]
      %v4438 = vld [vmem:[%s392 + $0x390] sm:$0xff]
      %v4439 = vld [vmem:[%s392 + $0x398] sm:$0xff]
      %v4440 = vld [vmem:[%s392 + $0x3a0] sm:$0xff]
      %v4441 = vld [vmem:[%s392 + $0x3a8] sm:$0xff]
      %v4442 = vld [vmem:[%s392 + $0x3b0] sm:$0xff]
      %v4443 = vld [vmem:[%s392 + $0x3b8] sm:$0xff]
      %v4444 = vld [vmem:[%s392 + $0x3c0] sm:$0xff]
      %v4445 = vld [vmem:[%s392 + $0x3c8] sm:$0xff]
      %v4446 = vld [vmem:[%s392 + $0x3d0] sm:$0xff]
      %v4447 = vld [vmem:[%s392 + $0x3d8] sm:$0xff]
      %v4448 = vld [vmem:[%s392 + $0x3e0] sm:$0xff]
      %v4449 = vld [vmem:[%s392 + $0x3e8] sm:$0xff]
      %v4450 = vld [vmem:[%s392 + $0x3f0] sm:$0xff]
      %v4451 = vld [vmem:[%s392 + $0x3f8] sm:$0xff]
      %v4452 = vld [vmem:[%s392 + $0x400] sm:$0xff]
      %v4453 = vld [vmem:[%s392 + $0x408] sm:$0xff]
      %v4454 = vld [vmem:[%s392 + $0x410] sm:$0xff]
      %v4455 = vld [vmem:[%s392 + $0x418] sm:$0xff]
      %v4456 = vld [vmem:[%s392 + $0x420] sm:$0xff]
      %v4457 = vld [vmem:[%s392 + $0x428] sm:$0xff]
      %v4458 = vld [vmem:[%s392 + $0x430] sm:$0xff]
      %v4459 = vld [vmem:[%s392 + $0x438] sm:$0xff]
      %v4460 = vld [vmem:[%s392 + $0x440] sm:$0xff]
      %v4461 = vld [vmem:[%s392 + $0x448] sm:$0xff]
      %v4462 = vld [vmem:[%s392 + $0x450] sm:$0xff]
      %v4463 = vld [vmem:[%s392 + $0x458] sm:$0xff]
      %v4464 = vld [vmem:[%s392 + $0x460] sm:$0xff]
      %v4465 = vld [vmem:[%s392 + $0x468] sm:$0xff]
      %v4466 = vld [vmem:[%s392 + $0x470] sm:$0xff]
      %v4467 = vld [vmem:[%s392 + $0x478] sm:$0xff]
      %v4468 = vld [vmem:[%s392 + $0x480] sm:$0xff]
      %v4469 = vld [vmem:[%s392 + $0x488] sm:$0xff]
      %v4470 = vld [vmem:[%s392 + $0x490] sm:$0xff]
      %v4471 = vld [vmem:[%s392 + $0x498] sm:$0xff]
      %v4472 = vld [vmem:[%s392 + $0x4a0] sm:$0xff]
      %v4473 = vld [vmem:[%s392 + $0x4a8] sm:$0xff]
      %v4474 = vld [vmem:[%s392 + $0x4b0] sm:$0xff]
      %v4475 = vld [vmem:[%s392 + $0x4b8] sm:$0xff]
      %v4476 = vld [vmem:[%s392 + $0x4c0] sm:$0xff]
      %v4477 = vld [vmem:[%s392 + $0x4c8] sm:$0xff]
      %v4478 = vld [vmem:[%s392 + $0x4d0] sm:$0xff]
      %v4479 = vld [vmem:[%s392 + $0x4d8] sm:$0xff]
      %v4480 = vld [vmem:[%s392 + $0x4e0] sm:$0xff]
      %v4481 = vld [vmem:[%s392 + $0x4e8] sm:$0xff]
      %v4482 = vld [vmem:[%s392 + $0x4f0] sm:$0xff]
      %v4483 = vld [vmem:[%s392 + $0x4f8] sm:$0xff]
      %v4484 = vld [vmem:[%s392 + $0x500] sm:$0xff]
      %v4485 = vld [vmem:[%s392 + $0x508] sm:$0xff]
      %v4486 = vld [vmem:[%s392 + $0x510] sm:$0xff]
      %v4487 = vld [vmem:[%s392 + $0x518] sm:$0xff]
      %v4488 = vld [vmem:[%s392 + $0x520] sm:$0xff]
      %v4489 = vld [vmem:[%s392 + $0x528] sm:$0xff]
      %v4490 = vld [vmem:[%s392 + $0x530] sm:$0xff]
      %v4491 = vld [vmem:[%s392 + $0x538] sm:$0xff]
      %v4492 = vld [vmem:[%s392 + $0x540] sm:$0xff]
      %v4493 = vld [vmem:[%s392 + $0x548] sm:$0xff]
      %v4494 = vld [vmem:[%s392 + $0x550] sm:$0xff]
      %v4495 = vld [vmem:[%s392 + $0x558] sm:$0xff]
      %v4496 = vld [vmem:[%s392 + $0x560] sm:$0xff]
      %v4497 = vld [vmem:[%s392 + $0x568] sm:$0xff]
      %v4498 = vld [vmem:[%s392 + $0x570] sm:$0xff]
      %v4499 = vld [vmem:[%s392 + $0x578] sm:$0xff]
      %v4500 = vld [vmem:[%s392 + $0x580] sm:$0xff]
      %v4501 = vld [vmem:[%s392 + $0x588] sm:$0xff]
      %v4502 = vld [vmem:[%s392 + $0x590] sm:$0xff]
      %v4503 = vld [vmem:[%s392 + $0x598] sm:$0xff]
      %v4504 = vld [vmem:[%s392 + $0x5a0] sm:$0xff]
      %v4505 = vld [vmem:[%s392 + $0x5a8] sm:$0xff]
      %v4506 = vld [vmem:[%s392 + $0x5b0] sm:$0xff]
      %v4507 = vld [vmem:[%s392 + $0x5b8] sm:$0xff]
      %v4508 = vld [vmem:[%s392 + $0x5c0] sm:$0xff]
      %v4509 = vld [vmem:[%s392 + $0x5c8] sm:$0xff]
      %v4510 = vld [vmem:[%s392 + $0x5d0] sm:$0xff]
      %v4511 = vld [vmem:[%s392 + $0x5d8] sm:$0xff]
      %v4512 = vld [vmem:[%s392 + $0x5e0] sm:$0xff]
      %v4513 = vld [vmem:[%s392 + $0x5e8] sm:$0xff]
      %v4514 = vld [vmem:[%s392 + $0x5f0] sm:$0xff]
      %v4515 = vld [vmem:[%s392 + $0x5f8] sm:$0xff]
      %v4516 = vld [vmem:[%s392 + $0x600] sm:$0xff]
      %v4517 = vld [vmem:[%s392 + $0x608] sm:$0xff]
      %v4518 = vld [vmem:[%s392 + $0x610] sm:$0xff]
      %v4519 = vld [vmem:[%s392 + $0x618] sm:$0xff]
      %v4520 = vld [vmem:[%s392 + $0x620] sm:$0xff]
      %v4521 = vld [vmem:[%s392 + $0x628] sm:$0xff]
      %v4522 = vld [vmem:[%s392 + $0x630] sm:$0xff]
      %v4523 = vld [vmem:[%s392 + $0x638] sm:$0xff]
      %v4524 = vld [vmem:[%s392 + $0x640] sm:$0xff]
      %v4525 = vld [vmem:[%s392 + $0x648] sm:$0xff]
      %v4526 = vld [vmem:[%s392 + $0x650] sm:$0xff]
      %v4527 = vld [vmem:[%s392 + $0x658] sm:$0xff]
      %v4528 = vld [vmem:[%s392 + $0x660] sm:$0xff]
      %v4529 = vld [vmem:[%s392 + $0x668] sm:$0xff]
      %v4530 = vld [vmem:[%s392 + $0x670] sm:$0xff]
      %v4531 = vld [vmem:[%s392 + $0x678] sm:$0xff]
      %v4532 = vld [vmem:[%s392 + $0x680] sm:$0xff]
      %v4533 = vld [vmem:[%s392 + $0x688] sm:$0xff]
      %v4534 = vld [vmem:[%s392 + $0x690] sm:$0xff]
      %v4535 = vld [vmem:[%s392 + $0x698] sm:$0xff]
      %v4536 = vld [vmem:[%s392 + $0x6a0] sm:$0xff]
      %v4537 = vld [vmem:[%s392 + $0x6a8] sm:$0xff]
      %v4538 = vld [vmem:[%s392 + $0x6b0] sm:$0xff]
      %v4539 = vld [vmem:[%s392 + $0x6b8] sm:$0xff]
      %v4540 = vld [vmem:[%s392 + $0x6c0] sm:$0xff]
      %v4541 = vld [vmem:[%s392 + $0x6c8] sm:$0xff]
      %v4542 = vld [vmem:[%s392 + $0x6d0] sm:$0xff]
      %v4543 = vld [vmem:[%s392 + $0x6d8] sm:$0xff]
      %v4544 = vld [vmem:[%s392 + $0x6e0] sm:$0xff]
      %v4545 = vld [vmem:[%s392 + $0x6e8] sm:$0xff]
      %v4546 = vld [vmem:[%s392 + $0x6f0] sm:$0xff]
      %v4547 = vld [vmem:[%s392 + $0x6f8] sm:$0xff]
      %v4548 = vld [vmem:[%s392 + $0x700] sm:$0xff]
      %v4549 = vld [vmem:[%s392 + $0x708] sm:$0xff]
      %v4550 = vld [vmem:[%s392 + $0x710] sm:$0xff]
      %v4551 = vld [vmem:[%s392 + $0x718] sm:$0xff]
      %v4552 = vld [vmem:[%s392 + $0x720] sm:$0xff]
      %v4553 = vld [vmem:[%s392 + $0x728] sm:$0xff]
      %v4554 = vld [vmem:[%s392 + $0x730] sm:$0xff]
      %v4555 = vld [vmem:[%s392 + $0x738] sm:$0xff]
      %v4556 = vld [vmem:[%s392 + $0x740] sm:$0xff]
      %v4557 = vld [vmem:[%s392 + $0x748] sm:$0xff]
      %v4558 = vld [vmem:[%s392 + $0x750] sm:$0xff]
      %v4559 = vld [vmem:[%s392 + $0x758] sm:$0xff]
      %v4560 = vld [vmem:[%s392 + $0x760] sm:$0xff]
      %v4561 = vld [vmem:[%s392 + $0x768] sm:$0xff]
      %v4562 = vld [vmem:[%s392 + $0x770] sm:$0xff]
      %v4563 = vld [vmem:[%s392 + $0x778] sm:$0xff]
      %v4564 = vld [vmem:[%s392 + $0x780] sm:$0xff]
      %v4565 = vld [vmem:[%s392 + $0x788] sm:$0xff]
      %v4566 = vld [vmem:[%s392 + $0x790] sm:$0xff]
      %v4567 = vld [vmem:[%s392 + $0x798] sm:$0xff]
      %v4568 = vld [vmem:[%s392 + $0x7a0] sm:$0xff]
      %v4569 = vld [vmem:[%s392 + $0x7a8] sm:$0xff]
      %v4570 = vld [vmem:[%s392 + $0x7b0] sm:$0xff]
      %v4571 = vld [vmem:[%s392 + $0x7b8] sm:$0xff]
      %v4572 = vld [vmem:[%s392 + $0x7c0] sm:$0xff]
      %v4573 = vld [vmem:[%s392 + $0x7c8] sm:$0xff]
      %v4574 = vld [vmem:[%s392 + $0x7d0] sm:$0xff]
      %v4575 = vld [vmem:[%s392 + $0x7d8] sm:$0xff]
      %v4576 = vld [vmem:[%s392 + $0x7e0] sm:$0xff]
      %v4577 = vld [vmem:[%s392 + $0x7e8] sm:$0xff]
      %v4578 = vld [vmem:[%s392 + $0x7f0] sm:$0xff]
      %v4579 = vld [vmem:[%s392 + $0x7f8] sm:$0xff]
      %v4580 = vld [vmem:[%s392 + $0x800] sm:$0xff]
      %v4581 = vld [vmem:[%s392 + $0x808] sm:$0xff]
      %v4582 = vld [vmem:[%s392 + $0x810] sm:$0xff]
      %v4583 = vld [vmem:[%s392 + $0x818] sm:$0xff]
      %v4584 = vld [vmem:[%s392 + $0x820] sm:$0xff]
      %v4585 = vld [vmem:[%s392 + $0x828] sm:$0xff]
      %v4586 = vld [vmem:[%s392 + $0x830] sm:$0xff]
      %v4587 = vld [vmem:[%s392 + $0x838] sm:$0xff]
      %v4588 = vld [vmem:[%s392 + $0x840] sm:$0xff]
      %v4589 = vld [vmem:[%s392 + $0x848] sm:$0xff]
      %v4590 = vld [vmem:[%s392 + $0x850] sm:$0xff]
      %v4591 = vld [vmem:[%s392 + $0x858] sm:$0xff]
      %v4592 = vld [vmem:[%s392 + $0x860] sm:$0xff]
      %v4593 = vld [vmem:[%s392 + $0x868] sm:$0xff]
      %v4594 = vld [vmem:[%s392 + $0x870] sm:$0xff]
      %v4595 = vld [vmem:[%s392 + $0x878] sm:$0xff]
      %v4596 = vld [vmem:[%s392 + $0x880] sm:$0xff]
      %v4597 = vld [vmem:[%s392 + $0x888] sm:$0xff]
      %v4598 = vld [vmem:[%s392 + $0x890] sm:$0xff]
      %v4599 = vld [vmem:[%s392 + $0x898] sm:$0xff]
      %v4600 = vld [vmem:[%s392 + $0x8a0] sm:$0xff]
      %v4601 = vld [vmem:[%s392 + $0x8a8] sm:$0xff]
      %v4602 = vld [vmem:[%s392 + $0x8b0] sm:$0xff]
      %v4603 = vld [vmem:[%s392 + $0x8b8] sm:$0xff]
      %v4604 = vld [vmem:[%s392 + $0x8c0] sm:$0xff]
      %v4605 = vld [vmem:[%s392 + $0x8c8] sm:$0xff]
      %v4606 = vld [vmem:[%s392 + $0x8d0] sm:$0xff]
      %v4607 = vld [vmem:[%s392 + $0x8d8] sm:$0xff]
      %v4608 = vld [vmem:[%s392 + $0x8e0] sm:$0xff]
      %v4609 = vld [vmem:[%s392 + $0x8e8] sm:$0xff]
      %v4610 = vld [vmem:[%s392 + $0x8f0] sm:$0xff]
      %v4611 = vld [vmem:[%s392 + $0x8f8] sm:$0xff]
      %v4612 = vld [vmem:[%s392 + $0x900] sm:$0xff]
      %v4613 = vld [vmem:[%s392 + $0x908] sm:$0xff]
      %v4614 = vld [vmem:[%s392 + $0x910] sm:$0xff]
      %v4615 = vld [vmem:[%s392 + $0x918] sm:$0xff]
      %v4616 = vld [vmem:[%s392 + $0x920] sm:$0xff]
      %v4617 = vld [vmem:[%s392 + $0x928] sm:$0xff]
      %v4618 = vld [vmem:[%s392 + $0x930] sm:$0xff]
      %v4619 = vld [vmem:[%s392 + $0x938] sm:$0xff]
      %v4620 = vld [vmem:[%s392 + $0x940] sm:$0xff]
      %v4621 = vld [vmem:[%s392 + $0x948] sm:$0xff]
      %v4622 = vld [vmem:[%s392 + $0x950] sm:$0xff]
      %v4623 = vld [vmem:[%s392 + $0x958] sm:$0xff]
      %v4624 = vld [vmem:[%s392 + $0x960] sm:$0xff]
      %v4625 = vld [vmem:[%s392 + $0x968] sm:$0xff]
      %v4626 = vld [vmem:[%s392 + $0x970] sm:$0xff]
      %v4627 = vld [vmem:[%s392 + $0x978] sm:$0xff]
      %v4628 = vld [vmem:[%s392 + $0x980] sm:$0xff]
      %v4629 = vld [vmem:[%s392 + $0x988] sm:$0xff]
      %v4630 = vld [vmem:[%s392 + $0x990] sm:$0xff]
      %v4631 = vld [vmem:[%s392 + $0x998] sm:$0xff]
      %v4632 = vld [vmem:[%s392 + $0x9a0] sm:$0xff]
      %v4633 = vld [vmem:[%s392 + $0x9a8] sm:$0xff]
      %v4634 = vld [vmem:[%s392 + $0x9b0] sm:$0xff]
      %v4635 = vld [vmem:[%s392 + $0x9b8] sm:$0xff]
      %v4636 = vld [vmem:[%s392 + $0x9c0] sm:$0xff]
      %v4637 = vld [vmem:[%s392 + $0x9c8] sm:$0xff]
      %v4638 = vld [vmem:[%s392 + $0x9d0] sm:$0xff]
      %v4639 = vld [vmem:[%s392 + $0x9d8] sm:$0xff]
      %v4640 = vld [vmem:[%s392 + $0x9e0] sm:$0xff]
      %v4641 = vld [vmem:[%s392 + $0x9e8] sm:$0xff]
      %v4642 = vld [vmem:[%s392 + $0x9f0] sm:$0xff]
      %v4643 = vld [vmem:[%s392 + $0x9f8] sm:$0xff]
      %v4644 = vld [vmem:[%s392 + $0xa00] sm:$0xff]
      %v4645 = vld [vmem:[%s392 + $0xa08] sm:$0xff]
      %v4646 = vld [vmem:[%s392 + $0xa10] sm:$0xff]
      %v4647 = vld [vmem:[%s392 + $0xa18] sm:$0xff]
      %v4648 = vld [vmem:[%s392 + $0xa20] sm:$0xff]
      %v4649 = vld [vmem:[%s392 + $0xa28] sm:$0xff]
      %v4650 = vld [vmem:[%s392 + $0xa30] sm:$0xff]
      %v4651 = vld [vmem:[%s392 + $0xa38] sm:$0xff]
      %v4652 = vld [vmem:[%s392 + $0xa40] sm:$0xff]
      %v4653 = vld [vmem:[%s392 + $0xa48] sm:$0xff]
      %v4654 = vld [vmem:[%s392 + $0xa50] sm:$0xff]
      %v4655 = vld [vmem:[%s392 + $0xa58] sm:$0xff]
      %v4656 = vld [vmem:[%s392 + $0xa60] sm:$0xff]
      %v4657 = vld [vmem:[%s392 + $0xa68] sm:$0xff]
      %v4658 = vld [vmem:[%s392 + $0xa70] sm:$0xff]
      %v4659 = vld [vmem:[%s392 + $0xa78] sm:$0xff]
      %v4660 = vld [vmem:[%s392 + $0xa80] sm:$0xff]
      %v4661 = vld [vmem:[%s392 + $0xa88] sm:$0xff]
      %v4662 = vld [vmem:[%s392 + $0xa90] sm:$0xff]
      %v4663 = vld [vmem:[%s392 + $0xa98] sm:$0xff]
      %v4664 = vld [vmem:[%s392 + $0xaa0] sm:$0xff]
      %v4665 = vld [vmem:[%s392 + $0xaa8] sm:$0xff]
      %v4666 = vld [vmem:[%s392 + $0xab0] sm:$0xff]
      %v4667 = vld [vmem:[%s392 + $0xab8] sm:$0xff]
      %v4668 = vld [vmem:[%s392 + $0xac0] sm:$0xff]
      %v4669 = vld [vmem:[%s392 + $0xac8] sm:$0xff]
      %v4670 = vld [vmem:[%s392 + $0xad0] sm:$0xff]
      %v4671 = vld [vmem:[%s392 + $0xad8] sm:$0xff]
      %v4672 = vld [vmem:[%s392 + $0xae0] sm:$0xff]
      %v4673 = vld [vmem:[%s392 + $0xae8] sm:$0xff]
      %v4674 = vld [vmem:[%s392 + $0xaf0] sm:$0xff]
      %v4675 = vld [vmem:[%s392 + $0xaf8] sm:$0xff]
      %v4676 = vld [vmem:[%s392 + $0xb00] sm:$0xff]
      %v4677 = vld [vmem:[%s392 + $0xb08] sm:$0xff]
      %v4678 = vld [vmem:[%s392 + $0xb10] sm:$0xff]
      %v4679 = vld [vmem:[%s392 + $0xb18] sm:$0xff]
      %v4680 = vld [vmem:[%s392 + $0xb20] sm:$0xff]
      %v4681 = vld [vmem:[%s392 + $0xb28] sm:$0xff]
      %v4682 = vld [vmem:[%s392 + $0xb30] sm:$0xff]
      %v4683 = vld [vmem:[%s392 + $0xb38] sm:$0xff]
      %v4684 = vld [vmem:[%s392 + $0xb40] sm:$0xff]
      %v4685 = vld [vmem:[%s392 + $0xb48] sm:$0xff]
      %v4686 = vld [vmem:[%s392 + $0xb50] sm:$0xff]
      %v4687 = vld [vmem:[%s392 + $0xb58] sm:$0xff]
      %v4688 = vld [vmem:[%s392 + $0xb60] sm:$0xff]
      %v4689 = vld [vmem:[%s392 + $0xb68] sm:$0xff]
      %v4690 = vld [vmem:[%s392 + $0xb70] sm:$0xff]
      %v4691 = vld [vmem:[%s392 + $0xb78] sm:$0xff]
      %v4692 = vld [vmem:[%s392 + $0xb80] sm:$0xff]
      %v4693 = vld [vmem:[%s392 + $0xb88] sm:$0xff]
      %v4694 = vld [vmem:[%s392 + $0xb90] sm:$0xff]
      %v4695 = vld [vmem:[%s392 + $0xb98] sm:$0xff]
      %v4696 = vld [vmem:[%s392 + $0xba0] sm:$0xff]
      %v4697 = vld [vmem:[%s392 + $0xba8] sm:$0xff]
      %v4698 = vld [vmem:[%s392 + $0xbb0] sm:$0xff]
      %v4699 = vld [vmem:[%s392 + $0xbb8] sm:$0xff]
      %v4700 = vld [vmem:[%s392 + $0xbc0] sm:$0xff]
      %v4701 = vld [vmem:[%s392 + $0xbc8] sm:$0xff]
      %v4702 = vld [vmem:[%s392 + $0xbd0] sm:$0xff]
      %v4703 = vld [vmem:[%s392 + $0xbd8] sm:$0xff]
      %v4704 = vld [vmem:[%s392 + $0xbe0] sm:$0xff]
      %v4705 = vld [vmem:[%s392 + $0xbe8] sm:$0xff]
      %v4706 = vld [vmem:[%s392 + $0xbf0] sm:$0xff]
      %v4707 = vld [vmem:[%s392 + $0xbf8] sm:$0xff]
      %v4708 = vld [vmem:[%s392 + $0xc00] sm:$0xff]
      %v4709 = vld [vmem:[%s392 + $0xc08] sm:$0xff]
      %v4710 = vld [vmem:[%s392 + $0xc10] sm:$0xff]
      %v4711 = vld [vmem:[%s392 + $0xc18] sm:$0xff]
      %v4712 = vld [vmem:[%s392 + $0xc20] sm:$0xff]
      %v4713 = vld [vmem:[%s392 + $0xc28] sm:$0xff]
      %v4714 = vld [vmem:[%s392 + $0xc30] sm:$0xff]
      %v4715 = vld [vmem:[%s392 + $0xc38] sm:$0xff]
      %v4716 = vld [vmem:[%s392 + $0xc40] sm:$0xff]
      %v4717 = vld [vmem:[%s392 + $0xc48] sm:$0xff]
      %v4718 = vld [vmem:[%s392 + $0xc50] sm:$0xff]
      %v4719 = vld [vmem:[%s392 + $0xc58] sm:$0xff]
      %v4720 = vld [vmem:[%s392 + $0xc60] sm:$0xff]
      %v4721 = vld [vmem:[%s392 + $0xc68] sm:$0xff]
      %v4722 = vld [vmem:[%s392 + $0xc70] sm:$0xff]
      %v4723 = vld [vmem:[%s392 + $0xc78] sm:$0xff]
      %v4724 = vld [vmem:[%s392 + $0xc80] sm:$0xff]
      %v4725 = vld [vmem:[%s392 + $0xc88] sm:$0xff]
      %v4726 = vld [vmem:[%s392 + $0xc90] sm:$0xff]
      %v4727 = vld [vmem:[%s392 + $0xc98] sm:$0xff]
      %v4728 = vld [vmem:[%s392 + $0xca0] sm:$0xff]
      %v4729 = vld [vmem:[%s392 + $0xca8] sm:$0xff]
      %v4730 = vld [vmem:[%s392 + $0xcb0] sm:$0xff]
      %v4731 = vld [vmem:[%s392 + $0xcb8] sm:$0xff]
      %v4732 = vld [vmem:[%s392 + $0xcc0] sm:$0xff]
      %v4733 = vld [vmem:[%s392 + $0xcc8] sm:$0xff]
      %v4734 = vld [vmem:[%s392 + $0xcd0] sm:$0xff]
      %v4735 = vld [vmem:[%s392 + $0xcd8] sm:$0xff]
      %v4736 = vld [vmem:[%s392 + $0xce0] sm:$0xff]
      %v4737 = vld [vmem:[%s392 + $0xce8] sm:$0xff]
      %v4738 = vld [vmem:[%s392 + $0xcf0] sm:$0xff]
      %v4739 = vld [vmem:[%s392 + $0xcf8] sm:$0xff]
      %v4740 = vld [vmem:[%s392 + $0xd00] sm:$0xff]
      %v4741 = vld [vmem:[%s392 + $0xd08] sm:$0xff]
      %v4742 = vld [vmem:[%s392 + $0xd10] sm:$0xff]
      %v4743 = vld [vmem:[%s392 + $0xd18] sm:$0xff]
      %v4744 = vld [vmem:[%s392 + $0xd20] sm:$0xff]
      %v4745 = vld [vmem:[%s392 + $0xd28] sm:$0xff]
      %v4746 = vld [vmem:[%s392 + $0xd30] sm:$0xff]
      %v4747 = vld [vmem:[%s392 + $0xd38] sm:$0xff]
      %v4748 = vld [vmem:[%s392 + $0xd40] sm:$0xff]
      %v4749 = vld [vmem:[%s392 + $0xd48] sm:$0xff]
      %v4750 = vld [vmem:[%s392 + $0xd50] sm:$0xff]
      %v4751 = vld [vmem:[%s392 + $0xd58] sm:$0xff]
      %v4752 = vld [vmem:[%s392 + $0xd60] sm:$0xff]
      %v4753 = vld [vmem:[%s392 + $0xd68] sm:$0xff]
      %v4754 = vld [vmem:[%s392 + $0xd70] sm:$0xff]
      %v4755 = vld [vmem:[%s392 + $0xd78] sm:$0xff]
      %v4756 = vld [vmem:[%s392 + $0xd80] sm:$0xff]
      %v4757 = vld [vmem:[%s392 + $0xd88] sm:$0xff]
      %v4758 = vld [vmem:[%s392 + $0xd90] sm:$0xff]
      %v4759 = vld [vmem:[%s392 + $0xd98] sm:$0xff]
      %v4760 = vld [vmem:[%s392 + $0xda0] sm:$0xff]
      %v4761 = vld [vmem:[%s392 + $0xda8] sm:$0xff]
      %v4762 = vld [vmem:[%s392 + $0xdb0] sm:$0xff]
      %v4763 = vld [vmem:[%s392 + $0xdb8] sm:$0xff]
      %v4764 = vld [vmem:[%s392 + $0xdc0] sm:$0xff]
      %v4765 = vld [vmem:[%s392 + $0xdc8] sm:$0xff]
      %v4766 = vld [vmem:[%s392 + $0xdd0] sm:$0xff]
      %v4767 = vld [vmem:[%s392 + $0xdd8] sm:$0xff]
      %v4768 = vld [vmem:[%s392 + $0xde0] sm:$0xff]
      %v4769 = vld [vmem:[%s392 + $0xde8] sm:$0xff]
      %v4770 = vld [vmem:[%s392 + $0xdf0] sm:$0xff]
      %v4771 = vld [vmem:[%s392 + $0xdf8] sm:$0xff]
      %v4772 = vld [vmem:[%s392 + $0xe00] sm:$0xff]
      %v4773 = vld [vmem:[%s392 + $0xe08] sm:$0xff]
      %v4774 = vld [vmem:[%s392 + $0xe10] sm:$0xff]
      %v4775 = vld [vmem:[%s392 + $0xe18] sm:$0xff]
      %v4776 = vld [vmem:[%s392 + $0xe20] sm:$0xff]
      %v4777 = vld [vmem:[%s392 + $0xe28] sm:$0xff]
      %v4778 = vld [vmem:[%s392 + $0xe30] sm:$0xff]
      %v4779 = vld [vmem:[%s392 + $0xe38] sm:$0xff]
      %v4780 = vld [vmem:[%s392 + $0xe40] sm:$0xff]
      %v4781 = vld [vmem:[%s392 + $0xe48] sm:$0xff]
      %v4782 = vld [vmem:[%s392 + $0xe50] sm:$0xff]
      %v4783 = vld [vmem:[%s392 + $0xe58] sm:$0xff]
      %v4784 = vld [vmem:[%s392 + $0xe60] sm:$0xff]
      %v4785 = vld [vmem:[%s392 + $0xe68] sm:$0xff]
      %v4786 = vld [vmem:[%s392 + $0xe70] sm:$0xff]
      %v4787 = vld [vmem:[%s392 + $0xe78] sm:$0xff]
      %v4788 = vld [vmem:[%s392 + $0xe80] sm:$0xff]
      %v4789 = vld [vmem:[%s392 + $0xe88] sm:$0xff]
      %v4790 = vld [vmem:[%s392 + $0xe90] sm:$0xff]
      %v4791 = vld [vmem:[%s392 + $0xe98] sm:$0xff]
      %v4792 = vld [vmem:[%s392 + $0xea0] sm:$0xff]
      %v4793 = vld [vmem:[%s392 + $0xea8] sm:$0xff]
      %v4794 = vld [vmem:[%s392 + $0xeb0] sm:$0xff]
      %v4795 = vld [vmem:[%s392 + $0xeb8] sm:$0xff]
      %v4796 = vld [vmem:[%s392 + $0xec0] sm:$0xff]
      %v4797 = vld [vmem:[%s392 + $0xec8] sm:$0xff]
      %v4798 = vld [vmem:[%s392 + $0xed0] sm:$0xff]
      %v4799 = vld [vmem:[%s392 + $0xed8] sm:$0xff]
      %v4800 = vld [vmem:[%s392 + $0xee0] sm:$0xff]
      %v4801 = vld [vmem:[%s392 + $0xee8] sm:$0xff]
      %v4802 = vld [vmem:[%s392 + $0xef0] sm:$0xff]
      %v4803 = vld [vmem:[%s392 + $0xef8] sm:$0xff]
      %v4804 = vld [vmem:[%s392 + $0xf00] sm:$0xff]
      %v4805 = vld [vmem:[%s392 + $0xf08] sm:$0xff]
      %v4806 = vld [vmem:[%s392 + $0xf10] sm:$0xff]
      %v4807 = vld [vmem:[%s392 + $0xf18] sm:$0xff]
      %v4808 = vld [vmem:[%s392 + $0xf20] sm:$0xff]
      %v4809 = vld [vmem:[%s392 + $0xf28] sm:$0xff]
      %v4810 = vld [vmem:[%s392 + $0xf30] sm:$0xff]
      %v4811 = vld [vmem:[%s392 + $0xf38] sm:$0xff]
      %v4812 = vld [vmem:[%s392 + $0xf40] sm:$0xff]
      %v4813 = vld [vmem:[%s392 + $0xf48] sm:$0xff]
      %v4814 = vld [vmem:[%s392 + $0xf50] sm:$0xff]
      %v4815 = vld [vmem:[%s392 + $0xf58] sm:$0xff]
      %v4816 = vld [vmem:[%s392 + $0xf60] sm:$0xff]
      %v4817 = vld [vmem:[%s392 + $0xf68] sm:$0xff]
      %v4818 = vld [vmem:[%s392 + $0xf70] sm:$0xff]
      %v4819 = vld [vmem:[%s392 + $0xf78] sm:$0xff]
      %v4820 = vld [vmem:[%s392 + $0xf80] sm:$0xff]
      %v4821 = vld [vmem:[%s392 + $0xf88] sm:$0xff]
      %v4822 = vld [vmem:[%s392 + $0xf90] sm:$0xff]
      %v4823 = vld [vmem:[%s392 + $0xf98] sm:$0xff]
      %v4824 = vld [vmem:[%s392 + $0xfa0] sm:$0xff]
      %v4825 = vld [vmem:[%s392 + $0xfa8] sm:$0xff]
      %v4826 = vld [vmem:[%s392 + $0xfb0] sm:$0xff]
      %v4827 = vld [vmem:[%s392 + $0xfb8] sm:$0xff]
      %v4828 = vld [vmem:[%s392 + $0xfc0] sm:$0xff]
      %v4829 = vld [vmem:[%s392 + $0xfc8] sm:$0xff]
      %v4830 = vld [vmem:[%s392 + $0xfd0] sm:$0xff]
      %v4831 = vld [vmem:[%s392 + $0xfd8] sm:$0xff]
      %v4832 = vld [vmem:[%s392 + $0xfe0] sm:$0xff]
      %v4833 = vld [vmem:[%s392 + $0xfe8] sm:$0xff]
      %v4834 = vld [vmem:[%s392 + $0xff0] sm:$0xff]
      %v4835 = vld [vmem:[%s392 + $0xff8] sm:$0xff]
      %v4836 = vld [vmem:[%s400] sm:$0xf]
      %v4838 = vlaneseq
      %v4839 = vshrl.u32 %v4838, 7
      %v4840 = vsub.s32 0, %v4839
      %v4841 = vrot.slane %v4836, %v4840
      %v4842 = vlaneseq
      %v4843 = vshrl.u32 %v4842, 7
      %v4844 = vsub.s32 1, %v4843
      %v4845 = vrot.slane %v4836, %v4844
      %v4846 = vlaneseq
      %v4847 = vshrl.u32 %v4846, 7
      %v4848 = vsub.s32 2, %v4847
      %v4849 = vrot.slane %v4836, %v4848
      %v4850 = vlaneseq
      %v4851 = vshrl.u32 %v4850, 7
      %v4852 = vsub.s32 3, %v4851
      %v4853 = vrot.slane %v4836, %v4852
      %v5370 = vunpack.c.l.b16 %v4324
      %v5371 = vunpack.c.h.b16 %v4324
      %v5372 = vunpack.c.l.b16 %v4325
      %v5373 = vunpack.c.h.b16 %v4325
      %v5374 = vunpack.c.l.b16 %v4326
      %v5375 = vunpack.c.h.b16 %v4326
      %v5376 = vunpack.c.l.b16 %v4327
      %v5377 = vunpack.c.h.b16 %v4327
      %v5378 = vunpack.c.l.b16 %v4328
      %v5379 = vunpack.c.h.b16 %v4328
      %v5380 = vunpack.c.l.b16 %v4329
      %v5381 = vunpack.c.h.b16 %v4329
      %v5382 = vunpack.c.l.b16 %v4330
      %v5383 = vunpack.c.h.b16 %v4330
      %v5384 = vunpack.c.l.b16 %v4331
      %v5385 = vunpack.c.h.b16 %v4331
      %v5386 = vunpack.c.l.b16 %v4332
      %v5387 = vunpack.c.h.b16 %v4332
      %v5388 = vunpack.c.l.b16 %v4333
      %v5389 = vunpack.c.h.b16 %v4333
      %v5390 = vunpack.c.l.b16 %v4334
      %v5391 = vunpack.c.h.b16 %v4334
      %v5392 = vunpack.c.l.b16 %v4335
      %v5393 = vunpack.c.h.b16 %v4335
      %v5394 = vunpack.c.l.b16 %v4336
      %v5395 = vunpack.c.h.b16 %v4336
      %v5396 = vunpack.c.l.b16 %v4337
      %v5397 = vunpack.c.h.b16 %v4337
      %v5398 = vunpack.c.l.b16 %v4338
      %v5399 = vunpack.c.h.b16 %v4338
      %v5400 = vunpack.c.l.b16 %v4339
      %v5401 = vunpack.c.h.b16 %v4339
      %v5402 = vunpack.c.l.b16 %v4340
      %v5403 = vunpack.c.h.b16 %v4340
      %v5404 = vunpack.c.l.b16 %v4341
      %v5405 = vunpack.c.h.b16 %v4341
      %v5406 = vunpack.c.l.b16 %v4342
      %v5407 = vunpack.c.h.b16 %v4342
      %v5408 = vunpack.c.l.b16 %v4343
      %v5409 = vunpack.c.h.b16 %v4343
      %v5410 = vunpack.c.l.b16 %v4344
      %v5411 = vunpack.c.h.b16 %v4344
      %v5412 = vunpack.c.l.b16 %v4345
      %v5413 = vunpack.c.h.b16 %v4345
      %v5414 = vunpack.c.l.b16 %v4346
      %v5415 = vunpack.c.h.b16 %v4346
      %v5416 = vunpack.c.l.b16 %v4347
      %v5417 = vunpack.c.h.b16 %v4347
      %v5418 = vunpack.c.l.b16 %v4348
      %v5419 = vunpack.c.h.b16 %v4348
      %v5420 = vunpack.c.l.b16 %v4349
      %v5421 = vunpack.c.h.b16 %v4349
      %v5422 = vunpack.c.l.b16 %v4350
      %v5423 = vunpack.c.h.b16 %v4350
      %v5424 = vunpack.c.l.b16 %v4351
      %v5425 = vunpack.c.h.b16 %v4351
      %v5426 = vunpack.c.l.b16 %v4352
      %v5427 = vunpack.c.h.b16 %v4352
      %v5428 = vunpack.c.l.b16 %v4353
      %v5429 = vunpack.c.h.b16 %v4353
      %v5430 = vunpack.c.l.b16 %v4354
      %v5431 = vunpack.c.h.b16 %v4354
      %v5432 = vunpack.c.l.b16 %v4355
      %v5433 = vunpack.c.h.b16 %v4355
      %v5434 = vunpack.c.l.b16 %v4356
      %v5435 = vunpack.c.h.b16 %v4356
      %v5436 = vunpack.c.l.b16 %v4357
      %v5437 = vunpack.c.h.b16 %v4357
      %v5438 = vunpack.c.l.b16 %v4358
      %v5439 = vunpack.c.h.b16 %v4358
      %v5440 = vunpack.c.l.b16 %v4359
      %v5441 = vunpack.c.h.b16 %v4359
      %v5442 = vunpack.c.l.b16 %v4360
      %v5443 = vunpack.c.h.b16 %v4360
      %v5444 = vunpack.c.l.b16 %v4361
      %v5445 = vunpack.c.h.b16 %v4361
      %v5446 = vunpack.c.l.b16 %v4362
      %v5447 = vunpack.c.h.b16 %v4362
      %v5448 = vunpack.c.l.b16 %v4363
      %v5449 = vunpack.c.h.b16 %v4363
      %v5450 = vunpack.c.l.b16 %v4364
      %v5451 = vunpack.c.h.b16 %v4364
      %v5452 = vunpack.c.l.b16 %v4365
      %v5453 = vunpack.c.h.b16 %v4365
      %v5454 = vunpack.c.l.b16 %v4366
      %v5455 = vunpack.c.h.b16 %v4366
      %v5456 = vunpack.c.l.b16 %v4367
      %v5457 = vunpack.c.h.b16 %v4367
      %v5458 = vunpack.c.l.b16 %v4368
      %v5459 = vunpack.c.h.b16 %v4368
      %v5460 = vunpack.c.l.b16 %v4369
      %v5461 = vunpack.c.h.b16 %v4369
      %v5462 = vunpack.c.l.b16 %v4370
      %v5463 = vunpack.c.h.b16 %v4370
      %v5464 = vunpack.c.l.b16 %v4371
      %v5465 = vunpack.c.h.b16 %v4371
      %v5466 = vunpack.c.l.b16 %v4372
      %v5467 = vunpack.c.h.b16 %v4372
      %v5468 = vunpack.c.l.b16 %v4373
      %v5469 = vunpack.c.h.b16 %v4373
      %v5470 = vunpack.c.l.b16 %v4374
      %v5471 = vunpack.c.h.b16 %v4374
      %v5472 = vunpack.c.l.b16 %v4375
      %v5473 = vunpack.c.h.b16 %v4375
      %v5474 = vunpack.c.l.b16 %v4376
      %v5475 = vunpack.c.h.b16 %v4376
      %v5476 = vunpack.c.l.b16 %v4377
      %v5477 = vunpack.c.h.b16 %v4377
      %v5478 = vunpack.c.l.b16 %v4378
      %v5479 = vunpack.c.h.b16 %v4378
      %v5480 = vunpack.c.l.b16 %v4379
      %v5481 = vunpack.c.h.b16 %v4379
      %v5482 = vunpack.c.l.b16 %v4380
      %v5483 = vunpack.c.h.b16 %v4380
      %v5484 = vunpack.c.l.b16 %v4381
      %v5485 = vunpack.c.h.b16 %v4381
      %v5486 = vunpack.c.l.b16 %v4382
      %v5487 = vunpack.c.h.b16 %v4382
      %v5488 = vunpack.c.l.b16 %v4383
      %v5489 = vunpack.c.h.b16 %v4383
      %v5490 = vunpack.c.l.b16 %v4384
      %v5491 = vunpack.c.h.b16 %v4384
      %v5492 = vunpack.c.l.b16 %v4385
      %v5493 = vunpack.c.h.b16 %v4385
      %v5494 = vunpack.c.l.b16 %v4386
      %v5495 = vunpack.c.h.b16 %v4386
      %v5496 = vunpack.c.l.b16 %v4387
      %v5497 = vunpack.c.h.b16 %v4387
      %v5498 = vunpack.c.l.b16 %v4388
      %v5499 = vunpack.c.h.b16 %v4388
      %v5500 = vunpack.c.l.b16 %v4389
      %v5501 = vunpack.c.h.b16 %v4389
      %v5502 = vunpack.c.l.b16 %v4390
      %v5503 = vunpack.c.h.b16 %v4390
      %v5504 = vunpack.c.l.b16 %v4391
      %v5505 = vunpack.c.h.b16 %v4391
      %v5506 = vunpack.c.l.b16 %v4392
      %v5507 = vunpack.c.h.b16 %v4392
      %v5508 = vunpack.c.l.b16 %v4393
      %v5509 = vunpack.c.h.b16 %v4393
      %v5510 = vunpack.c.l.b16 %v4394
      %v5511 = vunpack.c.h.b16 %v4394
      %v5512 = vunpack.c.l.b16 %v4395
      %v5513 = vunpack.c.h.b16 %v4395
      %v5514 = vunpack.c.l.b16 %v4396
      %v5515 = vunpack.c.h.b16 %v4396
      %v5516 = vunpack.c.l.b16 %v4397
      %v5517 = vunpack.c.h.b16 %v4397
      %v5518 = vunpack.c.l.b16 %v4398
      %v5519 = vunpack.c.h.b16 %v4398
      %v5520 = vunpack.c.l.b16 %v4399
      %v5521 = vunpack.c.h.b16 %v4399
      %v5522 = vunpack.c.l.b16 %v4400
      %v5523 = vunpack.c.h.b16 %v4400
      %v5524 = vunpack.c.l.b16 %v4401
      %v5525 = vunpack.c.h.b16 %v4401
      %v5526 = vunpack.c.l.b16 %v4402
      %v5527 = vunpack.c.h.b16 %v4402
      %v5528 = vunpack.c.l.b16 %v4403
      %v5529 = vunpack.c.h.b16 %v4403
      %v5530 = vunpack.c.l.b16 %v4404
      %v5531 = vunpack.c.h.b16 %v4404
      %v5532 = vunpack.c.l.b16 %v4405
      %v5533 = vunpack.c.h.b16 %v4405
      %v5534 = vunpack.c.l.b16 %v4406
      %v5535 = vunpack.c.h.b16 %v4406
      %v5536 = vunpack.c.l.b16 %v4407
      %v5537 = vunpack.c.h.b16 %v4407
      %v5538 = vunpack.c.l.b16 %v4408
      %v5539 = vunpack.c.h.b16 %v4408
      %v5540 = vunpack.c.l.b16 %v4409
      %v5541 = vunpack.c.h.b16 %v4409
      %v5542 = vunpack.c.l.b16 %v4410
      %v5543 = vunpack.c.h.b16 %v4410
      %v5544 = vunpack.c.l.b16 %v4411
      %v5545 = vunpack.c.h.b16 %v4411
      %v5546 = vunpack.c.l.b16 %v4412
      %v5547 = vunpack.c.h.b16 %v4412
      %v5548 = vunpack.c.l.b16 %v4413
      %v5549 = vunpack.c.h.b16 %v4413
      %v5550 = vunpack.c.l.b16 %v4414
      %v5551 = vunpack.c.h.b16 %v4414
      %v5552 = vunpack.c.l.b16 %v4415
      %v5553 = vunpack.c.h.b16 %v4415
      %v5554 = vunpack.c.l.b16 %v4416
      %v5555 = vunpack.c.h.b16 %v4416
      %v5556 = vunpack.c.l.b16 %v4417
      %v5557 = vunpack.c.h.b16 %v4417
      %v5558 = vunpack.c.l.b16 %v4418
      %v5559 = vunpack.c.h.b16 %v4418
      %v5560 = vunpack.c.l.b16 %v4419
      %v5561 = vunpack.c.h.b16 %v4419
      %v5562 = vunpack.c.l.b16 %v4420
      %v5563 = vunpack.c.h.b16 %v4420
      %v5564 = vunpack.c.l.b16 %v4421
      %v5565 = vunpack.c.h.b16 %v4421
      %v5566 = vunpack.c.l.b16 %v4422
      %v5567 = vunpack.c.h.b16 %v4422
      %v5568 = vunpack.c.l.b16 %v4423
      %v5569 = vunpack.c.h.b16 %v4423
      %v5570 = vunpack.c.l.b16 %v4424
      %v5571 = vunpack.c.h.b16 %v4424
      %v5572 = vunpack.c.l.b16 %v4425
      %v5573 = vunpack.c.h.b16 %v4425
      %v5574 = vunpack.c.l.b16 %v4426
      %v5575 = vunpack.c.h.b16 %v4426
      %v5576 = vunpack.c.l.b16 %v4427
      %v5577 = vunpack.c.h.b16 %v4427
      %v5578 = vunpack.c.l.b16 %v4428
      %v5579 = vunpack.c.h.b16 %v4428
      %v5580 = vunpack.c.l.b16 %v4429
      %v5581 = vunpack.c.h.b16 %v4429
      %v5582 = vunpack.c.l.b16 %v4430
      %v5583 = vunpack.c.h.b16 %v4430
      %v5584 = vunpack.c.l.b16 %v4431
      %v5585 = vunpack.c.h.b16 %v4431
      %v5586 = vunpack.c.l.b16 %v4432
      %v5587 = vunpack.c.h.b16 %v4432
      %v5588 = vunpack.c.l.b16 %v4433
      %v5589 = vunpack.c.h.b16 %v4433
      %v5590 = vunpack.c.l.b16 %v4434
      %v5591 = vunpack.c.h.b16 %v4434
      %v5592 = vunpack.c.l.b16 %v4435
      %v5593 = vunpack.c.h.b16 %v4435
      %v5594 = vunpack.c.l.b16 %v4436
      %v5595 = vunpack.c.h.b16 %v4436
      %v5596 = vunpack.c.l.b16 %v4437
      %v5597 = vunpack.c.h.b16 %v4437
      %v5598 = vunpack.c.l.b16 %v4438
      %v5599 = vunpack.c.h.b16 %v4438
      %v5600 = vunpack.c.l.b16 %v4439
      %v5601 = vunpack.c.h.b16 %v4439
      %v5602 = vunpack.c.l.b16 %v4440
      %v5603 = vunpack.c.h.b16 %v4440
      %v5604 = vunpack.c.l.b16 %v4441
      %v5605 = vunpack.c.h.b16 %v4441
      %v5606 = vunpack.c.l.b16 %v4442
      %v5607 = vunpack.c.h.b16 %v4442
      %v5608 = vunpack.c.l.b16 %v4443
      %v5609 = vunpack.c.h.b16 %v4443
      %v5610 = vunpack.c.l.b16 %v4444
      %v5611 = vunpack.c.h.b16 %v4444
      %v5612 = vunpack.c.l.b16 %v4445
      %v5613 = vunpack.c.h.b16 %v4445
      %v5614 = vunpack.c.l.b16 %v4446
      %v5615 = vunpack.c.h.b16 %v4446
      %v5616 = vunpack.c.l.b16 %v4447
      %v5617 = vunpack.c.h.b16 %v4447
      %v5618 = vunpack.c.l.b16 %v4448
      %v5619 = vunpack.c.h.b16 %v4448
      %v5620 = vunpack.c.l.b16 %v4449
      %v5621 = vunpack.c.h.b16 %v4449
      %v5622 = vunpack.c.l.b16 %v4450
      %v5623 = vunpack.c.h.b16 %v4450
      %v5624 = vunpack.c.l.b16 %v4451
      %v5625 = vunpack.c.h.b16 %v4451
      %v5626 = vunpack.c.l.b16 %v4452
      %v5627 = vunpack.c.h.b16 %v4452
      %v5628 = vunpack.c.l.b16 %v4453
      %v5629 = vunpack.c.h.b16 %v4453
      %v5630 = vunpack.c.l.b16 %v4454
      %v5631 = vunpack.c.h.b16 %v4454
      %v5632 = vunpack.c.l.b16 %v4455
      %v5633 = vunpack.c.h.b16 %v4455
      %v5634 = vunpack.c.l.b16 %v4456
      %v5635 = vunpack.c.h.b16 %v4456
      %v5636 = vunpack.c.l.b16 %v4457
      %v5637 = vunpack.c.h.b16 %v4457
      %v5638 = vunpack.c.l.b16 %v4458
      %v5639 = vunpack.c.h.b16 %v4458
      %v5640 = vunpack.c.l.b16 %v4459
      %v5641 = vunpack.c.h.b16 %v4459
      %v5642 = vunpack.c.l.b16 %v4460
      %v5643 = vunpack.c.h.b16 %v4460
      %v5644 = vunpack.c.l.b16 %v4461
      %v5645 = vunpack.c.h.b16 %v4461
      %v5646 = vunpack.c.l.b16 %v4462
      %v5647 = vunpack.c.h.b16 %v4462
      %v5648 = vunpack.c.l.b16 %v4463
      %v5649 = vunpack.c.h.b16 %v4463
      %v5650 = vunpack.c.l.b16 %v4464
      %v5651 = vunpack.c.h.b16 %v4464
      %v5652 = vunpack.c.l.b16 %v4465
      %v5653 = vunpack.c.h.b16 %v4465
      %v5654 = vunpack.c.l.b16 %v4466
      %v5655 = vunpack.c.h.b16 %v4466
      %v5656 = vunpack.c.l.b16 %v4467
      %v5657 = vunpack.c.h.b16 %v4467
      %v5658 = vunpack.c.l.b16 %v4468
      %v5659 = vunpack.c.h.b16 %v4468
      %v5660 = vunpack.c.l.b16 %v4469
      %v5661 = vunpack.c.h.b16 %v4469
      %v5662 = vunpack.c.l.b16 %v4470
      %v5663 = vunpack.c.h.b16 %v4470
      %v5664 = vunpack.c.l.b16 %v4471
      %v5665 = vunpack.c.h.b16 %v4471
      %v5666 = vunpack.c.l.b16 %v4472
      %v5667 = vunpack.c.h.b16 %v4472
      %v5668 = vunpack.c.l.b16 %v4473
      %v5669 = vunpack.c.h.b16 %v4473
      %v5670 = vunpack.c.l.b16 %v4474
      %v5671 = vunpack.c.h.b16 %v4474
      %v5672 = vunpack.c.l.b16 %v4475
      %v5673 = vunpack.c.h.b16 %v4475
      %v5674 = vunpack.c.l.b16 %v4476
      %v5675 = vunpack.c.h.b16 %v4476
      %v5676 = vunpack.c.l.b16 %v4477
      %v5677 = vunpack.c.h.b16 %v4477
      %v5678 = vunpack.c.l.b16 %v4478
      %v5679 = vunpack.c.h.b16 %v4478
      %v5680 = vunpack.c.l.b16 %v4479
      %v5681 = vunpack.c.h.b16 %v4479
      %v5682 = vunpack.c.l.b16 %v4480
      %v5683 = vunpack.c.h.b16 %v4480
      %v5684 = vunpack.c.l.b16 %v4481
      %v5685 = vunpack.c.h.b16 %v4481
      %v5686 = vunpack.c.l.b16 %v4482
      %v5687 = vunpack.c.h.b16 %v4482
      %v5688 = vunpack.c.l.b16 %v4483
      %v5689 = vunpack.c.h.b16 %v4483
      %v5690 = vunpack.c.l.b16 %v4484
      %v5691 = vunpack.c.h.b16 %v4484
      %v5692 = vunpack.c.l.b16 %v4485
      %v5693 = vunpack.c.h.b16 %v4485
      %v5694 = vunpack.c.l.b16 %v4486
      %v5695 = vunpack.c.h.b16 %v4486
      %v5696 = vunpack.c.l.b16 %v4487
      %v5697 = vunpack.c.h.b16 %v4487
      %v5698 = vunpack.c.l.b16 %v4488
      %v5699 = vunpack.c.h.b16 %v4488
      %v5700 = vunpack.c.l.b16 %v4489
      %v5701 = vunpack.c.h.b16 %v4489
      %v5702 = vunpack.c.l.b16 %v4490
      %v5703 = vunpack.c.h.b16 %v4490
      %v5704 = vunpack.c.l.b16 %v4491
      %v5705 = vunpack.c.h.b16 %v4491
      %v5706 = vunpack.c.l.b16 %v4492
      %v5707 = vunpack.c.h.b16 %v4492
      %v5708 = vunpack.c.l.b16 %v4493
      %v5709 = vunpack.c.h.b16 %v4493
      %v5710 = vunpack.c.l.b16 %v4494
      %v5711 = vunpack.c.h.b16 %v4494
      %v5712 = vunpack.c.l.b16 %v4495
      %v5713 = vunpack.c.h.b16 %v4495
      %v5714 = vunpack.c.l.b16 %v4496
      %v5715 = vunpack.c.h.b16 %v4496
      %v5716 = vunpack.c.l.b16 %v4497
      %v5717 = vunpack.c.h.b16 %v4497
      %v5718 = vunpack.c.l.b16 %v4498
      %v5719 = vunpack.c.h.b16 %v4498
      %v5720 = vunpack.c.l.b16 %v4499
      %v5721 = vunpack.c.h.b16 %v4499
      %v5722 = vunpack.c.l.b16 %v4500
      %v5723 = vunpack.c.h.b16 %v4500
      %v5724 = vunpack.c.l.b16 %v4501
      %v5725 = vunpack.c.h.b16 %v4501
      %v5726 = vunpack.c.l.b16 %v4502
      %v5727 = vunpack.c.h.b16 %v4502
      %v5728 = vunpack.c.l.b16 %v4503
      %v5729 = vunpack.c.h.b16 %v4503
      %v5730 = vunpack.c.l.b16 %v4504
      %v5731 = vunpack.c.h.b16 %v4504
      %v5732 = vunpack.c.l.b16 %v4505
      %v5733 = vunpack.c.h.b16 %v4505
      %v5734 = vunpack.c.l.b16 %v4506
      %v5735 = vunpack.c.h.b16 %v4506
      %v5736 = vunpack.c.l.b16 %v4507
      %v5737 = vunpack.c.h.b16 %v4507
      %v5738 = vunpack.c.l.b16 %v4508
      %v5739 = vunpack.c.h.b16 %v4508
      %v5740 = vunpack.c.l.b16 %v4509
      %v5741 = vunpack.c.h.b16 %v4509
      %v5742 = vunpack.c.l.b16 %v4510
      %v5743 = vunpack.c.h.b16 %v4510
      %v5744 = vunpack.c.l.b16 %v4511
      %v5745 = vunpack.c.h.b16 %v4511
      %v5746 = vunpack.c.l.b16 %v4512
      %v5747 = vunpack.c.h.b16 %v4512
      %v5748 = vunpack.c.l.b16 %v4513
      %v5749 = vunpack.c.h.b16 %v4513
      %v5750 = vunpack.c.l.b16 %v4514
      %v5751 = vunpack.c.h.b16 %v4514
      %v5752 = vunpack.c.l.b16 %v4515
      %v5753 = vunpack.c.h.b16 %v4515
      %v5754 = vunpack.c.l.b16 %v4516
      %v5755 = vunpack.c.h.b16 %v4516
      %v5756 = vunpack.c.l.b16 %v4517
      %v5757 = vunpack.c.h.b16 %v4517
      %v5758 = vunpack.c.l.b16 %v4518
      %v5759 = vunpack.c.h.b16 %v4518
      %v5760 = vunpack.c.l.b16 %v4519
      %v5761 = vunpack.c.h.b16 %v4519
      %v5762 = vunpack.c.l.b16 %v4520
      %v5763 = vunpack.c.h.b16 %v4520
      %v5764 = vunpack.c.l.b16 %v4521
      %v5765 = vunpack.c.h.b16 %v4521
      %v5766 = vunpack.c.l.b16 %v4522
      %v5767 = vunpack.c.h.b16 %v4522
      %v5768 = vunpack.c.l.b16 %v4523
      %v5769 = vunpack.c.h.b16 %v4523
      %v5770 = vunpack.c.l.b16 %v4524
      %v5771 = vunpack.c.h.b16 %v4524
      %v5772 = vunpack.c.l.b16 %v4525
      %v5773 = vunpack.c.h.b16 %v4525
      %v5774 = vunpack.c.l.b16 %v4526
      %v5775 = vunpack.c.h.b16 %v4526
      %v5776 = vunpack.c.l.b16 %v4527
      %v5777 = vunpack.c.h.b16 %v4527
      %v5778 = vunpack.c.l.b16 %v4528
      %v5779 = vunpack.c.h.b16 %v4528
      %v5780 = vunpack.c.l.b16 %v4529
      %v5781 = vunpack.c.h.b16 %v4529
      %v5782 = vunpack.c.l.b16 %v4530
      %v5783 = vunpack.c.h.b16 %v4530
      %v5784 = vunpack.c.l.b16 %v4531
      %v5785 = vunpack.c.h.b16 %v4531
      %v5786 = vunpack.c.l.b16 %v4532
      %v5787 = vunpack.c.h.b16 %v4532
      %v5788 = vunpack.c.l.b16 %v4533
      %v5789 = vunpack.c.h.b16 %v4533
      %v5790 = vunpack.c.l.b16 %v4534
      %v5791 = vunpack.c.h.b16 %v4534
      %v5792 = vunpack.c.l.b16 %v4535
      %v5793 = vunpack.c.h.b16 %v4535
      %v5794 = vunpack.c.l.b16 %v4536
      %v5795 = vunpack.c.h.b16 %v4536
      %v5796 = vunpack.c.l.b16 %v4537
      %v5797 = vunpack.c.h.b16 %v4537
      %v5798 = vunpack.c.l.b16 %v4538
      %v5799 = vunpack.c.h.b16 %v4538
      %v5800 = vunpack.c.l.b16 %v4539
      %v5801 = vunpack.c.h.b16 %v4539
      %v5802 = vunpack.c.l.b16 %v4540
      %v5803 = vunpack.c.h.b16 %v4540
      %v5804 = vunpack.c.l.b16 %v4541
      %v5805 = vunpack.c.h.b16 %v4541
      %v5806 = vunpack.c.l.b16 %v4542
      %v5807 = vunpack.c.h.b16 %v4542
      %v5808 = vunpack.c.l.b16 %v4543
      %v5809 = vunpack.c.h.b16 %v4543
      %v5810 = vunpack.c.l.b16 %v4544
      %v5811 = vunpack.c.h.b16 %v4544
      %v5812 = vunpack.c.l.b16 %v4545
      %v5813 = vunpack.c.h.b16 %v4545
      %v5814 = vunpack.c.l.b16 %v4546
      %v5815 = vunpack.c.h.b16 %v4546
      %v5816 = vunpack.c.l.b16 %v4547
      %v5817 = vunpack.c.h.b16 %v4547
      %v5818 = vunpack.c.l.b16 %v4548
      %v5819 = vunpack.c.h.b16 %v4548
      %v5820 = vunpack.c.l.b16 %v4549
      %v5821 = vunpack.c.h.b16 %v4549
      %v5822 = vunpack.c.l.b16 %v4550
      %v5823 = vunpack.c.h.b16 %v4550
      %v5824 = vunpack.c.l.b16 %v4551
      %v5825 = vunpack.c.h.b16 %v4551
      %v5826 = vunpack.c.l.b16 %v4552
      %v5827 = vunpack.c.h.b16 %v4552
      %v5828 = vunpack.c.l.b16 %v4553
      %v5829 = vunpack.c.h.b16 %v4553
      %v5830 = vunpack.c.l.b16 %v4554
      %v5831 = vunpack.c.h.b16 %v4554
      %v5832 = vunpack.c.l.b16 %v4555
      %v5833 = vunpack.c.h.b16 %v4555
      %v5834 = vunpack.c.l.b16 %v4556
      %v5835 = vunpack.c.h.b16 %v4556
      %v5836 = vunpack.c.l.b16 %v4557
      %v5837 = vunpack.c.h.b16 %v4557
      %v5838 = vunpack.c.l.b16 %v4558
      %v5839 = vunpack.c.h.b16 %v4558
      %v5840 = vunpack.c.l.b16 %v4559
      %v5841 = vunpack.c.h.b16 %v4559
      %v5842 = vunpack.c.l.b16 %v4560
      %v5843 = vunpack.c.h.b16 %v4560
      %v5844 = vunpack.c.l.b16 %v4561
      %v5845 = vunpack.c.h.b16 %v4561
      %v5846 = vunpack.c.l.b16 %v4562
      %v5847 = vunpack.c.h.b16 %v4562
      %v5848 = vunpack.c.l.b16 %v4563
      %v5849 = vunpack.c.h.b16 %v4563
      %v5850 = vunpack.c.l.b16 %v4564
      %v5851 = vunpack.c.h.b16 %v4564
      %v5852 = vunpack.c.l.b16 %v4565
      %v5853 = vunpack.c.h.b16 %v4565
      %v5854 = vunpack.c.l.b16 %v4566
      %v5855 = vunpack.c.h.b16 %v4566
      %v5856 = vunpack.c.l.b16 %v4567
      %v5857 = vunpack.c.h.b16 %v4567
      %v5858 = vunpack.c.l.b16 %v4568
      %v5859 = vunpack.c.h.b16 %v4568
      %v5860 = vunpack.c.l.b16 %v4569
      %v5861 = vunpack.c.h.b16 %v4569
      %v5862 = vunpack.c.l.b16 %v4570
      %v5863 = vunpack.c.h.b16 %v4570
      %v5864 = vunpack.c.l.b16 %v4571
      %v5865 = vunpack.c.h.b16 %v4571
      %v5866 = vunpack.c.l.b16 %v4572
      %v5867 = vunpack.c.h.b16 %v4572
      %v5868 = vunpack.c.l.b16 %v4573
      %v5869 = vunpack.c.h.b16 %v4573
      %v5870 = vunpack.c.l.b16 %v4574
      %v5871 = vunpack.c.h.b16 %v4574
      %v5872 = vunpack.c.l.b16 %v4575
      %v5873 = vunpack.c.h.b16 %v4575
      %v5874 = vunpack.c.l.b16 %v4576
      %v5875 = vunpack.c.h.b16 %v4576
      %v5876 = vunpack.c.l.b16 %v4577
      %v5877 = vunpack.c.h.b16 %v4577
      %v5878 = vunpack.c.l.b16 %v4578
      %v5879 = vunpack.c.h.b16 %v4578
      %v5880 = vunpack.c.l.b16 %v4579
      %v5881 = vunpack.c.h.b16 %v4579
      %v5882 = vunpack.c.l.b16 %v4580
      %v5883 = vunpack.c.h.b16 %v4580
      %v5884 = vunpack.c.l.b16 %v4581
      %v5885 = vunpack.c.h.b16 %v4581
      %v5886 = vunpack.c.l.b16 %v4582
      %v5887 = vunpack.c.h.b16 %v4582
      %v5888 = vunpack.c.l.b16 %v4583
      %v5889 = vunpack.c.h.b16 %v4583
      %v5890 = vunpack.c.l.b16 %v4584
      %v5891 = vunpack.c.h.b16 %v4584
      %v5892 = vunpack.c.l.b16 %v4585
      %v5893 = vunpack.c.h.b16 %v4585
      %v5894 = vunpack.c.l.b16 %v4586
      %v5895 = vunpack.c.h.b16 %v4586
      %v5896 = vunpack.c.l.b16 %v4587
      %v5897 = vunpack.c.h.b16 %v4587
      %v5898 = vunpack.c.l.b16 %v4588
      %v5899 = vunpack.c.h.b16 %v4588
      %v5900 = vunpack.c.l.b16 %v4589
      %v5901 = vunpack.c.h.b16 %v4589
      %v5902 = vunpack.c.l.b16 %v4590
      %v5903 = vunpack.c.h.b16 %v4590
      %v5904 = vunpack.c.l.b16 %v4591
      %v5905 = vunpack.c.h.b16 %v4591
      %v5906 = vunpack.c.l.b16 %v4592
      %v5907 = vunpack.c.h.b16 %v4592
      %v5908 = vunpack.c.l.b16 %v4593
      %v5909 = vunpack.c.h.b16 %v4593
      %v5910 = vunpack.c.l.b16 %v4594
      %v5911 = vunpack.c.h.b16 %v4594
      %v5912 = vunpack.c.l.b16 %v4595
      %v5913 = vunpack.c.h.b16 %v4595
      %v5914 = vunpack.c.l.b16 %v4596
      %v5915 = vunpack.c.h.b16 %v4596
      %v5916 = vunpack.c.l.b16 %v4597
      %v5917 = vunpack.c.h.b16 %v4597
      %v5918 = vunpack.c.l.b16 %v4598
      %v5919 = vunpack.c.h.b16 %v4598
      %v5920 = vunpack.c.l.b16 %v4599
      %v5921 = vunpack.c.h.b16 %v4599
      %v5922 = vunpack.c.l.b16 %v4600
      %v5923 = vunpack.c.h.b16 %v4600
      %v5924 = vunpack.c.l.b16 %v4601
      %v5925 = vunpack.c.h.b16 %v4601
      %v5926 = vunpack.c.l.b16 %v4602
      %v5927 = vunpack.c.h.b16 %v4602
      %v5928 = vunpack.c.l.b16 %v4603
      %v5929 = vunpack.c.h.b16 %v4603
      %v5930 = vunpack.c.l.b16 %v4604
      %v5931 = vunpack.c.h.b16 %v4604
      %v5932 = vunpack.c.l.b16 %v4605
      %v5933 = vunpack.c.h.b16 %v4605
      %v5934 = vunpack.c.l.b16 %v4606
      %v5935 = vunpack.c.h.b16 %v4606
      %v5936 = vunpack.c.l.b16 %v4607
      %v5937 = vunpack.c.h.b16 %v4607
      %v5938 = vunpack.c.l.b16 %v4608
      %v5939 = vunpack.c.h.b16 %v4608
      %v5940 = vunpack.c.l.b16 %v4609
      %v5941 = vunpack.c.h.b16 %v4609
      %v5942 = vunpack.c.l.b16 %v4610
      %v5943 = vunpack.c.h.b16 %v4610
      %v5944 = vunpack.c.l.b16 %v4611
      %v5945 = vunpack.c.h.b16 %v4611
      %v5946 = vunpack.c.l.b16 %v4612
      %v5947 = vunpack.c.h.b16 %v4612
      %v5948 = vunpack.c.l.b16 %v4613
      %v5949 = vunpack.c.h.b16 %v4613
      %v5950 = vunpack.c.l.b16 %v4614
      %v5951 = vunpack.c.h.b16 %v4614
      %v5952 = vunpack.c.l.b16 %v4615
      %v5953 = vunpack.c.h.b16 %v4615
      %v5954 = vunpack.c.l.b16 %v4616
      %v5955 = vunpack.c.h.b16 %v4616
      %v5956 = vunpack.c.l.b16 %v4617
      %v5957 = vunpack.c.h.b16 %v4617
      %v5958 = vunpack.c.l.b16 %v4618
      %v5959 = vunpack.c.h.b16 %v4618
      %v5960 = vunpack.c.l.b16 %v4619
      %v5961 = vunpack.c.h.b16 %v4619
      %v5962 = vunpack.c.l.b16 %v4620
      %v5963 = vunpack.c.h.b16 %v4620
      %v5964 = vunpack.c.l.b16 %v4621
      %v5965 = vunpack.c.h.b16 %v4621
      %v5966 = vunpack.c.l.b16 %v4622
      %v5967 = vunpack.c.h.b16 %v4622
      %v5968 = vunpack.c.l.b16 %v4623
      %v5969 = vunpack.c.h.b16 %v4623
      %v5970 = vunpack.c.l.b16 %v4624
      %v5971 = vunpack.c.h.b16 %v4624
      %v5972 = vunpack.c.l.b16 %v4625
      %v5973 = vunpack.c.h.b16 %v4625
      %v5974 = vunpack.c.l.b16 %v4626
      %v5975 = vunpack.c.h.b16 %v4626
      %v5976 = vunpack.c.l.b16 %v4627
      %v5977 = vunpack.c.h.b16 %v4627
      %v5978 = vunpack.c.l.b16 %v4628
      %v5979 = vunpack.c.h.b16 %v4628
      %v5980 = vunpack.c.l.b16 %v4629
      %v5981 = vunpack.c.h.b16 %v4629
      %v5982 = vunpack.c.l.b16 %v4630
      %v5983 = vunpack.c.h.b16 %v4630
      %v5984 = vunpack.c.l.b16 %v4631
      %v5985 = vunpack.c.h.b16 %v4631
      %v5986 = vunpack.c.l.b16 %v4632
      %v5987 = vunpack.c.h.b16 %v4632
      %v5988 = vunpack.c.l.b16 %v4633
      %v5989 = vunpack.c.h.b16 %v4633
      %v5990 = vunpack.c.l.b16 %v4634
      %v5991 = vunpack.c.h.b16 %v4634
      %v5992 = vunpack.c.l.b16 %v4635
      %v5993 = vunpack.c.h.b16 %v4635
      %v5994 = vunpack.c.l.b16 %v4636
      %v5995 = vunpack.c.h.b16 %v4636
      %v5996 = vunpack.c.l.b16 %v4637
      %v5997 = vunpack.c.h.b16 %v4637
      %v5998 = vunpack.c.l.b16 %v4638
      %v5999 = vunpack.c.h.b16 %v4638
      %v6000 = vunpack.c.l.b16 %v4639
      %v6001 = vunpack.c.h.b16 %v4639
      %v6002 = vunpack.c.l.b16 %v4640
      %v6003 = vunpack.c.h.b16 %v4640
      %v6004 = vunpack.c.l.b16 %v4641
      %v6005 = vunpack.c.h.b16 %v4641
      %v6006 = vunpack.c.l.b16 %v4642
      %v6007 = vunpack.c.h.b16 %v4642
      %v6008 = vunpack.c.l.b16 %v4643
      %v6009 = vunpack.c.h.b16 %v4643
      %v6010 = vunpack.c.l.b16 %v4644
      %v6011 = vunpack.c.h.b16 %v4644
      %v6012 = vunpack.c.l.b16 %v4645
      %v6013 = vunpack.c.h.b16 %v4645
      %v6014 = vunpack.c.l.b16 %v4646
      %v6015 = vunpack.c.h.b16 %v4646
      %v6016 = vunpack.c.l.b16 %v4647
      %v6017 = vunpack.c.h.b16 %v4647
      %v6018 = vunpack.c.l.b16 %v4648
      %v6019 = vunpack.c.h.b16 %v4648
      %v6020 = vunpack.c.l.b16 %v4649
      %v6021 = vunpack.c.h.b16 %v4649
      %v6022 = vunpack.c.l.b16 %v4650
      %v6023 = vunpack.c.h.b16 %v4650
      %v6024 = vunpack.c.l.b16 %v4651
      %v6025 = vunpack.c.h.b16 %v4651
      %v6026 = vunpack.c.l.b16 %v4652
      %v6027 = vunpack.c.h.b16 %v4652
      %v6028 = vunpack.c.l.b16 %v4653
      %v6029 = vunpack.c.h.b16 %v4653
      %v6030 = vunpack.c.l.b16 %v4654
      %v6031 = vunpack.c.h.b16 %v4654
      %v6032 = vunpack.c.l.b16 %v4655
      %v6033 = vunpack.c.h.b16 %v4655
      %v6034 = vunpack.c.l.b16 %v4656
      %v6035 = vunpack.c.h.b16 %v4656
      %v6036 = vunpack.c.l.b16 %v4657
      %v6037 = vunpack.c.h.b16 %v4657
      %v6038 = vunpack.c.l.b16 %v4658
      %v6039 = vunpack.c.h.b16 %v4658
      %v6040 = vunpack.c.l.b16 %v4659
      %v6041 = vunpack.c.h.b16 %v4659
      %v6042 = vunpack.c.l.b16 %v4660
      %v6043 = vunpack.c.h.b16 %v4660
      %v6044 = vunpack.c.l.b16 %v4661
      %v6045 = vunpack.c.h.b16 %v4661
      %v6046 = vunpack.c.l.b16 %v4662
      %v6047 = vunpack.c.h.b16 %v4662
      %v6048 = vunpack.c.l.b16 %v4663
      %v6049 = vunpack.c.h.b16 %v4663
      %v6050 = vunpack.c.l.b16 %v4664
      %v6051 = vunpack.c.h.b16 %v4664
      %v6052 = vunpack.c.l.b16 %v4665
      %v6053 = vunpack.c.h.b16 %v4665
      %v6054 = vunpack.c.l.b16 %v4666
      %v6055 = vunpack.c.h.b16 %v4666
      %v6056 = vunpack.c.l.b16 %v4667
      %v6057 = vunpack.c.h.b16 %v4667
      %v6058 = vunpack.c.l.b16 %v4668
      %v6059 = vunpack.c.h.b16 %v4668
      %v6060 = vunpack.c.l.b16 %v4669
      %v6061 = vunpack.c.h.b16 %v4669
      %v6062 = vunpack.c.l.b16 %v4670
      %v6063 = vunpack.c.h.b16 %v4670
      %v6064 = vunpack.c.l.b16 %v4671
      %v6065 = vunpack.c.h.b16 %v4671
      %v6066 = vunpack.c.l.b16 %v4672
      %v6067 = vunpack.c.h.b16 %v4672
      %v6068 = vunpack.c.l.b16 %v4673
      %v6069 = vunpack.c.h.b16 %v4673
      %v6070 = vunpack.c.l.b16 %v4674
      %v6071 = vunpack.c.h.b16 %v4674
      %v6072 = vunpack.c.l.b16 %v4675
      %v6073 = vunpack.c.h.b16 %v4675
      %v6074 = vunpack.c.l.b16 %v4676
      %v6075 = vunpack.c.h.b16 %v4676
      %v6076 = vunpack.c.l.b16 %v4677
      %v6077 = vunpack.c.h.b16 %v4677
      %v6078 = vunpack.c.l.b16 %v4678
      %v6079 = vunpack.c.h.b16 %v4678
      %v6080 = vunpack.c.l.b16 %v4679
      %v6081 = vunpack.c.h.b16 %v4679
      %v6082 = vunpack.c.l.b16 %v4680
      %v6083 = vunpack.c.h.b16 %v4680
      %v6084 = vunpack.c.l.b16 %v4681
      %v6085 = vunpack.c.h.b16 %v4681
      %v6086 = vunpack.c.l.b16 %v4682
      %v6087 = vunpack.c.h.b16 %v4682
      %v6088 = vunpack.c.l.b16 %v4683
      %v6089 = vunpack.c.h.b16 %v4683
      %v6090 = vunpack.c.l.b16 %v4684
      %v6091 = vunpack.c.h.b16 %v4684
      %v6092 = vunpack.c.l.b16 %v4685
      %v6093 = vunpack.c.h.b16 %v4685
      %v6094 = vunpack.c.l.b16 %v4686
      %v6095 = vunpack.c.h.b16 %v4686
      %v6096 = vunpack.c.l.b16 %v4687
      %v6097 = vunpack.c.h.b16 %v4687
      %v6098 = vunpack.c.l.b16 %v4688
      %v6099 = vunpack.c.h.b16 %v4688
      %v6100 = vunpack.c.l.b16 %v4689
      %v6101 = vunpack.c.h.b16 %v4689
      %v6102 = vunpack.c.l.b16 %v4690
      %v6103 = vunpack.c.h.b16 %v4690
      %v6104 = vunpack.c.l.b16 %v4691
      %v6105 = vunpack.c.h.b16 %v4691
      %v6106 = vunpack.c.l.b16 %v4692
      %v6107 = vunpack.c.h.b16 %v4692
      %v6108 = vunpack.c.l.b16 %v4693
      %v6109 = vunpack.c.h.b16 %v4693
      %v6110 = vunpack.c.l.b16 %v4694
      %v6111 = vunpack.c.h.b16 %v4694
      %v6112 = vunpack.c.l.b16 %v4695
      %v6113 = vunpack.c.h.b16 %v4695
      %v6114 = vunpack.c.l.b16 %v4696
      %v6115 = vunpack.c.h.b16 %v4696
      %v6116 = vunpack.c.l.b16 %v4697
      %v6117 = vunpack.c.h.b16 %v4697
      %v6118 = vunpack.c.l.b16 %v4698
      %v6119 = vunpack.c.h.b16 %v4698
      %v6120 = vunpack.c.l.b16 %v4699
      %v6121 = vunpack.c.h.b16 %v4699
      %v6122 = vunpack.c.l.b16 %v4700
      %v6123 = vunpack.c.h.b16 %v4700
      %v6124 = vunpack.c.l.b16 %v4701
      %v6125 = vunpack.c.h.b16 %v4701
      %v6126 = vunpack.c.l.b16 %v4702
      %v6127 = vunpack.c.h.b16 %v4702
      %v6128 = vunpack.c.l.b16 %v4703
      %v6129 = vunpack.c.h.b16 %v4703
      %v6130 = vunpack.c.l.b16 %v4704
      %v6131 = vunpack.c.h.b16 %v4704
      %v6132 = vunpack.c.l.b16 %v4705
      %v6133 = vunpack.c.h.b16 %v4705
      %v6134 = vunpack.c.l.b16 %v4706
      %v6135 = vunpack.c.h.b16 %v4706
      %v6136 = vunpack.c.l.b16 %v4707
      %v6137 = vunpack.c.h.b16 %v4707
      %v6138 = vunpack.c.l.b16 %v4708
      %v6139 = vunpack.c.h.b16 %v4708
      %v6140 = vunpack.c.l.b16 %v4709
      %v6141 = vunpack.c.h.b16 %v4709
      %v6142 = vunpack.c.l.b16 %v4710
      %v6143 = vunpack.c.h.b16 %v4710
      %v6144 = vunpack.c.l.b16 %v4711
      %v6145 = vunpack.c.h.b16 %v4711
      %v6146 = vunpack.c.l.b16 %v4712
      %v6147 = vunpack.c.h.b16 %v4712
      %v6148 = vunpack.c.l.b16 %v4713
      %v6149 = vunpack.c.h.b16 %v4713
      %v6150 = vunpack.c.l.b16 %v4714
      %v6151 = vunpack.c.h.b16 %v4714
      %v6152 = vunpack.c.l.b16 %v4715
      %v6153 = vunpack.c.h.b16 %v4715
      %v6154 = vunpack.c.l.b16 %v4716
      %v6155 = vunpack.c.h.b16 %v4716
      %v6156 = vunpack.c.l.b16 %v4717
      %v6157 = vunpack.c.h.b16 %v4717
      %v6158 = vunpack.c.l.b16 %v4718
      %v6159 = vunpack.c.h.b16 %v4718
      %v6160 = vunpack.c.l.b16 %v4719
      %v6161 = vunpack.c.h.b16 %v4719
      %v6162 = vunpack.c.l.b16 %v4720
      %v6163 = vunpack.c.h.b16 %v4720
      %v6164 = vunpack.c.l.b16 %v4721
      %v6165 = vunpack.c.h.b16 %v4721
      %v6166 = vunpack.c.l.b16 %v4722
      %v6167 = vunpack.c.h.b16 %v4722
      %v6168 = vunpack.c.l.b16 %v4723
      %v6169 = vunpack.c.h.b16 %v4723
      %v6170 = vunpack.c.l.b16 %v4724
      %v6171 = vunpack.c.h.b16 %v4724
      %v6172 = vunpack.c.l.b16 %v4725
      %v6173 = vunpack.c.h.b16 %v4725
      %v6174 = vunpack.c.l.b16 %v4726
      %v6175 = vunpack.c.h.b16 %v4726
      %v6176 = vunpack.c.l.b16 %v4727
      %v6177 = vunpack.c.h.b16 %v4727
      %v6178 = vunpack.c.l.b16 %v4728
      %v6179 = vunpack.c.h.b16 %v4728
      %v6180 = vunpack.c.l.b16 %v4729
      %v6181 = vunpack.c.h.b16 %v4729
      %v6182 = vunpack.c.l.b16 %v4730
      %v6183 = vunpack.c.h.b16 %v4730
      %v6184 = vunpack.c.l.b16 %v4731
      %v6185 = vunpack.c.h.b16 %v4731
      %v6186 = vunpack.c.l.b16 %v4732
      %v6187 = vunpack.c.h.b16 %v4732
      %v6188 = vunpack.c.l.b16 %v4733
      %v6189 = vunpack.c.h.b16 %v4733
      %v6190 = vunpack.c.l.b16 %v4734
      %v6191 = vunpack.c.h.b16 %v4734
      %v6192 = vunpack.c.l.b16 %v4735
      %v6193 = vunpack.c.h.b16 %v4735
      %v6194 = vunpack.c.l.b16 %v4736
      %v6195 = vunpack.c.h.b16 %v4736
      %v6196 = vunpack.c.l.b16 %v4737
      %v6197 = vunpack.c.h.b16 %v4737
      %v6198 = vunpack.c.l.b16 %v4738
      %v6199 = vunpack.c.h.b16 %v4738
      %v6200 = vunpack.c.l.b16 %v4739
      %v6201 = vunpack.c.h.b16 %v4739
      %v6202 = vunpack.c.l.b16 %v4740
      %v6203 = vunpack.c.h.b16 %v4740
      %v6204 = vunpack.c.l.b16 %v4741
      %v6205 = vunpack.c.h.b16 %v4741
      %v6206 = vunpack.c.l.b16 %v4742
      %v6207 = vunpack.c.h.b16 %v4742
      %v6208 = vunpack.c.l.b16 %v4743
      %v6209 = vunpack.c.h.b16 %v4743
      %v6210 = vunpack.c.l.b16 %v4744
      %v6211 = vunpack.c.h.b16 %v4744
      %v6212 = vunpack.c.l.b16 %v4745
      %v6213 = vunpack.c.h.b16 %v4745
      %v6214 = vunpack.c.l.b16 %v4746
      %v6215 = vunpack.c.h.b16 %v4746
      %v6216 = vunpack.c.l.b16 %v4747
      %v6217 = vunpack.c.h.b16 %v4747
      %v6218 = vunpack.c.l.b16 %v4748
      %v6219 = vunpack.c.h.b16 %v4748
      %v6220 = vunpack.c.l.b16 %v4749
      %v6221 = vunpack.c.h.b16 %v4749
      %v6222 = vunpack.c.l.b16 %v4750
      %v6223 = vunpack.c.h.b16 %v4750
      %v6224 = vunpack.c.l.b16 %v4751
      %v6225 = vunpack.c.h.b16 %v4751
      %v6226 = vunpack.c.l.b16 %v4752
      %v6227 = vunpack.c.h.b16 %v4752
      %v6228 = vunpack.c.l.b16 %v4753
      %v6229 = vunpack.c.h.b16 %v4753
      %v6230 = vunpack.c.l.b16 %v4754
      %v6231 = vunpack.c.h.b16 %v4754
      %v6232 = vunpack.c.l.b16 %v4755
      %v6233 = vunpack.c.h.b16 %v4755
      %v6234 = vunpack.c.l.b16 %v4756
      %v6235 = vunpack.c.h.b16 %v4756
      %v6236 = vunpack.c.l.b16 %v4757
      %v6237 = vunpack.c.h.b16 %v4757
      %v6238 = vunpack.c.l.b16 %v4758
      %v6239 = vunpack.c.h.b16 %v4758
      %v6240 = vunpack.c.l.b16 %v4759
      %v6241 = vunpack.c.h.b16 %v4759
      %v6242 = vunpack.c.l.b16 %v4760
      %v6243 = vunpack.c.h.b16 %v4760
      %v6244 = vunpack.c.l.b16 %v4761
      %v6245 = vunpack.c.h.b16 %v4761
      %v6246 = vunpack.c.l.b16 %v4762
      %v6247 = vunpack.c.h.b16 %v4762
      %v6248 = vunpack.c.l.b16 %v4763
      %v6249 = vunpack.c.h.b16 %v4763
      %v6250 = vunpack.c.l.b16 %v4764
      %v6251 = vunpack.c.h.b16 %v4764
      %v6252 = vunpack.c.l.b16 %v4765
      %v6253 = vunpack.c.h.b16 %v4765
      %v6254 = vunpack.c.l.b16 %v4766
      %v6255 = vunpack.c.h.b16 %v4766
      %v6256 = vunpack.c.l.b16 %v4767
      %v6257 = vunpack.c.h.b16 %v4767
      %v6258 = vunpack.c.l.b16 %v4768
      %v6259 = vunpack.c.h.b16 %v4768
      %v6260 = vunpack.c.l.b16 %v4769
      %v6261 = vunpack.c.h.b16 %v4769
      %v6262 = vunpack.c.l.b16 %v4770
      %v6263 = vunpack.c.h.b16 %v4770
      %v6264 = vunpack.c.l.b16 %v4771
      %v6265 = vunpack.c.h.b16 %v4771
      %v6266 = vunpack.c.l.b16 %v4772
      %v6267 = vunpack.c.h.b16 %v4772
      %v6268 = vunpack.c.l.b16 %v4773
      %v6269 = vunpack.c.h.b16 %v4773
      %v6270 = vunpack.c.l.b16 %v4774
      %v6271 = vunpack.c.h.b16 %v4774
      %v6272 = vunpack.c.l.b16 %v4775
      %v6273 = vunpack.c.h.b16 %v4775
      %v6274 = vunpack.c.l.b16 %v4776
      %v6275 = vunpack.c.h.b16 %v4776
      %v6276 = vunpack.c.l.b16 %v4777
      %v6277 = vunpack.c.h.b16 %v4777
      %v6278 = vunpack.c.l.b16 %v4778
      %v6279 = vunpack.c.h.b16 %v4778
      %v6280 = vunpack.c.l.b16 %v4779
      %v6281 = vunpack.c.h.b16 %v4779
      %v6282 = vunpack.c.l.b16 %v4780
      %v6283 = vunpack.c.h.b16 %v4780
      %v6284 = vunpack.c.l.b16 %v4781
      %v6285 = vunpack.c.h.b16 %v4781
      %v6286 = vunpack.c.l.b16 %v4782
      %v6287 = vunpack.c.h.b16 %v4782
      %v6288 = vunpack.c.l.b16 %v4783
      %v6289 = vunpack.c.h.b16 %v4783
      %v6290 = vunpack.c.l.b16 %v4784
      %v6291 = vunpack.c.h.b16 %v4784
      %v6292 = vunpack.c.l.b16 %v4785
      %v6293 = vunpack.c.h.b16 %v4785
      %v6294 = vunpack.c.l.b16 %v4786
      %v6295 = vunpack.c.h.b16 %v4786
      %v6296 = vunpack.c.l.b16 %v4787
      %v6297 = vunpack.c.h.b16 %v4787
      %v6298 = vunpack.c.l.b16 %v4788
      %v6299 = vunpack.c.h.b16 %v4788
      %v6300 = vunpack.c.l.b16 %v4789
      %v6301 = vunpack.c.h.b16 %v4789
      %v6302 = vunpack.c.l.b16 %v4790
      %v6303 = vunpack.c.h.b16 %v4790
      %v6304 = vunpack.c.l.b16 %v4791
      %v6305 = vunpack.c.h.b16 %v4791
      %v6306 = vunpack.c.l.b16 %v4792
      %v6307 = vunpack.c.h.b16 %v4792
      %v6308 = vunpack.c.l.b16 %v4793
      %v6309 = vunpack.c.h.b16 %v4793
      %v6310 = vunpack.c.l.b16 %v4794
      %v6311 = vunpack.c.h.b16 %v4794
      %v6312 = vunpack.c.l.b16 %v4795
      %v6313 = vunpack.c.h.b16 %v4795
      %v6314 = vunpack.c.l.b16 %v4796
      %v6315 = vunpack.c.h.b16 %v4796
      %v6316 = vunpack.c.l.b16 %v4797
      %v6317 = vunpack.c.h.b16 %v4797
      %v6318 = vunpack.c.l.b16 %v4798
      %v6319 = vunpack.c.h.b16 %v4798
      %v6320 = vunpack.c.l.b16 %v4799
      %v6321 = vunpack.c.h.b16 %v4799
      %v6322 = vunpack.c.l.b16 %v4800
      %v6323 = vunpack.c.h.b16 %v4800
      %v6324 = vunpack.c.l.b16 %v4801
      %v6325 = vunpack.c.h.b16 %v4801
      %v6326 = vunpack.c.l.b16 %v4802
      %v6327 = vunpack.c.h.b16 %v4802
      %v6328 = vunpack.c.l.b16 %v4803
      %v6329 = vunpack.c.h.b16 %v4803
      %v6330 = vunpack.c.l.b16 %v4804
      %v6331 = vunpack.c.h.b16 %v4804
      %v6332 = vunpack.c.l.b16 %v4805
      %v6333 = vunpack.c.h.b16 %v4805
      %v6334 = vunpack.c.l.b16 %v4806
      %v6335 = vunpack.c.h.b16 %v4806
      %v6336 = vunpack.c.l.b16 %v4807
      %v6337 = vunpack.c.h.b16 %v4807
      %v6338 = vunpack.c.l.b16 %v4808
      %v6339 = vunpack.c.h.b16 %v4808
      %v6340 = vunpack.c.l.b16 %v4809
      %v6341 = vunpack.c.h.b16 %v4809
      %v6342 = vunpack.c.l.b16 %v4810
      %v6343 = vunpack.c.h.b16 %v4810
      %v6344 = vunpack.c.l.b16 %v4811
      %v6345 = vunpack.c.h.b16 %v4811
      %v6346 = vunpack.c.l.b16 %v4812
      %v6347 = vunpack.c.h.b16 %v4812
      %v6348 = vunpack.c.l.b16 %v4813
      %v6349 = vunpack.c.h.b16 %v4813
      %v6350 = vunpack.c.l.b16 %v4814
      %v6351 = vunpack.c.h.b16 %v4814
      %v6352 = vunpack.c.l.b16 %v4815
      %v6353 = vunpack.c.h.b16 %v4815
      %v6354 = vunpack.c.l.b16 %v4816
      %v6355 = vunpack.c.h.b16 %v4816
      %v6356 = vunpack.c.l.b16 %v4817
      %v6357 = vunpack.c.h.b16 %v4817
      %v6358 = vunpack.c.l.b16 %v4818
      %v6359 = vunpack.c.h.b16 %v4818
      %v6360 = vunpack.c.l.b16 %v4819
      %v6361 = vunpack.c.h.b16 %v4819
      %v6362 = vunpack.c.l.b16 %v4820
      %v6363 = vunpack.c.h.b16 %v4820
      %v6364 = vunpack.c.l.b16 %v4821
      %v6365 = vunpack.c.h.b16 %v4821
      %v6366 = vunpack.c.l.b16 %v4822
      %v6367 = vunpack.c.h.b16 %v4822
      %v6368 = vunpack.c.l.b16 %v4823
      %v6369 = vunpack.c.h.b16 %v4823
      %v6370 = vunpack.c.l.b16 %v4824
      %v6371 = vunpack.c.h.b16 %v4824
      %v6372 = vunpack.c.l.b16 %v4825
      %v6373 = vunpack.c.h.b16 %v4825
      %v6374 = vunpack.c.l.b16 %v4826
      %v6375 = vunpack.c.h.b16 %v4826
      %v6376 = vunpack.c.l.b16 %v4827
      %v6377 = vunpack.c.h.b16 %v4827
      %v6378 = vunpack.c.l.b16 %v4828
      %v6379 = vunpack.c.h.b16 %v4828
      %v6380 = vunpack.c.l.b16 %v4829
      %v6381 = vunpack.c.h.b16 %v4829
      %v6382 = vunpack.c.l.b16 %v4830
      %v6383 = vunpack.c.h.b16 %v4830
      %v6384 = vunpack.c.l.b16 %v4831
      %v6385 = vunpack.c.h.b16 %v4831
      %v6386 = vunpack.c.l.b16 %v4832
      %v6387 = vunpack.c.h.b16 %v4832
      %v6388 = vunpack.c.l.b16 %v4833
      %v6389 = vunpack.c.h.b16 %v4833
      %v6390 = vunpack.c.l.b16 %v4834
      %v6391 = vunpack.c.h.b16 %v4834
      %v6392 = vunpack.c.l.b16 %v4835
      %v6393 = vunpack.c.h.b16 %v4835
      %v6394 = vpack.c.b16 %v5374, %v5370
      %v6395 = vpack.c.b16 %v5375, %v5371
      %v6396 = vpack.c.b16 %v5376, %v5372
      %v6397 = vpack.c.b16 %v5377, %v5373
      %v6398 = vpack.c.b16 %v5382, %v5378
      %v6399 = vpack.c.b16 %v5383, %v5379
      %v6400 = vpack.c.b16 %v5384, %v5380
      %v6401 = vpack.c.b16 %v5385, %v5381
      %v6402 = vpack.c.b16 %v5390, %v5386
      %v6403 = vpack.c.b16 %v5391, %v5387
      %v6404 = vpack.c.b16 %v5392, %v5388
      %v6405 = vpack.c.b16 %v5393, %v5389
      %v6406 = vpack.c.b16 %v5398, %v5394
      %v6407 = vpack.c.b16 %v5399, %v5395
      %v6408 = vpack.c.b16 %v5400, %v5396
      %v6409 = vpack.c.b16 %v5401, %v5397
      %v6410 = vpack.c.b16 %v5406, %v5402
      %v6411 = vpack.c.b16 %v5407, %v5403
      %v6412 = vpack.c.b16 %v5408, %v5404
      %v6413 = vpack.c.b16 %v5409, %v5405
      %v6414 = vpack.c.b16 %v5414, %v5410
      %v6415 = vpack.c.b16 %v5415, %v5411
      %v6416 = vpack.c.b16 %v5416, %v5412
      %v6417 = vpack.c.b16 %v5417, %v5413
      %v6418 = vpack.c.b16 %v5422, %v5418
      %v6419 = vpack.c.b16 %v5423, %v5419
      %v6420 = vpack.c.b16 %v5424, %v5420
      %v6421 = vpack.c.b16 %v5425, %v5421
      %v6422 = vpack.c.b16 %v5430, %v5426
      %v6423 = vpack.c.b16 %v5431, %v5427
      %v6424 = vpack.c.b16 %v5432, %v5428
      %v6425 = vpack.c.b16 %v5433, %v5429
      %v6426 = vpack.c.b16 %v5438, %v5434
      %v6427 = vpack.c.b16 %v5439, %v5435
      %v6428 = vpack.c.b16 %v5440, %v5436
      %v6429 = vpack.c.b16 %v5441, %v5437
      %v6430 = vpack.c.b16 %v5446, %v5442
      %v6431 = vpack.c.b16 %v5447, %v5443
      %v6432 = vpack.c.b16 %v5448, %v5444
      %v6433 = vpack.c.b16 %v5449, %v5445
      %v6434 = vpack.c.b16 %v5454, %v5450
      %v6435 = vpack.c.b16 %v5455, %v5451
      %v6436 = vpack.c.b16 %v5456, %v5452
      %v6437 = vpack.c.b16 %v5457, %v5453
      %v6438 = vpack.c.b16 %v5462, %v5458
      %v6439 = vpack.c.b16 %v5463, %v5459
      %v6440 = vpack.c.b16 %v5464, %v5460
      %v6441 = vpack.c.b16 %v5465, %v5461
      %v6442 = vpack.c.b16 %v5470, %v5466
      %v6443 = vpack.c.b16 %v5471, %v5467
      %v6444 = vpack.c.b16 %v5472, %v5468
      %v6445 = vpack.c.b16 %v5473, %v5469
      %v6446 = vpack.c.b16 %v5478, %v5474
      %v6447 = vpack.c.b16 %v5479, %v5475
      %v6448 = vpack.c.b16 %v5480, %v5476
      %v6449 = vpack.c.b16 %v5481, %v5477
      %v6450 = vpack.c.b16 %v5486, %v5482
      %v6451 = vpack.c.b16 %v5487, %v5483
      %v6452 = vpack.c.b16 %v5488, %v5484
      %v6453 = vpack.c.b16 %v5489, %v5485
      %v6454 = vpack.c.b16 %v5494, %v5490
      %v6455 = vpack.c.b16 %v5495, %v5491
      %v6456 = vpack.c.b16 %v5496, %v5492
      %v6457 = vpack.c.b16 %v5497, %v5493
      %v6458 = vpack.c.b16 %v5502, %v5498
      %v6459 = vpack.c.b16 %v5503, %v5499
      %v6460 = vpack.c.b16 %v5504, %v5500
      %v6461 = vpack.c.b16 %v5505, %v5501
      %v6462 = vpack.c.b16 %v5510, %v5506
      %v6463 = vpack.c.b16 %v5511, %v5507
      %v6464 = vpack.c.b16 %v5512, %v5508
      %v6465 = vpack.c.b16 %v5513, %v5509
      %v6466 = vpack.c.b16 %v5518, %v5514
      %v6467 = vpack.c.b16 %v5519, %v5515
      %v6468 = vpack.c.b16 %v5520, %v5516
      %v6469 = vpack.c.b16 %v5521, %v5517
      %v6470 = vpack.c.b16 %v5526, %v5522
      %v6471 = vpack.c.b16 %v5527, %v5523
      %v6472 = vpack.c.b16 %v5528, %v5524
      %v6473 = vpack.c.b16 %v5529, %v5525
      %v6474 = vpack.c.b16 %v5534, %v5530
      %v6475 = vpack.c.b16 %v5535, %v5531
      %v6476 = vpack.c.b16 %v5536, %v5532
      %v6477 = vpack.c.b16 %v5537, %v5533
      %v6478 = vpack.c.b16 %v5542, %v5538
      %v6479 = vpack.c.b16 %v5543, %v5539
      %v6480 = vpack.c.b16 %v5544, %v5540
      %v6481 = vpack.c.b16 %v5545, %v5541
      %v6482 = vpack.c.b16 %v5550, %v5546
      %v6483 = vpack.c.b16 %v5551, %v5547
      %v6484 = vpack.c.b16 %v5552, %v5548
      %v6485 = vpack.c.b16 %v5553, %v5549
      %v6486 = vpack.c.b16 %v5558, %v5554
      %v6487 = vpack.c.b16 %v5559, %v5555
      %v6488 = vpack.c.b16 %v5560, %v5556
      %v6489 = vpack.c.b16 %v5561, %v5557
      %v6490 = vpack.c.b16 %v5566, %v5562
      %v6491 = vpack.c.b16 %v5567, %v5563
      %v6492 = vpack.c.b16 %v5568, %v5564
      %v6493 = vpack.c.b16 %v5569, %v5565
      %v6494 = vpack.c.b16 %v5574, %v5570
      %v6495 = vpack.c.b16 %v5575, %v5571
      %v6496 = vpack.c.b16 %v5576, %v5572
      %v6497 = vpack.c.b16 %v5577, %v5573
      %v6498 = vpack.c.b16 %v5582, %v5578
      %v6499 = vpack.c.b16 %v5583, %v5579
      %v6500 = vpack.c.b16 %v5584, %v5580
      %v6501 = vpack.c.b16 %v5585, %v5581
      %v6502 = vpack.c.b16 %v5590, %v5586
      %v6503 = vpack.c.b16 %v5591, %v5587
      %v6504 = vpack.c.b16 %v5592, %v5588
      %v6505 = vpack.c.b16 %v5593, %v5589
      %v6506 = vpack.c.b16 %v5598, %v5594
      %v6507 = vpack.c.b16 %v5599, %v5595
      %v6508 = vpack.c.b16 %v5600, %v5596
      %v6509 = vpack.c.b16 %v5601, %v5597
      %v6510 = vpack.c.b16 %v5606, %v5602
      %v6511 = vpack.c.b16 %v5607, %v5603
      %v6512 = vpack.c.b16 %v5608, %v5604
      %v6513 = vpack.c.b16 %v5609, %v5605
      %v6514 = vpack.c.b16 %v5614, %v5610
      %v6515 = vpack.c.b16 %v5615, %v5611
      %v6516 = vpack.c.b16 %v5616, %v5612
      %v6517 = vpack.c.b16 %v5617, %v5613
      %v6518 = vpack.c.b16 %v5622, %v5618
      %v6519 = vpack.c.b16 %v5623, %v5619
      %v6520 = vpack.c.b16 %v5624, %v5620
      %v6521 = vpack.c.b16 %v5625, %v5621
      %v6522 = vpack.c.b16 %v5630, %v5626
      %v6523 = vpack.c.b16 %v5631, %v5627
      %v6524 = vpack.c.b16 %v5632, %v5628
      %v6525 = vpack.c.b16 %v5633, %v5629
      %v6526 = vpack.c.b16 %v5638, %v5634
      %v6527 = vpack.c.b16 %v5639, %v5635
      %v6528 = vpack.c.b16 %v5640, %v5636
      %v6529 = vpack.c.b16 %v5641, %v5637
      %v6530 = vpack.c.b16 %v5646, %v5642
      %v6531 = vpack.c.b16 %v5647, %v5643
      %v6532 = vpack.c.b16 %v5648, %v5644
      %v6533 = vpack.c.b16 %v5649, %v5645
      %v6534 = vpack.c.b16 %v5654, %v5650
      %v6535 = vpack.c.b16 %v5655, %v5651
      %v6536 = vpack.c.b16 %v5656, %v5652
      %v6537 = vpack.c.b16 %v5657, %v5653
      %v6538 = vpack.c.b16 %v5662, %v5658
      %v6539 = vpack.c.b16 %v5663, %v5659
      %v6540 = vpack.c.b16 %v5664, %v5660
      %v6541 = vpack.c.b16 %v5665, %v5661
      %v6542 = vpack.c.b16 %v5670, %v5666
      %v6543 = vpack.c.b16 %v5671, %v5667
      %v6544 = vpack.c.b16 %v5672, %v5668
      %v6545 = vpack.c.b16 %v5673, %v5669
      %v6546 = vpack.c.b16 %v5678, %v5674
      %v6547 = vpack.c.b16 %v5679, %v5675
      %v6548 = vpack.c.b16 %v5680, %v5676
      %v6549 = vpack.c.b16 %v5681, %v5677
      %v6550 = vpack.c.b16 %v5686, %v5682
      %v6551 = vpack.c.b16 %v5687, %v5683
      %v6552 = vpack.c.b16 %v5688, %v5684
      %v6553 = vpack.c.b16 %v5689, %v5685
      %v6554 = vpack.c.b16 %v5694, %v5690
      %v6555 = vpack.c.b16 %v5695, %v5691
      %v6556 = vpack.c.b16 %v5696, %v5692
      %v6557 = vpack.c.b16 %v5697, %v5693
      %v6558 = vpack.c.b16 %v5702, %v5698
      %v6559 = vpack.c.b16 %v5703, %v5699
      %v6560 = vpack.c.b16 %v5704, %v5700
      %v6561 = vpack.c.b16 %v5705, %v5701
      %v6562 = vpack.c.b16 %v5710, %v5706
      %v6563 = vpack.c.b16 %v5711, %v5707
      %v6564 = vpack.c.b16 %v5712, %v5708
      %v6565 = vpack.c.b16 %v5713, %v5709
      %v6566 = vpack.c.b16 %v5718, %v5714
      %v6567 = vpack.c.b16 %v5719, %v5715
      %v6568 = vpack.c.b16 %v5720, %v5716
      %v6569 = vpack.c.b16 %v5721, %v5717
      %v6570 = vpack.c.b16 %v5726, %v5722
      %v6571 = vpack.c.b16 %v5727, %v5723
      %v6572 = vpack.c.b16 %v5728, %v5724
      %v6573 = vpack.c.b16 %v5729, %v5725
      %v6574 = vpack.c.b16 %v5734, %v5730
      %v6575 = vpack.c.b16 %v5735, %v5731
      %v6576 = vpack.c.b16 %v5736, %v5732
      %v6577 = vpack.c.b16 %v5737, %v5733
      %v6578 = vpack.c.b16 %v5742, %v5738
      %v6579 = vpack.c.b16 %v5743, %v5739
      %v6580 = vpack.c.b16 %v5744, %v5740
      %v6581 = vpack.c.b16 %v5745, %v5741
      %v6582 = vpack.c.b16 %v5750, %v5746
      %v6583 = vpack.c.b16 %v5751, %v5747
      %v6584 = vpack.c.b16 %v5752, %v5748
      %v6585 = vpack.c.b16 %v5753, %v5749
      %v6586 = vpack.c.b16 %v5758, %v5754
      %v6587 = vpack.c.b16 %v5759, %v5755
      %v6588 = vpack.c.b16 %v5760, %v5756
      %v6589 = vpack.c.b16 %v5761, %v5757
      %v6590 = vpack.c.b16 %v5766, %v5762
      %v6591 = vpack.c.b16 %v5767, %v5763
      %v6592 = vpack.c.b16 %v5768, %v5764
      %v6593 = vpack.c.b16 %v5769, %v5765
      %v6594 = vpack.c.b16 %v5774, %v5770
      %v6595 = vpack.c.b16 %v5775, %v5771
      %v6596 = vpack.c.b16 %v5776, %v5772
      %v6597 = vpack.c.b16 %v5777, %v5773
      %v6598 = vpack.c.b16 %v5782, %v5778
      %v6599 = vpack.c.b16 %v5783, %v5779
      %v6600 = vpack.c.b16 %v5784, %v5780
      %v6601 = vpack.c.b16 %v5785, %v5781
      %v6602 = vpack.c.b16 %v5790, %v5786
      %v6603 = vpack.c.b16 %v5791, %v5787
      %v6604 = vpack.c.b16 %v5792, %v5788
      %v6605 = vpack.c.b16 %v5793, %v5789
      %v6606 = vpack.c.b16 %v5798, %v5794
      %v6607 = vpack.c.b16 %v5799, %v5795
      %v6608 = vpack.c.b16 %v5800, %v5796
      %v6609 = vpack.c.b16 %v5801, %v5797
      %v6610 = vpack.c.b16 %v5806, %v5802
      %v6611 = vpack.c.b16 %v5807, %v5803
      %v6612 = vpack.c.b16 %v5808, %v5804
      %v6613 = vpack.c.b16 %v5809, %v5805
      %v6614 = vpack.c.b16 %v5814, %v5810
      %v6615 = vpack.c.b16 %v5815, %v5811
      %v6616 = vpack.c.b16 %v5816, %v5812
      %v6617 = vpack.c.b16 %v5817, %v5813
      %v6618 = vpack.c.b16 %v5822, %v5818
      %v6619 = vpack.c.b16 %v5823, %v5819
      %v6620 = vpack.c.b16 %v5824, %v5820
      %v6621 = vpack.c.b16 %v5825, %v5821
      %v6622 = vpack.c.b16 %v5830, %v5826
      %v6623 = vpack.c.b16 %v5831, %v5827
      %v6624 = vpack.c.b16 %v5832, %v5828
      %v6625 = vpack.c.b16 %v5833, %v5829
      %v6626 = vpack.c.b16 %v5838, %v5834
      %v6627 = vpack.c.b16 %v5839, %v5835
      %v6628 = vpack.c.b16 %v5840, %v5836
      %v6629 = vpack.c.b16 %v5841, %v5837
      %v6630 = vpack.c.b16 %v5846, %v5842
      %v6631 = vpack.c.b16 %v5847, %v5843
      %v6632 = vpack.c.b16 %v5848, %v5844
      %v6633 = vpack.c.b16 %v5849, %v5845
      %v6634 = vpack.c.b16 %v5854, %v5850
      %v6635 = vpack.c.b16 %v5855, %v5851
      %v6636 = vpack.c.b16 %v5856, %v5852
      %v6637 = vpack.c.b16 %v5857, %v5853
      %v6638 = vpack.c.b16 %v5862, %v5858
      %v6639 = vpack.c.b16 %v5863, %v5859
      %v6640 = vpack.c.b16 %v5864, %v5860
      %v6641 = vpack.c.b16 %v5865, %v5861
      %v6642 = vpack.c.b16 %v5870, %v5866
      %v6643 = vpack.c.b16 %v5871, %v5867
      %v6644 = vpack.c.b16 %v5872, %v5868
      %v6645 = vpack.c.b16 %v5873, %v5869
      %v6646 = vpack.c.b16 %v5878, %v5874
      %v6647 = vpack.c.b16 %v5879, %v5875
      %v6648 = vpack.c.b16 %v5880, %v5876
      %v6649 = vpack.c.b16 %v5881, %v5877
      %v6650 = vpack.c.b16 %v5886, %v5882
      %v6651 = vpack.c.b16 %v5887, %v5883
      %v6652 = vpack.c.b16 %v5888, %v5884
      %v6653 = vpack.c.b16 %v5889, %v5885
      %v6654 = vpack.c.b16 %v5894, %v5890
      %v6655 = vpack.c.b16 %v5895, %v5891
      %v6656 = vpack.c.b16 %v5896, %v5892
      %v6657 = vpack.c.b16 %v5897, %v5893
      %v6658 = vpack.c.b16 %v5902, %v5898
      %v6659 = vpack.c.b16 %v5903, %v5899
      %v6660 = vpack.c.b16 %v5904, %v5900
      %v6661 = vpack.c.b16 %v5905, %v5901
      %v6662 = vpack.c.b16 %v5910, %v5906
      %v6663 = vpack.c.b16 %v5911, %v5907
      %v6664 = vpack.c.b16 %v5912, %v5908
      %v6665 = vpack.c.b16 %v5913, %v5909
      %v6666 = vpack.c.b16 %v5918, %v5914
      %v6667 = vpack.c.b16 %v5919, %v5915
      %v6668 = vpack.c.b16 %v5920, %v5916
      %v6669 = vpack.c.b16 %v5921, %v5917
      %v6670 = vpack.c.b16 %v5926, %v5922
      %v6671 = vpack.c.b16 %v5927, %v5923
      %v6672 = vpack.c.b16 %v5928, %v5924
      %v6673 = vpack.c.b16 %v5929, %v5925
      %v6674 = vpack.c.b16 %v5934, %v5930
      %v6675 = vpack.c.b16 %v5935, %v5931
      %v6676 = vpack.c.b16 %v5936, %v5932
      %v6677 = vpack.c.b16 %v5937, %v5933
      %v6678 = vpack.c.b16 %v5942, %v5938
      %v6679 = vpack.c.b16 %v5943, %v5939
      %v6680 = vpack.c.b16 %v5944, %v5940
      %v6681 = vpack.c.b16 %v5945, %v5941
      %v6682 = vpack.c.b16 %v5950, %v5946
      %v6683 = vpack.c.b16 %v5951, %v5947
      %v6684 = vpack.c.b16 %v5952, %v5948
      %v6685 = vpack.c.b16 %v5953, %v5949
      %v6686 = vpack.c.b16 %v5958, %v5954
      %v6687 = vpack.c.b16 %v5959, %v5955
      %v6688 = vpack.c.b16 %v5960, %v5956
      %v6689 = vpack.c.b16 %v5961, %v5957
      %v6690 = vpack.c.b16 %v5966, %v5962
      %v6691 = vpack.c.b16 %v5967, %v5963
      %v6692 = vpack.c.b16 %v5968, %v5964
      %v6693 = vpack.c.b16 %v5969, %v5965
      %v6694 = vpack.c.b16 %v5974, %v5970
      %v6695 = vpack.c.b16 %v5975, %v5971
      %v6696 = vpack.c.b16 %v5976, %v5972
      %v6697 = vpack.c.b16 %v5977, %v5973
      %v6698 = vpack.c.b16 %v5982, %v5978
      %v6699 = vpack.c.b16 %v5983, %v5979
      %v6700 = vpack.c.b16 %v5984, %v5980
      %v6701 = vpack.c.b16 %v5985, %v5981
      %v6702 = vpack.c.b16 %v5990, %v5986
      %v6703 = vpack.c.b16 %v5991, %v5987
      %v6704 = vpack.c.b16 %v5992, %v5988
      %v6705 = vpack.c.b16 %v5993, %v5989
      %v6706 = vpack.c.b16 %v5998, %v5994
      %v6707 = vpack.c.b16 %v5999, %v5995
      %v6708 = vpack.c.b16 %v6000, %v5996
      %v6709 = vpack.c.b16 %v6001, %v5997
      %v6710 = vpack.c.b16 %v6006, %v6002
      %v6711 = vpack.c.b16 %v6007, %v6003
      %v6712 = vpack.c.b16 %v6008, %v6004
      %v6713 = vpack.c.b16 %v6009, %v6005
      %v6714 = vpack.c.b16 %v6014, %v6010
      %v6715 = vpack.c.b16 %v6015, %v6011
      %v6716 = vpack.c.b16 %v6016, %v6012
      %v6717 = vpack.c.b16 %v6017, %v6013
      %v6718 = vpack.c.b16 %v6022, %v6018
      %v6719 = vpack.c.b16 %v6023, %v6019
      %v6720 = vpack.c.b16 %v6024, %v6020
      %v6721 = vpack.c.b16 %v6025, %v6021
      %v6722 = vpack.c.b16 %v6030, %v6026
      %v6723 = vpack.c.b16 %v6031, %v6027
      %v6724 = vpack.c.b16 %v6032, %v6028
      %v6725 = vpack.c.b16 %v6033, %v6029
      %v6726 = vpack.c.b16 %v6038, %v6034
      %v6727 = vpack.c.b16 %v6039, %v6035
      %v6728 = vpack.c.b16 %v6040, %v6036
      %v6729 = vpack.c.b16 %v6041, %v6037
      %v6730 = vpack.c.b16 %v6046, %v6042
      %v6731 = vpack.c.b16 %v6047, %v6043
      %v6732 = vpack.c.b16 %v6048, %v6044
      %v6733 = vpack.c.b16 %v6049, %v6045
      %v6734 = vpack.c.b16 %v6054, %v6050
      %v6735 = vpack.c.b16 %v6055, %v6051
      %v6736 = vpack.c.b16 %v6056, %v6052
      %v6737 = vpack.c.b16 %v6057, %v6053
      %v6738 = vpack.c.b16 %v6062, %v6058
      %v6739 = vpack.c.b16 %v6063, %v6059
      %v6740 = vpack.c.b16 %v6064, %v6060
      %v6741 = vpack.c.b16 %v6065, %v6061
      %v6742 = vpack.c.b16 %v6070, %v6066
      %v6743 = vpack.c.b16 %v6071, %v6067
      %v6744 = vpack.c.b16 %v6072, %v6068
      %v6745 = vpack.c.b16 %v6073, %v6069
      %v6746 = vpack.c.b16 %v6078, %v6074
      %v6747 = vpack.c.b16 %v6079, %v6075
      %v6748 = vpack.c.b16 %v6080, %v6076
      %v6749 = vpack.c.b16 %v6081, %v6077
      %v6750 = vpack.c.b16 %v6086, %v6082
      %v6751 = vpack.c.b16 %v6087, %v6083
      %v6752 = vpack.c.b16 %v6088, %v6084
      %v6753 = vpack.c.b16 %v6089, %v6085
      %v6754 = vpack.c.b16 %v6094, %v6090
      %v6755 = vpack.c.b16 %v6095, %v6091
      %v6756 = vpack.c.b16 %v6096, %v6092
      %v6757 = vpack.c.b16 %v6097, %v6093
      %v6758 = vpack.c.b16 %v6102, %v6098
      %v6759 = vpack.c.b16 %v6103, %v6099
      %v6760 = vpack.c.b16 %v6104, %v6100
      %v6761 = vpack.c.b16 %v6105, %v6101
      %v6762 = vpack.c.b16 %v6110, %v6106
      %v6763 = vpack.c.b16 %v6111, %v6107
      %v6764 = vpack.c.b16 %v6112, %v6108
      %v6765 = vpack.c.b16 %v6113, %v6109
      %v6766 = vpack.c.b16 %v6118, %v6114
      %v6767 = vpack.c.b16 %v6119, %v6115
      %v6768 = vpack.c.b16 %v6120, %v6116
      %v6769 = vpack.c.b16 %v6121, %v6117
      %v6770 = vpack.c.b16 %v6126, %v6122
      %v6771 = vpack.c.b16 %v6127, %v6123
      %v6772 = vpack.c.b16 %v6128, %v6124
      %v6773 = vpack.c.b16 %v6129, %v6125
      %v6774 = vpack.c.b16 %v6134, %v6130
      %v6775 = vpack.c.b16 %v6135, %v6131
      %v6776 = vpack.c.b16 %v6136, %v6132
      %v6777 = vpack.c.b16 %v6137, %v6133
      %v6778 = vpack.c.b16 %v6142, %v6138
      %v6779 = vpack.c.b16 %v6143, %v6139
      %v6780 = vpack.c.b16 %v6144, %v6140
      %v6781 = vpack.c.b16 %v6145, %v6141
      %v6782 = vpack.c.b16 %v6150, %v6146
      %v6783 = vpack.c.b16 %v6151, %v6147
      %v6784 = vpack.c.b16 %v6152, %v6148
      %v6785 = vpack.c.b16 %v6153, %v6149
      %v6786 = vpack.c.b16 %v6158, %v6154
      %v6787 = vpack.c.b16 %v6159, %v6155
      %v6788 = vpack.c.b16 %v6160, %v6156
      %v6789 = vpack.c.b16 %v6161, %v6157
      %v6790 = vpack.c.b16 %v6166, %v6162
      %v6791 = vpack.c.b16 %v6167, %v6163
      %v6792 = vpack.c.b16 %v6168, %v6164
      %v6793 = vpack.c.b16 %v6169, %v6165
      %v6794 = vpack.c.b16 %v6174, %v6170
      %v6795 = vpack.c.b16 %v6175, %v6171
      %v6796 = vpack.c.b16 %v6176, %v6172
      %v6797 = vpack.c.b16 %v6177, %v6173
      %v6798 = vpack.c.b16 %v6182, %v6178
      %v6799 = vpack.c.b16 %v6183, %v6179
      %v6800 = vpack.c.b16 %v6184, %v6180
      %v6801 = vpack.c.b16 %v6185, %v6181
      %v6802 = vpack.c.b16 %v6190, %v6186
      %v6803 = vpack.c.b16 %v6191, %v6187
      %v6804 = vpack.c.b16 %v6192, %v6188
      %v6805 = vpack.c.b16 %v6193, %v6189
      %v6806 = vpack.c.b16 %v6198, %v6194
      %v6807 = vpack.c.b16 %v6199, %v6195
      %v6808 = vpack.c.b16 %v6200, %v6196
      %v6809 = vpack.c.b16 %v6201, %v6197
      %v6810 = vpack.c.b16 %v6206, %v6202
      %v6811 = vpack.c.b16 %v6207, %v6203
      %v6812 = vpack.c.b16 %v6208, %v6204
      %v6813 = vpack.c.b16 %v6209, %v6205
      %v6814 = vpack.c.b16 %v6214, %v6210
      %v6815 = vpack.c.b16 %v6215, %v6211
      %v6816 = vpack.c.b16 %v6216, %v6212
      %v6817 = vpack.c.b16 %v6217, %v6213
      %v6818 = vpack.c.b16 %v6222, %v6218
      %v6819 = vpack.c.b16 %v6223, %v6219
      %v6820 = vpack.c.b16 %v6224, %v6220
      %v6821 = vpack.c.b16 %v6225, %v6221
      %v6822 = vpack.c.b16 %v6230, %v6226
      %v6823 = vpack.c.b16 %v6231, %v6227
      %v6824 = vpack.c.b16 %v6232, %v6228
      %v6825 = vpack.c.b16 %v6233, %v6229
      %v6826 = vpack.c.b16 %v6238, %v6234
      %v6827 = vpack.c.b16 %v6239, %v6235
      %v6828 = vpack.c.b16 %v6240, %v6236
      %v6829 = vpack.c.b16 %v6241, %v6237
      %v6830 = vpack.c.b16 %v6246, %v6242
      %v6831 = vpack.c.b16 %v6247, %v6243
      %v6832 = vpack.c.b16 %v6248, %v6244
      %v6833 = vpack.c.b16 %v6249, %v6245
      %v6834 = vpack.c.b16 %v6254, %v6250
      %v6835 = vpack.c.b16 %v6255, %v6251
      %v6836 = vpack.c.b16 %v6256, %v6252
      %v6837 = vpack.c.b16 %v6257, %v6253
      %v6838 = vpack.c.b16 %v6262, %v6258
      %v6839 = vpack.c.b16 %v6263, %v6259
      %v6840 = vpack.c.b16 %v6264, %v6260
      %v6841 = vpack.c.b16 %v6265, %v6261
      %v6842 = vpack.c.b16 %v6270, %v6266
      %v6843 = vpack.c.b16 %v6271, %v6267
      %v6844 = vpack.c.b16 %v6272, %v6268
      %v6845 = vpack.c.b16 %v6273, %v6269
      %v6846 = vpack.c.b16 %v6278, %v6274
      %v6847 = vpack.c.b16 %v6279, %v6275
      %v6848 = vpack.c.b16 %v6280, %v6276
      %v6849 = vpack.c.b16 %v6281, %v6277
      %v6850 = vpack.c.b16 %v6286, %v6282
      %v6851 = vpack.c.b16 %v6287, %v6283
      %v6852 = vpack.c.b16 %v6288, %v6284
      %v6853 = vpack.c.b16 %v6289, %v6285
      %v6854 = vpack.c.b16 %v6294, %v6290
      %v6855 = vpack.c.b16 %v6295, %v6291
      %v6856 = vpack.c.b16 %v6296, %v6292
      %v6857 = vpack.c.b16 %v6297, %v6293
      %v6858 = vpack.c.b16 %v6302, %v6298
      %v6859 = vpack.c.b16 %v6303, %v6299
      %v6860 = vpack.c.b16 %v6304, %v6300
      %v6861 = vpack.c.b16 %v6305, %v6301
      %v6862 = vpack.c.b16 %v6310, %v6306
      %v6863 = vpack.c.b16 %v6311, %v6307
      %v6864 = vpack.c.b16 %v6312, %v6308
      %v6865 = vpack.c.b16 %v6313, %v6309
      %v6866 = vpack.c.b16 %v6318, %v6314
      %v6867 = vpack.c.b16 %v6319, %v6315
      %v6868 = vpack.c.b16 %v6320, %v6316
      %v6869 = vpack.c.b16 %v6321, %v6317
      %v6870 = vpack.c.b16 %v6326, %v6322
      %v6871 = vpack.c.b16 %v6327, %v6323
      %v6872 = vpack.c.b16 %v6328, %v6324
      %v6873 = vpack.c.b16 %v6329, %v6325
      %v6874 = vpack.c.b16 %v6334, %v6330
      %v6875 = vpack.c.b16 %v6335, %v6331
      %v6876 = vpack.c.b16 %v6336, %v6332
      %v6877 = vpack.c.b16 %v6337, %v6333
      %v6878 = vpack.c.b16 %v6342, %v6338
      %v6879 = vpack.c.b16 %v6343, %v6339
      %v6880 = vpack.c.b16 %v6344, %v6340
      %v6881 = vpack.c.b16 %v6345, %v6341
      %v6882 = vpack.c.b16 %v6350, %v6346
      %v6883 = vpack.c.b16 %v6351, %v6347
      %v6884 = vpack.c.b16 %v6352, %v6348
      %v6885 = vpack.c.b16 %v6353, %v6349
      %v6886 = vpack.c.b16 %v6358, %v6354
      %v6887 = vpack.c.b16 %v6359, %v6355
      %v6888 = vpack.c.b16 %v6360, %v6356
      %v6889 = vpack.c.b16 %v6361, %v6357
      %v6890 = vpack.c.b16 %v6366, %v6362
      %v6891 = vpack.c.b16 %v6367, %v6363
      %v6892 = vpack.c.b16 %v6368, %v6364
      %v6893 = vpack.c.b16 %v6369, %v6365
      %v6894 = vpack.c.b16 %v6374, %v6370
      %v6895 = vpack.c.b16 %v6375, %v6371
      %v6896 = vpack.c.b16 %v6376, %v6372
      %v6897 = vpack.c.b16 %v6377, %v6373
      %v6898 = vpack.c.b16 %v6382, %v6378
      %v6899 = vpack.c.b16 %v6383, %v6379
      %v6900 = vpack.c.b16 %v6384, %v6380
      %v6901 = vpack.c.b16 %v6385, %v6381
      %v6902 = vpack.c.b16 %v6390, %v6386
      %v6903 = vpack.c.b16 %v6391, %v6387
      %v6904 = vpack.c.b16 %v6392, %v6388
      %v6905 = vpack.c.b16 %v6393, %v6389
      %7418 = vmatprep.subr.bf16.mxu0 %v6395
      %7419 = vmatpush1.bf16.msra.mxu0 %v6394
      %7420 = vmatprep.subr.bf16.mxu0 %v6399
      %7421 = vmatpush1.bf16.msra.mxu0 %v6398
      %7422 = vmatprep.subr.bf16.mxu0 %v6403
      %7423 = vmatpush1.bf16.msra.mxu0 %v6402
      %7424 = vmatprep.subr.bf16.mxu0 %v6407
      %7425 = vmatpush1.bf16.msra.mxu0 %v6406
      %7426 = vmatprep.subr.bf16.mxu0 %v6411
      %7427 = vmatpush1.bf16.msra.mxu0 %v6410
      %7428 = vmatprep.subr.bf16.mxu0 %v6415
      %7429 = vmatpush1.bf16.msra.mxu0 %v6414
      %7430 = vmatprep.subr.bf16.mxu0 %v6419
      %7431 = vmatpush1.bf16.msra.mxu0 %v6418
      %7432 = vmatprep.subr.bf16.mxu0 %v6423
      %7433 = vmatpush1.bf16.msra.mxu0 %v6422
      %7434 = vmatprep.subr.bf16.mxu0 %v6427
      %7435 = vmatpush1.bf16.msra.mxu0 %v6426
      %7436 = vmatprep.subr.bf16.mxu0 %v6431
      %7437 = vmatpush1.bf16.msra.mxu0 %v6430
      %7438 = vmatprep.subr.bf16.mxu0 %v6435
      %7439 = vmatpush1.bf16.msra.mxu0 %v6434
      %7440 = vmatprep.subr.bf16.mxu0 %v6439
      %7441 = vmatpush1.bf16.msra.mxu0 %v6438
      %7442 = vmatprep.subr.bf16.mxu0 %v6443
      %7443 = vmatpush1.bf16.msra.mxu0 %v6442
      %7444 = vmatprep.subr.bf16.mxu0 %v6447
      %7445 = vmatpush1.bf16.msra.mxu0 %v6446
      %7446 = vmatprep.subr.bf16.mxu0 %v6451
      %7447 = vmatpush1.bf16.msra.mxu0 %v6450
      %7448 = vmatprep.subr.bf16.mxu0 %v6455
      %7449 = vmatpush1.bf16.msra.mxu0 %v6454
      %7450 = vmatprep.mubr.bf16.mxu0 %v4309
      %7451 = vmatmul.mubr.bf16.gmra.mrb[0].mxu0 %v4308
      %v7452 = vpop.f32.mrb[0].mxu0
      %v7453 = vadd.f32 %v4841, %v7452
      %v7454 = vpop.f32.mrb[0].mxu0
      %v7455 = vadd.f32 %v4845, %v7454
      %v7456 = vpop.f32.mrb[0].mxu0
      %v7457 = vadd.f32 %v4841, %v7456
      %v7458 = vpop.f32.mrb[0].mxu0
      %v7459 = vadd.f32 %v4845, %v7458
      %7460 = vdwg.mxu0
      %7461 = vmatprep.subr.bf16.mxu0 %v6459
      %7462 = vmatpush1.bf16.msra.mxu0 %v6458
      %7463 = vmatprep.subr.bf16.mxu0 %v6463
      %7464 = vmatpush1.bf16.msra.mxu0 %v6462
      %7465 = vmatprep.subr.bf16.mxu0 %v6467
      %7466 = vmatpush1.bf16.msra.mxu0 %v6466
      %7467 = vmatprep.subr.bf16.mxu0 %v6471
      %7468 = vmatpush1.bf16.msra.mxu0 %v6470
      %7469 = vmatprep.subr.bf16.mxu0 %v6475
      %7470 = vmatpush1.bf16.msra.mxu0 %v6474
      %7471 = vmatprep.subr.bf16.mxu0 %v6479
      %7472 = vmatpush1.bf16.msra.mxu0 %v6478
      %7473 = vmatprep.subr.bf16.mxu0 %v6483
      %7474 = vmatpush1.bf16.msra.mxu0 %v6482
      %7475 = vmatprep.subr.bf16.mxu0 %v6487
      %7476 = vmatpush1.bf16.msra.mxu0 %v6486
      %7477 = vmatprep.subr.bf16.mxu0 %v6491
      %7478 = vmatpush1.bf16.msra.mxu0 %v6490
      %7479 = vmatprep.subr.bf16.mxu0 %v6495
      %7480 = vmatpush1.bf16.msra.mxu0 %v6494
      %7481 = vmatprep.subr.bf16.mxu0 %v6499
      %7482 = vmatpush1.bf16.msra.mxu0 %v6498
      %7483 = vmatprep.subr.bf16.mxu0 %v6503
      %7484 = vmatpush1.bf16.msra.mxu0 %v6502
      %7485 = vmatprep.subr.bf16.mxu0 %v6507
      %7486 = vmatpush1.bf16.msra.mxu0 %v6506
      %7487 = vmatprep.subr.bf16.mxu0 %v6511
      %7488 = vmatpush1.bf16.msra.mxu0 %v6510
      %7489 = vmatprep.subr.bf16.mxu0 %v6515
      %7490 = vmatpush1.bf16.msra.mxu0 %v6514
      %7491 = vmatprep.subr.bf16.mxu0 %v6519
      %7492 = vmatpush1.bf16.msra.mxu0 %v6518
      %7493 = vmatprep.mubr.bf16.mxu0 %v4311
      %7494 = vmatmul.mubr.bf16.gmra.mrb[0].mxu0 %v4310
      %v7495 = vpop.f32.mrb[0].mxu0
      %v7496 = vadd.f32 %v7453, %v7495
      %v7497 = vpop.f32.mrb[0].mxu0
      %v7498 = vadd.f32 %v7455, %v7497
      %v7499 = vpop.f32.mrb[0].mxu0
      %v7500 = vadd.f32 %v7457, %v7499
      %v7501 = vpop.f32.mrb[0].mxu0
      %v7502 = vadd.f32 %v7459, %v7501
      %7503 = vdwg.mxu0
      %7504 = vmatprep.subr.bf16.mxu0 %v6523
      %7505 = vmatpush1.bf16.msra.mxu0 %v6522
      %7506 = vmatprep.subr.bf16.mxu0 %v6527
      %7507 = vmatpush1.bf16.msra.mxu0 %v6526
      %7508 = vmatprep.subr.bf16.mxu0 %v6531
      %7509 = vmatpush1.bf16.msra.mxu0 %v6530
      %7510 = vmatprep.subr.bf16.mxu0 %v6535
      %7511 = vmatpush1.bf16.msra.mxu0 %v6534
      %7512 = vmatprep.subr.bf16.mxu0 %v6539
      %7513 = vmatpush1.bf16.msra.mxu0 %v6538
      %7514 = vmatprep.subr.bf16.mxu0 %v6543
      %7515 = vmatpush1.bf16.msra.mxu0 %v6542
      %7516 = vmatprep.subr.bf16.mxu0 %v6547
      %7517 = vmatpush1.bf16.msra.mxu0 %v6546
      %7518 = vmatprep.subr.bf16.mxu0 %v6551
      %7519 = vmatpush1.bf16.msra.mxu0 %v6550
      %7520 = vmatprep.subr.bf16.mxu0 %v6555
      %7521 = vmatpush1.bf16.msra.mxu0 %v6554
      %7522 = vmatprep.subr.bf16.mxu0 %v6559
      %7523 = vmatpush1.bf16.msra.mxu0 %v6558
      %7524 = vmatprep.subr.bf16.mxu0 %v6563
      %7525 = vmatpush1.bf16.msra.mxu0 %v6562
      %7526 = vmatprep.subr.bf16.mxu0 %v6567
      %7527 = vmatpush1.bf16.msra.mxu0 %v6566
      %7528 = vmatprep.subr.bf16.mxu0 %v6571
      %7529 = vmatpush1.bf16.msra.mxu0 %v6570
      %7530 = vmatprep.subr.bf16.mxu0 %v6575
      %7531 = vmatpush1.bf16.msra.mxu0 %v6574
      %7532 = vmatprep.subr.bf16.mxu0 %v6579
      %7533 = vmatpush1.bf16.msra.mxu0 %v6578
      %7534 = vmatprep.subr.bf16.mxu0 %v6583
      %7535 = vmatpush1.bf16.msra.mxu0 %v6582
      %7536 = vmatprep.mubr.bf16.mxu0 %v4313
      %7537 = vmatmul.mubr.bf16.gmra.mrb[0].mxu0 %v4312
      %v7538 = vpop.f32.mrb[0].mxu0
      %v7539 = vadd.f32 %v7496, %v7538
      %v7540 = vpop.f32.mrb[0].mxu0
      %v7541 = vadd.f32 %v7498, %v7540
      %v7542 = vpop.f32.mrb[0].mxu0
      %v7543 = vadd.f32 %v7500, %v7542
      %v7544 = vpop.f32.mrb[0].mxu0
      %v7545 = vadd.f32 %v7502, %v7544
      %7546 = vdwg.mxu0
      %7547 = vmatprep.subr.bf16.mxu0 %v6587
      %7548 = vmatpush1.bf16.msra.mxu0 %v6586
      %7549 = vmatprep.subr.bf16.mxu0 %v6591
      %7550 = vmatpush1.bf16.msra.mxu0 %v6590
      %7551 = vmatprep.subr.bf16.mxu0 %v6595
      %7552 = vmatpush1.bf16.msra.mxu0 %v6594
      %7553 = vmatprep.subr.bf16.mxu0 %v6599
      %7554 = vmatpush1.bf16.msra.mxu0 %v6598
      %7555 = vmatprep.subr.bf16.mxu0 %v6603
      %7556 = vmatpush1.bf16.msra.mxu0 %v6602
      %7557 = vmatprep.subr.bf16.mxu0 %v6607
      %7558 = vmatpush1.bf16.msra.mxu0 %v6606
      %7559 = vmatprep.subr.bf16.mxu0 %v6611
      %7560 = vmatpush1.bf16.msra.mxu0 %v6610
      %7561 = vmatprep.subr.bf16.mxu0 %v6615
      %7562 = vmatpush1.bf16.msra.mxu0 %v6614
      %7563 = vmatprep.subr.bf16.mxu0 %v6619
      %7564 = vmatpush1.bf16.msra.mxu0 %v6618
      %7565 = vmatprep.subr.bf16.mxu0 %v6623
      %7566 = vmatpush1.bf16.msra.mxu0 %v6622
      %7567 = vmatprep.subr.bf16.mxu0 %v6627
      %7568 = vmatpush1.bf16.msra.mxu0 %v6626
      %7569 = vmatprep.subr.bf16.mxu0 %v6631
      %7570 = vmatpush1.bf16.msra.mxu0 %v6630
      %7571 = vmatprep.subr.bf16.mxu0 %v6635
      %7572 = vmatpush1.bf16.msra.mxu0 %v6634
      %7573 = vmatprep.subr.bf16.mxu0 %v6639
      %7574 = vmatpush1.bf16.msra.mxu0 %v6638
      %7575 = vmatprep.subr.bf16.mxu0 %v6643
      %7576 = vmatpush1.bf16.msra.mxu0 %v6642
      %7577 = vmatprep.subr.bf16.mxu0 %v6647
      %7578 = vmatpush1.bf16.msra.mxu0 %v6646
      %7579 = vmatprep.mubr.bf16.mxu0 %v4315
      %7580 = vmatmul.mubr.bf16.gmra.mrb[0].mxu0 %v4314
      %v7581 = vpop.f32.mrb[0].mxu0
      %v7582 = vadd.f32 %v7539, %v7581
      %v7583 = vpop.f32.mrb[0].mxu0
      %v7584 = vadd.f32 %v7541, %v7583
      %v7585 = vpop.f32.mrb[0].mxu0
      %v7586 = vadd.f32 %v7543, %v7585
      %v7587 = vpop.f32.mrb[0].mxu0
      %v7588 = vadd.f32 %v7545, %v7587
      %7589 = vdwg.mxu0
      %7590 = vmatprep.subr.bf16.mxu0 %v6651
      %7591 = vmatpush1.bf16.msra.mxu0 %v6650
      %7592 = vmatprep.subr.bf16.mxu0 %v6655
      %7593 = vmatpush1.bf16.msra.mxu0 %v6654
      %7594 = vmatprep.subr.bf16.mxu0 %v6659
      %7595 = vmatpush1.bf16.msra.mxu0 %v6658
      %7596 = vmatprep.subr.bf16.mxu0 %v6663
      %7597 = vmatpush1.bf16.msra.mxu0 %v6662
      %7598 = vmatprep.subr.bf16.mxu0 %v6667
      %7599 = vmatpush1.bf16.msra.mxu0 %v6666
      %7600 = vmatprep.subr.bf16.mxu0 %v6671
      %7601 = vmatpush1.bf16.msra.mxu0 %v6670
      %7602 = vmatprep.subr.bf16.mxu0 %v6675
      %7603 = vmatpush1.bf16.msra.mxu0 %v6674
      %7604 = vmatprep.subr.bf16.mxu0 %v6679
      %7605 = vmatpush1.bf16.msra.mxu0 %v6678
      %7606 = vmatprep.subr.bf16.mxu0 %v6683
      %7607 = vmatpush1.bf16.msra.mxu0 %v6682
      %7608 = vmatprep.subr.bf16.mxu0 %v6687
      %7609 = vmatpush1.bf16.msra.mxu0 %v6686
      %7610 = vmatprep.subr.bf16.mxu0 %v6691
      %7611 = vmatpush1.bf16.msra.mxu0 %v6690
      %7612 = vmatprep.subr.bf16.mxu0 %v6695
      %7613 = vmatpush1.bf16.msra.mxu0 %v6694
      %7614 = vmatprep.subr.bf16.mxu0 %v6699
      %7615 = vmatpush1.bf16.msra.mxu0 %v6698
      %7616 = vmatprep.subr.bf16.mxu0 %v6703
      %7617 = vmatpush1.bf16.msra.mxu0 %v6702
      %7618 = vmatprep.subr.bf16.mxu0 %v6707
      %7619 = vmatpush1.bf16.msra.mxu0 %v6706
      %7620 = vmatprep.subr.bf16.mxu0 %v6711
      %7621 = vmatpush1.bf16.msra.mxu0 %v6710
      %7622 = vmatprep.mubr.bf16.mxu0 %v4317
      %7623 = vmatmul.mubr.bf16.gmra.mrb[0].mxu0 %v4316
      %v7624 = vpop.f32.mrb[0].mxu0
      %v7625 = vadd.f32 %v7582, %v7624
      %v7626 = vpop.f32.mrb[0].mxu0
      %v7627 = vadd.f32 %v7584, %v7626
      %v7628 = vpop.f32.mrb[0].mxu0
      %v7629 = vadd.f32 %v7586, %v7628
      %v7630 = vpop.f32.mrb[0].mxu0
      %v7631 = vadd.f32 %v7588, %v7630
      %7632 = vdwg.mxu0
      %7633 = vmatprep.subr.bf16.mxu0 %v6715
      %7634 = vmatpush1.bf16.msra.mxu0 %v6714
      %7635 = vmatprep.subr.bf16.mxu0 %v6719
      %7636 = vmatpush1.bf16.msra.mxu0 %v6718
      %7637 = vmatprep.subr.bf16.mxu0 %v6723
      %7638 = vmatpush1.bf16.msra.mxu0 %v6722
      %7639 = vmatprep.subr.bf16.mxu0 %v6727
      %7640 = vmatpush1.bf16.msra.mxu0 %v6726
      %7641 = vmatprep.subr.bf16.mxu0 %v6731
      %7642 = vmatpush1.bf16.msra.mxu0 %v6730
      %7643 = vmatprep.subr.bf16.mxu0 %v6735
      %7644 = vmatpush1.bf16.msra.mxu0 %v6734
      %7645 = vmatprep.subr.bf16.mxu0 %v6739
      %7646 = vmatpush1.bf16.msra.mxu0 %v6738
      %7647 = vmatprep.subr.bf16.mxu0 %v6743
      %7648 = vmatpush1.bf16.msra.mxu0 %v6742
      %7649 = vmatprep.subr.bf16.mxu0 %v6747
      %7650 = vmatpush1.bf16.msra.mxu0 %v6746
      %7651 = vmatprep.subr.bf16.mxu0 %v6751
      %7652 = vmatpush1.bf16.msra.mxu0 %v6750
      %7653 = vmatprep.subr.bf16.mxu0 %v6755
      %7654 = vmatpush1.bf16.msra.mxu0 %v6754
      %7655 = vmatprep.subr.bf16.mxu0 %v6759
      %7656 = vmatpush1.bf16.msra.mxu0 %v6758
      %7657 = vmatprep.subr.bf16.mxu0 %v6763
      %7658 = vmatpush1.bf16.msra.mxu0 %v6762
      %7659 = vmatprep.subr.bf16.mxu0 %v6767
      %7660 = vmatpush1.bf16.msra.mxu0 %v6766
      %7661 = vmatprep.subr.bf16.mxu0 %v6771
      %7662 = vmatpush1.bf16.msra.mxu0 %v6770
      %7663 = vmatprep.subr.bf16.mxu0 %v6775
      %7664 = vmatpush1.bf16.msra.mxu0 %v6774
      %7665 = vmatprep.mubr.bf16.mxu0 %v4319
      %7666 = vmatmul.mubr.bf16.gmra.mrb[0].mxu0 %v4318
      %v7667 = vpop.f32.mrb[0].mxu0
      %v7668 = vadd.f32 %v7625, %v7667
      %v7669 = vpop.f32.mrb[0].mxu0
      %v7670 = vadd.f32 %v7627, %v7669
      %v7671 = vpop.f32.mrb[0].mxu0
      %v7672 = vadd.f32 %v7629, %v7671
      %v7673 = vpop.f32.mrb[0].mxu0
      %v7674 = vadd.f32 %v7631, %v7673
      %7675 = vdwg.mxu0
      %7676 = vmatprep.subr.bf16.mxu0 %v6779
      %7677 = vmatpush1.bf16.msra.mxu0 %v6778
      %7678 = vmatprep.subr.bf16.mxu0 %v6783
      %7679 = vmatpush1.bf16.msra.mxu0 %v6782
      %7680 = vmatprep.subr.bf16.mxu0 %v6787
      %7681 = vmatpush1.bf16.msra.mxu0 %v6786
      %7682 = vmatprep.subr.bf16.mxu0 %v6791
      %7683 = vmatpush1.bf16.msra.mxu0 %v6790
      %7684 = vmatprep.subr.bf16.mxu0 %v6795
      %7685 = vmatpush1.bf16.msra.mxu0 %v6794
      %7686 = vmatprep.subr.bf16.mxu0 %v6799
      %7687 = vmatpush1.bf16.msra.mxu0 %v6798
      %7688 = vmatprep.subr.bf16.mxu0 %v6803
      %7689 = vmatpush1.bf16.msra.mxu0 %v6802
      %7690 = vmatprep.subr.bf16.mxu0 %v6807
      %7691 = vmatpush1.bf16.msra.mxu0 %v6806
      %7692 = vmatprep.subr.bf16.mxu0 %v6811
      %7693 = vmatpush1.bf16.msra.mxu0 %v6810
      %7694 = vmatprep.subr.bf16.mxu0 %v6815
      %7695 = vmatpush1.bf16.msra.mxu0 %v6814
      %7696 = vmatprep.subr.bf16.mxu0 %v6819
      %7697 = vmatpush1.bf16.msra.mxu0 %v6818
      %7698 = vmatprep.subr.bf16.mxu0 %v6823
      %7699 = vmatpush1.bf16.msra.mxu0 %v6822
      %7700 = vmatprep.subr.bf16.mxu0 %v6827
      %7701 = vmatpush1.bf16.msra.mxu0 %v6826
      %7702 = vmatprep.subr.bf16.mxu0 %v6831
      %7703 = vmatpush1.bf16.msra.mxu0 %v6830
      %7704 = vmatprep.subr.bf16.mxu0 %v6835
      %7705 = vmatpush1.bf16.msra.mxu0 %v6834
      %7706 = vmatprep.subr.bf16.mxu0 %v6839
      %7707 = vmatpush1.bf16.msra.mxu0 %v6838
      %7708 = vmatprep.mubr.bf16.mxu0 %v4321
      %7709 = vmatmul.mubr.bf16.gmra.mrb[0].mxu0 %v4320
      %v7710 = vpop.f32.mrb[0].mxu0
      %v7711 = vadd.f32 %v7668, %v7710
      %v7712 = vpop.f32.mrb[0].mxu0
      %v7713 = vadd.f32 %v7670, %v7712
      %v7714 = vpop.f32.mrb[0].mxu0
      %v7715 = vadd.f32 %v7672, %v7714
      %v7716 = vpop.f32.mrb[0].mxu0
      %v7717 = vadd.f32 %v7674, %v7716
      %7718 = vdwg.mxu0
      %7719 = vmatprep.subr.bf16.mxu0 %v6843
      %7720 = vmatpush1.bf16.msra.mxu0 %v6842
      %7721 = vmatprep.subr.bf16.mxu0 %v6847
      %7722 = vmatpush1.bf16.msra.mxu0 %v6846
      %7723 = vmatprep.subr.bf16.mxu0 %v6851
      %7724 = vmatpush1.bf16.msra.mxu0 %v6850
      %7725 = vmatprep.subr.bf16.mxu0 %v6855
      %7726 = vmatpush1.bf16.msra.mxu0 %v6854
      %7727 = vmatprep.subr.bf16.mxu0 %v6859
      %7728 = vmatpush1.bf16.msra.mxu0 %v6858
      %7729 = vmatprep.subr.bf16.mxu0 %v6863
      %7730 = vmatpush1.bf16.msra.mxu0 %v6862
      %7731 = vmatprep.subr.bf16.mxu0 %v6867
      %7732 = vmatpush1.bf16.msra.mxu0 %v6866
      %7733 = vmatprep.subr.bf16.mxu0 %v6871
      %7734 = vmatpush1.bf16.msra.mxu0 %v6870
      %7735 = vmatprep.subr.bf16.mxu0 %v6875
      %7736 = vmatpush1.bf16.msra.mxu0 %v6874
      %7737 = vmatprep.subr.bf16.mxu0 %v6879
      %7738 = vmatpush1.bf16.msra.mxu0 %v6878
      %7739 = vmatprep.subr.bf16.mxu0 %v6883
      %7740 = vmatpush1.bf16.msra.mxu0 %v6882
      %7741 = vmatprep.subr.bf16.mxu0 %v6887
      %7742 = vmatpush1.bf16.msra.mxu0 %v6886
      %7743 = vmatprep.subr.bf16.mxu0 %v6891
      %7744 = vmatpush1.bf16.msra.mxu0 %v6890
      %7745 = vmatprep.subr.bf16.mxu0 %v6895
      %7746 = vmatpush1.bf16.msra.mxu0 %v6894
      %7747 = vmatprep.subr.bf16.mxu0 %v6899
      %7748 = vmatpush1.bf16.msra.mxu0 %v6898
      %7749 = vmatprep.subr.bf16.mxu0 %v6903
      %7750 = vmatpush1.bf16.msra.mxu0 %v6902
      %7751 = vmatprep.mubr.bf16.mxu0 %v4323
      %7752 = vmatmul.mubr.bf16.gmra.mrb[0].mxu0 %v4322
      %v7753 = vpop.f32.mrb[0].mxu0
      %v7754 = vadd.f32 %v7711, %v7753
      %v7755 = vpop.f32.mrb[0].mxu0
      %v7756 = vadd.f32 %v7713, %v7755
      %v7757 = vpop.f32.mrb[0].mxu0
      %v7758 = vadd.f32 %v7715, %v7757
      %v7759 = vpop.f32.mrb[0].mxu0
      %v7760 = vadd.f32 %v7717, %v7759
      %7761 = vdwg.mxu0
      %7762 = vmatprep.subr.bf16.mxu0 %v6397
      %7763 = vmatpush1.bf16.msra.mxu0 %v6396
      %7764 = vmatprep.subr.bf16.mxu0 %v6401
      %7765 = vmatpush1.bf16.msra.mxu0 %v6400
      %7766 = vmatprep.subr.bf16.mxu0 %v6405
      %7767 = vmatpush1.bf16.msra.mxu0 %v6404
      %7768 = vmatprep.subr.bf16.mxu0 %v6409
      %7769 = vmatpush1.bf16.msra.mxu0 %v6408
      %7770 = vmatprep.subr.bf16.mxu0 %v6413
      %7771 = vmatpush1.bf16.msra.mxu0 %v6412
      %7772 = vmatprep.subr.bf16.mxu0 %v6417
      %7773 = vmatpush1.bf16.msra.mxu0 %v6416
      %7774 = vmatprep.subr.bf16.mxu0 %v6421
      %7775 = vmatpush1.bf16.msra.mxu0 %v6420
      %7776 = vmatprep.subr.bf16.mxu0 %v6425
      %7777 = vmatpush1.bf16.msra.mxu0 %v6424
      %7778 = vmatprep.subr.bf16.mxu0 %v6429
      %7779 = vmatpush1.bf16.msra.mxu0 %v6428
      %7780 = vmatprep.subr.bf16.mxu0 %v6433
      %7781 = vmatpush1.bf16.msra.mxu0 %v6432
      %7782 = vmatprep.subr.bf16.mxu0 %v6437
      %7783 = vmatpush1.bf16.msra.mxu0 %v6436
      %7784 = vmatprep.subr.bf16.mxu0 %v6441
      %7785 = vmatpush1.bf16.msra.mxu0 %v6440
      %7786 = vmatprep.subr.bf16.mxu0 %v6445
      %7787 = vmatpush1.bf16.msra.mxu0 %v6444
      %7788 = vmatprep.subr.bf16.mxu0 %v6449
      %7789 = vmatpush1.bf16.msra.mxu0 %v6448
      %7790 = vmatprep.subr.bf16.mxu0 %v6453
      %7791 = vmatpush1.bf16.msra.mxu0 %v6452
      %7792 = vmatprep.subr.bf16.mxu0 %v6457
      %7793 = vmatpush1.bf16.msra.mxu0 %v6456
      %7794 = vmatprep.mubr.bf16.mxu0 %v4309
      %7795 = vmatmul.mubr.bf16.gmra.mrb[0].mxu0 %v4308
      %v7796 = vpop.f32.mrb[0].mxu0
      %v7797 = vadd.f32 %v4849, %v7796
      %v7798 = vpop.f32.mrb[0].mxu0
      %v7799 = vadd.f32 %v4853, %v7798
      %v7800 = vpop.f32.mrb[0].mxu0
      %v7801 = vadd.f32 %v4849, %v7800
      %v7802 = vpop.f32.mrb[0].mxu0
      %v7803 = vadd.f32 %v4853, %v7802
      %7804 = vdwg.mxu0
      %7805 = vmatprep.subr.bf16.mxu0 %v6461
      %7806 = vmatpush1.bf16.msra.mxu0 %v6460
      %7807 = vmatprep.subr.bf16.mxu0 %v6465
      %7808 = vmatpush1.bf16.msra.mxu0 %v6464
      %7809 = vmatprep.subr.bf16.mxu0 %v6469
      %7810 = vmatpush1.bf16.msra.mxu0 %v6468
      %7811 = vmatprep.subr.bf16.mxu0 %v6473
      %7812 = vmatpush1.bf16.msra.mxu0 %v6472
      %7813 = vmatprep.subr.bf16.mxu0 %v6477
      %7814 = vmatpush1.bf16.msra.mxu0 %v6476
      %7815 = vmatprep.subr.bf16.mxu0 %v6481
      %7816 = vmatpush1.bf16.msra.mxu0 %v6480
      %7817 = vmatprep.subr.bf16.mxu0 %v6485
      %7818 = vmatpush1.bf16.msra.mxu0 %v6484
      %7819 = vmatprep.subr.bf16.mxu0 %v6489
      %7820 = vmatpush1.bf16.msra.mxu0 %v6488
      %7821 = vmatprep.subr.bf16.mxu0 %v6493
      %7822 = vmatpush1.bf16.msra.mxu0 %v6492
      %7823 = vmatprep.subr.bf16.mxu0 %v6497
      %7824 = vmatpush1.bf16.msra.mxu0 %v6496
      %7825 = vmatprep.subr.bf16.mxu0 %v6501
      %7826 = vmatpush1.bf16.msra.mxu0 %v6500
      %7827 = vmatprep.subr.bf16.mxu0 %v6505
      %7828 = vmatpush1.bf16.msra.mxu0 %v6504
      %7829 = vmatprep.subr.bf16.mxu0 %v6509
      %7830 = vmatpush1.bf16.msra.mxu0 %v6508
      %7831 = vmatprep.subr.bf16.mxu0 %v6513
      %7832 = vmatpush1.bf16.msra.mxu0 %v6512
      %7833 = vmatprep.subr.bf16.mxu0 %v6517
      %7834 = vmatpush1.bf16.msra.mxu0 %v6516
      %7835 = vmatprep.subr.bf16.mxu0 %v6521
      %7836 = vmatpush1.bf16.msra.mxu0 %v6520
      %7837 = vmatprep.mubr.bf16.mxu0 %v4311
      %7838 = vmatmul.mubr.bf16.gmra.mrb[0].mxu0 %v4310
      %v7839 = vpop.f32.mrb[0].mxu0
      %v7840 = vadd.f32 %v7797, %v7839
      %v7841 = vpop.f32.mrb[0].mxu0
      %v7842 = vadd.f32 %v7799, %v7841
      %v7843 = vpop.f32.mrb[0].mxu0
      %v7844 = vadd.f32 %v7801, %v7843
      %v7845 = vpop.f32.mrb[0].mxu0
      %v7846 = vadd.f32 %v7803, %v7845
      %7847 = vdwg.mxu0
      %7848 = vmatprep.subr.bf16.mxu0 %v6525
      %7849 = vmatpush1.bf16.msra.mxu0 %v6524
      %7850 = vmatprep.subr.bf16.mxu0 %v6529
      %7851 = vmatpush1.bf16.msra.mxu0 %v6528
      %7852 = vmatprep.subr.bf16.mxu0 %v6533
      %7853 = vmatpush1.bf16.msra.mxu0 %v6532
      %7854 = vmatprep.subr.bf16.mxu0 %v6537
      %7855 = vmatpush1.bf16.msra.mxu0 %v6536
      %7856 = vmatprep.subr.bf16.mxu0 %v6541
      %7857 = vmatpush1.bf16.msra.mxu0 %v6540
      %7858 = vmatprep.subr.bf16.mxu0 %v6545
      %7859 = vmatpush1.bf16.msra.mxu0 %v6544
      %7860 = vmatprep.subr.bf16.mxu0 %v6549
      %7861 = vmatpush1.bf16.msra.mxu0 %v6548
      %7862 = vmatprep.subr.bf16.mxu0 %v6553
      %7863 = vmatpush1.bf16.msra.mxu0 %v6552
      %7864 = vmatprep.subr.bf16.mxu0 %v6557
      %7865 = vmatpush1.bf16.msra.mxu0 %v6556
      %7866 = vmatprep.subr.bf16.mxu0 %v6561
      %7867 = vmatpush1.bf16.msra.mxu0 %v6560
      %7868 = vmatprep.subr.bf16.mxu0 %v6565
      %7869 = vmatpush1.bf16.msra.mxu0 %v6564
      %7870 = vmatprep.subr.bf16.mxu0 %v6569
      %7871 = vmatpush1.bf16.msra.mxu0 %v6568
      %7872 = vmatprep.subr.bf16.mxu0 %v6573
      %7873 = vmatpush1.bf16.msra.mxu0 %v6572
      %7874 = vmatprep.subr.bf16.mxu0 %v6577
      %7875 = vmatpush1.bf16.msra.mxu0 %v6576
      %7876 = vmatprep.subr.bf16.mxu0 %v6581
      %7877 = vmatpush1.bf16.msra.mxu0 %v6580
      %7878 = vmatprep.subr.bf16.mxu0 %v6585
      %7879 = vmatpush1.bf16.msra.mxu0 %v6584
      %7880 = vmatprep.mubr.bf16.mxu0 %v4313
      %7881 = vmatmul.mubr.bf16.gmra.mrb[0].mxu0 %v4312
      %v7882 = vpop.f32.mrb[0].mxu0
      %v7883 = vadd.f32 %v7840, %v7882
      %v7884 = vpop.f32.mrb[0].mxu0
      %v7885 = vadd.f32 %v7842, %v7884
      %v7886 = vpop.f32.mrb[0].mxu0
      %v7887 = vadd.f32 %v7844, %v7886
      %v7888 = vpop.f32.mrb[0].mxu0
      %v7889 = vadd.f32 %v7846, %v7888
      %7890 = vdwg.mxu0
      %7891 = vmatprep.subr.bf16.mxu0 %v6589
      %7892 = vmatpush1.bf16.msra.mxu0 %v6588
      %7893 = vmatprep.subr.bf16.mxu0 %v6593
      %7894 = vmatpush1.bf16.msra.mxu0 %v6592
      %7895 = vmatprep.subr.bf16.mxu0 %v6597
      %7896 = vmatpush1.bf16.msra.mxu0 %v6596
      %7897 = vmatprep.subr.bf16.mxu0 %v6601
      %7898 = vmatpush1.bf16.msra.mxu0 %v6600
      %7899 = vmatprep.subr.bf16.mxu0 %v6605
      %7900 = vmatpush1.bf16.msra.mxu0 %v6604
      %7901 = vmatprep.subr.bf16.mxu0 %v6609
      %7902 = vmatpush1.bf16.msra.mxu0 %v6608
      %7903 = vmatprep.subr.bf16.mxu0 %v6613
      %7904 = vmatpush1.bf16.msra.mxu0 %v6612
      %7905 = vmatprep.subr.bf16.mxu0 %v6617
      %7906 = vmatpush1.bf16.msra.mxu0 %v6616
      %7907 = vmatprep.subr.bf16.mxu0 %v6621
      %7908 = vmatpush1.bf16.msra.mxu0 %v6620
      %7909 = vmatprep.subr.bf16.mxu0 %v6625
      %7910 = vmatpush1.bf16.msra.mxu0 %v6624
      %7911 = vmatprep.subr.bf16.mxu0 %v6629
      %7912 = vmatpush1.bf16.msra.mxu0 %v6628
      %7913 = vmatprep.subr.bf16.mxu0 %v6633
      %7914 = vmatpush1.bf16.msra.mxu0 %v6632
      %7915 = vmatprep.subr.bf16.mxu0 %v6637
      %7916 = vmatpush1.bf16.msra.mxu0 %v6636
      %7917 = vmatprep.subr.bf16.mxu0 %v6641
      %7918 = vmatpush1.bf16.msra.mxu0 %v6640
      %7919 = vmatprep.subr.bf16.mxu0 %v6645
      %7920 = vmatpush1.bf16.msra.mxu0 %v6644
      %7921 = vmatprep.subr.bf16.mxu0 %v6649
      %7922 = vmatpush1.bf16.msra.mxu0 %v6648
      %7923 = vmatprep.mubr.bf16.mxu0 %v4315
      %7924 = vmatmul.mubr.bf16.gmra.mrb[0].mxu0 %v4314
      %v7925 = vpop.f32.mrb[0].mxu0
      %v7926 = vadd.f32 %v7883, %v7925
      %v7927 = vpop.f32.mrb[0].mxu0
      %v7928 = vadd.f32 %v7885, %v7927
      %v7929 = vpop.f32.mrb[0].mxu0
      %v7930 = vadd.f32 %v7887, %v7929
      %v7931 = vpop.f32.mrb[0].mxu0
      %v7932 = vadd.f32 %v7889, %v7931
      %7933 = vdwg.mxu0
      %7934 = vmatprep.subr.bf16.mxu0 %v6653
      %7935 = vmatpush1.bf16.msra.mxu0 %v6652
      %7936 = vmatprep.subr.bf16.mxu0 %v6657
      %7937 = vmatpush1.bf16.msra.mxu0 %v6656
      %7938 = vmatprep.subr.bf16.mxu0 %v6661
      %7939 = vmatpush1.bf16.msra.mxu0 %v6660
      %7940 = vmatprep.subr.bf16.mxu0 %v6665
      %7941 = vmatpush1.bf16.msra.mxu0 %v6664
      %7942 = vmatprep.subr.bf16.mxu0 %v6669
      %7943 = vmatpush1.bf16.msra.mxu0 %v6668
      %7944 = vmatprep.subr.bf16.mxu0 %v6673
      %7945 = vmatpush1.bf16.msra.mxu0 %v6672
      %7946 = vmatprep.subr.bf16.mxu0 %v6677
      %7947 = vmatpush1.bf16.msra.mxu0 %v6676
      %7948 = vmatprep.subr.bf16.mxu0 %v6681
      %7949 = vmatpush1.bf16.msra.mxu0 %v6680
      %7950 = vmatprep.subr.bf16.mxu0 %v6685
      %7951 = vmatpush1.bf16.msra.mxu0 %v6684
      %7952 = vmatprep.subr.bf16.mxu0 %v6689
      %7953 = vmatpush1.bf16.msra.mxu0 %v6688
      %7954 = vmatprep.subr.bf16.mxu0 %v6693
      %7955 = vmatpush1.bf16.msra.mxu0 %v6692
      %7956 = vmatprep.subr.bf16.mxu0 %v6697
      %7957 = vmatpush1.bf16.msra.mxu0 %v6696
      %7958 = vmatprep.subr.bf16.mxu0 %v6701
      %7959 = vmatpush1.bf16.msra.mxu0 %v6700
      %7960 = vmatprep.subr.bf16.mxu0 %v6705
      %7961 = vmatpush1.bf16.msra.mxu0 %v6704
      %7962 = vmatprep.subr.bf16.mxu0 %v6709
      %7963 = vmatpush1.bf16.msra.mxu0 %v6708
      %7964 = vmatprep.subr.bf16.mxu0 %v6713
      %7965 = vmatpush1.bf16.msra.mxu0 %v6712
      %7966 = vmatprep.mubr.bf16.mxu0 %v4317
      %7967 = vmatmul.mubr.bf16.gmra.mrb[0].mxu0 %v4316
      %v7968 = vpop.f32.mrb[0].mxu0
      %v7969 = vadd.f32 %v7926, %v7968
      %v7970 = vpop.f32.mrb[0].mxu0
      %v7971 = vadd.f32 %v7928, %v7970
      %v7972 = vpop.f32.mrb[0].mxu0
      %v7973 = vadd.f32 %v7930, %v7972
      %v7974 = vpop.f32.mrb[0].mxu0
      %v7975 = vadd.f32 %v7932, %v7974
      %7976 = vdwg.mxu0
      %7977 = vmatprep.subr.bf16.mxu0 %v6717
      %7978 = vmatpush1.bf16.msra.mxu0 %v6716
      %7979 = vmatprep.subr.bf16.mxu0 %v6721
      %7980 = vmatpush1.bf16.msra.mxu0 %v6720
      %7981 = vmatprep.subr.bf16.mxu0 %v6725
      %7982 = vmatpush1.bf16.msra.mxu0 %v6724
      %7983 = vmatprep.subr.bf16.mxu0 %v6729
      %7984 = vmatpush1.bf16.msra.mxu0 %v6728
      %7985 = vmatprep.subr.bf16.mxu0 %v6733
      %7986 = vmatpush1.bf16.msra.mxu0 %v6732
      %7987 = vmatprep.subr.bf16.mxu0 %v6737
      %7988 = vmatpush1.bf16.msra.mxu0 %v6736
      %7989 = vmatprep.subr.bf16.mxu0 %v6741
      %7990 = vmatpush1.bf16.msra.mxu0 %v6740
      %7991 = vmatprep.subr.bf16.mxu0 %v6745
      %7992 = vmatpush1.bf16.msra.mxu0 %v6744
      %7993 = vmatprep.subr.bf16.mxu0 %v6749
      %7994 = vmatpush1.bf16.msra.mxu0 %v6748
      %7995 = vmatprep.subr.bf16.mxu0 %v6753
      %7996 = vmatpush1.bf16.msra.mxu0 %v6752
      %7997 = vmatprep.subr.bf16.mxu0 %v6757
      %7998 = vmatpush1.bf16.msra.mxu0 %v6756
      %7999 = vmatprep.subr.bf16.mxu0 %v6761
      %8000 = vmatpush1.bf16.msra.mxu0 %v6760
      %8001 = vmatprep.subr.bf16.mxu0 %v6765
      %8002 = vmatpush1.bf16.msra.mxu0 %v6764
      %8003 = vmatprep.subr.bf16.mxu0 %v6769
      %8004 = vmatpush1.bf16.msra.mxu0 %v6768
      %8005 = vmatprep.subr.bf16.mxu0 %v6773
      %8006 = vmatpush1.bf16.msra.mxu0 %v6772
      %8007 = vmatprep.subr.bf16.mxu0 %v6777
      %8008 = vmatpush1.bf16.msra.mxu0 %v6776
      %8009 = vmatprep.mubr.bf16.mxu0 %v4319
      %8010 = vmatmul.mubr.bf16.gmra.mrb[0].mxu0 %v4318
      %v8011 = vpop.f32.mrb[0].mxu0
      %v8012 = vadd.f32 %v7969, %v8011
      %v8013 = vpop.f32.mrb[0].mxu0
      %v8014 = vadd.f32 %v7971, %v8013
      %v8015 = vpop.f32.mrb[0].mxu0
      %v8016 = vadd.f32 %v7973, %v8015
      %v8017 = vpop.f32.mrb[0].mxu0
      %v8018 = vadd.f32 %v7975, %v8017
      %8019 = vdwg.mxu0
      %8020 = vmatprep.subr.bf16.mxu0 %v6781
      %8021 = vmatpush1.bf16.msra.mxu0 %v6780
      %8022 = vmatprep.subr.bf16.mxu0 %v6785
      %8023 = vmatpush1.bf16.msra.mxu0 %v6784
      %8024 = vmatprep.subr.bf16.mxu0 %v6789
      %8025 = vmatpush1.bf16.msra.mxu0 %v6788
      %8026 = vmatprep.subr.bf16.mxu0 %v6793
      %8027 = vmatpush1.bf16.msra.mxu0 %v6792
      %8028 = vmatprep.subr.bf16.mxu0 %v6797
      %8029 = vmatpush1.bf16.msra.mxu0 %v6796
      %8030 = vmatprep.subr.bf16.mxu0 %v6801
      %8031 = vmatpush1.bf16.msra.mxu0 %v6800
      %8032 = vmatprep.subr.bf16.mxu0 %v6805
      %8033 = vmatpush1.bf16.msra.mxu0 %v6804
      %8034 = vmatprep.subr.bf16.mxu0 %v6809
      %8035 = vmatpush1.bf16.msra.mxu0 %v6808
      %8036 = vmatprep.subr.bf16.mxu0 %v6813
      %8037 = vmatpush1.bf16.msra.mxu0 %v6812
      %8038 = vmatprep.subr.bf16.mxu0 %v6817
      %8039 = vmatpush1.bf16.msra.mxu0 %v6816
      %8040 = vmatprep.subr.bf16.mxu0 %v6821
      %8041 = vmatpush1.bf16.msra.mxu0 %v6820
      %8042 = vmatprep.subr.bf16.mxu0 %v6825
      %8043 = vmatpush1.bf16.msra.mxu0 %v6824
      %8044 = vmatprep.subr.bf16.mxu0 %v6829
      %8045 = vmatpush1.bf16.msra.mxu0 %v6828
      %8046 = vmatprep.subr.bf16.mxu0 %v6833
      %8047 = vmatpush1.bf16.msra.mxu0 %v6832
      %8048 = vmatprep.subr.bf16.mxu0 %v6837
      %8049 = vmatpush1.bf16.msra.mxu0 %v6836
      %8050 = vmatprep.subr.bf16.mxu0 %v6841
      %8051 = vmatpush1.bf16.msra.mxu0 %v6840
      %8052 = vmatprep.mubr.bf16.mxu0 %v4321
      %8053 = vmatmul.mubr.bf16.gmra.mrb[0].mxu0 %v4320
      %v8054 = vpop.f32.mrb[0].mxu0
      %v8055 = vadd.f32 %v8012, %v8054
      %v8056 = vpop.f32.mrb[0].mxu0
      %v8057 = vadd.f32 %v8014, %v8056
      %v8058 = vpop.f32.mrb[0].mxu0
      %v8059 = vadd.f32 %v8016, %v8058
      %v8060 = vpop.f32.mrb[0].mxu0
      %v8061 = vadd.f32 %v8018, %v8060
      %8062 = vdwg.mxu0
      %8063 = vmatprep.subr.bf16.mxu0 %v6845
      %8064 = vmatpush1.bf16.msra.mxu0 %v6844
      %8065 = vmatprep.subr.bf16.mxu0 %v6849
      %8066 = vmatpush1.bf16.msra.mxu0 %v6848
      %8067 = vmatprep.subr.bf16.mxu0 %v6853
      %8068 = vmatpush1.bf16.msra.mxu0 %v6852
      %8069 = vmatprep.subr.bf16.mxu0 %v6857
      %8070 = vmatpush1.bf16.msra.mxu0 %v6856
      %8071 = vmatprep.subr.bf16.mxu0 %v6861
      %8072 = vmatpush1.bf16.msra.mxu0 %v6860
      %8073 = vmatprep.subr.bf16.mxu0 %v6865
      %8074 = vmatpush1.bf16.msra.mxu0 %v6864
      %8075 = vmatprep.subr.bf16.mxu0 %v6869
      %8076 = vmatpush1.bf16.msra.mxu0 %v6868
      %8077 = vmatprep.subr.bf16.mxu0 %v6873
      %8078 = vmatpush1.bf16.msra.mxu0 %v6872
      %8079 = vmatprep.subr.bf16.mxu0 %v6877
      %8080 = vmatpush1.bf16.msra.mxu0 %v6876
      %8081 = vmatprep.subr.bf16.mxu0 %v6881
      %8082 = vmatpush1.bf16.msra.mxu0 %v6880
      %8083 = vmatprep.subr.bf16.mxu0 %v6885
      %8084 = vmatpush1.bf16.msra.mxu0 %v6884
      %8085 = vmatprep.subr.bf16.mxu0 %v6889
      %8086 = vmatpush1.bf16.msra.mxu0 %v6888
      %8087 = vmatprep.subr.bf16.mxu0 %v6893
      %8088 = vmatpush1.bf16.msra.mxu0 %v6892
      %8089 = vmatprep.subr.bf16.mxu0 %v6897
      %8090 = vmatpush1.bf16.msra.mxu0 %v6896
      %8091 = vmatprep.subr.bf16.mxu0 %v6901
      %8092 = vmatpush1.bf16.msra.mxu0 %v6900
      %8093 = vmatprep.subr.bf16.mxu0 %v6905
      %8094 = vmatpush1.bf16.msra.mxu0 %v6904
      %8095 = vmatprep.mubr.bf16.mxu0 %v4323
      %8096 = vmatmul.mubr.bf16.gmra.mrb[0].mxu0 %v4322
      %v8097 = vpop.f32.mrb[0].mxu0
      %v8098 = vadd.f32 %v8055, %v8097
      %v8099 = vpop.f32.mrb[0].mxu0
      %v8100 = vadd.f32 %v8057, %v8099
      %v8101 = vpop.f32.mrb[0].mxu0
      %v8102 = vadd.f32 %v8059, %v8101
      %v8103 = vpop.f32.mrb[0].mxu0
      %v8104 = vadd.f32 %v8061, %v8103
      %8105 = vdwg.mxu0
      %v8106 = vld [vmem:[%s407] sm:$0xff]
      %v8107 = vld [vmem:[%s407 + $0x8] sm:$0xff]
      %v8108 = vld [vmem:[%s407 + $0x10] sm:$0xff]
      %v8109 = vld [vmem:[%s407 + $0x18] sm:$0xff]
      %v8110 = vld [vmem:[%s407 + $0x20] sm:$0xff]
      %v8111 = vld [vmem:[%s407 + $0x28] sm:$0xff]
      %v8112 = vld [vmem:[%s407 + $0x30] sm:$0xff]
      %v8113 = vld [vmem:[%s407 + $0x38] sm:$0xff]
      %v8114 = vld [vmem:[%s366] sm:$0xff]
      %v8115 = vld [vmem:[%s366 + $0x8] sm:$0xff]
      %8117 = vset.pattern.permute.xlu0 0
      %8118 = vperm.xlu0 %8117, %v8114
      %v8119 = vpop.permute.xlu0 %8118
      %8122 = vset.pattern.permute.xlu0 0
      %8123 = vperm.xlu0 %8122, %v8115
      %v8124 = vpop.permute.xlu0 %8123
      %v8126 = vmul.f32 %v8119, %v7754
      %v8127 = vmul.f32 %v8119, %v7756
      %v8128 = vmul.f32 %v8119, %v8098
      %v8129 = vmul.f32 %v8119, %v8100
      %v8130 = vmul.f32 %v8124, %v7758
      %v8131 = vmul.f32 %v8124, %v7760
      %v8132 = vmul.f32 %v8124, %v8102
      %v8133 = vmul.f32 %v8124, %v8104
      %v8134 = vadd.f32 %v8106, %v8126
      %v8135 = vadd.f32 %v8107, %v8127
      %v8136 = vadd.f32 %v8108, %v8128
      %v8137 = vadd.f32 %v8109, %v8129
      %v8138 = vadd.f32 %v8110, %v8130
      %v8139 = vadd.f32 %v8111, %v8131
      %v8140 = vadd.f32 %v8112, %v8132
      %v8141 = vadd.f32 %v8113, %v8133
      %8142 = vst [vmem:[%s407] sm:$0xff] %v8134
      %8143 = vst [vmem:[%s407 + $0x8] sm:$0xff] %v8135
      %8144 = vst [vmem:[%s407 + $0x10] sm:$0xff] %v8136
      %8145 = vst [vmem:[%s407 + $0x18] sm:$0xff] %v8137
      %8146 = vst [vmem:[%s407 + $0x20] sm:$0xff] %v8138
      %8147 = vst [vmem:[%s407 + $0x28] sm:$0xff] %v8139
      %8148 = vst [vmem:[%s407 + $0x30] sm:$0xff] %v8140
      %8149 = vst [vmem:[%s407 + $0x38] sm:$0xff] %v8141
      %p8150 = scmp.lt.s32.totalorder %s21, 1
      %s8151 = scalar_select %p8150, %s21, 1
      %s8152 = smul.addr %s8151, 8
      %s8153 = smul.addr %s8152, 8
      %s8154 = scalar_lea.vmem %s6, %s8153
      // Predicated region
      $region49: #{block_forward.3} parent=43 // pred_check
        %p8155 = pneg %p218
      $region50: #{block_forward.3} parent=43 // pred_check_branch
        %8157 = sbr.rel (%p8155) target = $region52
      $region51: #{block_forward.3} parent=43 // pred_region
        _
      $region52: #{block_forward.3} parent=43 // pred_fallthru
        _
    $region44: #{block_forward.3} parent=5 // pred_fallthru
      _
    %p8158 = scmp.le.s32.totalorder 2, %s12
    // Predicated region
    $region53: #{block_forward.3} parent=5 // pred_check
      %p8159 = pneg %p8158
    $region54: #{block_forward.3} parent=5 // pred_check_branch
      %8161 = sbr.rel (%p8159) target = $region56
    $region55: #{block_forward.3} parent=5 // pred_region
      %s8162 = ssub.s32 %s12, 2
      // Predicated region
      $region57: #{block_forward.3} parent=55 // pred_check
        %p8163 = pneg %p224
      $region58: #{block_forward.3} parent=55 // pred_check_branch
        %8165 = sbr.rel (%p8163) target = $region60
      $region59: #{block_forward.3} parent=55 // pred_region
        %p8166 = scmp.lt.s32.totalorder %s23, 1
        %s8167 = scalar_select %p8166, %s23, 1
        %s8168 = smul.addr %s8167, 8
        %s8169 = smul.addr %s8168, 8
        %s8170 = scalar_lea.vmem %s6, %s8169
      $region60: #{block_forward.3} parent=55 // pred_fallthru
        _
    $region56: #{block_forward.3} parent=5 // pred_fallthru
      _
  $region6: #{block_forward.3} parent=0 // loop_footer
    %s16 = sadd.s32 1, %s12
  $region7: #{block_forward.3} parent=0 // loop_footer_branch
    %11 = sbr.rel target = $region3
  $region8: #{block_forward.3} parent=0 // loop_exit
    _

</llo_original>
